<compile_context>
chip_gen: v7x
topology: tpu7x:2x2x1
jax: 0.10.0
libtpu: 0.0.40
codegen_flags: <defaults>
</compile_context>

<pallas_src>
import numpy as np
import jax
import jax.numpy as jnp
from jax.experimental import pallas as pl
from jax.experimental.pallas import tpu as pltpu

F_BINS = 257        # STFT bins (real size)
F_PAD = 384         # padded to 3*128 lanes
WIN = 512           # encoder filter length (n_fft)
HOP = 256           # encoder stride (WIN/2)
HID = 200           # LSTM hidden size (real)
HID_PAD = 256       # padded to 2*128 lanes
MID = 300           # MLP hidden (real)
MID_PAD = 384       # padded to 3*128 lanes
NEG_SLOPE = 0.3     # LeakyReLU negative slope
EPS = 1e-8          # TODO(synk): verify EPS matches the reference take_mag
VMEM_LIMIT = 32 * 1024 * 1024


# ----------------------------- Pallas kernels ------------------------------

def _encoder_kernel(frames_ref, fb_ref, spec_ref, mag_ref):
    # frames: (rows, WIN) f32, fb: (WIN, 2*F_PAD) bf16
    # -> spec (rows, 2*F_PAD) f32, mag (rows, F_PAD) f32   (take_mag)
    frames = frames_ref[...].astype(jnp.bfloat16)
    spec = jnp.dot(frames, fb_ref[...], preferred_element_type=jnp.float32)
    spec_ref[...] = spec
    re = spec[:, :F_PAD]          # lane-aligned split (384 = 3*128)
    im = spec[:, F_PAD:]
    mag_ref[...] = jnp.sqrt(re * re + im * im + EPS)


def _bilstm_kernel(x_ref, wih_ref, whh_ref, b_ref, hseq_ref, gates_ref):
    # One BiLSTM layer; grid=(2,) over direction (0=fwd, 1=bwd).
    # x: (T, B, Din) f32 (shared by both directions)
    # wih: (1, Din, 4*HID_PAD) bf16, whh: (1, HID_PAD, 4*HID_PAD) f32,
    # b: (1, 1, 4*HID_PAD) f32 (b_ih + b_hh, gate order i,f,g,o)
    # hseq out block: (T, B, HID_PAD) -> direction d writes lanes [d*H:(d+1)*H]
    d = pl.program_id(0)
    T, B, _ = x_ref.shape
    H = HID_PAD

    # Input projection + bias for all timesteps in one bf16 MXU matmul.
    x = x_ref[...].astype(jnp.bfloat16)
    gates = jax.lax.dot_general(
        x, wih_ref[0],
        dimension_numbers=(((2,), (0,)), ((), ())),
        preferred_element_type=jnp.float32)            # (T, B, 4H)
    gates_ref[...] = gates + b_ref[0]

    whh = whh_ref[0]                                   # (H, 4H) f32, hoisted

    def step(t, carry):
        h, c = carry
        tt = jnp.where(d == 0, t, T - 1 - t)           # in-kernel time reversal
        g = gates_ref[tt] + jnp.dot(h, whh, preferred_element_type=jnp.float32)
        i = jax.nn.sigmoid(g[:, 0 * H:1 * H])          # all slices lane-aligned
        f = jax.nn.sigmoid(g[:, 1 * H:2 * H])
        gg = jnp.tanh(g[:, 2 * H:3 * H])
        o = jax.nn.sigmoid(g[:, 3 * H:4 * H])
        c = f * c + i * gg
        h = o * jnp.tanh(c)
        hseq_ref[tt] = h                               # full-width 256-lane store
        return h, c

    h0 = jnp.zeros((B, H), jnp.float32)
    jax.lax.fori_loop(0, T, step, (h0, h0))
    # TODO(synk): chunk T (grid axis "arbitrary", h/c in scratch) for very long
    # utterances so gates/x/hseq stay within the v7x 64 MiB VMEM budget.


def _mask_decode_kernel(h_ref, spec_ref, w1_ref, b1_ref, w2_ref, b2_ref,
                        dre_ref, dim_ref, out_ref):
    # Fused: Linear(400,300)+LeakyReLU(0.3)+[Dropout=id]+Linear(300,257)+Sigmoid
    #        -> apply_mag_mask -> decoder filterbank matmul.
    h = h_ref[...].astype(jnp.bfloat16)                       # (rows, 2*HID_PAD)
    z = jnp.dot(h, w1_ref[...], preferred_element_type=jnp.float32) + b1_ref[...]
    z = jnp.where(z >= 0, z, NEG_SLOPE * z)                   # LeakyReLU(0.3)
    # nn.Dropout(0.05) is the identity at inference time.
    z = jnp.dot(z.astype(jnp.bfloat16), w2_ref[...],
                preferred_element_type=jnp.float32) + b2_ref[...]
    mask = jax.nn.sigmoid(z)                                  # (rows, F_PAD)

    spec = spec_ref[...]                                      # (rows, 2*F_PAD)
    re = (spec[:, :F_PAD] * mask).astype(jnp.bfloat16)        # aligned, no concat
    im = (spec[:, F_PAD:] * mask).astype(jnp.bfloat16)
    out_ref[...] = (jnp.dot(re, dre_ref[...], preferred_element_type=jnp.float32)
                    + jnp.dot(im, dim_ref[...], preferred_element_type=jnp.float32))


# ----------------------------- Pallas wrappers ------------------------------

def _full_spec(arr):
    return pl.BlockSpec(arr.shape, lambda i, _nd=arr.ndim: (0,) * _nd)


def encoder_pallas(frames, enc_fb, row_tile):
    npad = frames.shape[0]
    grid = (npad // row_tile,)
    return pl.pallas_call(
        _encoder_kernel,
        grid=grid,
        in_specs=[pl.BlockSpec((row_tile, WIN), lambda i: (i, 0)),
                  _full_spec(enc_fb)],
        out_specs=(pl.BlockSpec((row_tile, 2 * F_PAD), lambda i: (i, 0)),
                   pl.BlockSpec((row_tile, F_PAD), lambda i: (i, 0))),
        out_shape=(jax.ShapeDtypeStruct((npad, 2 * F_PAD), jnp.float32),
                   jax.ShapeDtypeStruct((npad, F_PAD), jnp.float32)),
        compiler_params=pltpu.CompilerParams(
            dimension_semantics=("parallel",), vmem_limit_bytes=VMEM_LIMIT),
    )(frames, enc_fb)


def bilstm_pallas(x, wih_all, whh_all, b_all):
    t, b, din = x.shape
    return pl.pallas_call(
        _bilstm_kernel,
        grid=(2,),   # direction axis; sharded across TCs on megacore parts
        in_specs=[
            pl.BlockSpec((t, b, din), lambda d: (0, 0, 0)),
            pl.BlockSpec((1, din, 4 * HID_PAD), lambda d: (d, 0, 0)),
            pl.BlockSpec((1, HID_PAD, 4 * HID_PAD), lambda d: (d, 0, 0)),
            pl.BlockSpec((1, 1, 4 * HID_PAD), lambda d: (d, 0, 0)),
        ],
        out_specs=pl.BlockSpec((t, b, HID_PAD), lambda d: (0, 0, d)),
        out_shape=jax.ShapeDtypeStruct((t, b, 2 * HID_PAD), jnp.float32),
        scratch_shapes=[pltpu.VMEM((t, b, 4 * HID_PAD), jnp.float32)],
        compiler_params=pltpu.CompilerParams(
            dimension_semantics=("parallel",), vmem_limit_bytes=VMEM_LIMIT),
    )(x, wih_all, whh_all, b_all)


def mask_decode_pallas(h_flat, spec, p, row_tile):
    npad = h_flat.shape[0]
    grid = (npad // row_tile,)
    return pl.pallas_call(
        _mask_decode_kernel,
        grid=grid,
        in_specs=[pl.BlockSpec((row_tile, 2 * HID_PAD), lambda i: (i, 0)),
                  pl.BlockSpec((row_tile, 2 * F_PAD), lambda i: (i, 0)),
                  _full_spec(p['w1']), _full_spec(p['b1']),
                  _full_spec(p['w2']), _full_spec(p['b2']),
                  _full_spec(p['dec_re']), _full_spec(p['dec_im'])],
        out_specs=pl.BlockSpec((row_tile, WIN), lambda i: (i, 0)),
        out_shape=jax.ShapeDtypeStruct((npad, WIN), jnp.float32),
        compiler_params=pltpu.CompilerParams(
            dimension_semantics=("parallel",), vmem_limit_bytes=VMEM_LIMIT),
    )(h_flat, spec, p['w1'], p['b1'], p['w2'], p['b2'], p['dec_re'], p['dec_im'])


# ------------------------------- JAX glue -----------------------------------

def frame_signal(x, win, hop):
    _, n = x.shape
    t = (n - win) // hop + 1
    idx = jnp.arange(t)[:, None] * hop + jnp.arange(win)[None, :]
    return x[:, idx]                                      # (B, T, win)


def overlap_add(frames, hop):
    # HOP == WIN/2 -> overlap-add is exactly two strided adds (O(1) XLA ops).
    b, t, w = frames.shape
    assert w == 2 * hop
    halves = frames.reshape(b, t, 2, hop)
    out = jnp.zeros((b, t + 1, hop), frames.dtype)
    out = out.at[:, :t].add(halves[:, :, 0, :])
    out = out.at[:, 1:].add(halves[:, :, 1, :])
    return out.reshape(b, (t + 1) * hop)


def pad_x_to_y(y, x):
    n = x.shape[-1]
    l = y.shape[-1]
    if l >= n:
        return y[..., :n]
    return jnp.pad(y, ((0, 0), (0, n - l)))


def _row_tile(n):
    if n >= 256:
        return 256
    return max(8, ((n + 7) // 8) * 8)


def generator_forward(x, params):
    b = x.shape[0]
    frames = frame_signal(x, WIN, HOP)                    # (B, T, WIN)
    t = frames.shape[1]
    n = b * t
    tile = _row_tile(n)
    npad = ((n + tile - 1) // tile) * tile

    # t-major flattening (folds both torch.transpose ops into the layout)
    frames_tb = jnp.transpose(frames, (1, 0, 2)).reshape(n, WIN)
    frames_tb = jnp.pad(frames_tb, ((0, npad - n), (0, 0)))

    # encoder + take_mag
    spec, mag = encoder_pallas(frames_tb, params['enc_fb'], tile)

    # 2-layer bidirectional LSTM, one kernel per layer (both directions fused)
    h = mag[:n].reshape(t, b, F_PAD)
    for (wih_all, whh_all, b_all) in params['lstm']:
        h = bilstm_pallas(h, wih_all, whh_all, b_all)     # (T, B, 2*HID_PAD)

    # mask MLP + apply_mag_mask + decoder filterbank (fused), then overlap-add
    h_flat = jnp.pad(h.reshape(n, 2 * HID_PAD), ((0, npad - n), (0, 0)))
    dec = mask_decode_pallas(h_flat, spec, params, tile)[:n]

    frames_out = jnp.transpose(dec.reshape(t, b, WIN), (1, 0, 2))
    y = overlap_add(frames_out, HOP)
    return pad_x_to_y(y, x)


# --------------------------- parameter construction --------------------------

def init_params(key):
    # Deterministic synthetic parameters (shapes dictated by the module),
    # zero-padded to the lane-aligned layout so padded lanes contribute 0.
    keys = jax.random.split(key, 8)
    padF = F_PAD - F_BINS

    # Encoder / decoder: STFT-like cos/sin filterbanks (encoder/decoder are
    # injected modules in the original code; we build deterministic ones).
    n = jnp.arange(WIN, dtype=jnp.float32)
    k = jnp.arange(F_BINS, dtype=jnp.float32)
    window = 0.5 - 0.5 * jnp.cos(2.0 * jnp.pi * n / WIN)          # Hann
    ang = 2.0 * jnp.pi * jnp.outer(n, k) / WIN                    # (WIN, F)
    cos_b = jnp.cos(ang) * window[:, None]
    sin_b = -jnp.sin(ang) * window[:, None]
    enc_fb = jnp.concatenate([jnp.pad(cos_b, ((0, 0), (0, padF))),
                              jnp.pad(sin_b, ((0, 0), (0, padF)))],
                             axis=1).astype(jnp.bfloat16)         # (WIN, 2*F_PAD)
    dec_base = (jnp.concatenate([jnp.cos(ang), -jnp.sin(ang)], axis=1).T
                * (window[None, :] / WIN))                        # (2F, WIN)
    dec_re = jnp.pad(dec_base[:F_BINS], ((0, padF), (0, 0))).astype(jnp.bfloat16)
    dec_im = jnp.pad(dec_base[F_BINS:], ((0, padF), (0, 0))).astype(jnp.bfloat16)

    def pad_gate_cols(w):
        # pad each of the 4 gate blocks (i,f,g,o) from HID to HID_PAD columns
        parts = [jnp.pad(w[..., g * HID:(g + 1) * HID],
                         [(0, 0)] * (w.ndim - 1) + [(0, HID_PAD - HID)])
                 for g in range(4)]
        return jnp.concatenate(parts, axis=-1)

    def remap_h_rows(w):
        # rows [fwd(HID) | bwd(HID)] -> [fwd pad HID_PAD | bwd pad HID_PAD]
        return jnp.concatenate([
            jnp.pad(w[:HID], ((0, HID_PAD - HID), (0, 0))),
            jnp.pad(w[HID:], ((0, HID_PAD - HID), (0, 0))),
        ], axis=0)

    # LSTM weights: uniform(-1/sqrt(H), 1/sqrt(H)) like PyTorch; stored
    # pre-transposed as (Din, 4H) / (H, 4H); bias = b_ih + b_hh; gate order i,f,g,o.
    s = 1.0 / np.sqrt(HID)
    lkeys = iter(jax.random.split(keys[0], 16))
    lstm = []
    for layer, din in enumerate((F_BINS, 2 * HID)):
        wih_d, whh_d, b_d = [], [], []
        for _ in range(2):                                        # fwd, bwd
            wih = jax.random.uniform(next(lkeys), (din, 4 * HID), jnp.float32, -s, s)
            whh = jax.random.uniform(next(lkeys), (HID, 4 * HID), jnp.float32, -s, s)
            bias = (jax.random.uniform(next(lkeys), (1, 4 * HID), jnp.float32, -s, s)
                    + jax.random.uniform(next(lkeys), (1, 4 * HID), jnp.float32, -s, s))
            wih = pad_gate_cols(wih)
            if layer == 0:
                wih = jnp.pad(wih, ((0, F_PAD - F_BINS), (0, 0)))   # (F_PAD, 4H_PAD)
            else:
                wih = remap_h_rows(wih)                             # (2*HID_PAD, 4H_PAD)
            whh = jnp.pad(pad_gate_cols(whh), ((0, HID_PAD - HID), (0, 0)))
            bias = pad_gate_cols(bias)
            wih_d.append(wih); whh_d.append(whh); b_d.append(bias)
        lstm.append((jnp.stack(wih_d).astype(jnp.bfloat16),        # (2, Din_pad, 4H_PAD)
                     jnp.stack(whh_d),                             # (2, HID_PAD, 4H_PAD) f32
                     jnp.stack(b_d)))                              # (2, 1, 4H_PAD) f32

    def lin(kw, kb, din, dout):
        sc = 1.0 / np.sqrt(din)
        w = jax.random.uniform(kw, (din, dout), jnp.float32, -sc, sc)
        bb = jax.random.uniform(kb, (1, dout), jnp.float32, -sc, sc)
        return w, bb

    w1, b1 = lin(keys[1], keys[2], 2 * HID, MID)                   # (400,300),(1,300)
    w2, b2 = lin(keys[3], keys[4], MID, F_BINS)                    # (300,257),(1,257)
    w1 = jnp.pad(remap_h_rows(w1), ((0, 0), (0, MID_PAD - MID))).astype(jnp.bfloat16)
    b1 = jnp.pad(b1, ((0, 0), (0, MID_PAD - MID)))
    w2 = jnp.pad(w2, ((0, MID_PAD - MID), (0, F_PAD - F_BINS))).astype(jnp.bfloat16)
    b2 = jnp.pad(b2, ((0, 0), (0, F_PAD - F_BINS)))

    return dict(enc_fb=enc_fb, dec_re=dec_re, dec_im=dec_im, lstm=lstm,
                w1=w1, b1=b1, w2=w2, b2=b2)


# ----------------------------------- main ------------------------------------

if __name__ == "__main__":
    key = jax.random.PRNGKey(0)
    k_x, k_p = jax.random.split(key)

    # 8 STFT frames: signal length = (T-1)*HOP + WIN = 2304
    x = jax.random.normal(k_x, (2, 2304), jnp.float32)
    params = init_params(k_p)

    fwd = jax.jit(generator_forward)
    y = fwd(x, params)
    jax.block_until_ready(y)

    assert y.shape == x.shape, (y.shape, x.shape)
    assert bool(jnp.all(jnp.isfinite(y)))
    print("KERNEL_OK")
</pallas_src>

<mosaic_0001>
module attributes {stable_mosaic.version = 11 : i64} {
  func.func private @main(%arg0: i32) attributes {dimension_semantics = [#tpu.dimension_semantics<core_parallel>], iteration_bounds = array<i64: 2>, tpu.core_type = #tpu.core_type<sc_scalar_subcore>, window_params = []} {
    return
  }
}

module attributes {stable_mosaic.version = 11 : i64} {
  func.func private @main(%arg0: i32) attributes {dimension_semantics = [#tpu.dimension_semantics<core_parallel>], iteration_bounds = array<i64: 2>, tpu.core_type = #tpu.core_type<sc_scalar_subcore>, window_params = []} {
    return
  }
}

module attributes {stable_mosaic.version = 11 : i64} {
  func.func @_encoder_kernel(%arg0: i32, %arg1: memref<16x512xf32, #tpu.memory_space<vmem>>, %arg2: memref<512x768xbf16, #tpu.memory_space<vmem>>, %arg3: memref<16x768xf32, #tpu.memory_space<vmem>>, %arg4: memref<16x384xf32, #tpu.memory_space<vmem>>) attributes {dimension_semantics = [#tpu.dimension_semantics<parallel>], iteration_bounds = array<i64: 1>, scalar_prefetch = 0 : i64, scratch_operands = 0 : i64, tpu.core_type = #tpu.core_type<tc>, window_params = [{transform_indices = @transform_0, window_bounds = array<i64: 16, 512>}, {pipeline_mode = #tpu.pipeline_mode<synchronous>, transform_indices = @transform_1, window_bounds = array<i64: 512, 768>}, {transform_indices = @transform_2, window_bounds = array<i64: 16, 768>}, {transform_indices = @transform_3, window_bounds = array<i64: 16, 384>}]} {
    %c0 = arith.constant 0 : index
    %c0_0 = arith.constant 0 : index
    %0 = vector.load %arg1[%c0, %c0_0] : memref<16x512xf32, #tpu.memory_space<vmem>>, vector<16x512xf32>
    %1 = arith.truncf %0 : vector<16x512xf32> to vector<16x512xbf16>
    %c0_1 = arith.constant 0 : index
    %c0_2 = arith.constant 0 : index
    %2 = vector.load %arg2[%c0_1, %c0_2] : memref<512x768xbf16, #tpu.memory_space<vmem>>, vector<512x768xbf16>
    %cst = arith.constant dense<0.000000e+00> : vector<16x768xf32>
    %3 = tpu.matmul %1, %2, %cst {dimension_numbers = #tpu.dot_dimension_numbers<[1], [0], [0], [1], [0, 0, 1, 1], [], []>} : vector<16x512xbf16>, vector<512x768xbf16>, vector<16x768xf32> -> vector<16x768xf32>
    %c0_3 = arith.constant 0 : index
    %c0_4 = arith.constant 0 : index
    %4 = vector.load %arg3[%c0_3, %c0_4] : memref<16x768xf32, #tpu.memory_space<vmem>>, vector<16x768xf32>
    tpu.vector_store %arg3[%c0_3, %c0_4], %3 {strides = array<i32>} : memref<16x768xf32, #tpu.memory_space<vmem>>, vector<16x768xf32>,
    %5 = vector.extract_strided_slice %3 {offsets = [0, 0], sizes = [16, 384], strides = [1, 1]} : vector<16x768xf32> to vector<16x384xf32>
    %6 = vector.extract_strided_slice %3 {offsets = [0, 384], sizes = [16, 384], strides = [1, 1]} : vector<16x768xf32> to vector<16x384xf32>
    %7 = arith.mulf %5, %5 : vector<16x384xf32>
    %8 = arith.mulf %6, %6 : vector<16x384xf32>
    %9 = arith.addf %7, %8 : vector<16x384xf32>
    %cst_5 = arith.constant 9.99999993E-9 : f32
    %10 = vector.broadcast %cst_5 : f32 to vector<16x384xf32>
    %11 = arith.addf %9, %10 : vector<16x384xf32>
    %12 = math.sqrt %11 : vector<16x384xf32>
    %c0_6 = arith.constant 0 : index
    %c0_7 = arith.constant 0 : index
    %13 = vector.load %arg4[%c0_6, %c0_7] : memref<16x384xf32, #tpu.memory_space<vmem>>, vector<16x384xf32>
    tpu.vector_store %arg4[%c0_6, %c0_7], %12 {strides = array<i32>} : memref<16x384xf32, #tpu.memory_space<vmem>>, vector<16x384xf32>,
    return
  }
  func.func @transform_0(%arg0: i32) -> (i32, i32) {
    %c0_i32 = arith.constant 0 : i32
    %c0_i32_0 = arith.constant 0 : i32
    return %arg0, %c0_i32 : i32, i32
  }
  func.func @transform_1(%arg0: i32) -> (i32, i32) {
    %c0_i32 = arith.constant 0 : i32
    %c0_i32_0 = arith.constant 0 : i32
    %c0_i32_1 = arith.constant 0 : i32
    return %c0_i32, %c0_i32_0 : i32, i32
  }
  func.func @transform_2(%arg0: i32) -> (i32, i32) {
    %c0_i32 = arith.constant 0 : i32
    %c0_i32_0 = arith.constant 0 : i32
    return %arg0, %c0_i32 : i32, i32
  }
  func.func @transform_3(%arg0: i32) -> (i32, i32) {
    %c0_i32 = arith.constant 0 : i32
    %c0_i32_0 = arith.constant 0 : i32
    return %arg0, %c0_i32 : i32, i32
  }
}

module attributes {stable_mosaic.version = 11 : i64} {
  func.func @_bilstm_kernel(%arg0: i32, %arg1: memref<8x2x512xf32, #tpu.memory_space<vmem>>, %arg2: memref<1x512x1024xbf16, #tpu.memory_space<vmem>>, %arg3: memref<1x256x1024xf32, #tpu.memory_space<vmem>>, %arg4: memref<1x1x1024xf32, #tpu.memory_space<vmem>>, %arg5: memref<8x2x256xf32, #tpu.memory_space<vmem>>, %arg6: memref<8x2x1024xf32, #tpu.memory_space<vmem>>) attributes {dimension_semantics = [#tpu.dimension_semantics<parallel>], iteration_bounds = array<i64: 2>, scalar_prefetch = 0 : i64, scratch_operands = 1 : i64, tpu.core_type = #tpu.core_type<tc>, window_params = [{pipeline_mode = #tpu.pipeline_mode<synchronous>, transform_indices = @transform_0, window_bounds = array<i64: 8, 2, 512>}, {transform_indices = @transform_1, window_bounds = array<i64: 1, 512, 1024>}, {transform_indices = @transform_2, window_bounds = array<i64: 1, 256, 1024>}, {transform_indices = @transform_3, window_bounds = array<i64: 1, 1, 1024>}, {transform_indices = @transform_4, window_bounds = array<i64: 8, 2, 256>}]} {
    %c0 = arith.constant 0 : index
    %c0_0 = arith.constant 0 : index
    %c0_1 = arith.constant 0 : index
    %0 = vector.load %arg1[%c0, %c0_0, %c0_1] : memref<8x2x512xf32, #tpu.memory_space<vmem>>, vector<8x2x512xf32>
    %1 = arith.truncf %0 : vector<8x2x512xf32> to vector<8x2x512xbf16>
    %c0_2 = arith.constant 0 : index
    %c0_3 = arith.constant 0 : index
    %c0_4 = arith.constant 0 : index
    %2 = vector.load %arg2[%c0_2, %c0_3, %c0_4] : memref<1x512x1024xbf16, #tpu.memory_space<vmem>>, vector<1x512x1024xbf16>
    %3 = vector.shape_cast %2 : vector<1x512x1024xbf16> to vector<512x1024xbf16>
    %cst = arith.constant dense<0.000000e+00> : vector<8x2x1024xf32>
    %4 = tpu.matmul %1, %3, %cst {dimension_numbers = #tpu.dot_dimension_numbers<[2], [0], [0, 1], [1], [0, 0, 0, 1, 1, 1], [], []>} : vector<8x2x512xbf16>, vector<512x1024xbf16>, vector<8x2x1024xf32> -> vector<8x2x1024xf32>
    %c0_5 = arith.constant 0 : index
    %c0_6 = arith.constant 0 : index
    %c0_7 = arith.constant 0 : index
    %5 = vector.load %arg4[%c0_5, %c0_6, %c0_7] : memref<1x1x1024xf32, #tpu.memory_space<vmem>>, vector<1x1x1024xf32>
    %6 = vector.shape_cast %5 : vector<1x1x1024xf32> to vector<1x1024xf32>
    %7 = vector.shape_cast %6 : vector<1x1024xf32> to vector<1x1x1024xf32>
    %8 = vector.broadcast %7 : vector<1x1x1024xf32> to vector<8x2x1024xf32>
    %9 = arith.addf %4, %8 : vector<8x2x1024xf32>
    %c0_8 = arith.constant 0 : index
    %c0_9 = arith.constant 0 : index
    %c0_10 = arith.constant 0 : index
    %10 = vector.load %arg6[%c0_8, %c0_9, %c0_10] : memref<8x2x1024xf32, #tpu.memory_space<vmem>>, vector<8x2x1024xf32>
    tpu.vector_store %arg6[%c0_8, %c0_9, %c0_10], %9 {strides = array<i32>} : memref<8x2x1024xf32, #tpu.memory_space<vmem>>, vector<8x2x1024xf32>,
    %c0_11 = arith.constant 0 : index
    %c0_12 = arith.constant 0 : index
    %c0_13 = arith.constant 0 : index
    %11 = vector.load %arg3[%c0_11, %c0_12, %c0_13] : memref<1x256x1024xf32, #tpu.memory_space<vmem>>, vector<1x256x1024xf32>
    %12 = vector.shape_cast %11 : vector<1x256x1024xf32> to vector<256x1024xf32>
    %cst_14 = arith.constant 0.000000e+00 : f32
    %13 = vector.broadcast %cst_14 : f32 to vector<2x256xf32>
    %c0_i32 = arith.constant 0 : i32
    %c8_i32 = arith.constant 8 : i32
    %14 = arith.addi %c0_i32, %c8_i32 : i32
    %c1_i32 = arith.constant 1 : i32
    %15:2 = scf.for %arg7 = %c0_i32 to %14 step %c1_i32 iter_args(%arg8 = %13, %arg9 = %13) -> (vector<2x256xf32>, vector<2x256xf32>)  : i32 {
      %c0_i32_16 = arith.constant 0 : i32
      %16 = arith.cmpi eq, %arg0, %c0_i32_16 : i32
      %c7_i32 = arith.constant 7 : i32
      %17 = arith.subi %c7_i32, %arg7 : i32
      %18 = arith.select %16, %arg7, %17 : i32
      %19 = arith.index_cast %18 : i32 to index
      %c0_17 = arith.constant 0 : index
      %c0_18 = arith.constant 0 : index
      %20 = vector.load %arg6[%19, %c0_17, %c0_18] : memref<8x2x1024xf32, #tpu.memory_space<vmem>>, vector<1x2x1024xf32>
      %21 = vector.shape_cast %20 : vector<1x2x1024xf32> to vector<2x1024xf32>
      %cst_19 = arith.constant dense<0.000000e+00> : vector<2x1024xf32>
      %22 = tpu.matmul %arg8, %12, %cst_19 {dimension_numbers = #tpu.dot_dimension_numbers<[1], [0], [0], [1], [0, 0, 1, 1], [], []>} : vector<2x256xf32>, vector<256x1024xf32>, vector<2x1024xf32> -> vector<2x1024xf32>
      %23 = arith.addf %21, %22 : vector<2x1024xf32>
      %24 = vector.extract_strided_slice %23 {offsets = [0, 0], sizes = [2, 256], strides = [1, 1]} : vector<2x1024xf32> to vector<2x256xf32>
      %25 = arith.negf %24 : vector<2x256xf32>
      %26 = math.exp %25 : vector<2x256xf32>
      %cst_20 = arith.constant 1.000000e+00 : f32
      %27 = vector.broadcast %cst_20 : f32 to vector<2x256xf32>
      %28 = arith.addf %27, %26 : vector<2x256xf32>
      %29 = arith.divf %27, %28 : vector<2x256xf32>
      %30 = vector.extract_strided_slice %23 {offsets = [0, 256], sizes = [2, 256], strides = [1, 1]} : vector<2x1024xf32> to vector<2x256xf32>
      %31 = arith.negf %30 : vector<2x256xf32>
      %32 = math.exp %31 : vector<2x256xf32>
      %cst_21 = arith.constant 1.000000e+00 : f32
      %33 = vector.broadcast %cst_21 : f32 to vector<2x256xf32>
      %34 = arith.addf %33, %32 : vector<2x256xf32>
      %35 = arith.divf %33, %34 : vector<2x256xf32>
      %36 = vector.extract_strided_slice %23 {offsets = [0, 512], sizes = [2, 256], strides = [1, 1]} : vector<2x1024xf32> to vector<2x256xf32>
      %37 = math.tanh %36 : vector<2x256xf32>
      %38 = vector.extract_strided_slice %23 {offsets = [0, 768], sizes = [2, 256], strides = [1, 1]} : vector<2x1024xf32> to vector<2x256xf32>
      %39 = arith.negf %38 : vector<2x256xf32>
      %40 = math.exp %39 : vector<2x256xf32>
      %cst_22 = arith.constant 1.000000e+00 : f32
      %41 = vector.broadcast %cst_22 : f32 to vector<2x256xf32>
      %42 = arith.addf %41, %40 : vector<2x256xf32>
      %43 = arith.divf %41, %42 : vector<2x256xf32>
      %44 = arith.mulf %35, %arg9 : vector<2x256xf32>
      %45 = arith.mulf %29, %37 : vector<2x256xf32>
      %46 = arith.addf %44, %45 : vector<2x256xf32>
      %47 = math.tanh %46 : vector<2x256xf32>
      %48 = arith.mulf %43, %47 : vector<2x256xf32>
      %49 = arith.index_cast %18 : i32 to index
      %c0_23 = arith.constant 0 : index
      %c0_24 = arith.constant 0 : index
      %50 = vector.load %arg5[%49, %c0_23, %c0_24] : memref<8x2x256xf32, #tpu.memory_space<vmem>>, vector<1x2x256xf32>
      %51 = vector.shape_cast %50 : vector<1x2x256xf32> to vector<2x256xf32>
      %52 = vector.shape_cast %48 : vector<2x256xf32> to vector<1x2x256xf32>
      tpu.vector_store %arg5[%49, %c0_23, %c0_24], %52 {strides = array<i32>} : memref<8x2x256xf32, #tpu.memory_space<vmem>>, vector<1x2x256xf32>,
      scf.yield %48, %46 : vector<2x256xf32>, vector<2x256xf32>
    }
    %c8_i32_15 = arith.constant 8 : i32
    return
  }
  func.func @transform_0(%arg0: i32) -> (i32, i32, i32) {
    %c0_i32 = arith.constant 0 : i32
    %c0_i32_0 = arith.constant 0 : i32
    %c0_i32_1 = arith.constant 0 : i32
    %c0_i32_2 = arith.constant 0 : i32
    return %c0_i32, %c0_i32_0, %c0_i32_1 : i32, i32, i32
  }
  func.func @transform_1(%arg0: i32) -> (i32, i32, i32) {
    %c0_i32 = arith.constant 0 : i32
    %c0_i32_0 = arith.constant 0 : i32
    %c0_i32_1 = arith.constant 0 : i32
    return %arg0, %c0_i32, %c0_i32_0 : i32, i32, i32
  }
  func.func @transform_2(%arg0: i32) -> (i32, i32, i32) {
    %c0_i32 = arith.constant 0 : i32
    %c0_i32_0 = arith.constant 0 : i32
    %c0_i32_1 = arith.constant 0 : i32
    return %arg0, %c0_i32, %c0_i32_0 : i32, i32, i32
  }
  func.func @transform_3(%arg0: i32) -> (i32, i32, i32) {
    %c0_i32 = arith.constant 0 : i32
    %c0_i32_0 = arith.constant 0 : i32
    %c0_i32_1 = arith.constant 0 : i32
    return %arg0, %c0_i32, %c0_i32_0 : i32, i32, i32
  }
  func.func @transform_4(%arg0: i32) -> (i32, i32, i32) {
    %c0_i32 = arith.constant 0 : i32
    %c0_i32_0 = arith.constant 0 : i32
    %c0_i32_1 = arith.constant 0 : i32
    return %c0_i32, %c0_i32_0, %arg0 : i32, i32, i32
  }
}

module attributes {stable_mosaic.version = 11 : i64} {
  func.func @_bilstm_kernel(%arg0: i32, %arg1: memref<8x2x384xf32, #tpu.memory_space<vmem>>, %arg2: memref<1x384x1024xbf16, #tpu.memory_space<vmem>>, %arg3: memref<1x256x1024xf32, #tpu.memory_space<vmem>>, %arg4: memref<1x1x1024xf32, #tpu.memory_space<vmem>>, %arg5: memref<8x2x256xf32, #tpu.memory_space<vmem>>, %arg6: memref<8x2x1024xf32, #tpu.memory_space<vmem>>) attributes {dimension_semantics = [#tpu.dimension_semantics<parallel>], iteration_bounds = array<i64: 2>, scalar_prefetch = 0 : i64, scratch_operands = 1 : i64, tpu.core_type = #tpu.core_type<tc>, window_params = [{pipeline_mode = #tpu.pipeline_mode<synchronous>, transform_indices = @transform_0, window_bounds = array<i64: 8, 2, 384>}, {transform_indices = @transform_1, window_bounds = array<i64: 1, 384, 1024>}, {transform_indices = @transform_2, window_bounds = array<i64: 1, 256, 1024>}, {transform_indices = @transform_3, window_bounds = array<i64: 1, 1, 1024>}, {transform_indices = @transform_4, window_bounds = array<i64: 8, 2, 256>}]} {
    %c0 = arith.constant 0 : index
    %c0_0 = arith.constant 0 : index
    %c0_1 = arith.constant 0 : index
    %0 = vector.load %arg1[%c0, %c0_0, %c0_1] : memref<8x2x384xf32, #tpu.memory_space<vmem>>, vector<8x2x384xf32>
    %1 = arith.truncf %0 : vector<8x2x384xf32> to vector<8x2x384xbf16>
    %c0_2 = arith.constant 0 : index
    %c0_3 = arith.constant 0 : index
    %c0_4 = arith.constant 0 : index
    %2 = vector.load %arg2[%c0_2, %c0_3, %c0_4] : memref<1x384x1024xbf16, #tpu.memory_space<vmem>>, vector<1x384x1024xbf16>
    %3 = vector.shape_cast %2 : vector<1x384x1024xbf16> to vector<384x1024xbf16>
    %cst = arith.constant dense<0.000000e+00> : vector<8x2x1024xf32>
    %4 = tpu.matmul %1, %3, %cst {dimension_numbers = #tpu.dot_dimension_numbers<[2], [0], [0, 1], [1], [0, 0, 0, 1, 1, 1], [], []>} : vector<8x2x384xbf16>, vector<384x1024xbf16>, vector<8x2x1024xf32> -> vector<8x2x1024xf32>
    %c0_5 = arith.constant 0 : index
    %c0_6 = arith.constant 0 : index
    %c0_7 = arith.constant 0 : index
    %5 = vector.load %arg4[%c0_5, %c0_6, %c0_7] : memref<1x1x1024xf32, #tpu.memory_space<vmem>>, vector<1x1x1024xf32>
    %6 = vector.shape_cast %5 : vector<1x1x1024xf32> to vector<1x1024xf32>
    %7 = vector.shape_cast %6 : vector<1x1024xf32> to vector<1x1x1024xf32>
    %8 = vector.broadcast %7 : vector<1x1x1024xf32> to vector<8x2x1024xf32>
    %9 = arith.addf %4, %8 : vector<8x2x1024xf32>
    %c0_8 = arith.constant 0 : index
    %c0_9 = arith.constant 0 : index
    %c0_10 = arith.constant 0 : index
    %10 = vector.load %arg6[%c0_8, %c0_9, %c0_10] : memref<8x2x1024xf32, #tpu.memory_space<vmem>>, vector<8x2x1024xf32>
    tpu.vector_store %arg6[%c0_8, %c0_9, %c0_10], %9 {strides = array<i32>} : memref<8x2x1024xf32, #tpu.memory_space<vmem>>, vector<8x2x1024xf32>,
    %c0_11 = arith.constant 0 : index
    %c0_12 = arith.constant 0 : index
    %c0_13 = arith.constant 0 : index
    %11 = vector.load %arg3[%c0_11, %c0_12, %c0_13] : memref<1x256x1024xf32, #tpu.memory_space<vmem>>, vector<1x256x1024xf32>
    %12 = vector.shape_cast %11 : vector<1x256x1024xf32> to vector<256x1024xf32>
    %cst_14 = arith.constant 0.000000e+00 : f32
    %13 = vector.broadcast %cst_14 : f32 to vector<2x256xf32>
    %c0_i32 = arith.constant 0 : i32
    %c8_i32 = arith.constant 8 : i32
    %14 = arith.addi %c0_i32, %c8_i32 : i32
    %c1_i32 = arith.constant 1 : i32
    %15:2 = scf.for %arg7 = %c0_i32 to %14 step %c1_i32 iter_args(%arg8 = %13, %arg9 = %13) -> (vector<2x256xf32>, vector<2x256xf32>)  : i32 {
      %c0_i32_16 = arith.constant 0 : i32
      %16 = arith.cmpi eq, %arg0, %c0_i32_16 : i32
      %c7_i32 = arith.constant 7 : i32
      %17 = arith.subi %c7_i32, %arg7 : i32
      %18 = arith.select %16, %arg7, %17 : i32
      %19 = arith.index_cast %18 : i32 to index
      %c0_17 = arith.constant 0 : index
      %c0_18 = arith.constant 0 : index
      %20 = vector.load %arg6[%19, %c0_17, %c0_18] : memref<8x2x1024xf32, #tpu.memory_space<vmem>>, vector<1x2x1024xf32>
      %21 = vector.shape_cast %20 : vector<1x2x1024xf32> to vector<2x1024xf32>
      %cst_19 = arith.constant dense<0.000000e+00> : vector<2x1024xf32>
      %22 = tpu.matmul %arg8, %12, %cst_19 {dimension_numbers = #tpu.dot_dimension_numbers<[1], [0], [0], [1], [0, 0, 1, 1], [], []>} : vector<2x256xf32>, vector<256x1024xf32>, vector<2x1024xf32> -> vector<2x1024xf32>
      %23 = arith.addf %21, %22 : vector<2x1024xf32>
      %24 = vector.extract_strided_slice %23 {offsets = [0, 0], sizes = [2, 256], strides = [1, 1]} : vector<2x1024xf32> to vector<2x256xf32>
      %25 = arith.negf %24 : vector<2x256xf32>
      %26 = math.exp %25 : vector<2x256xf32>
      %cst_20 = arith.constant 1.000000e+00 : f32
      %27 = vector.broadcast %cst_20 : f32 to vector<2x256xf32>
      %28 = arith.addf %27, %26 : vector<2x256xf32>
      %29 = arith.divf %27, %28 : vector<2x256xf32>
      %30 = vector.extract_strided_slice %23 {offsets = [0, 256], sizes = [2, 256], strides = [1, 1]} : vector<2x1024xf32> to vector<2x256xf32>
      %31 = arith.negf %30 : vector<2x256xf32>
      %32 = math.exp %31 : vector<2x256xf32>
      %cst_21 = arith.constant 1.000000e+00 : f32
      %33 = vector.broadcast %cst_21 : f32 to vector<2x256xf32>
      %34 = arith.addf %33, %32 : vector<2x256xf32>
      %35 = arith.divf %33, %34 : vector<2x256xf32>
      %36 = vector.extract_strided_slice %23 {offsets = [0, 512], sizes = [2, 256], strides = [1, 1]} : vector<2x1024xf32> to vector<2x256xf32>
      %37 = math.tanh %36 : vector<2x256xf32>
      %38 = vector.extract_strided_slice %23 {offsets = [0, 768], sizes = [2, 256], strides = [1, 1]} : vector<2x1024xf32> to vector<2x256xf32>
      %39 = arith.negf %38 : vector<2x256xf32>
      %40 = math.exp %39 : vector<2x256xf32>
      %cst_22 = arith.constant 1.000000e+00 : f32
      %41 = vector.broadcast %cst_22 : f32 to vector<2x256xf32>
      %42 = arith.addf %41, %40 : vector<2x256xf32>
      %43 = arith.divf %41, %42 : vector<2x256xf32>
      %44 = arith.mulf %35, %arg9 : vector<2x256xf32>
      %45 = arith.mulf %29, %37 : vector<2x256xf32>
      %46 = arith.addf %44, %45 : vector<2x256xf32>
      %47 = math.tanh %46 : vector<2x256xf32>
      %48 = arith.mulf %43, %47 : vector<2x256xf32>
      %49 = arith.index_cast %18 : i32 to index
      %c0_23 = arith.constant 0 : index
      %c0_24 = arith.constant 0 : index
      %50 = vector.load %arg5[%49, %c0_23, %c0_24] : memref<8x2x256xf32, #tpu.memory_space<vmem>>, vector<1x2x256xf32>
      %51 = vector.shape_cast %50 : vector<1x2x256xf32> to vector<2x256xf32>
      %52 = vector.shape_cast %48 : vector<2x256xf32> to vector<1x2x256xf32>
      tpu.vector_store %arg5[%49, %c0_23, %c0_24], %52 {strides = array<i32>} : memref<8x2x256xf32, #tpu.memory_space<vmem>>, vector<1x2x256xf32>,
      scf.yield %48, %46 : vector<2x256xf32>, vector<2x256xf32>
    }
    %c8_i32_15 = arith.constant 8 : i32
    return
  }
  func.func @transform_0(%arg0: i32) -> (i32, i32, i32) {
    %c0_i32 = arith.constant 0 : i32
    %c0_i32_0 = arith.constant 0 : i32
    %c0_i32_1 = arith.constant 0 : i32
    %c0_i32_2 = arith.constant 0 : i32
    return %c0_i32, %c0_i32_0, %c0_i32_1 : i32, i32, i32
  }
  func.func @transform_1(%arg0: i32) -> (i32, i32, i32) {
    %c0_i32 = arith.constant 0 : i32
    %c0_i32_0 = arith.constant 0 : i32
    %c0_i32_1 = arith.constant 0 : i32
    return %arg0, %c0_i32, %c0_i32_0 : i32, i32, i32
  }
  func.func @transform_2(%arg0: i32) -> (i32, i32, i32) {
    %c0_i32 = arith.constant 0 : i32
    %c0_i32_0 = arith.constant 0 : i32
    %c0_i32_1 = arith.constant 0 : i32
    return %arg0, %c0_i32, %c0_i32_0 : i32, i32, i32
  }
  func.func @transform_3(%arg0: i32) -> (i32, i32, i32) {
    %c0_i32 = arith.constant 0 : i32
    %c0_i32_0 = arith.constant 0 : i32
    %c0_i32_1 = arith.constant 0 : i32
    return %arg0, %c0_i32, %c0_i32_0 : i32, i32, i32
  }
  func.func @transform_4(%arg0: i32) -> (i32, i32, i32) {
    %c0_i32 = arith.constant 0 : i32
    %c0_i32_0 = arith.constant 0 : i32
    %c0_i32_1 = arith.constant 0 : i32
    return %c0_i32, %c0_i32_0, %arg0 : i32, i32, i32
  }
}

module attributes {stable_mosaic.version = 11 : i64} {
  func.func @_mask_decode_kernel(%arg0: i32, %arg1: memref<16x512xf32, #tpu.memory_space<vmem>>, %arg2: memref<16x768xf32, #tpu.memory_space<vmem>>, %arg3: memref<512x384xbf16, #tpu.memory_space<vmem>>, %arg4: memref<1x384xf32, #tpu.memory_space<vmem>>, %arg5: memref<384x384xbf16, #tpu.memory_space<vmem>>, %arg6: memref<1x384xf32, #tpu.memory_space<vmem>>, %arg7: memref<384x512xbf16, #tpu.memory_space<vmem>>, %arg8: memref<384x512xbf16, #tpu.memory_space<vmem>>, %arg9: memref<16x512xf32, #tpu.memory_space<vmem>>) attributes {dimension_semantics = [#tpu.dimension_semantics<parallel>], iteration_bounds = array<i64: 1>, scalar_prefetch = 0 : i64, scratch_operands = 0 : i64, tpu.core_type = #tpu.core_type<tc>, window_params = [{transform_indices = @transform_0, window_bounds = array<i64: 16, 512>}, {transform_indices = @transform_1, window_bounds = array<i64: 16, 768>}, {pipeline_mode = #tpu.pipeline_mode<synchronous>, transform_indices = @transform_2, window_bounds = array<i64: 512, 384>}, {pipeline_mode = #tpu.pipeline_mode<synchronous>, transform_indices = @transform_3, window_bounds = array<i64: 1, 384>}, {pipeline_mode = #tpu.pipeline_mode<synchronous>, transform_indices = @transform_4, window_bounds = array<i64: 384, 384>}, {pipeline_mode = #tpu.pipeline_mode<synchronous>, transform_indices = @transform_5, window_bounds = array<i64: 1, 384>}, {pipeline_mode = #tpu.pipeline_mode<synchronous>, transform_indices = @transform_6, window_bounds = array<i64: 384, 512>}, {pipeline_mode = #tpu.pipeline_mode<synchronous>, transform_indices = @transform_7, window_bounds = array<i64: 384, 512>}, {transform_indices = @transform_8, window_bounds = array<i64: 16, 512>}]} {
    %c0 = arith.constant 0 : index
    %c0_0 = arith.constant 0 : index
    %0 = vector.load %arg1[%c0, %c0_0] : memref<16x512xf32, #tpu.memory_space<vmem>>, vector<16x512xf32>
    %1 = arith.truncf %0 : vector<16x512xf32> to vector<16x512xbf16>
    %c0_1 = arith.constant 0 : index
    %c0_2 = arith.constant 0 : index
    %2 = vector.load %arg3[%c0_1, %c0_2] : memref<512x384xbf16, #tpu.memory_space<vmem>>, vector<512x384xbf16>
    %cst = arith.constant dense<0.000000e+00> : vector<16x384xf32>
    %3 = tpu.matmul %1, %2, %cst {dimension_numbers = #tpu.dot_dimension_numbers<[1], [0], [0], [1], [0, 0, 1, 1], [], []>} : vector<16x512xbf16>, vector<512x384xbf16>, vector<16x384xf32> -> vector<16x384xf32>
    %c0_3 = arith.constant 0 : index
    %c0_4 = arith.constant 0 : index
    %4 = vector.load %arg4[%c0_3, %c0_4] : memref<1x384xf32, #tpu.memory_space<vmem>>, vector<1x384xf32>
    %5 = vector.broadcast %4 : vector<1x384xf32> to vector<16x384xf32>
    %6 = arith.addf %3, %5 : vector<16x384xf32>
    %cst_5 = arith.constant 0.000000e+00 : f32
    %7 = vector.broadcast %cst_5 : f32 to vector<16x384xf32>
    %8 = arith.cmpf oge, %6, %7 : vector<16x384xf32>
    %cst_6 = arith.constant 3.000000e-01 : f32
    %9 = vector.broadcast %cst_6 : f32 to vector<16x384xf32>
    %10 = arith.mulf %9, %6 : vector<16x384xf32>
    %11 = arith.select %8, %6, %10 : vector<16x384xi1>, vector<16x384xf32>
    %12 = arith.truncf %11 : vector<16x384xf32> to vector<16x384xbf16>
    %c0_7 = arith.constant 0 : index
    %c0_8 = arith.constant 0 : index
    %13 = vector.load %arg5[%c0_7, %c0_8] : memref<384x384xbf16, #tpu.memory_space<vmem>>, vector<384x384xbf16>
    %cst_9 = arith.constant dense<0.000000e+00> : vector<16x384xf32>
    %14 = tpu.matmul %12, %13, %cst_9 {dimension_numbers = #tpu.dot_dimension_numbers<[1], [0], [0], [1], [0, 0, 1, 1], [], []>} : vector<16x384xbf16>, vector<384x384xbf16>, vector<16x384xf32> -> vector<16x384xf32>
    %c0_10 = arith.constant 0 : index
    %c0_11 = arith.constant 0 : index
    %15 = vector.load %arg6[%c0_10, %c0_11] : memref<1x384xf32, #tpu.memory_space<vmem>>, vector<1x384xf32>
    %16 = vector.broadcast %15 : vector<1x384xf32> to vector<16x384xf32>
    %17 = arith.addf %14, %16 : vector<16x384xf32>
    %18 = arith.negf %17 : vector<16x384xf32>
    %19 = math.exp %18 : vector<16x384xf32>
    %cst_12 = arith.constant 1.000000e+00 : f32
    %20 = vector.broadcast %cst_12 : f32 to vector<16x384xf32>
    %21 = arith.addf %20, %19 : vector<16x384xf32>
    %22 = arith.divf %20, %21 : vector<16x384xf32>
    %c0_13 = arith.constant 0 : index
    %c0_14 = arith.constant 0 : index
    %23 = vector.load %arg2[%c0_13, %c0_14] : memref<16x768xf32, #tpu.memory_space<vmem>>, vector<16x768xf32>
    %24 = vector.extract_strided_slice %23 {offsets = [0, 0], sizes = [16, 384], strides = [1, 1]} : vector<16x768xf32> to vector<16x384xf32>
    %25 = arith.mulf %24, %22 : vector<16x384xf32>
    %26 = arith.truncf %25 : vector<16x384xf32> to vector<16x384xbf16>
    %27 = vector.extract_strided_slice %23 {offsets = [0, 384], sizes = [16, 384], strides = [1, 1]} : vector<16x768xf32> to vector<16x384xf32>
    %28 = arith.mulf %27, %22 : vector<16x384xf32>
    %29 = arith.truncf %28 : vector<16x384xf32> to vector<16x384xbf16>
    %c0_15 = arith.constant 0 : index
    %c0_16 = arith.constant 0 : index
    %30 = vector.load %arg7[%c0_15, %c0_16] : memref<384x512xbf16, #tpu.memory_space<vmem>>, vector<384x512xbf16>
    %cst_17 = arith.constant dense<0.000000e+00> : vector<16x512xf32>
    %31 = tpu.matmul %26, %30, %cst_17 {dimension_numbers = #tpu.dot_dimension_numbers<[1], [0], [0], [1], [0, 0, 1, 1], [], []>} : vector<16x384xbf16>, vector<384x512xbf16>, vector<16x512xf32> -> vector<16x512xf32>
    %c0_18 = arith.constant 0 : index
    %c0_19 = arith.constant 0 : index
    %32 = vector.load %arg8[%c0_18, %c0_19] : memref<384x512xbf16, #tpu.memory_space<vmem>>, vector<384x512xbf16>
    %cst_20 = arith.constant dense<0.000000e+00> : vector<16x512xf32>
    %33 = tpu.matmul %29, %32, %cst_20 {dimension_numbers = #tpu.dot_dimension_numbers<[1], [0], [0], [1], [0, 0, 1, 1], [], []>} : vector<16x384xbf16>, vector<384x512xbf16>, vector<16x512xf32> -> vector<16x512xf32>
    %34 = arith.addf %31, %33 : vector<16x512xf32>
    %c0_21 = arith.constant 0 : index
    %c0_22 = arith.constant 0 : index
    %35 = vector.load %arg9[%c0_21, %c0_22] : memref<16x512xf32, #tpu.memory_space<vmem>>, vector<16x512xf32>
    tpu.vector_store %arg9[%c0_21, %c0_22], %34 {strides = array<i32>} : memref<16x512xf32, #tpu.memory_space<vmem>>, vector<16x512xf32>,
    return
  }
  func.func @transform_0(%arg0: i32) -> (i32, i32) {
    %c0_i32 = arith.constant 0 : i32
    %c0_i32_0 = arith.constant 0 : i32
    return %arg0, %c0_i32 : i32, i32
  }
  func.func @transform_1(%arg0: i32) -> (i32, i32) {
    %c0_i32 = arith.constant 0 : i32
    %c0_i32_0 = arith.constant 0 : i32
    return %arg0, %c0_i32 : i32, i32
  }
  func.func @transform_2(%arg0: i32) -> (i32, i32) {
    %c0_i32 = arith.constant 0 : i32
    %c0_i32_0 = arith.constant 0 : i32
    %c0_i32_1 = arith.constant 0 : i32
    return %c0_i32, %c0_i32_0 : i32, i32
  }
  func.func @transform_3(%arg0: i32) -> (i32, i32) {
    %c0_i32 = arith.constant 0 : i32
    %c0_i32_0 = arith.constant 0 : i32
    %c0_i32_1 = arith.constant 0 : i32
    return %c0_i32, %c0_i32_0 : i32, i32
  }
  func.func @transform_4(%arg0: i32) -> (i32, i32) {
    %c0_i32 = arith.constant 0 : i32
    %c0_i32_0 = arith.constant 0 : i32
    %c0_i32_1 = arith.constant 0 : i32
    return %c0_i32, %c0_i32_0 : i32, i32
  }
  func.func @transform_5(%arg0: i32) -> (i32, i32) {
    %c0_i32 = arith.constant 0 : i32
    %c0_i32_0 = arith.constant 0 : i32
    %c0_i32_1 = arith.constant 0 : i32
    return %c0_i32, %c0_i32_0 : i32, i32
  }
  func.func @transform_6(%arg0: i32) -> (i32, i32) {
    %c0_i32 = arith.constant 0 : i32
    %c0_i32_0 = arith.constant 0 : i32
    %c0_i32_1 = arith.constant 0 : i32
    return %c0_i32, %c0_i32_0 : i32, i32
  }
  func.func @transform_7(%arg0: i32) -> (i32, i32) {
    %c0_i32 = arith.constant 0 : i32
    %c0_i32_0 = arith.constant 0 : i32
    %c0_i32_1 = arith.constant 0 : i32
    return %c0_i32, %c0_i32_0 : i32, i32
  }
  func.func @transform_8(%arg0: i32) -> (i32, i32) {
    %c0_i32 = arith.constant 0 : i32
    %c0_i32_0 = arith.constant 0 : i32
    return %arg0, %c0_i32 : i32, i32
  }
}

</mosaic_0001>

<llo_original>
// kernel: generator_forward.4
$region0: #{generator_forward.4}
  #allocation0 [shape = 'u32[]', space=smem, size = 0x4, offset = 0x4, fixed_abs, tag = 'smem constant byte address 0x4 - core index']
  #allocation1 [shape = 'u32[144,128]{1,0:T(1,128)}', space=vmem, size = 0x12000, scoped, tag = 'internal scratch']
  %s0 = inlined_call_operand.vmem [shape: f32[16,512], index: 0, kind: input, shape index: {}]
  %s1 = inlined_call_operand.vmem [shape: bf16[512,768], index: 1, kind: input, shape index: {}]
  %s2 = inlined_call_operand.vmem [shape: f32[16,768], index: 2, kind: output, shape index: {0}]
  %s3 = inlined_call_operand.vmem [shape: f32[16,384], index: 3, kind: output, shape index: {1}]
  %4 = xla_tuple %s2, %s3
  %s5 = sld [smem:[#allocation0]]
  $region26: #{generator_forward.4} parent=0
    _
  %s7 = ssub.s32 1, %s5
  %s8 = scalar_select 0, %s7, %s5
  // Predicated region
  $region2: #{generator_forward.4} parent=0 // pred_check
    _
  $region3: #{generator_forward.4} parent=0 // pred_check_branch
    %10 = sbr.rel (0) target = $region5
  $region4: #{generator_forward.4} parent=0 // pred_region
    _
  $region5: #{generator_forward.4} parent=0 // pred_fallthru
    _
  // Predicated region
  $region6: #{generator_forward.4} parent=0 // pred_check
    _
  $region7: #{generator_forward.4} parent=0 // pred_check_branch
    %12 = sbr.rel (0) target = $region9
  $region8: #{generator_forward.4} parent=0 // pred_region
    _
  $region9: #{generator_forward.4} parent=0 // pred_fallthru
    _
  %v13 = vld [vmem:[%s0] sm:$0xff]
  %v14 = vld [vmem:[%s0 + $0x8] sm:$0xff]
  %v15 = vld [vmem:[%s0 + $0x10] sm:$0xff]
  %v16 = vld [vmem:[%s0 + $0x18] sm:$0xff]
  %v17 = vld [vmem:[%s0 + $0x20] sm:$0xff]
  %v18 = vld [vmem:[%s0 + $0x28] sm:$0xff]
  %v19 = vld [vmem:[%s0 + $0x30] sm:$0xff]
  %v20 = vld [vmem:[%s0 + $0x38] sm:$0xff]
  %v21 = vpack.c.bf16 %v17, %v13
  %v22 = vpack.c.bf16 %v18, %v14
  %v23 = vpack.c.bf16 %v19, %v15
  %v24 = vpack.c.bf16 %v20, %v16
  %v25 = vld [vmem:[%s1] sm:$0xff]
  %v26 = vld [vmem:[%s1 + $0x8] sm:$0xff]
  %v27 = vld [vmem:[%s1 + $0x10] sm:$0xff]
  %v28 = vld [vmem:[%s1 + $0x18] sm:$0xff]
  %v29 = vld [vmem:[%s1 + $0x20] sm:$0xff]
  %v30 = vld [vmem:[%s1 + $0x28] sm:$0xff]
  %v31 = vld [vmem:[%s1 + $0x30] sm:$0xff]
  %v32 = vld [vmem:[%s1 + $0x38] sm:$0xff]
  %v33 = vld [vmem:[%s1 + $0x40] sm:$0xff]
  %v34 = vld [vmem:[%s1 + $0x48] sm:$0xff]
  %v35 = vld [vmem:[%s1 + $0x50] sm:$0xff]
  %v36 = vld [vmem:[%s1 + $0x58] sm:$0xff]
  %v37 = vld [vmem:[%s1 + $0x60] sm:$0xff]
  %v38 = vld [vmem:[%s1 + $0x68] sm:$0xff]
  %v39 = vld [vmem:[%s1 + $0x70] sm:$0xff]
  %v40 = vld [vmem:[%s1 + $0x78] sm:$0xff]
  %v41 = vld [vmem:[%s1 + $0x80] sm:$0xff]
  %v42 = vld [vmem:[%s1 + $0x88] sm:$0xff]
  %v43 = vld [vmem:[%s1 + $0x90] sm:$0xff]
  %v44 = vld [vmem:[%s1 + $0x98] sm:$0xff]
  %v45 = vld [vmem:[%s1 + $0xa0] sm:$0xff]
  %v46 = vld [vmem:[%s1 + $0xa8] sm:$0xff]
  %v47 = vld [vmem:[%s1 + $0xb0] sm:$0xff]
  %v48 = vld [vmem:[%s1 + $0xb8] sm:$0xff]
  %v49 = vld [vmem:[%s1 + $0xc0] sm:$0xff]
  %v50 = vld [vmem:[%s1 + $0xc8] sm:$0xff]
  %v51 = vld [vmem:[%s1 + $0xd0] sm:$0xff]
  %v52 = vld [vmem:[%s1 + $0xd8] sm:$0xff]
  %v53 = vld [vmem:[%s1 + $0xe0] sm:$0xff]
  %v54 = vld [vmem:[%s1 + $0xe8] sm:$0xff]
  %v55 = vld [vmem:[%s1 + $0xf0] sm:$0xff]
  %v56 = vld [vmem:[%s1 + $0xf8] sm:$0xff]
  %v57 = vld [vmem:[%s1 + $0x100] sm:$0xff]
  %v58 = vld [vmem:[%s1 + $0x108] sm:$0xff]
  %v59 = vld [vmem:[%s1 + $0x110] sm:$0xff]
  %v60 = vld [vmem:[%s1 + $0x118] sm:$0xff]
  %v61 = vld [vmem:[%s1 + $0x120] sm:$0xff]
  %v62 = vld [vmem:[%s1 + $0x128] sm:$0xff]
  %v63 = vld [vmem:[%s1 + $0x130] sm:$0xff]
  %v64 = vld [vmem:[%s1 + $0x138] sm:$0xff]
  %v65 = vld [vmem:[%s1 + $0x140] sm:$0xff]
  %v66 = vld [vmem:[%s1 + $0x148] sm:$0xff]
  %v67 = vld [vmem:[%s1 + $0x150] sm:$0xff]
  %v68 = vld [vmem:[%s1 + $0x158] sm:$0xff]
  %v69 = vld [vmem:[%s1 + $0x160] sm:$0xff]
  %v70 = vld [vmem:[%s1 + $0x168] sm:$0xff]
  %v71 = vld [vmem:[%s1 + $0x170] sm:$0xff]
  %v72 = vld [vmem:[%s1 + $0x178] sm:$0xff]
  %v73 = vld [vmem:[%s1 + $0x180] sm:$0xff]
  %v74 = vld [vmem:[%s1 + $0x188] sm:$0xff]
  %v75 = vld [vmem:[%s1 + $0x190] sm:$0xff]
  %v76 = vld [vmem:[%s1 + $0x198] sm:$0xff]
  %v77 = vld [vmem:[%s1 + $0x1a0] sm:$0xff]
  %v78 = vld [vmem:[%s1 + $0x1a8] sm:$0xff]
  %v79 = vld [vmem:[%s1 + $0x1b0] sm:$0xff]
  %v80 = vld [vmem:[%s1 + $0x1b8] sm:$0xff]
  %v81 = vld [vmem:[%s1 + $0x1c0] sm:$0xff]
  %v82 = vld [vmem:[%s1 + $0x1c8] sm:$0xff]
  %v83 = vld [vmem:[%s1 + $0x1d0] sm:$0xff]
  %v84 = vld [vmem:[%s1 + $0x1d8] sm:$0xff]
  %v85 = vld [vmem:[%s1 + $0x1e0] sm:$0xff]
  %v86 = vld [vmem:[%s1 + $0x1e8] sm:$0xff]
  %v87 = vld [vmem:[%s1 + $0x1f0] sm:$0xff]
  %v88 = vld [vmem:[%s1 + $0x1f8] sm:$0xff]
  %v89 = vld [vmem:[%s1 + $0x200] sm:$0xff]
  %v90 = vld [vmem:[%s1 + $0x208] sm:$0xff]
  %v91 = vld [vmem:[%s1 + $0x210] sm:$0xff]
  %v92 = vld [vmem:[%s1 + $0x218] sm:$0xff]
  %v93 = vld [vmem:[%s1 + $0x220] sm:$0xff]
  %v94 = vld [vmem:[%s1 + $0x228] sm:$0xff]
  %v95 = vld [vmem:[%s1 + $0x230] sm:$0xff]
  %v96 = vld [vmem:[%s1 + $0x238] sm:$0xff]
  %v97 = vld [vmem:[%s1 + $0x240] sm:$0xff]
  %v98 = vld [vmem:[%s1 + $0x248] sm:$0xff]
  %v99 = vld [vmem:[%s1 + $0x250] sm:$0xff]
  %v100 = vld [vmem:[%s1 + $0x258] sm:$0xff]
  %v101 = vld [vmem:[%s1 + $0x260] sm:$0xff]
  %v102 = vld [vmem:[%s1 + $0x268] sm:$0xff]
  %v103 = vld [vmem:[%s1 + $0x270] sm:$0xff]
  %v104 = vld [vmem:[%s1 + $0x278] sm:$0xff]
  %v105 = vld [vmem:[%s1 + $0x280] sm:$0xff]
  %v106 = vld [vmem:[%s1 + $0x288] sm:$0xff]
  %v107 = vld [vmem:[%s1 + $0x290] sm:$0xff]
  %v108 = vld [vmem:[%s1 + $0x298] sm:$0xff]
  %v109 = vld [vmem:[%s1 + $0x2a0] sm:$0xff]
  %v110 = vld [vmem:[%s1 + $0x2a8] sm:$0xff]
  %v111 = vld [vmem:[%s1 + $0x2b0] sm:$0xff]
  %v112 = vld [vmem:[%s1 + $0x2b8] sm:$0xff]
  %v113 = vld [vmem:[%s1 + $0x2c0] sm:$0xff]
  %v114 = vld [vmem:[%s1 + $0x2c8] sm:$0xff]
  %v115 = vld [vmem:[%s1 + $0x2d0] sm:$0xff]
  %v116 = vld [vmem:[%s1 + $0x2d8] sm:$0xff]
  %v117 = vld [vmem:[%s1 + $0x2e0] sm:$0xff]
  %v118 = vld [vmem:[%s1 + $0x2e8] sm:$0xff]
  %v119 = vld [vmem:[%s1 + $0x2f0] sm:$0xff]
  %v120 = vld [vmem:[%s1 + $0x2f8] sm:$0xff]
  %v121 = vld [vmem:[%s1 + $0x300] sm:$0xff]
  %v122 = vld [vmem:[%s1 + $0x308] sm:$0xff]
  %v123 = vld [vmem:[%s1 + $0x310] sm:$0xff]
  %v124 = vld [vmem:[%s1 + $0x318] sm:$0xff]
  %v125 = vld [vmem:[%s1 + $0x320] sm:$0xff]
  %v126 = vld [vmem:[%s1 + $0x328] sm:$0xff]
  %v127 = vld [vmem:[%s1 + $0x330] sm:$0xff]
  %v128 = vld [vmem:[%s1 + $0x338] sm:$0xff]
  %v129 = vld [vmem:[%s1 + $0x340] sm:$0xff]
  %v130 = vld [vmem:[%s1 + $0x348] sm:$0xff]
  %v131 = vld [vmem:[%s1 + $0x350] sm:$0xff]
  %v132 = vld [vmem:[%s1 + $0x358] sm:$0xff]
  %v133 = vld [vmem:[%s1 + $0x360] sm:$0xff]
  %v134 = vld [vmem:[%s1 + $0x368] sm:$0xff]
  %v135 = vld [vmem:[%s1 + $0x370] sm:$0xff]
  %v136 = vld [vmem:[%s1 + $0x378] sm:$0xff]
  %v137 = vld [vmem:[%s1 + $0x380] sm:$0xff]
  %v138 = vld [vmem:[%s1 + $0x388] sm:$0xff]
  %v139 = vld [vmem:[%s1 + $0x390] sm:$0xff]
  %v140 = vld [vmem:[%s1 + $0x398] sm:$0xff]
  %v141 = vld [vmem:[%s1 + $0x3a0] sm:$0xff]
  %v142 = vld [vmem:[%s1 + $0x3a8] sm:$0xff]
  %v143 = vld [vmem:[%s1 + $0x3b0] sm:$0xff]
  %v144 = vld [vmem:[%s1 + $0x3b8] sm:$0xff]
  %v145 = vld [vmem:[%s1 + $0x3c0] sm:$0xff]
  %v146 = vld [vmem:[%s1 + $0x3c8] sm:$0xff]
  %v147 = vld [vmem:[%s1 + $0x3d0] sm:$0xff]
  %v148 = vld [vmem:[%s1 + $0x3d8] sm:$0xff]
  %v149 = vld [vmem:[%s1 + $0x3e0] sm:$0xff]
  %v150 = vld [vmem:[%s1 + $0x3e8] sm:$0xff]
  %v151 = vld [vmem:[%s1 + $0x3f0] sm:$0xff]
  %v152 = vld [vmem:[%s1 + $0x3f8] sm:$0xff]
  %v153 = vld [vmem:[%s1 + $0x400] sm:$0xff]
  %v154 = vld [vmem:[%s1 + $0x408] sm:$0xff]
  %v155 = vld [vmem:[%s1 + $0x410] sm:$0xff]
  %v156 = vld [vmem:[%s1 + $0x418] sm:$0xff]
  %v157 = vld [vmem:[%s1 + $0x420] sm:$0xff]
  %v158 = vld [vmem:[%s1 + $0x428] sm:$0xff]
  %v159 = vld [vmem:[%s1 + $0x430] sm:$0xff]
  %v160 = vld [vmem:[%s1 + $0x438] sm:$0xff]
  %v161 = vld [vmem:[%s1 + $0x440] sm:$0xff]
  %v162 = vld [vmem:[%s1 + $0x448] sm:$0xff]
  %v163 = vld [vmem:[%s1 + $0x450] sm:$0xff]
  %v164 = vld [vmem:[%s1 + $0x458] sm:$0xff]
  %v165 = vld [vmem:[%s1 + $0x460] sm:$0xff]
  %v166 = vld [vmem:[%s1 + $0x468] sm:$0xff]
  %v167 = vld [vmem:[%s1 + $0x470] sm:$0xff]
  %v168 = vld [vmem:[%s1 + $0x478] sm:$0xff]
  %v169 = vld [vmem:[%s1 + $0x480] sm:$0xff]
  %v170 = vld [vmem:[%s1 + $0x488] sm:$0xff]
  %v171 = vld [vmem:[%s1 + $0x490] sm:$0xff]
  %v172 = vld [vmem:[%s1 + $0x498] sm:$0xff]
  %v173 = vld [vmem:[%s1 + $0x4a0] sm:$0xff]
  %v174 = vld [vmem:[%s1 + $0x4a8] sm:$0xff]
  %v175 = vld [vmem:[%s1 + $0x4b0] sm:$0xff]
  %v176 = vld [vmem:[%s1 + $0x4b8] sm:$0xff]
  %v177 = vld [vmem:[%s1 + $0x4c0] sm:$0xff]
  %v178 = vld [vmem:[%s1 + $0x4c8] sm:$0xff]
  %v179 = vld [vmem:[%s1 + $0x4d0] sm:$0xff]
  %v180 = vld [vmem:[%s1 + $0x4d8] sm:$0xff]
  %v181 = vld [vmem:[%s1 + $0x4e0] sm:$0xff]
  %v182 = vld [vmem:[%s1 + $0x4e8] sm:$0xff]
  %v183 = vld [vmem:[%s1 + $0x4f0] sm:$0xff]
  %v184 = vld [vmem:[%s1 + $0x4f8] sm:$0xff]
  %v185 = vld [vmem:[%s1 + $0x500] sm:$0xff]
  %v186 = vld [vmem:[%s1 + $0x508] sm:$0xff]
  %v187 = vld [vmem:[%s1 + $0x510] sm:$0xff]
  %v188 = vld [vmem:[%s1 + $0x518] sm:$0xff]
  %v189 = vld [vmem:[%s1 + $0x520] sm:$0xff]
  %v190 = vld [vmem:[%s1 + $0x528] sm:$0xff]
  %v191 = vld [vmem:[%s1 + $0x530] sm:$0xff]
  %v192 = vld [vmem:[%s1 + $0x538] sm:$0xff]
  %v193 = vld [vmem:[%s1 + $0x540] sm:$0xff]
  %v194 = vld [vmem:[%s1 + $0x548] sm:$0xff]
  %v195 = vld [vmem:[%s1 + $0x550] sm:$0xff]
  %v196 = vld [vmem:[%s1 + $0x558] sm:$0xff]
  %v197 = vld [vmem:[%s1 + $0x560] sm:$0xff]
  %v198 = vld [vmem:[%s1 + $0x568] sm:$0xff]
  %v199 = vld [vmem:[%s1 + $0x570] sm:$0xff]
  %v200 = vld [vmem:[%s1 + $0x578] sm:$0xff]
  %v201 = vld [vmem:[%s1 + $0x580] sm:$0xff]
  %v202 = vld [vmem:[%s1 + $0x588] sm:$0xff]
  %v203 = vld [vmem:[%s1 + $0x590] sm:$0xff]
  %v204 = vld [vmem:[%s1 + $0x598] sm:$0xff]
  %v205 = vld [vmem:[%s1 + $0x5a0] sm:$0xff]
  %v206 = vld [vmem:[%s1 + $0x5a8] sm:$0xff]
  %v207 = vld [vmem:[%s1 + $0x5b0] sm:$0xff]
  %v208 = vld [vmem:[%s1 + $0x5b8] sm:$0xff]
  %v209 = vld [vmem:[%s1 + $0x5c0] sm:$0xff]
  %v210 = vld [vmem:[%s1 + $0x5c8] sm:$0xff]
  %v211 = vld [vmem:[%s1 + $0x5d0] sm:$0xff]
  %v212 = vld [vmem:[%s1 + $0x5d8] sm:$0xff]
  %v213 = vld [vmem:[%s1 + $0x5e0] sm:$0xff]
  %v214 = vld [vmem:[%s1 + $0x5e8] sm:$0xff]
  %v215 = vld [vmem:[%s1 + $0x5f0] sm:$0xff]
  %v216 = vld [vmem:[%s1 + $0x5f8] sm:$0xff]
  %v409 = vunpack.c.l.b16 %v25
  %v410 = vunpack.c.h.b16 %v25
  %v411 = vunpack.c.l.b16 %v26
  %v412 = vunpack.c.h.b16 %v26
  %v413 = vunpack.c.l.b16 %v27
  %v414 = vunpack.c.h.b16 %v27
  %v415 = vunpack.c.l.b16 %v28
  %v416 = vunpack.c.h.b16 %v28
  %v417 = vunpack.c.l.b16 %v29
  %v418 = vunpack.c.h.b16 %v29
  %v419 = vunpack.c.l.b16 %v30
  %v420 = vunpack.c.h.b16 %v30
  %v421 = vunpack.c.l.b16 %v31
  %v422 = vunpack.c.h.b16 %v31
  %v423 = vunpack.c.l.b16 %v32
  %v424 = vunpack.c.h.b16 %v32
  %v425 = vunpack.c.l.b16 %v33
  %v426 = vunpack.c.h.b16 %v33
  %v427 = vunpack.c.l.b16 %v34
  %v428 = vunpack.c.h.b16 %v34
  %v429 = vunpack.c.l.b16 %v35
  %v430 = vunpack.c.h.b16 %v35
  %v431 = vunpack.c.l.b16 %v36
  %v432 = vunpack.c.h.b16 %v36
  %v433 = vunpack.c.l.b16 %v37
  %v434 = vunpack.c.h.b16 %v37
  %v435 = vunpack.c.l.b16 %v38
  %v436 = vunpack.c.h.b16 %v38
  %v437 = vunpack.c.l.b16 %v39
  %v438 = vunpack.c.h.b16 %v39
  %v439 = vunpack.c.l.b16 %v40
  %v440 = vunpack.c.h.b16 %v40
  %v441 = vunpack.c.l.b16 %v41
  %v442 = vunpack.c.h.b16 %v41
  %v443 = vunpack.c.l.b16 %v42
  %v444 = vunpack.c.h.b16 %v42
  %v445 = vunpack.c.l.b16 %v43
  %v446 = vunpack.c.h.b16 %v43
  %v447 = vunpack.c.l.b16 %v44
  %v448 = vunpack.c.h.b16 %v44
  %v449 = vunpack.c.l.b16 %v45
  %v450 = vunpack.c.h.b16 %v45
  %v451 = vunpack.c.l.b16 %v46
  %v452 = vunpack.c.h.b16 %v46
  %v453 = vunpack.c.l.b16 %v47
  %v454 = vunpack.c.h.b16 %v47
  %v455 = vunpack.c.l.b16 %v48
  %v456 = vunpack.c.h.b16 %v48
  %v457 = vunpack.c.l.b16 %v49
  %v458 = vunpack.c.h.b16 %v49
  %v459 = vunpack.c.l.b16 %v50
  %v460 = vunpack.c.h.b16 %v50
  %v461 = vunpack.c.l.b16 %v51
  %v462 = vunpack.c.h.b16 %v51
  %v463 = vunpack.c.l.b16 %v52
  %v464 = vunpack.c.h.b16 %v52
  %v465 = vunpack.c.l.b16 %v53
  %v466 = vunpack.c.h.b16 %v53
  %v467 = vunpack.c.l.b16 %v54
  %v468 = vunpack.c.h.b16 %v54
  %v469 = vunpack.c.l.b16 %v55
  %v470 = vunpack.c.h.b16 %v55
  %v471 = vunpack.c.l.b16 %v56
  %v472 = vunpack.c.h.b16 %v56
  %v473 = vunpack.c.l.b16 %v57
  %v474 = vunpack.c.h.b16 %v57
  %v475 = vunpack.c.l.b16 %v58
  %v476 = vunpack.c.h.b16 %v58
  %v477 = vunpack.c.l.b16 %v59
  %v478 = vunpack.c.h.b16 %v59
  %v479 = vunpack.c.l.b16 %v60
  %v480 = vunpack.c.h.b16 %v60
  %v481 = vunpack.c.l.b16 %v61
  %v482 = vunpack.c.h.b16 %v61
  %v483 = vunpack.c.l.b16 %v62
  %v484 = vunpack.c.h.b16 %v62
  %v485 = vunpack.c.l.b16 %v63
  %v486 = vunpack.c.h.b16 %v63
  %v487 = vunpack.c.l.b16 %v64
  %v488 = vunpack.c.h.b16 %v64
  %v489 = vunpack.c.l.b16 %v65
  %v490 = vunpack.c.h.b16 %v65
  %v491 = vunpack.c.l.b16 %v66
  %v492 = vunpack.c.h.b16 %v66
  %v493 = vunpack.c.l.b16 %v67
  %v494 = vunpack.c.h.b16 %v67
  %v495 = vunpack.c.l.b16 %v68
  %v496 = vunpack.c.h.b16 %v68
  %v497 = vunpack.c.l.b16 %v69
  %v498 = vunpack.c.h.b16 %v69
  %v499 = vunpack.c.l.b16 %v70
  %v500 = vunpack.c.h.b16 %v70
  %v501 = vunpack.c.l.b16 %v71
  %v502 = vunpack.c.h.b16 %v71
  %v503 = vunpack.c.l.b16 %v72
  %v504 = vunpack.c.h.b16 %v72
  %v505 = vunpack.c.l.b16 %v73
  %v506 = vunpack.c.h.b16 %v73
  %v507 = vunpack.c.l.b16 %v74
  %v508 = vunpack.c.h.b16 %v74
  %v509 = vunpack.c.l.b16 %v75
  %v510 = vunpack.c.h.b16 %v75
  %v511 = vunpack.c.l.b16 %v76
  %v512 = vunpack.c.h.b16 %v76
  %v513 = vunpack.c.l.b16 %v77
  %v514 = vunpack.c.h.b16 %v77
  %v515 = vunpack.c.l.b16 %v78
  %v516 = vunpack.c.h.b16 %v78
  %v517 = vunpack.c.l.b16 %v79
  %v518 = vunpack.c.h.b16 %v79
  %v519 = vunpack.c.l.b16 %v80
  %v520 = vunpack.c.h.b16 %v80
  %v521 = vunpack.c.l.b16 %v81
  %v522 = vunpack.c.h.b16 %v81
  %v523 = vunpack.c.l.b16 %v82
  %v524 = vunpack.c.h.b16 %v82
  %v525 = vunpack.c.l.b16 %v83
  %v526 = vunpack.c.h.b16 %v83
  %v527 = vunpack.c.l.b16 %v84
  %v528 = vunpack.c.h.b16 %v84
  %v529 = vunpack.c.l.b16 %v85
  %v530 = vunpack.c.h.b16 %v85
  %v531 = vunpack.c.l.b16 %v86
  %v532 = vunpack.c.h.b16 %v86
  %v533 = vunpack.c.l.b16 %v87
  %v534 = vunpack.c.h.b16 %v87
  %v535 = vunpack.c.l.b16 %v88
  %v536 = vunpack.c.h.b16 %v88
  %v537 = vunpack.c.l.b16 %v89
  %v538 = vunpack.c.h.b16 %v89
  %v539 = vunpack.c.l.b16 %v90
  %v540 = vunpack.c.h.b16 %v90
  %v541 = vunpack.c.l.b16 %v91
  %v542 = vunpack.c.h.b16 %v91
  %v543 = vunpack.c.l.b16 %v92
  %v544 = vunpack.c.h.b16 %v92
  %v545 = vunpack.c.l.b16 %v93
  %v546 = vunpack.c.h.b16 %v93
  %v547 = vunpack.c.l.b16 %v94
  %v548 = vunpack.c.h.b16 %v94
  %v549 = vunpack.c.l.b16 %v95
  %v550 = vunpack.c.h.b16 %v95
  %v551 = vunpack.c.l.b16 %v96
  %v552 = vunpack.c.h.b16 %v96
  %v553 = vunpack.c.l.b16 %v97
  %v554 = vunpack.c.h.b16 %v97
  %v555 = vunpack.c.l.b16 %v98
  %v556 = vunpack.c.h.b16 %v98
  %v557 = vunpack.c.l.b16 %v99
  %v558 = vunpack.c.h.b16 %v99
  %v559 = vunpack.c.l.b16 %v100
  %v560 = vunpack.c.h.b16 %v100
  %v561 = vunpack.c.l.b16 %v101
  %v562 = vunpack.c.h.b16 %v101
  %v563 = vunpack.c.l.b16 %v102
  %v564 = vunpack.c.h.b16 %v102
  %v565 = vunpack.c.l.b16 %v103
  %v566 = vunpack.c.h.b16 %v103
  %v567 = vunpack.c.l.b16 %v104
  %v568 = vunpack.c.h.b16 %v104
  %v569 = vunpack.c.l.b16 %v105
  %v570 = vunpack.c.h.b16 %v105
  %v571 = vunpack.c.l.b16 %v106
  %v572 = vunpack.c.h.b16 %v106
  %v573 = vunpack.c.l.b16 %v107
  %v574 = vunpack.c.h.b16 %v107
  %v575 = vunpack.c.l.b16 %v108
  %v576 = vunpack.c.h.b16 %v108
  %v577 = vunpack.c.l.b16 %v109
  %v578 = vunpack.c.h.b16 %v109
  %v579 = vunpack.c.l.b16 %v110
  %v580 = vunpack.c.h.b16 %v110
  %v581 = vunpack.c.l.b16 %v111
  %v582 = vunpack.c.h.b16 %v111
  %v583 = vunpack.c.l.b16 %v112
  %v584 = vunpack.c.h.b16 %v112
  %v585 = vunpack.c.l.b16 %v113
  %v586 = vunpack.c.h.b16 %v113
  %v587 = vunpack.c.l.b16 %v114
  %v588 = vunpack.c.h.b16 %v114
  %v589 = vunpack.c.l.b16 %v115
  %v590 = vunpack.c.h.b16 %v115
  %v591 = vunpack.c.l.b16 %v116
  %v592 = vunpack.c.h.b16 %v116
  %v593 = vunpack.c.l.b16 %v117
  %v594 = vunpack.c.h.b16 %v117
  %v595 = vunpack.c.l.b16 %v118
  %v596 = vunpack.c.h.b16 %v118
  %v597 = vunpack.c.l.b16 %v119
  %v598 = vunpack.c.h.b16 %v119
  %v599 = vunpack.c.l.b16 %v120
  %v600 = vunpack.c.h.b16 %v120
  %v601 = vunpack.c.l.b16 %v121
  %v602 = vunpack.c.h.b16 %v121
  %v603 = vunpack.c.l.b16 %v122
  %v604 = vunpack.c.h.b16 %v122
  %v605 = vunpack.c.l.b16 %v123
  %v606 = vunpack.c.h.b16 %v123
  %v607 = vunpack.c.l.b16 %v124
  %v608 = vunpack.c.h.b16 %v124
  %v609 = vunpack.c.l.b16 %v125
  %v610 = vunpack.c.h.b16 %v125
  %v611 = vunpack.c.l.b16 %v126
  %v612 = vunpack.c.h.b16 %v126
  %v613 = vunpack.c.l.b16 %v127
  %v614 = vunpack.c.h.b16 %v127
  %v615 = vunpack.c.l.b16 %v128
  %v616 = vunpack.c.h.b16 %v128
  %v617 = vunpack.c.l.b16 %v129
  %v618 = vunpack.c.h.b16 %v129
  %v619 = vunpack.c.l.b16 %v130
  %v620 = vunpack.c.h.b16 %v130
  %v621 = vunpack.c.l.b16 %v131
  %v622 = vunpack.c.h.b16 %v131
  %v623 = vunpack.c.l.b16 %v132
  %v624 = vunpack.c.h.b16 %v132
  %v625 = vunpack.c.l.b16 %v133
  %v626 = vunpack.c.h.b16 %v133
  %v627 = vunpack.c.l.b16 %v134
  %v628 = vunpack.c.h.b16 %v134
  %v629 = vunpack.c.l.b16 %v135
  %v630 = vunpack.c.h.b16 %v135
  %v631 = vunpack.c.l.b16 %v136
  %v632 = vunpack.c.h.b16 %v136
  %v633 = vunpack.c.l.b16 %v137
  %v634 = vunpack.c.h.b16 %v137
  %v635 = vunpack.c.l.b16 %v138
  %v636 = vunpack.c.h.b16 %v138
  %v637 = vunpack.c.l.b16 %v139
  %v638 = vunpack.c.h.b16 %v139
  %v639 = vunpack.c.l.b16 %v140
  %v640 = vunpack.c.h.b16 %v140
  %v641 = vunpack.c.l.b16 %v141
  %v642 = vunpack.c.h.b16 %v141
  %v643 = vunpack.c.l.b16 %v142
  %v644 = vunpack.c.h.b16 %v142
  %v645 = vunpack.c.l.b16 %v143
  %v646 = vunpack.c.h.b16 %v143
  %v647 = vunpack.c.l.b16 %v144
  %v648 = vunpack.c.h.b16 %v144
  %v649 = vunpack.c.l.b16 %v145
  %v650 = vunpack.c.h.b16 %v145
  %v651 = vunpack.c.l.b16 %v146
  %v652 = vunpack.c.h.b16 %v146
  %v653 = vunpack.c.l.b16 %v147
  %v654 = vunpack.c.h.b16 %v147
  %v655 = vunpack.c.l.b16 %v148
  %v656 = vunpack.c.h.b16 %v148
  %v657 = vunpack.c.l.b16 %v149
  %v658 = vunpack.c.h.b16 %v149
  %v659 = vunpack.c.l.b16 %v150
  %v660 = vunpack.c.h.b16 %v150
  %v661 = vunpack.c.l.b16 %v151
  %v662 = vunpack.c.h.b16 %v151
  %v663 = vunpack.c.l.b16 %v152
  %v664 = vunpack.c.h.b16 %v152
  %v665 = vunpack.c.l.b16 %v153
  %v666 = vunpack.c.h.b16 %v153
  %v667 = vunpack.c.l.b16 %v154
  %v668 = vunpack.c.h.b16 %v154
  %v669 = vunpack.c.l.b16 %v155
  %v670 = vunpack.c.h.b16 %v155
  %v671 = vunpack.c.l.b16 %v156
  %v672 = vunpack.c.h.b16 %v156
  %v673 = vunpack.c.l.b16 %v157
  %v674 = vunpack.c.h.b16 %v157
  %v675 = vunpack.c.l.b16 %v158
  %v676 = vunpack.c.h.b16 %v158
  %v677 = vunpack.c.l.b16 %v159
  %v678 = vunpack.c.h.b16 %v159
  %v679 = vunpack.c.l.b16 %v160
  %v680 = vunpack.c.h.b16 %v160
  %v681 = vunpack.c.l.b16 %v161
  %v682 = vunpack.c.h.b16 %v161
  %v683 = vunpack.c.l.b16 %v162
  %v684 = vunpack.c.h.b16 %v162
  %v685 = vunpack.c.l.b16 %v163
  %v686 = vunpack.c.h.b16 %v163
  %v687 = vunpack.c.l.b16 %v164
  %v688 = vunpack.c.h.b16 %v164
  %v689 = vunpack.c.l.b16 %v165
  %v690 = vunpack.c.h.b16 %v165
  %v691 = vunpack.c.l.b16 %v166
  %v692 = vunpack.c.h.b16 %v166
  %v693 = vunpack.c.l.b16 %v167
  %v694 = vunpack.c.h.b16 %v167
  %v695 = vunpack.c.l.b16 %v168
  %v696 = vunpack.c.h.b16 %v168
  %v697 = vunpack.c.l.b16 %v169
  %v698 = vunpack.c.h.b16 %v169
  %v699 = vunpack.c.l.b16 %v170
  %v700 = vunpack.c.h.b16 %v170
  %v701 = vunpack.c.l.b16 %v171
  %v702 = vunpack.c.h.b16 %v171
  %v703 = vunpack.c.l.b16 %v172
  %v704 = vunpack.c.h.b16 %v172
  %v705 = vunpack.c.l.b16 %v173
  %v706 = vunpack.c.h.b16 %v173
  %v707 = vunpack.c.l.b16 %v174
  %v708 = vunpack.c.h.b16 %v174
  %v709 = vunpack.c.l.b16 %v175
  %v710 = vunpack.c.h.b16 %v175
  %v711 = vunpack.c.l.b16 %v176
  %v712 = vunpack.c.h.b16 %v176
  %v713 = vunpack.c.l.b16 %v177
  %v714 = vunpack.c.h.b16 %v177
  %v715 = vunpack.c.l.b16 %v178
  %v716 = vunpack.c.h.b16 %v178
  %v717 = vunpack.c.l.b16 %v179
  %v718 = vunpack.c.h.b16 %v179
  %v719 = vunpack.c.l.b16 %v180
  %v720 = vunpack.c.h.b16 %v180
  %v721 = vunpack.c.l.b16 %v181
  %v722 = vunpack.c.h.b16 %v181
  %v723 = vunpack.c.l.b16 %v182
  %v724 = vunpack.c.h.b16 %v182
  %v725 = vunpack.c.l.b16 %v183
  %v726 = vunpack.c.h.b16 %v183
  %v727 = vunpack.c.l.b16 %v184
  %v728 = vunpack.c.h.b16 %v184
  %v729 = vunpack.c.l.b16 %v185
  %v730 = vunpack.c.h.b16 %v185
  %v731 = vunpack.c.l.b16 %v186
  %v732 = vunpack.c.h.b16 %v186
  %v733 = vunpack.c.l.b16 %v187
  %v734 = vunpack.c.h.b16 %v187
  %v735 = vunpack.c.l.b16 %v188
  %v736 = vunpack.c.h.b16 %v188
  %v737 = vunpack.c.l.b16 %v189
  %v738 = vunpack.c.h.b16 %v189
  %v739 = vunpack.c.l.b16 %v190
  %v740 = vunpack.c.h.b16 %v190
  %v741 = vunpack.c.l.b16 %v191
  %v742 = vunpack.c.h.b16 %v191
  %v743 = vunpack.c.l.b16 %v192
  %v744 = vunpack.c.h.b16 %v192
  %v745 = vunpack.c.l.b16 %v193
  %v746 = vunpack.c.h.b16 %v193
  %v747 = vunpack.c.l.b16 %v194
  %v748 = vunpack.c.h.b16 %v194
  %v749 = vunpack.c.l.b16 %v195
  %v750 = vunpack.c.h.b16 %v195
  %v751 = vunpack.c.l.b16 %v196
  %v752 = vunpack.c.h.b16 %v196
  %v753 = vunpack.c.l.b16 %v197
  %v754 = vunpack.c.h.b16 %v197
  %v755 = vunpack.c.l.b16 %v198
  %v756 = vunpack.c.h.b16 %v198
  %v757 = vunpack.c.l.b16 %v199
  %v758 = vunpack.c.h.b16 %v199
  %v759 = vunpack.c.l.b16 %v200
  %v760 = vunpack.c.h.b16 %v200
  %v761 = vunpack.c.l.b16 %v201
  %v762 = vunpack.c.h.b16 %v201
  %v763 = vunpack.c.l.b16 %v202
  %v764 = vunpack.c.h.b16 %v202
  %v765 = vunpack.c.l.b16 %v203
  %v766 = vunpack.c.h.b16 %v203
  %v767 = vunpack.c.l.b16 %v204
  %v768 = vunpack.c.h.b16 %v204
  %v769 = vunpack.c.l.b16 %v205
  %v770 = vunpack.c.h.b16 %v205
  %v771 = vunpack.c.l.b16 %v206
  %v772 = vunpack.c.h.b16 %v206
  %v773 = vunpack.c.l.b16 %v207
  %v774 = vunpack.c.h.b16 %v207
  %v775 = vunpack.c.l.b16 %v208
  %v776 = vunpack.c.h.b16 %v208
  %v777 = vunpack.c.l.b16 %v209
  %v778 = vunpack.c.h.b16 %v209
  %v779 = vunpack.c.l.b16 %v210
  %v780 = vunpack.c.h.b16 %v210
  %v781 = vunpack.c.l.b16 %v211
  %v782 = vunpack.c.h.b16 %v211
  %v783 = vunpack.c.l.b16 %v212
  %v784 = vunpack.c.h.b16 %v212
  %v785 = vunpack.c.l.b16 %v213
  %v786 = vunpack.c.h.b16 %v213
  %v787 = vunpack.c.l.b16 %v214
  %v788 = vunpack.c.h.b16 %v214
  %v789 = vunpack.c.l.b16 %v215
  %v790 = vunpack.c.h.b16 %v215
  %v791 = vunpack.c.l.b16 %v216
  %v792 = vunpack.c.h.b16 %v216
  %v793 = vpack.c.b16 %v415, %v409
  %v794 = vpack.c.b16 %v416, %v410
  %v795 = vpack.c.b16 %v417, %v411
  %v796 = vpack.c.b16 %v418, %v412
  %v797 = vpack.c.b16 %v419, %v413
  %v798 = vpack.c.b16 %v420, %v414
  %v799 = vpack.c.b16 %v427, %v421
  %v800 = vpack.c.b16 %v428, %v422
  %v801 = vpack.c.b16 %v429, %v423
  %v802 = vpack.c.b16 %v430, %v424
  %v803 = vpack.c.b16 %v431, %v425
  %v804 = vpack.c.b16 %v432, %v426
  %v805 = vpack.c.b16 %v439, %v433
  %v806 = vpack.c.b16 %v440, %v434
  %v807 = vpack.c.b16 %v441, %v435
  %v808 = vpack.c.b16 %v442, %v436
  %v809 = vpack.c.b16 %v443, %v437
  %v810 = vpack.c.b16 %v444, %v438
  %v811 = vpack.c.b16 %v451, %v445
  %v812 = vpack.c.b16 %v452, %v446
  %v813 = vpack.c.b16 %v453, %v447
  %v814 = vpack.c.b16 %v454, %v448
  %v815 = vpack.c.b16 %v455, %v449
  %v816 = vpack.c.b16 %v456, %v450
  %v817 = vpack.c.b16 %v463, %v457
  %v818 = vpack.c.b16 %v464, %v458
  %v819 = vpack.c.b16 %v465, %v459
  %v820 = vpack.c.b16 %v466, %v460
  %v821 = vpack.c.b16 %v467, %v461
  %v822 = vpack.c.b16 %v468, %v462
  %v823 = vpack.c.b16 %v475, %v469
  %v824 = vpack.c.b16 %v476, %v470
  %v825 = vpack.c.b16 %v477, %v471
  %v826 = vpack.c.b16 %v478, %v472
  %v827 = vpack.c.b16 %v479, %v473
  %v828 = vpack.c.b16 %v480, %v474
  %v829 = vpack.c.b16 %v487, %v481
  %v830 = vpack.c.b16 %v488, %v482
  %v831 = vpack.c.b16 %v489, %v483
  %v832 = vpack.c.b16 %v490, %v484
  %v833 = vpack.c.b16 %v491, %v485
  %v834 = vpack.c.b16 %v492, %v486
  %v835 = vpack.c.b16 %v499, %v493
  %v836 = vpack.c.b16 %v500, %v494
  %v837 = vpack.c.b16 %v501, %v495
  %v838 = vpack.c.b16 %v502, %v496
  %v839 = vpack.c.b16 %v503, %v497
  %v840 = vpack.c.b16 %v504, %v498
  %v841 = vpack.c.b16 %v511, %v505
  %v842 = vpack.c.b16 %v512, %v506
  %v843 = vpack.c.b16 %v513, %v507
  %v844 = vpack.c.b16 %v514, %v508
  %v845 = vpack.c.b16 %v515, %v509
  %v846 = vpack.c.b16 %v516, %v510
  %v847 = vpack.c.b16 %v523, %v517
  %v848 = vpack.c.b16 %v524, %v518
  %v849 = vpack.c.b16 %v525, %v519
  %v850 = vpack.c.b16 %v526, %v520
  %v851 = vpack.c.b16 %v527, %v521
  %v852 = vpack.c.b16 %v528, %v522
  %v853 = vpack.c.b16 %v535, %v529
  %v854 = vpack.c.b16 %v536, %v530
  %v855 = vpack.c.b16 %v537, %v531
  %v856 = vpack.c.b16 %v538, %v532
  %v857 = vpack.c.b16 %v539, %v533
  %v858 = vpack.c.b16 %v540, %v534
  %v859 = vpack.c.b16 %v547, %v541
  %v860 = vpack.c.b16 %v548, %v542
  %v861 = vpack.c.b16 %v549, %v543
  %v862 = vpack.c.b16 %v550, %v544
  %v863 = vpack.c.b16 %v551, %v545
  %v864 = vpack.c.b16 %v552, %v546
  %v865 = vpack.c.b16 %v559, %v553
  %v866 = vpack.c.b16 %v560, %v554
  %v867 = vpack.c.b16 %v561, %v555
  %v868 = vpack.c.b16 %v562, %v556
  %v869 = vpack.c.b16 %v563, %v557
  %v870 = vpack.c.b16 %v564, %v558
  %v871 = vpack.c.b16 %v571, %v565
  %v872 = vpack.c.b16 %v572, %v566
  %v873 = vpack.c.b16 %v573, %v567
  %v874 = vpack.c.b16 %v574, %v568
  %v875 = vpack.c.b16 %v575, %v569
  %v876 = vpack.c.b16 %v576, %v570
  %v877 = vpack.c.b16 %v583, %v577
  %v878 = vpack.c.b16 %v584, %v578
  %v879 = vpack.c.b16 %v585, %v579
  %v880 = vpack.c.b16 %v586, %v580
  %v881 = vpack.c.b16 %v587, %v581
  %v882 = vpack.c.b16 %v588, %v582
  %v883 = vpack.c.b16 %v595, %v589
  %v884 = vpack.c.b16 %v596, %v590
  %v885 = vpack.c.b16 %v597, %v591
  %v886 = vpack.c.b16 %v598, %v592
  %v887 = vpack.c.b16 %v599, %v593
  %v888 = vpack.c.b16 %v600, %v594
  %v889 = vpack.c.b16 %v607, %v601
  %v890 = vpack.c.b16 %v608, %v602
  %v891 = vpack.c.b16 %v609, %v603
  %v892 = vpack.c.b16 %v610, %v604
  %v893 = vpack.c.b16 %v611, %v605
  %v894 = vpack.c.b16 %v612, %v606
  %v895 = vpack.c.b16 %v619, %v613
  %v896 = vpack.c.b16 %v620, %v614
  %v897 = vpack.c.b16 %v621, %v615
  %v898 = vpack.c.b16 %v622, %v616
  %v899 = vpack.c.b16 %v623, %v617
  %v900 = vpack.c.b16 %v624, %v618
  %v901 = vpack.c.b16 %v631, %v625
  %v902 = vpack.c.b16 %v632, %v626
  %v903 = vpack.c.b16 %v633, %v627
  %v904 = vpack.c.b16 %v634, %v628
  %v905 = vpack.c.b16 %v635, %v629
  %v906 = vpack.c.b16 %v636, %v630
  %v907 = vpack.c.b16 %v643, %v637
  %v908 = vpack.c.b16 %v644, %v638
  %v909 = vpack.c.b16 %v645, %v639
  %v910 = vpack.c.b16 %v646, %v640
  %v911 = vpack.c.b16 %v647, %v641
  %v912 = vpack.c.b16 %v648, %v642
  %v913 = vpack.c.b16 %v655, %v649
  %v914 = vpack.c.b16 %v656, %v650
  %v915 = vpack.c.b16 %v657, %v651
  %v916 = vpack.c.b16 %v658, %v652
  %v917 = vpack.c.b16 %v659, %v653
  %v918 = vpack.c.b16 %v660, %v654
  %v919 = vpack.c.b16 %v667, %v661
  %v920 = vpack.c.b16 %v668, %v662
  %v921 = vpack.c.b16 %v669, %v663
  %v922 = vpack.c.b16 %v670, %v664
  %v923 = vpack.c.b16 %v671, %v665
  %v924 = vpack.c.b16 %v672, %v666
  %v925 = vpack.c.b16 %v679, %v673
  %v926 = vpack.c.b16 %v680, %v674
  %v927 = vpack.c.b16 %v681, %v675
  %v928 = vpack.c.b16 %v682, %v676
  %v929 = vpack.c.b16 %v683, %v677
  %v930 = vpack.c.b16 %v684, %v678
  %v931 = vpack.c.b16 %v691, %v685
  %v932 = vpack.c.b16 %v692, %v686
  %v933 = vpack.c.b16 %v693, %v687
  %v934 = vpack.c.b16 %v694, %v688
  %v935 = vpack.c.b16 %v695, %v689
  %v936 = vpack.c.b16 %v696, %v690
  %v937 = vpack.c.b16 %v703, %v697
  %v938 = vpack.c.b16 %v704, %v698
  %v939 = vpack.c.b16 %v705, %v699
  %v940 = vpack.c.b16 %v706, %v700
  %v941 = vpack.c.b16 %v707, %v701
  %v942 = vpack.c.b16 %v708, %v702
  %v943 = vpack.c.b16 %v715, %v709
  %v944 = vpack.c.b16 %v716, %v710
  %v945 = vpack.c.b16 %v717, %v711
  %v946 = vpack.c.b16 %v718, %v712
  %v947 = vpack.c.b16 %v719, %v713
  %v948 = vpack.c.b16 %v720, %v714
  %v949 = vpack.c.b16 %v727, %v721
  %v950 = vpack.c.b16 %v728, %v722
  %v951 = vpack.c.b16 %v729, %v723
  %v952 = vpack.c.b16 %v730, %v724
  %v953 = vpack.c.b16 %v731, %v725
  %v954 = vpack.c.b16 %v732, %v726
  %v955 = vpack.c.b16 %v739, %v733
  %v956 = vpack.c.b16 %v740, %v734
  %v957 = vpack.c.b16 %v741, %v735
  %v958 = vpack.c.b16 %v742, %v736
  %v959 = vpack.c.b16 %v743, %v737
  %v960 = vpack.c.b16 %v744, %v738
  %v961 = vpack.c.b16 %v751, %v745
  %v962 = vpack.c.b16 %v752, %v746
  %v963 = vpack.c.b16 %v753, %v747
  %v964 = vpack.c.b16 %v754, %v748
  %v965 = vpack.c.b16 %v755, %v749
  %v966 = vpack.c.b16 %v756, %v750
  %v967 = vpack.c.b16 %v763, %v757
  %v968 = vpack.c.b16 %v764, %v758
  %v969 = vpack.c.b16 %v765, %v759
  %v970 = vpack.c.b16 %v766, %v760
  %v971 = vpack.c.b16 %v767, %v761
  %v972 = vpack.c.b16 %v768, %v762
  %v973 = vpack.c.b16 %v775, %v769
  %v974 = vpack.c.b16 %v776, %v770
  %v975 = vpack.c.b16 %v777, %v771
  %v976 = vpack.c.b16 %v778, %v772
  %v977 = vpack.c.b16 %v779, %v773
  %v978 = vpack.c.b16 %v780, %v774
  %v979 = vpack.c.b16 %v787, %v781
  %v980 = vpack.c.b16 %v788, %v782
  %v981 = vpack.c.b16 %v789, %v783
  %v982 = vpack.c.b16 %v790, %v784
  %v983 = vpack.c.b16 %v791, %v785
  %v984 = vpack.c.b16 %v792, %v786
  %1177 = vmatprep.subr.bf16.mxu0 %v794
  %1178 = vmatpush1.bf16.msra.mxu0 %v793
  %1179 = vmatprep.subr.bf16.mxu0 %v800
  %1180 = vmatpush1.bf16.msra.mxu0 %v799
  %1181 = vmatprep.subr.bf16.mxu0 %v806
  %1182 = vmatpush1.bf16.msra.mxu0 %v805
  %1183 = vmatprep.subr.bf16.mxu0 %v812
  %1184 = vmatpush1.bf16.msra.mxu0 %v811
  %1185 = vmatprep.subr.bf16.mxu0 %v818
  %1186 = vmatpush1.bf16.msra.mxu0 %v817
  %1187 = vmatprep.subr.bf16.mxu0 %v824
  %1188 = vmatpush1.bf16.msra.mxu0 %v823
  %1189 = vmatprep.subr.bf16.mxu0 %v830
  %1190 = vmatpush1.bf16.msra.mxu0 %v829
  %1191 = vmatprep.subr.bf16.mxu0 %v836
  %1192 = vmatpush1.bf16.msra.mxu0 %v835
  %1193 = vmatprep.subr.bf16.mxu0 %v842
  %1194 = vmatpush1.bf16.msra.mxu0 %v841
  %1195 = vmatprep.subr.bf16.mxu0 %v848
  %1196 = vmatpush1.bf16.msra.mxu0 %v847
  %1197 = vmatprep.subr.bf16.mxu0 %v854
  %1198 = vmatpush1.bf16.msra.mxu0 %v853
  %1199 = vmatprep.subr.bf16.mxu0 %v860
  %1200 = vmatpush1.bf16.msra.mxu0 %v859
  %1201 = vmatprep.subr.bf16.mxu0 %v866
  %1202 = vmatpush1.bf16.msra.mxu0 %v865
  %1203 = vmatprep.subr.bf16.mxu0 %v872
  %1204 = vmatpush1.bf16.msra.mxu0 %v871
  %1205 = vmatprep.subr.bf16.mxu0 %v878
  %1206 = vmatpush1.bf16.msra.mxu0 %v877
  %1207 = vmatprep.subr.bf16.mxu0 %v884
  %1208 = vmatpush1.bf16.msra.mxu0 %v883
  %1209 = vmatprep.mubr.bf16.mxu0 %v22
  %1210 = vmatmul.mubr.bf16.gmra.mrb[0].mxu0 %v21
  %v1211 = vpop.f32.mrb[0].mxu0
  %v1212 = vadd.f32 0.0, %v1211
  %v1213 = vpop.f32.mrb[0].mxu0
  %v1214 = vadd.f32 0.0, %v1213
  %v1215 = vpop.f32.mrb[0].mxu0
  %v1216 = vadd.f32 0.0, %v1215
  %v1217 = vpop.f32.mrb[0].mxu0
  %v1218 = vadd.f32 0.0, %v1217
  %1219 = vdwg.mxu0
  %1220 = vmatprep.subr.bf16.mxu0 %v890
  %1221 = vmatpush1.bf16.msra.mxu0 %v889
  %1222 = vmatprep.subr.bf16.mxu0 %v896
  %1223 = vmatpush1.bf16.msra.mxu0 %v895
  %1224 = vmatprep.subr.bf16.mxu0 %v902
  %1225 = vmatpush1.bf16.msra.mxu0 %v901
  %1226 = vmatprep.subr.bf16.mxu0 %v908
  %1227 = vmatpush1.bf16.msra.mxu0 %v907
  %1228 = vmatprep.subr.bf16.mxu0 %v914
  %1229 = vmatpush1.bf16.msra.mxu0 %v913
  %1230 = vmatprep.subr.bf16.mxu0 %v920
  %1231 = vmatpush1.bf16.msra.mxu0 %v919
  %1232 = vmatprep.subr.bf16.mxu0 %v926
  %1233 = vmatpush1.bf16.msra.mxu0 %v925
  %1234 = vmatprep.subr.bf16.mxu0 %v932
  %1235 = vmatpush1.bf16.msra.mxu0 %v931
  %1236 = vmatprep.subr.bf16.mxu0 %v938
  %1237 = vmatpush1.bf16.msra.mxu0 %v937
  %1238 = vmatprep.subr.bf16.mxu0 %v944
  %1239 = vmatpush1.bf16.msra.mxu0 %v943
  %1240 = vmatprep.subr.bf16.mxu0 %v950
  %1241 = vmatpush1.bf16.msra.mxu0 %v949
  %1242 = vmatprep.subr.bf16.mxu0 %v956
  %1243 = vmatpush1.bf16.msra.mxu0 %v955
  %1244 = vmatprep.subr.bf16.mxu0 %v962
  %1245 = vmatpush1.bf16.msra.mxu0 %v961
  %1246 = vmatprep.subr.bf16.mxu0 %v968
  %1247 = vmatpush1.bf16.msra.mxu0 %v967
  %1248 = vmatprep.subr.bf16.mxu0 %v974
  %1249 = vmatpush1.bf16.msra.mxu0 %v973
  %1250 = vmatprep.subr.bf16.mxu0 %v980
  %1251 = vmatpush1.bf16.msra.mxu0 %v979
  %1252 = vmatprep.mubr.bf16.mxu0 %v24
  %1253 = vmatmul.mubr.bf16.gmra.mrb[0].mxu0 %v23
  %v1254 = vpop.f32.mrb[0].mxu0
  %v1255 = vadd.f32 %v1212, %v1254
  %v1256 = vpop.f32.mrb[0].mxu0
  %v1257 = vadd.f32 %v1214, %v1256
  %v1258 = vpop.f32.mrb[0].mxu0
  %v1259 = vadd.f32 %v1216, %v1258
  %v1260 = vpop.f32.mrb[0].mxu0
  %v1261 = vadd.f32 %v1218, %v1260
  %1262 = vdwg.mxu0
  %1263 = vmatprep.subr.bf16.mxu0 %v796
  %1264 = vmatpush1.bf16.msra.mxu0 %v795
  %1265 = vmatprep.subr.bf16.mxu0 %v802
  %1266 = vmatpush1.bf16.msra.mxu0 %v801
  %1267 = vmatprep.subr.bf16.mxu0 %v808
  %1268 = vmatpush1.bf16.msra.mxu0 %v807
  %1269 = vmatprep.subr.bf16.mxu0 %v814
  %1270 = vmatpush1.bf16.msra.mxu0 %v813
  %1271 = vmatprep.subr.bf16.mxu0 %v820
  %1272 = vmatpush1.bf16.msra.mxu0 %v819
  %1273 = vmatprep.subr.bf16.mxu0 %v826
  %1274 = vmatpush1.bf16.msra.mxu0 %v825
  %1275 = vmatprep.subr.bf16.mxu0 %v832
  %1276 = vmatpush1.bf16.msra.mxu0 %v831
  %1277 = vmatprep.subr.bf16.mxu0 %v838
  %1278 = vmatpush1.bf16.msra.mxu0 %v837
  %1279 = vmatprep.subr.bf16.mxu0 %v844
  %1280 = vmatpush1.bf16.msra.mxu0 %v843
  %1281 = vmatprep.subr.bf16.mxu0 %v850
  %1282 = vmatpush1.bf16.msra.mxu0 %v849
  %1283 = vmatprep.subr.bf16.mxu0 %v856
  %1284 = vmatpush1.bf16.msra.mxu0 %v855
  %1285 = vmatprep.subr.bf16.mxu0 %v862
  %1286 = vmatpush1.bf16.msra.mxu0 %v861
  %1287 = vmatprep.subr.bf16.mxu0 %v868
  %1288 = vmatpush1.bf16.msra.mxu0 %v867
  %1289 = vmatprep.subr.bf16.mxu0 %v874
  %1290 = vmatpush1.bf16.msra.mxu0 %v873
  %1291 = vmatprep.subr.bf16.mxu0 %v880
  %1292 = vmatpush1.bf16.msra.mxu0 %v879
  %1293 = vmatprep.subr.bf16.mxu0 %v886
  %1294 = vmatpush1.bf16.msra.mxu0 %v885
  %1295 = vmatprep.mubr.bf16.mxu0 %v22
  %1296 = vmatmul.mubr.bf16.gmra.mrb[0].mxu0 %v21
  %v1297 = vpop.f32.mrb[0].mxu0
  %v1298 = vadd.f32 0.0, %v1297
  %v1299 = vpop.f32.mrb[0].mxu0
  %v1300 = vadd.f32 0.0, %v1299
  %v1301 = vpop.f32.mrb[0].mxu0
  %v1302 = vadd.f32 0.0, %v1301
  %v1303 = vpop.f32.mrb[0].mxu0
  %v1304 = vadd.f32 0.0, %v1303
  %1305 = vdwg.mxu0
  %1306 = vmatprep.subr.bf16.mxu0 %v892
  %1307 = vmatpush1.bf16.msra.mxu0 %v891
  %1308 = vmatprep.subr.bf16.mxu0 %v898
  %1309 = vmatpush1.bf16.msra.mxu0 %v897
  %1310 = vmatprep.subr.bf16.mxu0 %v904
  %1311 = vmatpush1.bf16.msra.mxu0 %v903
  %1312 = vmatprep.subr.bf16.mxu0 %v910
  %1313 = vmatpush1.bf16.msra.mxu0 %v909
  %1314 = vmatprep.subr.bf16.mxu0 %v916
  %1315 = vmatpush1.bf16.msra.mxu0 %v915
  %1316 = vmatprep.subr.bf16.mxu0 %v922
  %1317 = vmatpush1.bf16.msra.mxu0 %v921
  %1318 = vmatprep.subr.bf16.mxu0 %v928
  %1319 = vmatpush1.bf16.msra.mxu0 %v927
  %1320 = vmatprep.subr.bf16.mxu0 %v934
  %1321 = vmatpush1.bf16.msra.mxu0 %v933
  %1322 = vmatprep.subr.bf16.mxu0 %v940
  %1323 = vmatpush1.bf16.msra.mxu0 %v939
  %1324 = vmatprep.subr.bf16.mxu0 %v946
  %1325 = vmatpush1.bf16.msra.mxu0 %v945
  %1326 = vmatprep.subr.bf16.mxu0 %v952
  %1327 = vmatpush1.bf16.msra.mxu0 %v951
  %1328 = vmatprep.subr.bf16.mxu0 %v958
  %1329 = vmatpush1.bf16.msra.mxu0 %v957
  %1330 = vmatprep.subr.bf16.mxu0 %v964
  %1331 = vmatpush1.bf16.msra.mxu0 %v963
  %1332 = vmatprep.subr.bf16.mxu0 %v970
  %1333 = vmatpush1.bf16.msra.mxu0 %v969
  %1334 = vmatprep.subr.bf16.mxu0 %v976
  %1335 = vmatpush1.bf16.msra.mxu0 %v975
  %1336 = vmatprep.subr.bf16.mxu0 %v982
  %1337 = vmatpush1.bf16.msra.mxu0 %v981
  %1338 = vmatprep.mubr.bf16.mxu0 %v24
  %1339 = vmatmul.mubr.bf16.gmra.mrb[0].mxu0 %v23
  %v1340 = vpop.f32.mrb[0].mxu0
  %v1341 = vadd.f32 %v1298, %v1340
  %v1342 = vpop.f32.mrb[0].mxu0
  %v1343 = vadd.f32 %v1300, %v1342
  %v1344 = vpop.f32.mrb[0].mxu0
  %v1345 = vadd.f32 %v1302, %v1344
  %v1346 = vpop.f32.mrb[0].mxu0
  %v1347 = vadd.f32 %v1304, %v1346
  %1348 = vdwg.mxu0
  %1349 = vmatprep.subr.bf16.mxu0 %v798
  %1350 = vmatpush1.bf16.msra.mxu0 %v797
  %1351 = vmatprep.subr.bf16.mxu0 %v804
  %1352 = vmatpush1.bf16.msra.mxu0 %v803
  %1353 = vmatprep.subr.bf16.mxu0 %v810
  %1354 = vmatpush1.bf16.msra.mxu0 %v809
  %1355 = vmatprep.subr.bf16.mxu0 %v816
  %1356 = vmatpush1.bf16.msra.mxu0 %v815
  %1357 = vmatprep.subr.bf16.mxu0 %v822
  %1358 = vmatpush1.bf16.msra.mxu0 %v821
  %1359 = vmatprep.subr.bf16.mxu0 %v828
  %1360 = vmatpush1.bf16.msra.mxu0 %v827
  %1361 = vmatprep.subr.bf16.mxu0 %v834
  %1362 = vmatpush1.bf16.msra.mxu0 %v833
  %1363 = vmatprep.subr.bf16.mxu0 %v840
  %1364 = vmatpush1.bf16.msra.mxu0 %v839
  %1365 = vmatprep.subr.bf16.mxu0 %v846
  %1366 = vmatpush1.bf16.msra.mxu0 %v845
  %1367 = vmatprep.subr.bf16.mxu0 %v852
  %1368 = vmatpush1.bf16.msra.mxu0 %v851
  %1369 = vmatprep.subr.bf16.mxu0 %v858
  %1370 = vmatpush1.bf16.msra.mxu0 %v857
  %1371 = vmatprep.subr.bf16.mxu0 %v864
  %1372 = vmatpush1.bf16.msra.mxu0 %v863
  %1373 = vmatprep.subr.bf16.mxu0 %v870
  %1374 = vmatpush1.bf16.msra.mxu0 %v869
  %1375 = vmatprep.subr.bf16.mxu0 %v876
  %1376 = vmatpush1.bf16.msra.mxu0 %v875
  %1377 = vmatprep.subr.bf16.mxu0 %v882
  %1378 = vmatpush1.bf16.msra.mxu0 %v881
  %1379 = vmatprep.subr.bf16.mxu0 %v888
  %1380 = vmatpush1.bf16.msra.mxu0 %v887
  %1381 = vmatprep.mubr.bf16.mxu0 %v22
  %1382 = vmatmul.mubr.bf16.gmra.mrb[0].mxu0 %v21
  %v1383 = vpop.f32.mrb[0].mxu0
  %v1384 = vadd.f32 0.0, %v1383
  %v1385 = vpop.f32.mrb[0].mxu0
  %v1386 = vadd.f32 0.0, %v1385
  %v1387 = vpop.f32.mrb[0].mxu0
  %v1388 = vadd.f32 0.0, %v1387
  %v1389 = vpop.f32.mrb[0].mxu0
  %v1390 = vadd.f32 0.0, %v1389
  %1391 = vdwg.mxu0
  %1392 = vmatprep.subr.bf16.mxu0 %v894
  %1393 = vmatpush1.bf16.msra.mxu0 %v893
  %1394 = vmatprep.subr.bf16.mxu0 %v900
  %1395 = vmatpush1.bf16.msra.mxu0 %v899
  %1396 = vmatprep.subr.bf16.mxu0 %v906
  %1397 = vmatpush1.bf16.msra.mxu0 %v905
  %1398 = vmatprep.subr.bf16.mxu0 %v912
  %1399 = vmatpush1.bf16.msra.mxu0 %v911
  %1400 = vmatprep.subr.bf16.mxu0 %v918
  %1401 = vmatpush1.bf16.msra.mxu0 %v917
  %1402 = vmatprep.subr.bf16.mxu0 %v924
  %1403 = vmatpush1.bf16.msra.mxu0 %v923
  %1404 = vmatprep.subr.bf16.mxu0 %v930
  %1405 = vmatpush1.bf16.msra.mxu0 %v929
  %1406 = vmatprep.subr.bf16.mxu0 %v936
  %1407 = vmatpush1.bf16.msra.mxu0 %v935
  %1408 = vmatprep.subr.bf16.mxu0 %v942
  %1409 = vmatpush1.bf16.msra.mxu0 %v941
  %1410 = vmatprep.subr.bf16.mxu0 %v948
  %1411 = vmatpush1.bf16.msra.mxu0 %v947
  %1412 = vmatprep.subr.bf16.mxu0 %v954
  %1413 = vmatpush1.bf16.msra.mxu0 %v953
  %1414 = vmatprep.subr.bf16.mxu0 %v960
  %1415 = vmatpush1.bf16.msra.mxu0 %v959
  %1416 = vmatprep.subr.bf16.mxu0 %v966
  %1417 = vmatpush1.bf16.msra.mxu0 %v965
  %1418 = vmatprep.subr.bf16.mxu0 %v972
  %1419 = vmatpush1.bf16.msra.mxu0 %v971
  %1420 = vmatprep.subr.bf16.mxu0 %v978
  %1421 = vmatpush1.bf16.msra.mxu0 %v977
  %1422 = vmatprep.subr.bf16.mxu0 %v984
  %1423 = vmatpush1.bf16.msra.mxu0 %v983
  %1424 = vmatprep.mubr.bf16.mxu0 %v24
  %1425 = vmatmul.mubr.bf16.gmra.mrb[0].mxu0 %v23
  %v1426 = vpop.f32.mrb[0].mxu0
  %v1427 = vadd.f32 %v1384, %v1426
  %v1428 = vpop.f32.mrb[0].mxu0
  %v1429 = vadd.f32 %v1386, %v1428
  %v1430 = vpop.f32.mrb[0].mxu0
  %v1431 = vadd.f32 %v1388, %v1430
  %v1432 = vpop.f32.mrb[0].mxu0
  %v1433 = vadd.f32 %v1390, %v1432
  %1434 = vdwg.mxu0
  %1435 = vst [vmem:[%s2] sm:$0xff] %v1255
  %1436 = vst [vmem:[%s2 + $0x8] sm:$0xff] %v1257
  %1437 = vst [vmem:[%s2 + $0x10] sm:$0xff] %v1341
  %1438 = vst [vmem:[%s2 + $0x18] sm:$0xff] %v1343
  %1439 = vst [vmem:[%s2 + $0x20] sm:$0xff] %v1427
  %1440 = vst [vmem:[%s2 + $0x28] sm:$0xff] %v1429
  %1441 = vst [vmem:[%s2 + $0x30] sm:$0xff] %v1259
  %1442 = vst [vmem:[%s2 + $0x38] sm:$0xff] %v1261
  %1443 = vst [vmem:[%s2 + $0x40] sm:$0xff] %v1345
  %1444 = vst [vmem:[%s2 + $0x48] sm:$0xff] %v1347
  %1445 = vst [vmem:[%s2 + $0x50] sm:$0xff] %v1431
  %1446 = vst [vmem:[%s2 + $0x58] sm:$0xff] %v1433
  %v1447 = vmul.f32 %v1255, %v1255
  %v1448 = vmul.f32 %v1257, %v1257
  %v1449 = vmul.f32 %v1341, %v1341
  %v1450 = vmul.f32 %v1259, %v1259
  %v1451 = vmul.f32 %v1261, %v1261
  %v1452 = vmul.f32 %v1345, %v1345
  %v1453 = vmul.f32 %v1343, %v1343
  %v1454 = vmul.f32 %v1427, %v1427
  %v1455 = vmul.f32 %v1429, %v1429
  %v1456 = vmul.f32 %v1347, %v1347
  %v1457 = vmul.f32 %v1431, %v1431
  %v1458 = vmul.f32 %v1433, %v1433
  %v1459 = vadd.f32 %v1447, %v1453
  %v1460 = vadd.f32 %v1448, %v1454
  %v1461 = vadd.f32 %v1449, %v1455
  %v1462 = vadd.f32 %v1450, %v1456
  %v1463 = vadd.f32 %v1451, %v1457
  %v1464 = vadd.f32 %v1452, %v1458
  %v1465 = vadd.f32 %v1459, 1e-08
  %v1466 = vadd.f32 %v1460, 1e-08
  %v1467 = vadd.f32 %v1461, 1e-08
  %v1468 = vadd.f32 %v1462, 1e-08
  %v1469 = vadd.f32 %v1463, 1e-08
  %v1470 = vadd.f32 %v1464, 1e-08
  %v1471 = vrsqrt.pop %v1465
  %v1472 = vmul.f32 %v1465, %v1471
  %vm1473 = vcmp.eq.f32.partialorder %v1465, inf
  %v1474 = vsel %vm1473, %v1465, %v1472
  %vm1475 = vcmp.eq.f32.partialorder %v1465, 0.0
  %v1476 = vand.u32 %v1465, 2147483648
  %v1477 = vsel %vm1475, %v1476, %v1474
  %v1478 = vrsqrt.pop %v1466
  %v1479 = vmul.f32 %v1466, %v1478
  %vm1480 = vcmp.eq.f32.partialorder %v1466, inf
  %v1481 = vsel %vm1480, %v1466, %v1479
  %vm1482 = vcmp.eq.f32.partialorder %v1466, 0.0
  %v1483 = vand.u32 %v1466, 2147483648
  %v1484 = vsel %vm1482, %v1483, %v1481
  %v1485 = vrsqrt.pop %v1467
  %v1486 = vmul.f32 %v1467, %v1485
  %vm1487 = vcmp.eq.f32.partialorder %v1467, inf
  %v1488 = vsel %vm1487, %v1467, %v1486
  %vm1489 = vcmp.eq.f32.partialorder %v1467, 0.0
  %v1490 = vand.u32 %v1467, 2147483648
  %v1491 = vsel %vm1489, %v1490, %v1488
  %v1492 = vrsqrt.pop %v1468
  %v1493 = vmul.f32 %v1468, %v1492
  %vm1494 = vcmp.eq.f32.partialorder %v1468, inf
  %v1495 = vsel %vm1494, %v1468, %v1493
  %vm1496 = vcmp.eq.f32.partialorder %v1468, 0.0
  %v1497 = vand.u32 %v1468, 2147483648
  %v1498 = vsel %vm1496, %v1497, %v1495
  %v1499 = vrsqrt.pop %v1469
  %v1500 = vmul.f32 %v1469, %v1499
  %vm1501 = vcmp.eq.f32.partialorder %v1469, inf
  %v1502 = vsel %vm1501, %v1469, %v1500
  %vm1503 = vcmp.eq.f32.partialorder %v1469, 0.0
  %v1504 = vand.u32 %v1469, 2147483648
  %v1505 = vsel %vm1503, %v1504, %v1502
  %v1506 = vrsqrt.pop %v1470
  %v1507 = vmul.f32 %v1470, %v1506
  %vm1508 = vcmp.eq.f32.partialorder %v1470, inf
  %v1509 = vsel %vm1508, %v1470, %v1507
  %vm1510 = vcmp.eq.f32.partialorder %v1470, 0.0
  %v1511 = vand.u32 %v1470, 2147483648
  %v1512 = vsel %vm1510, %v1511, %v1509
  %1513 = vst [vmem:[%s3] sm:$0xff] %v1477
  %1514 = vst [vmem:[%s3 + $0x8] sm:$0xff] %v1484
  %1515 = vst [vmem:[%s3 + $0x10] sm:$0xff] %v1491
  %1516 = vst [vmem:[%s3 + $0x18] sm:$0xff] %v1498
  %1517 = vst [vmem:[%s3 + $0x20] sm:$0xff] %v1505
  %1518 = vst [vmem:[%s3 + $0x28] sm:$0xff] %v1512
  // Predicated region
  $region10: #{generator_forward.4} parent=0 // pred_check
    _
  $region11: #{generator_forward.4} parent=0 // pred_check_branch
    %1520 = sbr.rel (0) target = $region13
  $region12: #{generator_forward.4} parent=0 // pred_region
    _
  $region13: #{generator_forward.4} parent=0 // pred_fallthru
    _
  // Predicated region
  $region14: #{generator_forward.4} parent=0 // pred_check
    _
  $region15: #{generator_forward.4} parent=0 // pred_check_branch
    %1522 = sbr.rel (0) target = $region17
  $region16: #{generator_forward.4} parent=0 // pred_region
    _
  $region17: #{generator_forward.4} parent=0 // pred_fallthru
    _
  // Predicated region
  $region18: #{generator_forward.4} parent=0 // pred_check
    _
  $region19: #{generator_forward.4} parent=0 // pred_check_branch
    %1524 = sbr.rel (0) target = $region21
  $region20: #{generator_forward.4} parent=0 // pred_region
    _
  $region21: #{generator_forward.4} parent=0 // pred_fallthru
    _
  // Predicated region
  $region22: #{generator_forward.4} parent=0 // pred_check
    _
  $region23: #{generator_forward.4} parent=0 // pred_check_branch
    %1526 = sbr.rel (0) target = $region25
  $region24: #{generator_forward.4} parent=0 // pred_region
    _
  $region25: #{generator_forward.4} parent=0 // pred_fallthru
    _

// kernel: generator_forward.6
$region0: #{generator_forward.6}
  #allocation0 [shape = 'u32[]', space=smem, size = 0x4, offset = 0x4, fixed_abs, tag = 'smem constant byte address 0x4 - core index']
  #allocation1 [shape = 'u32[144,128]{1,0:T(1,128)}', space=vmem, size = 0x12000, scoped, tag = 'internal scratch']
  #allocation2 [shape = 'f32[8,2,1024]{2,1,0:T(2,128)}', space=vmem, size = 0x10000, scoped, tag = 'scratch operand']
  %s0 = inlined_call_operand.vmem [shape: f32[8,2,512], index: 0, kind: input, shape index: {}]
  %s1 = inlined_call_operand.vmem [shape: bf16[2,512,1024], index: 1, kind: input, shape index: {}]
  %s2 = inlined_call_operand.vmem [shape: f32[2,256,1024], index: 2, kind: input, shape index: {}]
  %s3 = inlined_call_operand.vmem [shape: f32[2,1,1024], index: 3, kind: input, shape index: {}]
  %s4 = inlined_call_operand.vmem [shape: f32[8,2,512], index: 4, kind: output, shape index: {}]
  %s5 = sld [smem:[#allocation0]]
  $region93: #{generator_forward.6} parent=0
    _
  %s7 = ssub.s32 1, %s5
  %s8 = scalar_select 0, %s7, %s5
  $region1: #{generator_forward.6} parent=0
    #allocation3 [shape = 'u8[32768]{0}', space=vmem, size = 0x8000, scoped, tag = 'output window, operand 0']
    loop: start=0, step=1, limit=4
    $region2: #{generator_forward.6} parent=1 // loop_pre_header
      _
    $region3: #{generator_forward.6} parent=1 // loop_header
      %s10 = sphi 0, %s14
      %p11 = scmp.ge.s32.totalorder %s10, 4
      %s18 = sphi 0, %s18
      %s20 = sphi 0, %s18
      %s21 = sphi 0, %s20
      %s35 = sphi 0, %s21
      %s41 = sphi 0, %s43
      %s44 = sphi 0, %s41
      %s45 = sphi 0, %s44
      %s61 = sphi 0, %s45
      %s67 = sphi 0, %s69
      %s70 = sphi 0, %s67
      %s71 = sphi 0, %s70
      %s87 = sphi 0, %s71
      %s93 = sphi 0, %s95
      %s96 = sphi 0, %s93
      %s97 = sphi 0, %s96
      %s113 = sphi 0, %s97
      %s119 = sphi 0, %s121
      %s122 = sphi 0, %s119
      %s123 = sphi 0, %s122
      %s139 = sphi 0, %s123
    $region4: #{generator_forward.6} parent=1 // loop_header_branch
      %13 = sbr.rel (%p11) target = $region8
    $region5: #{generator_forward.6} parent=1 // loop_body
      %s15 = ssub.s32 %s10, 1
      %s16 = ssub.s32 %s10, 2
      %s17 = sadd.s32 %s10, 1
      %s19 = sadd.s32 %s18, 1
      %p22 = scmp.eq.s32.totalorder %s10, 1
      %p23 = scmp.ne.s32.totalorder %s18, %s20
      %p24 = scmp.eq.s32.totalorder %s10, 0
      %p25 = por %p23, %p24
      %p26 = scmp.ne.s32.totalorder %s18, %s20
      %p27 = scmp.eq.s32.totalorder %s15, 1
      %p28 = por %p26, %p27
      %p29 = scmp.ne.s32.totalorder %s20, %s21
      %p30 = scmp.eq.s32.totalorder %s15, 0
      %p31 = por %p29, %p30
      %p32 = scmp.ne.s32.totalorder %s20, %s21
      %p33 = scmp.eq.s32.totalorder %s16, 1
      %p34 = por %p32, %p33
      %p36 = scmp.ne.s32.totalorder %s21, %s35
      %p37 = scmp.eq.s32.totalorder %s16, 0
      %p38 = por %p36, %p37
      %s39 = ssub.s32 %s10, %s17
      %p40 = scmp.eq.s32.totalorder %s39, 0
      %s42 = sadd.s32 %s41, 1
      %s43 = scalar_select %p40, %s41, %s42
      %p46 = pneg %p40
      %p47 = scmp.eq.s32.totalorder %s10, 1
      %p48 = por %p46, %p47
      %p49 = scmp.ne.s32.totalorder %s41, %s44
      %p50 = scmp.eq.s32.totalorder %s10, 0
      %p51 = por %p49, %p50
      %p52 = scmp.ne.s32.totalorder %s41, %s44
      %p53 = scmp.eq.s32.totalorder %s15, 1
      %p54 = por %p52, %p53
      %p55 = scmp.ne.s32.totalorder %s44, %s45
      %p56 = scmp.eq.s32.totalorder %s15, 0
      %p57 = por %p55, %p56
      %p58 = scmp.ne.s32.totalorder %s44, %s45
      %p59 = scmp.eq.s32.totalorder %s16, 1
      %p60 = por %p58, %p59
      %p62 = scmp.ne.s32.totalorder %s45, %s61
      %p63 = scmp.eq.s32.totalorder %s16, 0
      %p64 = por %p62, %p63
      %s65 = ssub.s32 %s10, %s17
      %p66 = scmp.eq.s32.totalorder %s65, 0
      %s68 = sadd.s32 %s67, 1
      %s69 = scalar_select %p66, %s67, %s68
      %p72 = pneg %p66
      %p73 = scmp.eq.s32.totalorder %s10, 1
      %p74 = por %p72, %p73
      %p75 = scmp.ne.s32.totalorder %s67, %s70
      %p76 = scmp.eq.s32.totalorder %s10, 0
      %p77 = por %p75, %p76
      %p78 = scmp.ne.s32.totalorder %s67, %s70
      %p79 = scmp.eq.s32.totalorder %s15, 1
      %p80 = por %p78, %p79
      %p81 = scmp.ne.s32.totalorder %s70, %s71
      %p82 = scmp.eq.s32.totalorder %s15, 0
      %p83 = por %p81, %p82
      %p84 = scmp.ne.s32.totalorder %s70, %s71
      %p85 = scmp.eq.s32.totalorder %s16, 1
      %p86 = por %p84, %p85
      %p88 = scmp.ne.s32.totalorder %s71, %s87
      %p89 = scmp.eq.s32.totalorder %s16, 0
      %p90 = por %p88, %p89
      %s91 = ssub.s32 %s10, %s17
      %p92 = scmp.eq.s32.totalorder %s91, 0
      %s94 = sadd.s32 %s93, 1
      %s95 = scalar_select %p92, %s93, %s94
      %p98 = pneg %p92
      %p99 = scmp.eq.s32.totalorder %s10, 1
      %p100 = por %p98, %p99
      %p101 = scmp.ne.s32.totalorder %s93, %s96
      %p102 = scmp.eq.s32.totalorder %s10, 0
      %p103 = por %p101, %p102
      %p104 = scmp.ne.s32.totalorder %s93, %s96
      %p105 = scmp.eq.s32.totalorder %s15, 1
      %p106 = por %p104, %p105
      %p107 = scmp.ne.s32.totalorder %s96, %s97
      %p108 = scmp.eq.s32.totalorder %s15, 0
      %p109 = por %p107, %p108
      %p110 = scmp.ne.s32.totalorder %s96, %s97
      %p111 = scmp.eq.s32.totalorder %s16, 1
      %p112 = por %p110, %p111
      %p114 = scmp.ne.s32.totalorder %s97, %s113
      %p115 = scmp.eq.s32.totalorder %s16, 0
      %p116 = por %p114, %p115
      %s117 = ssub.s32 %s10, %s17
      %p118 = scmp.eq.s32.totalorder %s117, 0
      %s120 = sadd.s32 %s119, 1
      %s121 = scalar_select %p118, %s119, %s120
      %p124 = pneg %p118
      %p125 = scmp.eq.s32.totalorder %s10, 1
      %p126 = por %p124, %p125
      %p127 = scmp.ne.s32.totalorder %s119, %s122
      %p128 = scmp.eq.s32.totalorder %s10, 0
      %p129 = por %p127, %p128
      %p130 = scmp.ne.s32.totalorder %s119, %s122
      %p131 = scmp.eq.s32.totalorder %s15, 1
      %p132 = por %p130, %p131
      %p133 = scmp.ne.s32.totalorder %s122, %s123
      %p134 = scmp.eq.s32.totalorder %s15, 0
      %p135 = por %p133, %p134
      %p136 = scmp.ne.s32.totalorder %s122, %s123
      %p137 = scmp.eq.s32.totalorder %s16, 1
      %p138 = por %p136, %p137
      %p140 = scmp.ne.s32.totalorder %s123, %s139
      %p141 = scmp.eq.s32.totalorder %s16, 0
      %p142 = por %p140, %p141
      %p143 = scmp.le.s32.totalorder 1, %s10
      %p144 = scmp.lt.s32.totalorder %s10, 3
      %p145 = pnand %p143, %p144
      %p146 = pneg %p145
      // Predicated region
      $region9: #{generator_forward.6} parent=5 // pred_check
        _
      $region10: #{generator_forward.6} parent=5 // pred_check_branch
        %148 = sbr.rel (%p145) target = $region12
      $region11: #{generator_forward.6} parent=5 // pred_region
        %s149 = ssub.s32 %s10, 1
        // Predicated region
        $region13: #{generator_forward.6} parent=11 // pred_check
          %p150 = pneg %p31
        $region14: #{generator_forward.6} parent=11 // pred_check_branch
          %152 = sbr.rel (%p150) target = $region16
        $region15: #{generator_forward.6} parent=11 // pred_region
          _
        $region16: #{generator_forward.6} parent=11 // pred_fallthru
          _
      $region12: #{generator_forward.6} parent=5 // pred_fallthru
        _
      %p153 = scmp.lt.s32.totalorder %s10, 2
      // Predicated region
      $region17: #{generator_forward.6} parent=5 // pred_check
        %p154 = pneg %p153
      $region18: #{generator_forward.6} parent=5 // pred_check_branch
        %156 = sbr.rel (%p154) target = $region20
      $region19: #{generator_forward.6} parent=5 // pred_region
        // Predicated region
        $region21: #{generator_forward.6} parent=19 // pred_check
          %p157 = pneg %p51
        $region22: #{generator_forward.6} parent=19 // pred_check_branch
          %159 = sbr.rel (%p157) target = $region24
        $region23: #{generator_forward.6} parent=19 // pred_region
          %p160 = scmp.lt.s32.totalorder %s10, 1
          %s161 = scalar_select %p160, %s10, 1
          %s162 = smul.addr %s161, 512
          %s163 = smul.addr %s162, 4
          %s164 = scalar_lea.vmem %s1, %s163
        $region24: #{generator_forward.6} parent=19 // pred_fallthru
          _
        // Predicated region
        $region25: #{generator_forward.6} parent=19 // pred_check
          %p165 = pneg %p77
        $region26: #{generator_forward.6} parent=19 // pred_check_branch
          %167 = sbr.rel (%p165) target = $region28
        $region27: #{generator_forward.6} parent=19 // pred_region
          %p168 = scmp.lt.s32.totalorder %s10, 1
          %s169 = scalar_select %p168, %s10, 1
          %s170 = smul.addr %s169, 256
          %s171 = smul.addr %s170, 8
          %s172 = scalar_lea.vmem %s2, %s171
        $region28: #{generator_forward.6} parent=19 // pred_fallthru
          _
        // Predicated region
        $region29: #{generator_forward.6} parent=19 // pred_check
          %p173 = pneg %p103
        $region30: #{generator_forward.6} parent=19 // pred_check_branch
          %175 = sbr.rel (%p173) target = $region32
        $region31: #{generator_forward.6} parent=19 // pred_region
          %p176 = scmp.lt.s32.totalorder %s10, 1
          %s177 = scalar_select %p176, %s10, 1
          %s178 = smul.addr %s177, 8
          %s179 = scalar_lea.vmem %s3, %s178
        $region32: #{generator_forward.6} parent=19 // pred_fallthru
          _
      $region20: #{generator_forward.6} parent=5 // pred_fallthru
        _
      %p180 = scmp.le.s32.totalorder 1, %s10
      %p181 = scmp.lt.s32.totalorder %s10, 3
      %p182 = pnand %p180, %p181
      %p183 = pneg %p182
      // Predicated region
      $region33: #{generator_forward.6} parent=5 // pred_check
        _
      $region34: #{generator_forward.6} parent=5 // pred_check_branch
        %185 = sbr.rel (%p182) target = $region36
      $region35: #{generator_forward.6} parent=5 // pred_region
        %s186 = ssub.s32 %s10, 1
        %p187 = pneg %p31
        %p188 = pneg %p28
        %p189 = scmp.lt.s32.totalorder %s15, 1
        %s190 = scalar_select %p189, %s15, 1
        %s191 = smul.addr %s190, 512
        %s192 = smul.addr %s191, 4
        %s193 = scalar_lea.vmem %s1, %s192
        %p194 = pneg %p57
        %p195 = pneg %p54
        %p196 = scmp.lt.s32.totalorder %s15, 1
        %s197 = scalar_select %p196, %s15, 1
        %s198 = smul.addr %s197, 256
        %s199 = smul.addr %s198, 8
        %s200 = scalar_lea.vmem %s2, %s199
        %p201 = pneg %p83
        %p202 = pneg %p80
        %p203 = scmp.lt.s32.totalorder %s15, 1
        %s204 = scalar_select %p203, %s15, 1
        %s205 = smul.addr %s204, 8
        %s206 = scalar_lea.vmem %s3, %s205
        %p207 = pneg %p109
        %p208 = pneg %p106
        %p209 = pneg %p135
        %p210 = pneg %p132
        %s211 = sand.u32 %s122, 1
        %s212 = sand.u32 %s122, 1
        %s213 = smul.addr %s212, 32
        %s214 = scalar_lea.vmem [#allocation3], %s213
        %p215 = scmp.lt.s32.totalorder %s15, 1
        %s216 = scalar_select %p215, %s15, 1
        %s217 = smul.addr %s216, 512
        %s218 = smul.addr %s217, 4
        %s219 = scalar_lea.vmem %s1, %s218
        %p220 = scmp.lt.s32.totalorder %s15, 1
        %s221 = scalar_select %p220, %s15, 1
        %s222 = smul.addr %s221, 256
        %s223 = smul.addr %s222, 8
        %s224 = scalar_lea.vmem %s2, %s223
        %p225 = scmp.lt.s32.totalorder %s15, 1
        %s226 = scalar_select %p225, %s15, 1
        %s227 = smul.addr %s226, 8
        %s228 = scalar_lea.vmem %s3, %s227
        %s229 = smul.u32 2, %s15
        %v230 = vld [vmem:[%s0] sm:$0xff]
        %v231 = vld [vmem:[%s0 + $0x8] sm:$0xff]
        %v232 = vld [vmem:[%s0 + $0x10] sm:$0xff]
        %v233 = vld [vmem:[%s0 + $0x18] sm:$0xff]
        %v234 = vld [vmem:[%s0 + $0x20] sm:$0xff]
        %v235 = vld [vmem:[%s0 + $0x28] sm:$0xff]
        %v236 = vld [vmem:[%s0 + $0x30] sm:$0xff]
        %v237 = vld [vmem:[%s0 + $0x38] sm:$0xff]
        %v246 = vcombine.high %v230, %v230
        %v248 = vunpack.c.l.s4 1983009808
        %v249 = vunpack.c.0.s8 %v248
        %v250 = vlaneseq
        %v251 = vshrl.u32 %v250, 7
        %v252 = vsub.s32 %v249, %v251
        %v253 = vrot.slane %v230, %v252
        %v255 = vunpack.c.l.s4 1983009808
        %v256 = vunpack.c.0.s8 %v255
        %v257 = vlaneseq
        %v258 = vshrl.u32 %v257, 7
        %v259 = vsub.s32 %v256, %v258
        %v260 = vrot.slane %v246, %v259
        %v261 = vcombine.high %v253, %v253
        %v262 = vcombine.high %v260, %v260
        %v263 = vcombine.high %v231, %v231
        %v265 = vunpack.c.l.s4 1983009808
        %v266 = vunpack.c.0.s8 %v265
        %v267 = vlaneseq
        %v268 = vshrl.u32 %v267, 7
        %v269 = vsub.s32 %v266, %v268
        %v270 = vrot.slane %v231, %v269
        %v272 = vunpack.c.l.s4 1983009808
        %v273 = vunpack.c.0.s8 %v272
        %v274 = vlaneseq
        %v275 = vshrl.u32 %v274, 7
        %v276 = vsub.s32 %v273, %v275
        %v277 = vrot.slane %v263, %v276
        %v278 = vcombine.high %v270, %v270
        %v279 = vcombine.high %v277, %v277
        %v280 = vcombine.high %v232, %v232
        %v282 = vunpack.c.l.s4 1983009808
        %v283 = vunpack.c.0.s8 %v282
        %v284 = vlaneseq
        %v285 = vshrl.u32 %v284, 7
        %v286 = vsub.s32 %v283, %v285
        %v287 = vrot.slane %v232, %v286
        %v289 = vunpack.c.l.s4 1983009808
        %v290 = vunpack.c.0.s8 %v289
        %v291 = vlaneseq
        %v292 = vshrl.u32 %v291, 7
        %v293 = vsub.s32 %v290, %v292
        %v294 = vrot.slane %v280, %v293
        %v295 = vcombine.high %v287, %v287
        %v296 = vcombine.high %v294, %v294
        %v297 = vcombine.high %v233, %v233
        %v299 = vunpack.c.l.s4 1983009808
        %v300 = vunpack.c.0.s8 %v299
        %v301 = vlaneseq
        %v302 = vshrl.u32 %v301, 7
        %v303 = vsub.s32 %v300, %v302
        %v304 = vrot.slane %v233, %v303
        %v306 = vunpack.c.l.s4 1983009808
        %v307 = vunpack.c.0.s8 %v306
        %v308 = vlaneseq
        %v309 = vshrl.u32 %v308, 7
        %v310 = vsub.s32 %v307, %v309
        %v311 = vrot.slane %v297, %v310
        %v312 = vcombine.high %v304, %v304
        %v313 = vcombine.high %v311, %v311
        %v314 = vcombine.high %v234, %v234
        %v316 = vunpack.c.l.s4 1983009808
        %v317 = vunpack.c.0.s8 %v316
        %v318 = vlaneseq
        %v319 = vshrl.u32 %v318, 7
        %v320 = vsub.s32 %v317, %v319
        %v321 = vrot.slane %v234, %v320
        %v323 = vunpack.c.l.s4 1983009808
        %v324 = vunpack.c.0.s8 %v323
        %v325 = vlaneseq
        %v326 = vshrl.u32 %v325, 7
        %v327 = vsub.s32 %v324, %v326
        %v328 = vrot.slane %v314, %v327
        %v329 = vcombine.high %v321, %v321
        %v330 = vcombine.high %v328, %v328
        %v331 = vcombine.high %v235, %v235
        %v333 = vunpack.c.l.s4 1983009808
        %v334 = vunpack.c.0.s8 %v333
        %v335 = vlaneseq
        %v336 = vshrl.u32 %v335, 7
        %v337 = vsub.s32 %v334, %v336
        %v338 = vrot.slane %v235, %v337
        %v340 = vunpack.c.l.s4 1983009808
        %v341 = vunpack.c.0.s8 %v340
        %v342 = vlaneseq
        %v343 = vshrl.u32 %v342, 7
        %v344 = vsub.s32 %v341, %v343
        %v345 = vrot.slane %v331, %v344
        %v346 = vcombine.high %v338, %v338
        %v347 = vcombine.high %v345, %v345
        %v348 = vcombine.high %v236, %v236
        %v350 = vunpack.c.l.s4 1983009808
        %v351 = vunpack.c.0.s8 %v350
        %v352 = vlaneseq
        %v353 = vshrl.u32 %v352, 7
        %v354 = vsub.s32 %v351, %v353
        %v355 = vrot.slane %v236, %v354
        %v357 = vunpack.c.l.s4 1983009808
        %v358 = vunpack.c.0.s8 %v357
        %v359 = vlaneseq
        %v360 = vshrl.u32 %v359, 7
        %v361 = vsub.s32 %v358, %v360
        %v362 = vrot.slane %v348, %v361
        %v363 = vcombine.high %v355, %v355
        %v364 = vcombine.high %v362, %v362
        %v365 = vcombine.high %v237, %v237
        %v367 = vunpack.c.l.s4 1983009808
        %v368 = vunpack.c.0.s8 %v367
        %v369 = vlaneseq
        %v370 = vshrl.u32 %v369, 7
        %v371 = vsub.s32 %v368, %v370
        %v372 = vrot.slane %v237, %v371
        %v374 = vunpack.c.l.s4 1983009808
        %v375 = vunpack.c.0.s8 %v374
        %v376 = vlaneseq
        %v377 = vshrl.u32 %v376, 7
        %v378 = vsub.s32 %v375, %v377
        %v379 = vrot.slane %v365, %v378
        %v380 = vcombine.high %v372, %v372
        %v381 = vcombine.high %v379, %v379
        %v414 = vpack.c.bf16 %v253, %v253
        %v415 = vpack.c.bf16 %v261, %v261
        %v416 = vpack.c.bf16 %v260, %v260
        %v417 = vpack.c.bf16 %v262, %v262
        %v418 = vpack.c.bf16 %v270, %v270
        %v419 = vpack.c.bf16 %v278, %v278
        %v420 = vpack.c.bf16 %v277, %v277
        %v421 = vpack.c.bf16 %v279, %v279
        %v422 = vpack.c.bf16 %v287, %v287
        %v423 = vpack.c.bf16 %v295, %v295
        %v424 = vpack.c.bf16 %v294, %v294
        %v425 = vpack.c.bf16 %v296, %v296
        %v426 = vpack.c.bf16 %v304, %v304
        %v427 = vpack.c.bf16 %v312, %v312
        %v428 = vpack.c.bf16 %v311, %v311
        %v429 = vpack.c.bf16 %v313, %v313
        %v430 = vpack.c.bf16 %v321, %v321
        %v431 = vpack.c.bf16 %v329, %v329
        %v432 = vpack.c.bf16 %v328, %v328
        %v433 = vpack.c.bf16 %v330, %v330
        %v434 = vpack.c.bf16 %v338, %v338
        %v435 = vpack.c.bf16 %v346, %v346
        %v436 = vpack.c.bf16 %v345, %v345
        %v437 = vpack.c.bf16 %v347, %v347
        %v438 = vpack.c.bf16 %v355, %v355
        %v439 = vpack.c.bf16 %v363, %v363
        %v440 = vpack.c.bf16 %v362, %v362
        %v441 = vpack.c.bf16 %v364, %v364
        %v442 = vpack.c.bf16 %v372, %v372
        %v443 = vpack.c.bf16 %v380, %v380
        %v444 = vpack.c.bf16 %v379, %v379
        %v445 = vpack.c.bf16 %v381, %v381
        %v446 = vld [vmem:[%s219] sm:$0xff]
        %v447 = vld [vmem:[%s219 + $0x8] sm:$0xff]
        %v448 = vld [vmem:[%s219 + $0x10] sm:$0xff]
        %v449 = vld [vmem:[%s219 + $0x18] sm:$0xff]
        %v450 = vld [vmem:[%s219 + $0x20] sm:$0xff]
        %v451 = vld [vmem:[%s219 + $0x28] sm:$0xff]
        %v452 = vld [vmem:[%s219 + $0x30] sm:$0xff]
        %v453 = vld [vmem:[%s219 + $0x38] sm:$0xff]
        %v454 = vld [vmem:[%s219 + $0x40] sm:$0xff]
        %v455 = vld [vmem:[%s219 + $0x48] sm:$0xff]
        %v456 = vld [vmem:[%s219 + $0x50] sm:$0xff]
        %v457 = vld [vmem:[%s219 + $0x58] sm:$0xff]
        %v458 = vld [vmem:[%s219 + $0x60] sm:$0xff]
        %v459 = vld [vmem:[%s219 + $0x68] sm:$0xff]
        %v460 = vld [vmem:[%s219 + $0x70] sm:$0xff]
        %v461 = vld [vmem:[%s219 + $0x78] sm:$0xff]
        %v462 = vld [vmem:[%s219 + $0x80] sm:$0xff]
        %v463 = vld [vmem:[%s219 + $0x88] sm:$0xff]
        %v464 = vld [vmem:[%s219 + $0x90] sm:$0xff]
        %v465 = vld [vmem:[%s219 + $0x98] sm:$0xff]
        %v466 = vld [vmem:[%s219 + $0xa0] sm:$0xff]
        %v467 = vld [vmem:[%s219 + $0xa8] sm:$0xff]
        %v468 = vld [vmem:[%s219 + $0xb0] sm:$0xff]
        %v469 = vld [vmem:[%s219 + $0xb8] sm:$0xff]
        %v470 = vld [vmem:[%s219 + $0xc0] sm:$0xff]
        %v471 = vld [vmem:[%s219 + $0xc8] sm:$0xff]
        %v472 = vld [vmem:[%s219 + $0xd0] sm:$0xff]
        %v473 = vld [vmem:[%s219 + $0xd8] sm:$0xff]
        %v474 = vld [vmem:[%s219 + $0xe0] sm:$0xff]
        %v475 = vld [vmem:[%s219 + $0xe8] sm:$0xff]
        %v476 = vld [vmem:[%s219 + $0xf0] sm:$0xff]
        %v477 = vld [vmem:[%s219 + $0xf8] sm:$0xff]
        %v478 = vld [vmem:[%s219 + $0x100] sm:$0xff]
        %v479 = vld [vmem:[%s219 + $0x108] sm:$0xff]
        %v480 = vld [vmem:[%s219 + $0x110] sm:$0xff]
        %v481 = vld [vmem:[%s219 + $0x118] sm:$0xff]
        %v482 = vld [vmem:[%s219 + $0x120] sm:$0xff]
        %v483 = vld [vmem:[%s219 + $0x128] sm:$0xff]
        %v484 = vld [vmem:[%s219 + $0x130] sm:$0xff]
        %v485 = vld [vmem:[%s219 + $0x138] sm:$0xff]
        %v486 = vld [vmem:[%s219 + $0x140] sm:$0xff]
        %v487 = vld [vmem:[%s219 + $0x148] sm:$0xff]
        %v488 = vld [vmem:[%s219 + $0x150] sm:$0xff]
        %v489 = vld [vmem:[%s219 + $0x158] sm:$0xff]
        %v490 = vld [vmem:[%s219 + $0x160] sm:$0xff]
        %v491 = vld [vmem:[%s219 + $0x168] sm:$0xff]
        %v492 = vld [vmem:[%s219 + $0x170] sm:$0xff]
        %v493 = vld [vmem:[%s219 + $0x178] sm:$0xff]
        %v494 = vld [vmem:[%s219 + $0x180] sm:$0xff]
        %v495 = vld [vmem:[%s219 + $0x188] sm:$0xff]
        %v496 = vld [vmem:[%s219 + $0x190] sm:$0xff]
        %v497 = vld [vmem:[%s219 + $0x198] sm:$0xff]
        %v498 = vld [vmem:[%s219 + $0x1a0] sm:$0xff]
        %v499 = vld [vmem:[%s219 + $0x1a8] sm:$0xff]
        %v500 = vld [vmem:[%s219 + $0x1b0] sm:$0xff]
        %v501 = vld [vmem:[%s219 + $0x1b8] sm:$0xff]
        %v502 = vld [vmem:[%s219 + $0x1c0] sm:$0xff]
        %v503 = vld [vmem:[%s219 + $0x1c8] sm:$0xff]
        %v504 = vld [vmem:[%s219 + $0x1d0] sm:$0xff]
        %v505 = vld [vmem:[%s219 + $0x1d8] sm:$0xff]
        %v506 = vld [vmem:[%s219 + $0x1e0] sm:$0xff]
        %v507 = vld [vmem:[%s219 + $0x1e8] sm:$0xff]
        %v508 = vld [vmem:[%s219 + $0x1f0] sm:$0xff]
        %v509 = vld [vmem:[%s219 + $0x1f8] sm:$0xff]
        %v510 = vld [vmem:[%s219 + $0x200] sm:$0xff]
        %v511 = vld [vmem:[%s219 + $0x208] sm:$0xff]
        %v512 = vld [vmem:[%s219 + $0x210] sm:$0xff]
        %v513 = vld [vmem:[%s219 + $0x218] sm:$0xff]
        %v514 = vld [vmem:[%s219 + $0x220] sm:$0xff]
        %v515 = vld [vmem:[%s219 + $0x228] sm:$0xff]
        %v516 = vld [vmem:[%s219 + $0x230] sm:$0xff]
        %v517 = vld [vmem:[%s219 + $0x238] sm:$0xff]
        %v518 = vld [vmem:[%s219 + $0x240] sm:$0xff]
        %v519 = vld [vmem:[%s219 + $0x248] sm:$0xff]
        %v520 = vld [vmem:[%s219 + $0x250] sm:$0xff]
        %v521 = vld [vmem:[%s219 + $0x258] sm:$0xff]
        %v522 = vld [vmem:[%s219 + $0x260] sm:$0xff]
        %v523 = vld [vmem:[%s219 + $0x268] sm:$0xff]
        %v524 = vld [vmem:[%s219 + $0x270] sm:$0xff]
        %v525 = vld [vmem:[%s219 + $0x278] sm:$0xff]
        %v526 = vld [vmem:[%s219 + $0x280] sm:$0xff]
        %v527 = vld [vmem:[%s219 + $0x288] sm:$0xff]
        %v528 = vld [vmem:[%s219 + $0x290] sm:$0xff]
        %v529 = vld [vmem:[%s219 + $0x298] sm:$0xff]
        %v530 = vld [vmem:[%s219 + $0x2a0] sm:$0xff]
        %v531 = vld [vmem:[%s219 + $0x2a8] sm:$0xff]
        %v532 = vld [vmem:[%s219 + $0x2b0] sm:$0xff]
        %v533 = vld [vmem:[%s219 + $0x2b8] sm:$0xff]
        %v534 = vld [vmem:[%s219 + $0x2c0] sm:$0xff]
        %v535 = vld [vmem:[%s219 + $0x2c8] sm:$0xff]
        %v536 = vld [vmem:[%s219 + $0x2d0] sm:$0xff]
        %v537 = vld [vmem:[%s219 + $0x2d8] sm:$0xff]
        %v538 = vld [vmem:[%s219 + $0x2e0] sm:$0xff]
        %v539 = vld [vmem:[%s219 + $0x2e8] sm:$0xff]
        %v540 = vld [vmem:[%s219 + $0x2f0] sm:$0xff]
        %v541 = vld [vmem:[%s219 + $0x2f8] sm:$0xff]
        %v542 = vld [vmem:[%s219 + $0x300] sm:$0xff]
        %v543 = vld [vmem:[%s219 + $0x308] sm:$0xff]
        %v544 = vld [vmem:[%s219 + $0x310] sm:$0xff]
        %v545 = vld [vmem:[%s219 + $0x318] sm:$0xff]
        %v546 = vld [vmem:[%s219 + $0x320] sm:$0xff]
        %v547 = vld [vmem:[%s219 + $0x328] sm:$0xff]
        %v548 = vld [vmem:[%s219 + $0x330] sm:$0xff]
        %v549 = vld [vmem:[%s219 + $0x338] sm:$0xff]
        %v550 = vld [vmem:[%s219 + $0x340] sm:$0xff]
        %v551 = vld [vmem:[%s219 + $0x348] sm:$0xff]
        %v552 = vld [vmem:[%s219 + $0x350] sm:$0xff]
        %v553 = vld [vmem:[%s219 + $0x358] sm:$0xff]
        %v554 = vld [vmem:[%s219 + $0x360] sm:$0xff]
        %v555 = vld [vmem:[%s219 + $0x368] sm:$0xff]
        %v556 = vld [vmem:[%s219 + $0x370] sm:$0xff]
        %v557 = vld [vmem:[%s219 + $0x378] sm:$0xff]
        %v558 = vld [vmem:[%s219 + $0x380] sm:$0xff]
        %v559 = vld [vmem:[%s219 + $0x388] sm:$0xff]
        %v560 = vld [vmem:[%s219 + $0x390] sm:$0xff]
        %v561 = vld [vmem:[%s219 + $0x398] sm:$0xff]
        %v562 = vld [vmem:[%s219 + $0x3a0] sm:$0xff]
        %v563 = vld [vmem:[%s219 + $0x3a8] sm:$0xff]
        %v564 = vld [vmem:[%s219 + $0x3b0] sm:$0xff]
        %v565 = vld [vmem:[%s219 + $0x3b8] sm:$0xff]
        %v566 = vld [vmem:[%s219 + $0x3c0] sm:$0xff]
        %v567 = vld [vmem:[%s219 + $0x3c8] sm:$0xff]
        %v568 = vld [vmem:[%s219 + $0x3d0] sm:$0xff]
        %v569 = vld [vmem:[%s219 + $0x3d8] sm:$0xff]
        %v570 = vld [vmem:[%s219 + $0x3e0] sm:$0xff]
        %v571 = vld [vmem:[%s219 + $0x3e8] sm:$0xff]
        %v572 = vld [vmem:[%s219 + $0x3f0] sm:$0xff]
        %v573 = vld [vmem:[%s219 + $0x3f8] sm:$0xff]
        %v574 = vld [vmem:[%s219 + $0x400] sm:$0xff]
        %v575 = vld [vmem:[%s219 + $0x408] sm:$0xff]
        %v576 = vld [vmem:[%s219 + $0x410] sm:$0xff]
        %v577 = vld [vmem:[%s219 + $0x418] sm:$0xff]
        %v578 = vld [vmem:[%s219 + $0x420] sm:$0xff]
        %v579 = vld [vmem:[%s219 + $0x428] sm:$0xff]
        %v580 = vld [vmem:[%s219 + $0x430] sm:$0xff]
        %v581 = vld [vmem:[%s219 + $0x438] sm:$0xff]
        %v582 = vld [vmem:[%s219 + $0x440] sm:$0xff]
        %v583 = vld [vmem:[%s219 + $0x448] sm:$0xff]
        %v584 = vld [vmem:[%s219 + $0x450] sm:$0xff]
        %v585 = vld [vmem:[%s219 + $0x458] sm:$0xff]
        %v586 = vld [vmem:[%s219 + $0x460] sm:$0xff]
        %v587 = vld [vmem:[%s219 + $0x468] sm:$0xff]
        %v588 = vld [vmem:[%s219 + $0x470] sm:$0xff]
        %v589 = vld [vmem:[%s219 + $0x478] sm:$0xff]
        %v590 = vld [vmem:[%s219 + $0x480] sm:$0xff]
        %v591 = vld [vmem:[%s219 + $0x488] sm:$0xff]
        %v592 = vld [vmem:[%s219 + $0x490] sm:$0xff]
        %v593 = vld [vmem:[%s219 + $0x498] sm:$0xff]
        %v594 = vld [vmem:[%s219 + $0x4a0] sm:$0xff]
        %v595 = vld [vmem:[%s219 + $0x4a8] sm:$0xff]
        %v596 = vld [vmem:[%s219 + $0x4b0] sm:$0xff]
        %v597 = vld [vmem:[%s219 + $0x4b8] sm:$0xff]
        %v598 = vld [vmem:[%s219 + $0x4c0] sm:$0xff]
        %v599 = vld [vmem:[%s219 + $0x4c8] sm:$0xff]
        %v600 = vld [vmem:[%s219 + $0x4d0] sm:$0xff]
        %v601 = vld [vmem:[%s219 + $0x4d8] sm:$0xff]
        %v602 = vld [vmem:[%s219 + $0x4e0] sm:$0xff]
        %v603 = vld [vmem:[%s219 + $0x4e8] sm:$0xff]
        %v604 = vld [vmem:[%s219 + $0x4f0] sm:$0xff]
        %v605 = vld [vmem:[%s219 + $0x4f8] sm:$0xff]
        %v606 = vld [vmem:[%s219 + $0x500] sm:$0xff]
        %v607 = vld [vmem:[%s219 + $0x508] sm:$0xff]
        %v608 = vld [vmem:[%s219 + $0x510] sm:$0xff]
        %v609 = vld [vmem:[%s219 + $0x518] sm:$0xff]
        %v610 = vld [vmem:[%s219 + $0x520] sm:$0xff]
        %v611 = vld [vmem:[%s219 + $0x528] sm:$0xff]
        %v612 = vld [vmem:[%s219 + $0x530] sm:$0xff]
        %v613 = vld [vmem:[%s219 + $0x538] sm:$0xff]
        %v614 = vld [vmem:[%s219 + $0x540] sm:$0xff]
        %v615 = vld [vmem:[%s219 + $0x548] sm:$0xff]
        %v616 = vld [vmem:[%s219 + $0x550] sm:$0xff]
        %v617 = vld [vmem:[%s219 + $0x558] sm:$0xff]
        %v618 = vld [vmem:[%s219 + $0x560] sm:$0xff]
        %v619 = vld [vmem:[%s219 + $0x568] sm:$0xff]
        %v620 = vld [vmem:[%s219 + $0x570] sm:$0xff]
        %v621 = vld [vmem:[%s219 + $0x578] sm:$0xff]
        %v622 = vld [vmem:[%s219 + $0x580] sm:$0xff]
        %v623 = vld [vmem:[%s219 + $0x588] sm:$0xff]
        %v624 = vld [vmem:[%s219 + $0x590] sm:$0xff]
        %v625 = vld [vmem:[%s219 + $0x598] sm:$0xff]
        %v626 = vld [vmem:[%s219 + $0x5a0] sm:$0xff]
        %v627 = vld [vmem:[%s219 + $0x5a8] sm:$0xff]
        %v628 = vld [vmem:[%s219 + $0x5b0] sm:$0xff]
        %v629 = vld [vmem:[%s219 + $0x5b8] sm:$0xff]
        %v630 = vld [vmem:[%s219 + $0x5c0] sm:$0xff]
        %v631 = vld [vmem:[%s219 + $0x5c8] sm:$0xff]
        %v632 = vld [vmem:[%s219 + $0x5d0] sm:$0xff]
        %v633 = vld [vmem:[%s219 + $0x5d8] sm:$0xff]
        %v634 = vld [vmem:[%s219 + $0x5e0] sm:$0xff]
        %v635 = vld [vmem:[%s219 + $0x5e8] sm:$0xff]
        %v636 = vld [vmem:[%s219 + $0x5f0] sm:$0xff]
        %v637 = vld [vmem:[%s219 + $0x5f8] sm:$0xff]
        %v638 = vld [vmem:[%s219 + $0x600] sm:$0xff]
        %v639 = vld [vmem:[%s219 + $0x608] sm:$0xff]
        %v640 = vld [vmem:[%s219 + $0x610] sm:$0xff]
        %v641 = vld [vmem:[%s219 + $0x618] sm:$0xff]
        %v642 = vld [vmem:[%s219 + $0x620] sm:$0xff]
        %v643 = vld [vmem:[%s219 + $0x628] sm:$0xff]
        %v644 = vld [vmem:[%s219 + $0x630] sm:$0xff]
        %v645 = vld [vmem:[%s219 + $0x638] sm:$0xff]
        %v646 = vld [vmem:[%s219 + $0x640] sm:$0xff]
        %v647 = vld [vmem:[%s219 + $0x648] sm:$0xff]
        %v648 = vld [vmem:[%s219 + $0x650] sm:$0xff]
        %v649 = vld [vmem:[%s219 + $0x658] sm:$0xff]
        %v650 = vld [vmem:[%s219 + $0x660] sm:$0xff]
        %v651 = vld [vmem:[%s219 + $0x668] sm:$0xff]
        %v652 = vld [vmem:[%s219 + $0x670] sm:$0xff]
        %v653 = vld [vmem:[%s219 + $0x678] sm:$0xff]
        %v654 = vld [vmem:[%s219 + $0x680] sm:$0xff]
        %v655 = vld [vmem:[%s219 + $0x688] sm:$0xff]
        %v656 = vld [vmem:[%s219 + $0x690] sm:$0xff]
        %v657 = vld [vmem:[%s219 + $0x698] sm:$0xff]
        %v658 = vld [vmem:[%s219 + $0x6a0] sm:$0xff]
        %v659 = vld [vmem:[%s219 + $0x6a8] sm:$0xff]
        %v660 = vld [vmem:[%s219 + $0x6b0] sm:$0xff]
        %v661 = vld [vmem:[%s219 + $0x6b8] sm:$0xff]
        %v662 = vld [vmem:[%s219 + $0x6c0] sm:$0xff]
        %v663 = vld [vmem:[%s219 + $0x6c8] sm:$0xff]
        %v664 = vld [vmem:[%s219 + $0x6d0] sm:$0xff]
        %v665 = vld [vmem:[%s219 + $0x6d8] sm:$0xff]
        %v666 = vld [vmem:[%s219 + $0x6e0] sm:$0xff]
        %v667 = vld [vmem:[%s219 + $0x6e8] sm:$0xff]
        %v668 = vld [vmem:[%s219 + $0x6f0] sm:$0xff]
        %v669 = vld [vmem:[%s219 + $0x6f8] sm:$0xff]
        %v670 = vld [vmem:[%s219 + $0x700] sm:$0xff]
        %v671 = vld [vmem:[%s219 + $0x708] sm:$0xff]
        %v672 = vld [vmem:[%s219 + $0x710] sm:$0xff]
        %v673 = vld [vmem:[%s219 + $0x718] sm:$0xff]
        %v674 = vld [vmem:[%s219 + $0x720] sm:$0xff]
        %v675 = vld [vmem:[%s219 + $0x728] sm:$0xff]
        %v676 = vld [vmem:[%s219 + $0x730] sm:$0xff]
        %v677 = vld [vmem:[%s219 + $0x738] sm:$0xff]
        %v678 = vld [vmem:[%s219 + $0x740] sm:$0xff]
        %v679 = vld [vmem:[%s219 + $0x748] sm:$0xff]
        %v680 = vld [vmem:[%s219 + $0x750] sm:$0xff]
        %v681 = vld [vmem:[%s219 + $0x758] sm:$0xff]
        %v682 = vld [vmem:[%s219 + $0x760] sm:$0xff]
        %v683 = vld [vmem:[%s219 + $0x768] sm:$0xff]
        %v684 = vld [vmem:[%s219 + $0x770] sm:$0xff]
        %v685 = vld [vmem:[%s219 + $0x778] sm:$0xff]
        %v686 = vld [vmem:[%s219 + $0x780] sm:$0xff]
        %v687 = vld [vmem:[%s219 + $0x788] sm:$0xff]
        %v688 = vld [vmem:[%s219 + $0x790] sm:$0xff]
        %v689 = vld [vmem:[%s219 + $0x798] sm:$0xff]
        %v690 = vld [vmem:[%s219 + $0x7a0] sm:$0xff]
        %v691 = vld [vmem:[%s219 + $0x7a8] sm:$0xff]
        %v692 = vld [vmem:[%s219 + $0x7b0] sm:$0xff]
        %v693 = vld [vmem:[%s219 + $0x7b8] sm:$0xff]
        %v694 = vld [vmem:[%s219 + $0x7c0] sm:$0xff]
        %v695 = vld [vmem:[%s219 + $0x7c8] sm:$0xff]
        %v696 = vld [vmem:[%s219 + $0x7d0] sm:$0xff]
        %v697 = vld [vmem:[%s219 + $0x7d8] sm:$0xff]
        %v698 = vld [vmem:[%s219 + $0x7e0] sm:$0xff]
        %v699 = vld [vmem:[%s219 + $0x7e8] sm:$0xff]
        %v700 = vld [vmem:[%s219 + $0x7f0] sm:$0xff]
        %v701 = vld [vmem:[%s219 + $0x7f8] sm:$0xff]
        %v702 = vld [vmem:[%s228] sm:$0xff]
        %v704 = vlaneseq
        %v705 = vshrl.u32 %v704, 7
        %v706 = vsub.s32 0, %v705
        %v707 = vrot.slane %v702, %v706
        %v708 = vlaneseq
        %v709 = vshrl.u32 %v708, 7
        %v710 = vsub.s32 1, %v709
        %v711 = vrot.slane %v702, %v710
        %v712 = vlaneseq
        %v713 = vshrl.u32 %v712, 7
        %v714 = vsub.s32 2, %v713
        %v715 = vrot.slane %v702, %v714
        %v716 = vlaneseq
        %v717 = vshrl.u32 %v716, 7
        %v718 = vsub.s32 3, %v717
        %v719 = vrot.slane %v702, %v718
        %v720 = vlaneseq
        %v721 = vshrl.u32 %v720, 7
        %v722 = vsub.s32 4, %v721
        %v723 = vrot.slane %v702, %v722
        %v724 = vlaneseq
        %v725 = vshrl.u32 %v724, 7
        %v726 = vsub.s32 5, %v725
        %v727 = vrot.slane %v702, %v726
        %v728 = vlaneseq
        %v729 = vshrl.u32 %v728, 7
        %v730 = vsub.s32 6, %v729
        %v731 = vrot.slane %v702, %v730
        %v732 = vlaneseq
        %v733 = vshrl.u32 %v732, 7
        %v734 = vsub.s32 7, %v733
        %v735 = vrot.slane %v702, %v734
        %v768 = vcombine.low %v414, %v415
        %v769 = vcombine.low %v416, %v417
        %v771 = vunpack.c.l.s4 1966171168
        %v772 = vunpack.c.0.s8 %v771
        %v773 = vlaneseq
        %v774 = vshrl.u32 %v773, 7
        %v775 = vsub.s32 %v772, %v774
        %v776 = vrot.slane %v768, %v775
        %v778 = vunpack.c.l.s4 1966171168
        %v779 = vunpack.c.0.s8 %v778
        %v780 = vlaneseq
        %v781 = vshrl.u32 %v780, 7
        %v782 = vsub.s32 %v779, %v781
        %v783 = vrot.slane %v769, %v782
        %v784 = vcombine.low %v776, %v783
        %v786 = vunpack.c.l.s4 1966171168
        %v787 = vunpack.c.0.s8 %v786
        %v788 = vlaneseq
        %v789 = vshrl.u32 %v788, 7
        %v790 = vsub.s32 %v787, %v789
        %v791 = vrot.slane %v784, %v790
        %v792 = vcombine.low %v418, %v419
        %v793 = vcombine.low %v420, %v421
        %v795 = vunpack.c.l.s4 1966171168
        %v796 = vunpack.c.0.s8 %v795
        %v797 = vlaneseq
        %v798 = vshrl.u32 %v797, 7
        %v799 = vsub.s32 %v796, %v798
        %v800 = vrot.slane %v792, %v799
        %v802 = vunpack.c.l.s4 1966171168
        %v803 = vunpack.c.0.s8 %v802
        %v804 = vlaneseq
        %v805 = vshrl.u32 %v804, 7
        %v806 = vsub.s32 %v803, %v805
        %v807 = vrot.slane %v793, %v806
        %v808 = vcombine.low %v800, %v807
        %v810 = vunpack.c.l.s4 1966171168
        %v811 = vunpack.c.0.s8 %v810
        %v812 = vlaneseq
        %v813 = vshrl.u32 %v812, 7
        %v814 = vsub.s32 %v811, %v813
        %v815 = vrot.slane %v808, %v814
        %v816 = vcombine.low %v422, %v423
        %v817 = vcombine.low %v424, %v425
        %v819 = vunpack.c.l.s4 1966171168
        %v820 = vunpack.c.0.s8 %v819
        %v821 = vlaneseq
        %v822 = vshrl.u32 %v821, 7
        %v823 = vsub.s32 %v820, %v822
        %v824 = vrot.slane %v816, %v823
        %v826 = vunpack.c.l.s4 1966171168
        %v827 = vunpack.c.0.s8 %v826
        %v828 = vlaneseq
        %v829 = vshrl.u32 %v828, 7
        %v830 = vsub.s32 %v827, %v829
        %v831 = vrot.slane %v817, %v830
        %v832 = vcombine.low %v824, %v831
        %v834 = vunpack.c.l.s4 1966171168
        %v835 = vunpack.c.0.s8 %v834
        %v836 = vlaneseq
        %v837 = vshrl.u32 %v836, 7
        %v838 = vsub.s32 %v835, %v837
        %v839 = vrot.slane %v832, %v838
        %v840 = vcombine.low %v426, %v427
        %v841 = vcombine.low %v428, %v429
        %v843 = vunpack.c.l.s4 1966171168
        %v844 = vunpack.c.0.s8 %v843
        %v845 = vlaneseq
        %v846 = vshrl.u32 %v845, 7
        %v847 = vsub.s32 %v844, %v846
        %v848 = vrot.slane %v840, %v847
        %v850 = vunpack.c.l.s4 1966171168
        %v851 = vunpack.c.0.s8 %v850
        %v852 = vlaneseq
        %v853 = vshrl.u32 %v852, 7
        %v854 = vsub.s32 %v851, %v853
        %v855 = vrot.slane %v841, %v854
        %v856 = vcombine.low %v848, %v855
        %v858 = vunpack.c.l.s4 1966171168
        %v859 = vunpack.c.0.s8 %v858
        %v860 = vlaneseq
        %v861 = vshrl.u32 %v860, 7
        %v862 = vsub.s32 %v859, %v861
        %v863 = vrot.slane %v856, %v862
        %v864 = vcombine.low %v430, %v431
        %v865 = vcombine.low %v432, %v433
        %v867 = vunpack.c.l.s4 1966171168
        %v868 = vunpack.c.0.s8 %v867
        %v869 = vlaneseq
        %v870 = vshrl.u32 %v869, 7
        %v871 = vsub.s32 %v868, %v870
        %v872 = vrot.slane %v864, %v871
        %v874 = vunpack.c.l.s4 1966171168
        %v875 = vunpack.c.0.s8 %v874
        %v876 = vlaneseq
        %v877 = vshrl.u32 %v876, 7
        %v878 = vsub.s32 %v875, %v877
        %v879 = vrot.slane %v865, %v878
        %v880 = vcombine.low %v872, %v879
        %v882 = vunpack.c.l.s4 1966171168
        %v883 = vunpack.c.0.s8 %v882
        %v884 = vlaneseq
        %v885 = vshrl.u32 %v884, 7
        %v886 = vsub.s32 %v883, %v885
        %v887 = vrot.slane %v880, %v886
        %v888 = vcombine.low %v434, %v435
        %v889 = vcombine.low %v436, %v437
        %v891 = vunpack.c.l.s4 1966171168
        %v892 = vunpack.c.0.s8 %v891
        %v893 = vlaneseq
        %v894 = vshrl.u32 %v893, 7
        %v895 = vsub.s32 %v892, %v894
        %v896 = vrot.slane %v888, %v895
        %v898 = vunpack.c.l.s4 1966171168
        %v899 = vunpack.c.0.s8 %v898
        %v900 = vlaneseq
        %v901 = vshrl.u32 %v900, 7
        %v902 = vsub.s32 %v899, %v901
        %v903 = vrot.slane %v889, %v902
        %v904 = vcombine.low %v896, %v903
        %v906 = vunpack.c.l.s4 1966171168
        %v907 = vunpack.c.0.s8 %v906
        %v908 = vlaneseq
        %v909 = vshrl.u32 %v908, 7
        %v910 = vsub.s32 %v907, %v909
        %v911 = vrot.slane %v904, %v910
        %v912 = vcombine.low %v438, %v439
        %v913 = vcombine.low %v440, %v441
        %v915 = vunpack.c.l.s4 1966171168
        %v916 = vunpack.c.0.s8 %v915
        %v917 = vlaneseq
        %v918 = vshrl.u32 %v917, 7
        %v919 = vsub.s32 %v916, %v918
        %v920 = vrot.slane %v912, %v919
        %v922 = vunpack.c.l.s4 1966171168
        %v923 = vunpack.c.0.s8 %v922
        %v924 = vlaneseq
        %v925 = vshrl.u32 %v924, 7
        %v926 = vsub.s32 %v923, %v925
        %v927 = vrot.slane %v913, %v926
        %v928 = vcombine.low %v920, %v927
        %v930 = vunpack.c.l.s4 1966171168
        %v931 = vunpack.c.0.s8 %v930
        %v932 = vlaneseq
        %v933 = vshrl.u32 %v932, 7
        %v934 = vsub.s32 %v931, %v933
        %v935 = vrot.slane %v928, %v934
        %v936 = vcombine.low %v442, %v443
        %v937 = vcombine.low %v444, %v445
        %v939 = vunpack.c.l.s4 1966171168
        %v940 = vunpack.c.0.s8 %v939
        %v941 = vlaneseq
        %v942 = vshrl.u32 %v941, 7
        %v943 = vsub.s32 %v940, %v942
        %v944 = vrot.slane %v936, %v943
        %v946 = vunpack.c.l.s4 1966171168
        %v947 = vunpack.c.0.s8 %v946
        %v948 = vlaneseq
        %v949 = vshrl.u32 %v948, 7
        %v950 = vsub.s32 %v947, %v949
        %v951 = vrot.slane %v937, %v950
        %v952 = vcombine.low %v944, %v951
        %v954 = vunpack.c.l.s4 1966171168
        %v955 = vunpack.c.0.s8 %v954
        %v956 = vlaneseq
        %v957 = vshrl.u32 %v956, 7
        %v958 = vsub.s32 %v955, %v957
        %v959 = vrot.slane %v952, %v958
        %v960 = vcombine.low %v707, %v711
        %v961 = vcombine.low %v715, %v719
        %v963 = vunpack.c.l.s4 1983009808
        %v964 = vunpack.c.0.s8 %v963
        %v965 = vlaneseq
        %v966 = vshrl.u32 %v965, 7
        %v967 = vsub.s32 %v964, %v966
        %v968 = vrot.slane %v960, %v967
        %v970 = vunpack.c.l.s4 1983009808
        %v971 = vunpack.c.0.s8 %v970
        %v972 = vlaneseq
        %v973 = vshrl.u32 %v972, 7
        %v974 = vsub.s32 %v971, %v973
        %v975 = vrot.slane %v961, %v974
        %v976 = vcombine.low %v968, %v975
        %v977 = vcombine.low %v723, %v727
        %v978 = vcombine.low %v731, %v735
        %v980 = vunpack.c.l.s4 1983009808
        %v981 = vunpack.c.0.s8 %v980
        %v982 = vlaneseq
        %v983 = vshrl.u32 %v982, 7
        %v984 = vsub.s32 %v981, %v983
        %v985 = vrot.slane %v977, %v984
        %v987 = vunpack.c.l.s4 1983009808
        %v988 = vunpack.c.0.s8 %v987
        %v989 = vlaneseq
        %v990 = vshrl.u32 %v989, 7
        %v991 = vsub.s32 %v988, %v990
        %v992 = vrot.slane %v978, %v991
        %v993 = vcombine.low %v985, %v992
        %v994 = vcombine.low %v791, %v815
        %v995 = vcombine.low %v839, %v863
        %v996 = vcombine.low %v887, %v911
        %v997 = vcombine.low %v935, %v959
        %v999 = vunpack.c.l.s4 1966171168
        %v1000 = vunpack.c.0.s8 %v999
        %v1001 = vlaneseq
        %v1002 = vshrl.u32 %v1001, 7
        %v1003 = vsub.s32 %v1000, %v1002
        %v1004 = vrot.slane %v994, %v1003
        %v1006 = vunpack.c.l.s4 1966171168
        %v1007 = vunpack.c.0.s8 %v1006
        %v1008 = vlaneseq
        %v1009 = vshrl.u32 %v1008, 7
        %v1010 = vsub.s32 %v1007, %v1009
        %v1011 = vrot.slane %v995, %v1010
        %v1013 = vunpack.c.l.s4 1966171168
        %v1014 = vunpack.c.0.s8 %v1013
        %v1015 = vlaneseq
        %v1016 = vshrl.u32 %v1015, 7
        %v1017 = vsub.s32 %v1014, %v1016
        %v1018 = vrot.slane %v996, %v1017
        %v1020 = vunpack.c.l.s4 1966171168
        %v1021 = vunpack.c.0.s8 %v1020
        %v1022 = vlaneseq
        %v1023 = vshrl.u32 %v1022, 7
        %v1024 = vsub.s32 %v1021, %v1023
        %v1025 = vrot.slane %v997, %v1024
        %v1026 = vcombine.low %v1004, %v1011
        %v1027 = vcombine.high %v1004, %v1011
        %v1028 = vcombine.low %v1018, %v1025
        %v1029 = vcombine.high %v1018, %v1025
        %v1031 = vunpack.c.l.s4 1966171168
        %v1032 = vunpack.c.0.s8 %v1031
        %v1033 = vlaneseq
        %v1034 = vshrl.u32 %v1033, 7
        %v1035 = vsub.s32 %v1032, %v1034
        %v1036 = vrot.slane %v1026, %v1035
        %v1038 = vunpack.c.l.s4 1966171168
        %v1039 = vunpack.c.0.s8 %v1038
        %v1040 = vlaneseq
        %v1041 = vshrl.u32 %v1040, 7
        %v1042 = vsub.s32 %v1039, %v1041
        %v1043 = vrot.slane %v1027, %v1042
        %v1045 = vunpack.c.l.s4 1966171168
        %v1046 = vunpack.c.0.s8 %v1045
        %v1047 = vlaneseq
        %v1048 = vshrl.u32 %v1047, 7
        %v1049 = vsub.s32 %v1046, %v1048
        %v1050 = vrot.slane %v1028, %v1049
        %v1052 = vunpack.c.l.s4 1966171168
        %v1053 = vunpack.c.0.s8 %v1052
        %v1054 = vlaneseq
        %v1055 = vshrl.u32 %v1054, 7
        %v1056 = vsub.s32 %v1053, %v1055
        %v1057 = vrot.slane %v1029, %v1056
        %v1058 = vcombine.low %v1036, %v1050
        %v1059 = vcombine.high %v1036, %v1050
        %v1060 = vcombine.low %v1043, %v1057
        %v1061 = vcombine.high %v1043, %v1057
        %v1322 = vunpack.c.l.b16 %v446
        %v1323 = vunpack.c.h.b16 %v446
        %v1324 = vunpack.c.l.b16 %v447
        %v1325 = vunpack.c.h.b16 %v447
        %v1326 = vunpack.c.l.b16 %v448
        %v1327 = vunpack.c.h.b16 %v448
        %v1328 = vunpack.c.l.b16 %v449
        %v1329 = vunpack.c.h.b16 %v449
        %v1330 = vunpack.c.l.b16 %v450
        %v1331 = vunpack.c.h.b16 %v450
        %v1332 = vunpack.c.l.b16 %v451
        %v1333 = vunpack.c.h.b16 %v451
        %v1334 = vunpack.c.l.b16 %v452
        %v1335 = vunpack.c.h.b16 %v452
        %v1336 = vunpack.c.l.b16 %v453
        %v1337 = vunpack.c.h.b16 %v453
        %v1338 = vunpack.c.l.b16 %v454
        %v1339 = vunpack.c.h.b16 %v454
        %v1340 = vunpack.c.l.b16 %v455
        %v1341 = vunpack.c.h.b16 %v455
        %v1342 = vunpack.c.l.b16 %v456
        %v1343 = vunpack.c.h.b16 %v456
        %v1344 = vunpack.c.l.b16 %v457
        %v1345 = vunpack.c.h.b16 %v457
        %v1346 = vunpack.c.l.b16 %v458
        %v1347 = vunpack.c.h.b16 %v458
        %v1348 = vunpack.c.l.b16 %v459
        %v1349 = vunpack.c.h.b16 %v459
        %v1350 = vunpack.c.l.b16 %v460
        %v1351 = vunpack.c.h.b16 %v460
        %v1352 = vunpack.c.l.b16 %v461
        %v1353 = vunpack.c.h.b16 %v461
        %v1354 = vunpack.c.l.b16 %v462
        %v1355 = vunpack.c.h.b16 %v462
        %v1356 = vunpack.c.l.b16 %v463
        %v1357 = vunpack.c.h.b16 %v463
        %v1358 = vunpack.c.l.b16 %v464
        %v1359 = vunpack.c.h.b16 %v464
        %v1360 = vunpack.c.l.b16 %v465
        %v1361 = vunpack.c.h.b16 %v465
        %v1362 = vunpack.c.l.b16 %v466
        %v1363 = vunpack.c.h.b16 %v466
        %v1364 = vunpack.c.l.b16 %v467
        %v1365 = vunpack.c.h.b16 %v467
        %v1366 = vunpack.c.l.b16 %v468
        %v1367 = vunpack.c.h.b16 %v468
        %v1368 = vunpack.c.l.b16 %v469
        %v1369 = vunpack.c.h.b16 %v469
        %v1370 = vunpack.c.l.b16 %v470
        %v1371 = vunpack.c.h.b16 %v470
        %v1372 = vunpack.c.l.b16 %v471
        %v1373 = vunpack.c.h.b16 %v471
        %v1374 = vunpack.c.l.b16 %v472
        %v1375 = vunpack.c.h.b16 %v472
        %v1376 = vunpack.c.l.b16 %v473
        %v1377 = vunpack.c.h.b16 %v473
        %v1378 = vunpack.c.l.b16 %v474
        %v1379 = vunpack.c.h.b16 %v474
        %v1380 = vunpack.c.l.b16 %v475
        %v1381 = vunpack.c.h.b16 %v475
        %v1382 = vunpack.c.l.b16 %v476
        %v1383 = vunpack.c.h.b16 %v476
        %v1384 = vunpack.c.l.b16 %v477
        %v1385 = vunpack.c.h.b16 %v477
        %v1386 = vunpack.c.l.b16 %v478
        %v1387 = vunpack.c.h.b16 %v478
        %v1388 = vunpack.c.l.b16 %v479
        %v1389 = vunpack.c.h.b16 %v479
        %v1390 = vunpack.c.l.b16 %v480
        %v1391 = vunpack.c.h.b16 %v480
        %v1392 = vunpack.c.l.b16 %v481
        %v1393 = vunpack.c.h.b16 %v481
        %v1394 = vunpack.c.l.b16 %v482
        %v1395 = vunpack.c.h.b16 %v482
        %v1396 = vunpack.c.l.b16 %v483
        %v1397 = vunpack.c.h.b16 %v483
        %v1398 = vunpack.c.l.b16 %v484
        %v1399 = vunpack.c.h.b16 %v484
        %v1400 = vunpack.c.l.b16 %v485
        %v1401 = vunpack.c.h.b16 %v485
        %v1402 = vunpack.c.l.b16 %v486
        %v1403 = vunpack.c.h.b16 %v486
        %v1404 = vunpack.c.l.b16 %v487
        %v1405 = vunpack.c.h.b16 %v487
        %v1406 = vunpack.c.l.b16 %v488
        %v1407 = vunpack.c.h.b16 %v488
        %v1408 = vunpack.c.l.b16 %v489
        %v1409 = vunpack.c.h.b16 %v489
        %v1410 = vunpack.c.l.b16 %v490
        %v1411 = vunpack.c.h.b16 %v490
        %v1412 = vunpack.c.l.b16 %v491
        %v1413 = vunpack.c.h.b16 %v491
        %v1414 = vunpack.c.l.b16 %v492
        %v1415 = vunpack.c.h.b16 %v492
        %v1416 = vunpack.c.l.b16 %v493
        %v1417 = vunpack.c.h.b16 %v493
        %v1418 = vunpack.c.l.b16 %v494
        %v1419 = vunpack.c.h.b16 %v494
        %v1420 = vunpack.c.l.b16 %v495
        %v1421 = vunpack.c.h.b16 %v495
        %v1422 = vunpack.c.l.b16 %v496
        %v1423 = vunpack.c.h.b16 %v496
        %v1424 = vunpack.c.l.b16 %v497
        %v1425 = vunpack.c.h.b16 %v497
        %v1426 = vunpack.c.l.b16 %v498
        %v1427 = vunpack.c.h.b16 %v498
        %v1428 = vunpack.c.l.b16 %v499
        %v1429 = vunpack.c.h.b16 %v499
        %v1430 = vunpack.c.l.b16 %v500
        %v1431 = vunpack.c.h.b16 %v500
        %v1432 = vunpack.c.l.b16 %v501
        %v1433 = vunpack.c.h.b16 %v501
        %v1434 = vunpack.c.l.b16 %v502
        %v1435 = vunpack.c.h.b16 %v502
        %v1436 = vunpack.c.l.b16 %v503
        %v1437 = vunpack.c.h.b16 %v503
        %v1438 = vunpack.c.l.b16 %v504
        %v1439 = vunpack.c.h.b16 %v504
        %v1440 = vunpack.c.l.b16 %v505
        %v1441 = vunpack.c.h.b16 %v505
        %v1442 = vunpack.c.l.b16 %v506
        %v1443 = vunpack.c.h.b16 %v506
        %v1444 = vunpack.c.l.b16 %v507
        %v1445 = vunpack.c.h.b16 %v507
        %v1446 = vunpack.c.l.b16 %v508
        %v1447 = vunpack.c.h.b16 %v508
        %v1448 = vunpack.c.l.b16 %v509
        %v1449 = vunpack.c.h.b16 %v509
        %v1450 = vunpack.c.l.b16 %v510
        %v1451 = vunpack.c.h.b16 %v510
        %v1452 = vunpack.c.l.b16 %v511
        %v1453 = vunpack.c.h.b16 %v511
        %v1454 = vunpack.c.l.b16 %v512
        %v1455 = vunpack.c.h.b16 %v512
        %v1456 = vunpack.c.l.b16 %v513
        %v1457 = vunpack.c.h.b16 %v513
        %v1458 = vunpack.c.l.b16 %v514
        %v1459 = vunpack.c.h.b16 %v514
        %v1460 = vunpack.c.l.b16 %v515
        %v1461 = vunpack.c.h.b16 %v515
        %v1462 = vunpack.c.l.b16 %v516
        %v1463 = vunpack.c.h.b16 %v516
        %v1464 = vunpack.c.l.b16 %v517
        %v1465 = vunpack.c.h.b16 %v517
        %v1466 = vunpack.c.l.b16 %v518
        %v1467 = vunpack.c.h.b16 %v518
        %v1468 = vunpack.c.l.b16 %v519
        %v1469 = vunpack.c.h.b16 %v519
        %v1470 = vunpack.c.l.b16 %v520
        %v1471 = vunpack.c.h.b16 %v520
        %v1472 = vunpack.c.l.b16 %v521
        %v1473 = vunpack.c.h.b16 %v521
        %v1474 = vunpack.c.l.b16 %v522
        %v1475 = vunpack.c.h.b16 %v522
        %v1476 = vunpack.c.l.b16 %v523
        %v1477 = vunpack.c.h.b16 %v523
        %v1478 = vunpack.c.l.b16 %v524
        %v1479 = vunpack.c.h.b16 %v524
        %v1480 = vunpack.c.l.b16 %v525
        %v1481 = vunpack.c.h.b16 %v525
        %v1482 = vunpack.c.l.b16 %v526
        %v1483 = vunpack.c.h.b16 %v526
        %v1484 = vunpack.c.l.b16 %v527
        %v1485 = vunpack.c.h.b16 %v527
        %v1486 = vunpack.c.l.b16 %v528
        %v1487 = vunpack.c.h.b16 %v528
        %v1488 = vunpack.c.l.b16 %v529
        %v1489 = vunpack.c.h.b16 %v529
        %v1490 = vunpack.c.l.b16 %v530
        %v1491 = vunpack.c.h.b16 %v530
        %v1492 = vunpack.c.l.b16 %v531
        %v1493 = vunpack.c.h.b16 %v531
        %v1494 = vunpack.c.l.b16 %v532
        %v1495 = vunpack.c.h.b16 %v532
        %v1496 = vunpack.c.l.b16 %v533
        %v1497 = vunpack.c.h.b16 %v533
        %v1498 = vunpack.c.l.b16 %v534
        %v1499 = vunpack.c.h.b16 %v534
        %v1500 = vunpack.c.l.b16 %v535
        %v1501 = vunpack.c.h.b16 %v535
        %v1502 = vunpack.c.l.b16 %v536
        %v1503 = vunpack.c.h.b16 %v536
        %v1504 = vunpack.c.l.b16 %v537
        %v1505 = vunpack.c.h.b16 %v537
        %v1506 = vunpack.c.l.b16 %v538
        %v1507 = vunpack.c.h.b16 %v538
        %v1508 = vunpack.c.l.b16 %v539
        %v1509 = vunpack.c.h.b16 %v539
        %v1510 = vunpack.c.l.b16 %v540
        %v1511 = vunpack.c.h.b16 %v540
        %v1512 = vunpack.c.l.b16 %v541
        %v1513 = vunpack.c.h.b16 %v541
        %v1514 = vunpack.c.l.b16 %v542
        %v1515 = vunpack.c.h.b16 %v542
        %v1516 = vunpack.c.l.b16 %v543
        %v1517 = vunpack.c.h.b16 %v543
        %v1518 = vunpack.c.l.b16 %v544
        %v1519 = vunpack.c.h.b16 %v544
        %v1520 = vunpack.c.l.b16 %v545
        %v1521 = vunpack.c.h.b16 %v545
        %v1522 = vunpack.c.l.b16 %v546
        %v1523 = vunpack.c.h.b16 %v546
        %v1524 = vunpack.c.l.b16 %v547
        %v1525 = vunpack.c.h.b16 %v547
        %v1526 = vunpack.c.l.b16 %v548
        %v1527 = vunpack.c.h.b16 %v548
        %v1528 = vunpack.c.l.b16 %v549
        %v1529 = vunpack.c.h.b16 %v549
        %v1530 = vunpack.c.l.b16 %v550
        %v1531 = vunpack.c.h.b16 %v550
        %v1532 = vunpack.c.l.b16 %v551
        %v1533 = vunpack.c.h.b16 %v551
        %v1534 = vunpack.c.l.b16 %v552
        %v1535 = vunpack.c.h.b16 %v552
        %v1536 = vunpack.c.l.b16 %v553
        %v1537 = vunpack.c.h.b16 %v553
        %v1538 = vunpack.c.l.b16 %v554
        %v1539 = vunpack.c.h.b16 %v554
        %v1540 = vunpack.c.l.b16 %v555
        %v1541 = vunpack.c.h.b16 %v555
        %v1542 = vunpack.c.l.b16 %v556
        %v1543 = vunpack.c.h.b16 %v556
        %v1544 = vunpack.c.l.b16 %v557
        %v1545 = vunpack.c.h.b16 %v557
        %v1546 = vunpack.c.l.b16 %v558
        %v1547 = vunpack.c.h.b16 %v558
        %v1548 = vunpack.c.l.b16 %v559
        %v1549 = vunpack.c.h.b16 %v559
        %v1550 = vunpack.c.l.b16 %v560
        %v1551 = vunpack.c.h.b16 %v560
        %v1552 = vunpack.c.l.b16 %v561
        %v1553 = vunpack.c.h.b16 %v561
        %v1554 = vunpack.c.l.b16 %v562
        %v1555 = vunpack.c.h.b16 %v562
        %v1556 = vunpack.c.l.b16 %v563
        %v1557 = vunpack.c.h.b16 %v563
        %v1558 = vunpack.c.l.b16 %v564
        %v1559 = vunpack.c.h.b16 %v564
        %v1560 = vunpack.c.l.b16 %v565
        %v1561 = vunpack.c.h.b16 %v565
        %v1562 = vunpack.c.l.b16 %v566
        %v1563 = vunpack.c.h.b16 %v566
        %v1564 = vunpack.c.l.b16 %v567
        %v1565 = vunpack.c.h.b16 %v567
        %v1566 = vunpack.c.l.b16 %v568
        %v1567 = vunpack.c.h.b16 %v568
        %v1568 = vunpack.c.l.b16 %v569
        %v1569 = vunpack.c.h.b16 %v569
        %v1570 = vunpack.c.l.b16 %v570
        %v1571 = vunpack.c.h.b16 %v570
        %v1572 = vunpack.c.l.b16 %v571
        %v1573 = vunpack.c.h.b16 %v571
        %v1574 = vunpack.c.l.b16 %v572
        %v1575 = vunpack.c.h.b16 %v572
        %v1576 = vunpack.c.l.b16 %v573
        %v1577 = vunpack.c.h.b16 %v573
        %v1578 = vunpack.c.l.b16 %v574
        %v1579 = vunpack.c.h.b16 %v574
        %v1580 = vunpack.c.l.b16 %v575
        %v1581 = vunpack.c.h.b16 %v575
        %v1582 = vunpack.c.l.b16 %v576
        %v1583 = vunpack.c.h.b16 %v576
        %v1584 = vunpack.c.l.b16 %v577
        %v1585 = vunpack.c.h.b16 %v577
        %v1586 = vunpack.c.l.b16 %v578
        %v1587 = vunpack.c.h.b16 %v578
        %v1588 = vunpack.c.l.b16 %v579
        %v1589 = vunpack.c.h.b16 %v579
        %v1590 = vunpack.c.l.b16 %v580
        %v1591 = vunpack.c.h.b16 %v580
        %v1592 = vunpack.c.l.b16 %v581
        %v1593 = vunpack.c.h.b16 %v581
        %v1594 = vunpack.c.l.b16 %v582
        %v1595 = vunpack.c.h.b16 %v582
        %v1596 = vunpack.c.l.b16 %v583
        %v1597 = vunpack.c.h.b16 %v583
        %v1598 = vunpack.c.l.b16 %v584
        %v1599 = vunpack.c.h.b16 %v584
        %v1600 = vunpack.c.l.b16 %v585
        %v1601 = vunpack.c.h.b16 %v585
        %v1602 = vunpack.c.l.b16 %v586
        %v1603 = vunpack.c.h.b16 %v586
        %v1604 = vunpack.c.l.b16 %v587
        %v1605 = vunpack.c.h.b16 %v587
        %v1606 = vunpack.c.l.b16 %v588
        %v1607 = vunpack.c.h.b16 %v588
        %v1608 = vunpack.c.l.b16 %v589
        %v1609 = vunpack.c.h.b16 %v589
        %v1610 = vunpack.c.l.b16 %v590
        %v1611 = vunpack.c.h.b16 %v590
        %v1612 = vunpack.c.l.b16 %v591
        %v1613 = vunpack.c.h.b16 %v591
        %v1614 = vunpack.c.l.b16 %v592
        %v1615 = vunpack.c.h.b16 %v592
        %v1616 = vunpack.c.l.b16 %v593
        %v1617 = vunpack.c.h.b16 %v593
        %v1618 = vunpack.c.l.b16 %v594
        %v1619 = vunpack.c.h.b16 %v594
        %v1620 = vunpack.c.l.b16 %v595
        %v1621 = vunpack.c.h.b16 %v595
        %v1622 = vunpack.c.l.b16 %v596
        %v1623 = vunpack.c.h.b16 %v596
        %v1624 = vunpack.c.l.b16 %v597
        %v1625 = vunpack.c.h.b16 %v597
        %v1626 = vunpack.c.l.b16 %v598
        %v1627 = vunpack.c.h.b16 %v598
        %v1628 = vunpack.c.l.b16 %v599
        %v1629 = vunpack.c.h.b16 %v599
        %v1630 = vunpack.c.l.b16 %v600
        %v1631 = vunpack.c.h.b16 %v600
        %v1632 = vunpack.c.l.b16 %v601
        %v1633 = vunpack.c.h.b16 %v601
        %v1634 = vunpack.c.l.b16 %v602
        %v1635 = vunpack.c.h.b16 %v602
        %v1636 = vunpack.c.l.b16 %v603
        %v1637 = vunpack.c.h.b16 %v603
        %v1638 = vunpack.c.l.b16 %v604
        %v1639 = vunpack.c.h.b16 %v604
        %v1640 = vunpack.c.l.b16 %v605
        %v1641 = vunpack.c.h.b16 %v605
        %v1642 = vunpack.c.l.b16 %v606
        %v1643 = vunpack.c.h.b16 %v606
        %v1644 = vunpack.c.l.b16 %v607
        %v1645 = vunpack.c.h.b16 %v607
        %v1646 = vunpack.c.l.b16 %v608
        %v1647 = vunpack.c.h.b16 %v608
        %v1648 = vunpack.c.l.b16 %v609
        %v1649 = vunpack.c.h.b16 %v609
        %v1650 = vunpack.c.l.b16 %v610
        %v1651 = vunpack.c.h.b16 %v610
        %v1652 = vunpack.c.l.b16 %v611
        %v1653 = vunpack.c.h.b16 %v611
        %v1654 = vunpack.c.l.b16 %v612
        %v1655 = vunpack.c.h.b16 %v612
        %v1656 = vunpack.c.l.b16 %v613
        %v1657 = vunpack.c.h.b16 %v613
        %v1658 = vunpack.c.l.b16 %v614
        %v1659 = vunpack.c.h.b16 %v614
        %v1660 = vunpack.c.l.b16 %v615
        %v1661 = vunpack.c.h.b16 %v615
        %v1662 = vunpack.c.l.b16 %v616
        %v1663 = vunpack.c.h.b16 %v616
        %v1664 = vunpack.c.l.b16 %v617
        %v1665 = vunpack.c.h.b16 %v617
        %v1666 = vunpack.c.l.b16 %v618
        %v1667 = vunpack.c.h.b16 %v618
        %v1668 = vunpack.c.l.b16 %v619
        %v1669 = vunpack.c.h.b16 %v619
        %v1670 = vunpack.c.l.b16 %v620
        %v1671 = vunpack.c.h.b16 %v620
        %v1672 = vunpack.c.l.b16 %v621
        %v1673 = vunpack.c.h.b16 %v621
        %v1674 = vunpack.c.l.b16 %v622
        %v1675 = vunpack.c.h.b16 %v622
        %v1676 = vunpack.c.l.b16 %v623
        %v1677 = vunpack.c.h.b16 %v623
        %v1678 = vunpack.c.l.b16 %v624
        %v1679 = vunpack.c.h.b16 %v624
        %v1680 = vunpack.c.l.b16 %v625
        %v1681 = vunpack.c.h.b16 %v625
        %v1682 = vunpack.c.l.b16 %v626
        %v1683 = vunpack.c.h.b16 %v626
        %v1684 = vunpack.c.l.b16 %v627
        %v1685 = vunpack.c.h.b16 %v627
        %v1686 = vunpack.c.l.b16 %v628
        %v1687 = vunpack.c.h.b16 %v628
        %v1688 = vunpack.c.l.b16 %v629
        %v1689 = vunpack.c.h.b16 %v629
        %v1690 = vunpack.c.l.b16 %v630
        %v1691 = vunpack.c.h.b16 %v630
        %v1692 = vunpack.c.l.b16 %v631
        %v1693 = vunpack.c.h.b16 %v631
        %v1694 = vunpack.c.l.b16 %v632
        %v1695 = vunpack.c.h.b16 %v632
        %v1696 = vunpack.c.l.b16 %v633
        %v1697 = vunpack.c.h.b16 %v633
        %v1698 = vunpack.c.l.b16 %v634
        %v1699 = vunpack.c.h.b16 %v634
        %v1700 = vunpack.c.l.b16 %v635
        %v1701 = vunpack.c.h.b16 %v635
        %v1702 = vunpack.c.l.b16 %v636
        %v1703 = vunpack.c.h.b16 %v636
        %v1704 = vunpack.c.l.b16 %v637
        %v1705 = vunpack.c.h.b16 %v637
        %v1706 = vunpack.c.l.b16 %v638
        %v1707 = vunpack.c.h.b16 %v638
        %v1708 = vunpack.c.l.b16 %v639
        %v1709 = vunpack.c.h.b16 %v639
        %v1710 = vunpack.c.l.b16 %v640
        %v1711 = vunpack.c.h.b16 %v640
        %v1712 = vunpack.c.l.b16 %v641
        %v1713 = vunpack.c.h.b16 %v641
        %v1714 = vunpack.c.l.b16 %v642
        %v1715 = vunpack.c.h.b16 %v642
        %v1716 = vunpack.c.l.b16 %v643
        %v1717 = vunpack.c.h.b16 %v643
        %v1718 = vunpack.c.l.b16 %v644
        %v1719 = vunpack.c.h.b16 %v644
        %v1720 = vunpack.c.l.b16 %v645
        %v1721 = vunpack.c.h.b16 %v645
        %v1722 = vunpack.c.l.b16 %v646
        %v1723 = vunpack.c.h.b16 %v646
        %v1724 = vunpack.c.l.b16 %v647
        %v1725 = vunpack.c.h.b16 %v647
        %v1726 = vunpack.c.l.b16 %v648
        %v1727 = vunpack.c.h.b16 %v648
        %v1728 = vunpack.c.l.b16 %v649
        %v1729 = vunpack.c.h.b16 %v649
        %v1730 = vunpack.c.l.b16 %v650
        %v1731 = vunpack.c.h.b16 %v650
        %v1732 = vunpack.c.l.b16 %v651
        %v1733 = vunpack.c.h.b16 %v651
        %v1734 = vunpack.c.l.b16 %v652
        %v1735 = vunpack.c.h.b16 %v652
        %v1736 = vunpack.c.l.b16 %v653
        %v1737 = vunpack.c.h.b16 %v653
        %v1738 = vunpack.c.l.b16 %v654
        %v1739 = vunpack.c.h.b16 %v654
        %v1740 = vunpack.c.l.b16 %v655
        %v1741 = vunpack.c.h.b16 %v655
        %v1742 = vunpack.c.l.b16 %v656
        %v1743 = vunpack.c.h.b16 %v656
        %v1744 = vunpack.c.l.b16 %v657
        %v1745 = vunpack.c.h.b16 %v657
        %v1746 = vunpack.c.l.b16 %v658
        %v1747 = vunpack.c.h.b16 %v658
        %v1748 = vunpack.c.l.b16 %v659
        %v1749 = vunpack.c.h.b16 %v659
        %v1750 = vunpack.c.l.b16 %v660
        %v1751 = vunpack.c.h.b16 %v660
        %v1752 = vunpack.c.l.b16 %v661
        %v1753 = vunpack.c.h.b16 %v661
        %v1754 = vunpack.c.l.b16 %v662
        %v1755 = vunpack.c.h.b16 %v662
        %v1756 = vunpack.c.l.b16 %v663
        %v1757 = vunpack.c.h.b16 %v663
        %v1758 = vunpack.c.l.b16 %v664
        %v1759 = vunpack.c.h.b16 %v664
        %v1760 = vunpack.c.l.b16 %v665
        %v1761 = vunpack.c.h.b16 %v665
        %v1762 = vunpack.c.l.b16 %v666
        %v1763 = vunpack.c.h.b16 %v666
        %v1764 = vunpack.c.l.b16 %v667
        %v1765 = vunpack.c.h.b16 %v667
        %v1766 = vunpack.c.l.b16 %v668
        %v1767 = vunpack.c.h.b16 %v668
        %v1768 = vunpack.c.l.b16 %v669
        %v1769 = vunpack.c.h.b16 %v669
        %v1770 = vunpack.c.l.b16 %v670
        %v1771 = vunpack.c.h.b16 %v670
        %v1772 = vunpack.c.l.b16 %v671
        %v1773 = vunpack.c.h.b16 %v671
        %v1774 = vunpack.c.l.b16 %v672
        %v1775 = vunpack.c.h.b16 %v672
        %v1776 = vunpack.c.l.b16 %v673
        %v1777 = vunpack.c.h.b16 %v673
        %v1778 = vunpack.c.l.b16 %v674
        %v1779 = vunpack.c.h.b16 %v674
        %v1780 = vunpack.c.l.b16 %v675
        %v1781 = vunpack.c.h.b16 %v675
        %v1782 = vunpack.c.l.b16 %v676
        %v1783 = vunpack.c.h.b16 %v676
        %v1784 = vunpack.c.l.b16 %v677
        %v1785 = vunpack.c.h.b16 %v677
        %v1786 = vunpack.c.l.b16 %v678
        %v1787 = vunpack.c.h.b16 %v678
        %v1788 = vunpack.c.l.b16 %v679
        %v1789 = vunpack.c.h.b16 %v679
        %v1790 = vunpack.c.l.b16 %v680
        %v1791 = vunpack.c.h.b16 %v680
        %v1792 = vunpack.c.l.b16 %v681
        %v1793 = vunpack.c.h.b16 %v681
        %v1794 = vunpack.c.l.b16 %v682
        %v1795 = vunpack.c.h.b16 %v682
        %v1796 = vunpack.c.l.b16 %v683
        %v1797 = vunpack.c.h.b16 %v683
        %v1798 = vunpack.c.l.b16 %v684
        %v1799 = vunpack.c.h.b16 %v684
        %v1800 = vunpack.c.l.b16 %v685
        %v1801 = vunpack.c.h.b16 %v685
        %v1802 = vunpack.c.l.b16 %v686
        %v1803 = vunpack.c.h.b16 %v686
        %v1804 = vunpack.c.l.b16 %v687
        %v1805 = vunpack.c.h.b16 %v687
        %v1806 = vunpack.c.l.b16 %v688
        %v1807 = vunpack.c.h.b16 %v688
        %v1808 = vunpack.c.l.b16 %v689
        %v1809 = vunpack.c.h.b16 %v689
        %v1810 = vunpack.c.l.b16 %v690
        %v1811 = vunpack.c.h.b16 %v690
        %v1812 = vunpack.c.l.b16 %v691
        %v1813 = vunpack.c.h.b16 %v691
        %v1814 = vunpack.c.l.b16 %v692
        %v1815 = vunpack.c.h.b16 %v692
        %v1816 = vunpack.c.l.b16 %v693
        %v1817 = vunpack.c.h.b16 %v693
        %v1818 = vunpack.c.l.b16 %v694
        %v1819 = vunpack.c.h.b16 %v694
        %v1820 = vunpack.c.l.b16 %v695
        %v1821 = vunpack.c.h.b16 %v695
        %v1822 = vunpack.c.l.b16 %v696
        %v1823 = vunpack.c.h.b16 %v696
        %v1824 = vunpack.c.l.b16 %v697
        %v1825 = vunpack.c.h.b16 %v697
        %v1826 = vunpack.c.l.b16 %v698
        %v1827 = vunpack.c.h.b16 %v698
        %v1828 = vunpack.c.l.b16 %v699
        %v1829 = vunpack.c.h.b16 %v699
        %v1830 = vunpack.c.l.b16 %v700
        %v1831 = vunpack.c.h.b16 %v700
        %v1832 = vunpack.c.l.b16 %v701
        %v1833 = vunpack.c.h.b16 %v701
        %v1834 = vpack.c.b16 %v1330, %v1322
        %v1835 = vpack.c.b16 %v1331, %v1323
        %v1836 = vpack.c.b16 %v1332, %v1324
        %v1837 = vpack.c.b16 %v1333, %v1325
        %v1838 = vpack.c.b16 %v1334, %v1326
        %v1839 = vpack.c.b16 %v1335, %v1327
        %v1840 = vpack.c.b16 %v1336, %v1328
        %v1841 = vpack.c.b16 %v1337, %v1329
        %v1842 = vpack.c.b16 %v1346, %v1338
        %v1843 = vpack.c.b16 %v1347, %v1339
        %v1844 = vpack.c.b16 %v1348, %v1340
        %v1845 = vpack.c.b16 %v1349, %v1341
        %v1846 = vpack.c.b16 %v1350, %v1342
        %v1847 = vpack.c.b16 %v1351, %v1343
        %v1848 = vpack.c.b16 %v1352, %v1344
        %v1849 = vpack.c.b16 %v1353, %v1345
        %v1850 = vpack.c.b16 %v1362, %v1354
        %v1851 = vpack.c.b16 %v1363, %v1355
        %v1852 = vpack.c.b16 %v1364, %v1356
        %v1853 = vpack.c.b16 %v1365, %v1357
        %v1854 = vpack.c.b16 %v1366, %v1358
        %v1855 = vpack.c.b16 %v1367, %v1359
        %v1856 = vpack.c.b16 %v1368, %v1360
        %v1857 = vpack.c.b16 %v1369, %v1361
        %v1858 = vpack.c.b16 %v1378, %v1370
        %v1859 = vpack.c.b16 %v1379, %v1371
        %v1860 = vpack.c.b16 %v1380, %v1372
        %v1861 = vpack.c.b16 %v1381, %v1373
        %v1862 = vpack.c.b16 %v1382, %v1374
        %v1863 = vpack.c.b16 %v1383, %v1375
        %v1864 = vpack.c.b16 %v1384, %v1376
        %v1865 = vpack.c.b16 %v1385, %v1377
        %v1866 = vpack.c.b16 %v1394, %v1386
        %v1867 = vpack.c.b16 %v1395, %v1387
        %v1868 = vpack.c.b16 %v1396, %v1388
        %v1869 = vpack.c.b16 %v1397, %v1389
        %v1870 = vpack.c.b16 %v1398, %v1390
        %v1871 = vpack.c.b16 %v1399, %v1391
        %v1872 = vpack.c.b16 %v1400, %v1392
        %v1873 = vpack.c.b16 %v1401, %v1393
        %v1874 = vpack.c.b16 %v1410, %v1402
        %v1875 = vpack.c.b16 %v1411, %v1403
        %v1876 = vpack.c.b16 %v1412, %v1404
        %v1877 = vpack.c.b16 %v1413, %v1405
        %v1878 = vpack.c.b16 %v1414, %v1406
        %v1879 = vpack.c.b16 %v1415, %v1407
        %v1880 = vpack.c.b16 %v1416, %v1408
        %v1881 = vpack.c.b16 %v1417, %v1409
        %v1882 = vpack.c.b16 %v1426, %v1418
        %v1883 = vpack.c.b16 %v1427, %v1419
        %v1884 = vpack.c.b16 %v1428, %v1420
        %v1885 = vpack.c.b16 %v1429, %v1421
        %v1886 = vpack.c.b16 %v1430, %v1422
        %v1887 = vpack.c.b16 %v1431, %v1423
        %v1888 = vpack.c.b16 %v1432, %v1424
        %v1889 = vpack.c.b16 %v1433, %v1425
        %v1890 = vpack.c.b16 %v1442, %v1434
        %v1891 = vpack.c.b16 %v1443, %v1435
        %v1892 = vpack.c.b16 %v1444, %v1436
        %v1893 = vpack.c.b16 %v1445, %v1437
        %v1894 = vpack.c.b16 %v1446, %v1438
        %v1895 = vpack.c.b16 %v1447, %v1439
        %v1896 = vpack.c.b16 %v1448, %v1440
        %v1897 = vpack.c.b16 %v1449, %v1441
        %v1898 = vpack.c.b16 %v1458, %v1450
        %v1899 = vpack.c.b16 %v1459, %v1451
        %v1900 = vpack.c.b16 %v1460, %v1452
        %v1901 = vpack.c.b16 %v1461, %v1453
        %v1902 = vpack.c.b16 %v1462, %v1454
        %v1903 = vpack.c.b16 %v1463, %v1455
        %v1904 = vpack.c.b16 %v1464, %v1456
        %v1905 = vpack.c.b16 %v1465, %v1457
        %v1906 = vpack.c.b16 %v1474, %v1466
        %v1907 = vpack.c.b16 %v1475, %v1467
        %v1908 = vpack.c.b16 %v1476, %v1468
        %v1909 = vpack.c.b16 %v1477, %v1469
        %v1910 = vpack.c.b16 %v1478, %v1470
        %v1911 = vpack.c.b16 %v1479, %v1471
        %v1912 = vpack.c.b16 %v1480, %v1472
        %v1913 = vpack.c.b16 %v1481, %v1473
        %v1914 = vpack.c.b16 %v1490, %v1482
        %v1915 = vpack.c.b16 %v1491, %v1483
        %v1916 = vpack.c.b16 %v1492, %v1484
        %v1917 = vpack.c.b16 %v1493, %v1485
        %v1918 = vpack.c.b16 %v1494, %v1486
        %v1919 = vpack.c.b16 %v1495, %v1487
        %v1920 = vpack.c.b16 %v1496, %v1488
        %v1921 = vpack.c.b16 %v1497, %v1489
        %v1922 = vpack.c.b16 %v1506, %v1498
        %v1923 = vpack.c.b16 %v1507, %v1499
        %v1924 = vpack.c.b16 %v1508, %v1500
        %v1925 = vpack.c.b16 %v1509, %v1501
        %v1926 = vpack.c.b16 %v1510, %v1502
        %v1927 = vpack.c.b16 %v1511, %v1503
        %v1928 = vpack.c.b16 %v1512, %v1504
        %v1929 = vpack.c.b16 %v1513, %v1505
        %v1930 = vpack.c.b16 %v1522, %v1514
        %v1931 = vpack.c.b16 %v1523, %v1515
        %v1932 = vpack.c.b16 %v1524, %v1516
        %v1933 = vpack.c.b16 %v1525, %v1517
        %v1934 = vpack.c.b16 %v1526, %v1518
        %v1935 = vpack.c.b16 %v1527, %v1519
        %v1936 = vpack.c.b16 %v1528, %v1520
        %v1937 = vpack.c.b16 %v1529, %v1521
        %v1938 = vpack.c.b16 %v1538, %v1530
        %v1939 = vpack.c.b16 %v1539, %v1531
        %v1940 = vpack.c.b16 %v1540, %v1532
        %v1941 = vpack.c.b16 %v1541, %v1533
        %v1942 = vpack.c.b16 %v1542, %v1534
        %v1943 = vpack.c.b16 %v1543, %v1535
        %v1944 = vpack.c.b16 %v1544, %v1536
        %v1945 = vpack.c.b16 %v1545, %v1537
        %v1946 = vpack.c.b16 %v1554, %v1546
        %v1947 = vpack.c.b16 %v1555, %v1547
        %v1948 = vpack.c.b16 %v1556, %v1548
        %v1949 = vpack.c.b16 %v1557, %v1549
        %v1950 = vpack.c.b16 %v1558, %v1550
        %v1951 = vpack.c.b16 %v1559, %v1551
        %v1952 = vpack.c.b16 %v1560, %v1552
        %v1953 = vpack.c.b16 %v1561, %v1553
        %v1954 = vpack.c.b16 %v1570, %v1562
        %v1955 = vpack.c.b16 %v1571, %v1563
        %v1956 = vpack.c.b16 %v1572, %v1564
        %v1957 = vpack.c.b16 %v1573, %v1565
        %v1958 = vpack.c.b16 %v1574, %v1566
        %v1959 = vpack.c.b16 %v1575, %v1567
        %v1960 = vpack.c.b16 %v1576, %v1568
        %v1961 = vpack.c.b16 %v1577, %v1569
        %v1962 = vpack.c.b16 %v1586, %v1578
        %v1963 = vpack.c.b16 %v1587, %v1579
        %v1964 = vpack.c.b16 %v1588, %v1580
        %v1965 = vpack.c.b16 %v1589, %v1581
        %v1966 = vpack.c.b16 %v1590, %v1582
        %v1967 = vpack.c.b16 %v1591, %v1583
        %v1968 = vpack.c.b16 %v1592, %v1584
        %v1969 = vpack.c.b16 %v1593, %v1585
        %v1970 = vpack.c.b16 %v1602, %v1594
        %v1971 = vpack.c.b16 %v1603, %v1595
        %v1972 = vpack.c.b16 %v1604, %v1596
        %v1973 = vpack.c.b16 %v1605, %v1597
        %v1974 = vpack.c.b16 %v1606, %v1598
        %v1975 = vpack.c.b16 %v1607, %v1599
        %v1976 = vpack.c.b16 %v1608, %v1600
        %v1977 = vpack.c.b16 %v1609, %v1601
        %v1978 = vpack.c.b16 %v1618, %v1610
        %v1979 = vpack.c.b16 %v1619, %v1611
        %v1980 = vpack.c.b16 %v1620, %v1612
        %v1981 = vpack.c.b16 %v1621, %v1613
        %v1982 = vpack.c.b16 %v1622, %v1614
        %v1983 = vpack.c.b16 %v1623, %v1615
        %v1984 = vpack.c.b16 %v1624, %v1616
        %v1985 = vpack.c.b16 %v1625, %v1617
        %v1986 = vpack.c.b16 %v1634, %v1626
        %v1987 = vpack.c.b16 %v1635, %v1627
        %v1988 = vpack.c.b16 %v1636, %v1628
        %v1989 = vpack.c.b16 %v1637, %v1629
        %v1990 = vpack.c.b16 %v1638, %v1630
        %v1991 = vpack.c.b16 %v1639, %v1631
        %v1992 = vpack.c.b16 %v1640, %v1632
        %v1993 = vpack.c.b16 %v1641, %v1633
        %v1994 = vpack.c.b16 %v1650, %v1642
        %v1995 = vpack.c.b16 %v1651, %v1643
        %v1996 = vpack.c.b16 %v1652, %v1644
        %v1997 = vpack.c.b16 %v1653, %v1645
        %v1998 = vpack.c.b16 %v1654, %v1646
        %v1999 = vpack.c.b16 %v1655, %v1647
        %v2000 = vpack.c.b16 %v1656, %v1648
        %v2001 = vpack.c.b16 %v1657, %v1649
        %v2002 = vpack.c.b16 %v1666, %v1658
        %v2003 = vpack.c.b16 %v1667, %v1659
        %v2004 = vpack.c.b16 %v1668, %v1660
        %v2005 = vpack.c.b16 %v1669, %v1661
        %v2006 = vpack.c.b16 %v1670, %v1662
        %v2007 = vpack.c.b16 %v1671, %v1663
        %v2008 = vpack.c.b16 %v1672, %v1664
        %v2009 = vpack.c.b16 %v1673, %v1665
        %v2010 = vpack.c.b16 %v1682, %v1674
        %v2011 = vpack.c.b16 %v1683, %v1675
        %v2012 = vpack.c.b16 %v1684, %v1676
        %v2013 = vpack.c.b16 %v1685, %v1677
        %v2014 = vpack.c.b16 %v1686, %v1678
        %v2015 = vpack.c.b16 %v1687, %v1679
        %v2016 = vpack.c.b16 %v1688, %v1680
        %v2017 = vpack.c.b16 %v1689, %v1681
        %v2018 = vpack.c.b16 %v1698, %v1690
        %v2019 = vpack.c.b16 %v1699, %v1691
        %v2020 = vpack.c.b16 %v1700, %v1692
        %v2021 = vpack.c.b16 %v1701, %v1693
        %v2022 = vpack.c.b16 %v1702, %v1694
        %v2023 = vpack.c.b16 %v1703, %v1695
        %v2024 = vpack.c.b16 %v1704, %v1696
        %v2025 = vpack.c.b16 %v1705, %v1697
        %v2026 = vpack.c.b16 %v1714, %v1706
        %v2027 = vpack.c.b16 %v1715, %v1707
        %v2028 = vpack.c.b16 %v1716, %v1708
        %v2029 = vpack.c.b16 %v1717, %v1709
        %v2030 = vpack.c.b16 %v1718, %v1710
        %v2031 = vpack.c.b16 %v1719, %v1711
        %v2032 = vpack.c.b16 %v1720, %v1712
        %v2033 = vpack.c.b16 %v1721, %v1713
        %v2034 = vpack.c.b16 %v1730, %v1722
        %v2035 = vpack.c.b16 %v1731, %v1723
        %v2036 = vpack.c.b16 %v1732, %v1724
        %v2037 = vpack.c.b16 %v1733, %v1725
        %v2038 = vpack.c.b16 %v1734, %v1726
        %v2039 = vpack.c.b16 %v1735, %v1727
        %v2040 = vpack.c.b16 %v1736, %v1728
        %v2041 = vpack.c.b16 %v1737, %v1729
        %v2042 = vpack.c.b16 %v1746, %v1738
        %v2043 = vpack.c.b16 %v1747, %v1739
        %v2044 = vpack.c.b16 %v1748, %v1740
        %v2045 = vpack.c.b16 %v1749, %v1741
        %v2046 = vpack.c.b16 %v1750, %v1742
        %v2047 = vpack.c.b16 %v1751, %v1743
        %v2048 = vpack.c.b16 %v1752, %v1744
        %v2049 = vpack.c.b16 %v1753, %v1745
        %v2050 = vpack.c.b16 %v1762, %v1754
        %v2051 = vpack.c.b16 %v1763, %v1755
        %v2052 = vpack.c.b16 %v1764, %v1756
        %v2053 = vpack.c.b16 %v1765, %v1757
        %v2054 = vpack.c.b16 %v1766, %v1758
        %v2055 = vpack.c.b16 %v1767, %v1759
        %v2056 = vpack.c.b16 %v1768, %v1760
        %v2057 = vpack.c.b16 %v1769, %v1761
        %v2058 = vpack.c.b16 %v1778, %v1770
        %v2059 = vpack.c.b16 %v1779, %v1771
        %v2060 = vpack.c.b16 %v1780, %v1772
        %v2061 = vpack.c.b16 %v1781, %v1773
        %v2062 = vpack.c.b16 %v1782, %v1774
        %v2063 = vpack.c.b16 %v1783, %v1775
        %v2064 = vpack.c.b16 %v1784, %v1776
        %v2065 = vpack.c.b16 %v1785, %v1777
        %v2066 = vpack.c.b16 %v1794, %v1786
        %v2067 = vpack.c.b16 %v1795, %v1787
        %v2068 = vpack.c.b16 %v1796, %v1788
        %v2069 = vpack.c.b16 %v1797, %v1789
        %v2070 = vpack.c.b16 %v1798, %v1790
        %v2071 = vpack.c.b16 %v1799, %v1791
        %v2072 = vpack.c.b16 %v1800, %v1792
        %v2073 = vpack.c.b16 %v1801, %v1793
        %v2074 = vpack.c.b16 %v1810, %v1802
        %v2075 = vpack.c.b16 %v1811, %v1803
        %v2076 = vpack.c.b16 %v1812, %v1804
        %v2077 = vpack.c.b16 %v1813, %v1805
        %v2078 = vpack.c.b16 %v1814, %v1806
        %v2079 = vpack.c.b16 %v1815, %v1807
        %v2080 = vpack.c.b16 %v1816, %v1808
        %v2081 = vpack.c.b16 %v1817, %v1809
        %v2082 = vpack.c.b16 %v1826, %v1818
        %v2083 = vpack.c.b16 %v1827, %v1819
        %v2084 = vpack.c.b16 %v1828, %v1820
        %v2085 = vpack.c.b16 %v1829, %v1821
        %v2086 = vpack.c.b16 %v1830, %v1822
        %v2087 = vpack.c.b16 %v1831, %v1823
        %v2088 = vpack.c.b16 %v1832, %v1824
        %v2089 = vpack.c.b16 %v1833, %v1825
        %v2346 = vcombine.low %v976, %v976
        %v2347 = vcombine.high %v976, %v976
        %v2349 = vunpack.c.l.s4 1983009808
        %v2350 = vunpack.c.0.s8 %v2349
        %v2351 = vlaneseq
        %v2352 = vshrl.u32 %v2351, 7
        %v2353 = vsub.s32 %v2350, %v2352
        %v2354 = vrot.slane %v2346, %v2353
        %v2356 = vunpack.c.l.s4 1983009808
        %v2357 = vunpack.c.0.s8 %v2356
        %v2358 = vlaneseq
        %v2359 = vshrl.u32 %v2358, 7
        %v2360 = vsub.s32 %v2357, %v2359
        %v2361 = vrot.slane %v2347, %v2360
        %v2362 = vcombine.low %v2354, %v2354
        %v2363 = vcombine.high %v2354, %v2354
        %v2364 = vcombine.low %v2361, %v2361
        %v2365 = vcombine.high %v2361, %v2361
        %v2366 = vcombine.low %v993, %v993
        %v2367 = vcombine.high %v993, %v993
        %v2369 = vunpack.c.l.s4 1983009808
        %v2370 = vunpack.c.0.s8 %v2369
        %v2371 = vlaneseq
        %v2372 = vshrl.u32 %v2371, 7
        %v2373 = vsub.s32 %v2370, %v2372
        %v2374 = vrot.slane %v2366, %v2373
        %v2376 = vunpack.c.l.s4 1983009808
        %v2377 = vunpack.c.0.s8 %v2376
        %v2378 = vlaneseq
        %v2379 = vshrl.u32 %v2378, 7
        %v2380 = vsub.s32 %v2377, %v2379
        %v2381 = vrot.slane %v2367, %v2380
        %v2382 = vcombine.low %v2374, %v2374
        %v2383 = vcombine.high %v2374, %v2374
        %v2384 = vcombine.low %v2381, %v2381
        %v2385 = vcombine.high %v2381, %v2381
        %2394 = vmatprep.subr.bf16.mxu0 %v1835
        %2395 = vmatpush1.bf16.msra.mxu0 %v1834
        %2396 = vmatprep.subr.bf16.mxu0 %v1843
        %2397 = vmatpush1.bf16.msra.mxu0 %v1842
        %2398 = vmatprep.subr.bf16.mxu0 %v1851
        %2399 = vmatpush1.bf16.msra.mxu0 %v1850
        %2400 = vmatprep.subr.bf16.mxu0 %v1859
        %2401 = vmatpush1.bf16.msra.mxu0 %v1858
        %2402 = vmatprep.subr.bf16.mxu0 %v1867
        %2403 = vmatpush1.bf16.msra.mxu0 %v1866
        %2404 = vmatprep.subr.bf16.mxu0 %v1875
        %2405 = vmatpush1.bf16.msra.mxu0 %v1874
        %2406 = vmatprep.subr.bf16.mxu0 %v1883
        %2407 = vmatpush1.bf16.msra.mxu0 %v1882
        %2408 = vmatprep.subr.bf16.mxu0 %v1891
        %2409 = vmatpush1.bf16.msra.mxu0 %v1890
        %2410 = vmatprep.subr.bf16.mxu0 %v1899
        %2411 = vmatpush1.bf16.msra.mxu0 %v1898
        %2412 = vmatprep.subr.bf16.mxu0 %v1907
        %2413 = vmatpush1.bf16.msra.mxu0 %v1906
        %2414 = vmatprep.subr.bf16.mxu0 %v1915
        %2415 = vmatpush1.bf16.msra.mxu0 %v1914
        %2416 = vmatprep.subr.bf16.mxu0 %v1923
        %2417 = vmatpush1.bf16.msra.mxu0 %v1922
        %2418 = vmatprep.subr.bf16.mxu0 %v1931
        %2419 = vmatpush1.bf16.msra.mxu0 %v1930
        %2420 = vmatprep.subr.bf16.mxu0 %v1939
        %2421 = vmatpush1.bf16.msra.mxu0 %v1938
        %2422 = vmatprep.subr.bf16.mxu0 %v1947
        %2423 = vmatpush1.bf16.msra.mxu0 %v1946
        %2424 = vmatprep.subr.bf16.mxu0 %v1955
        %2425 = vmatpush1.bf16.msra.mxu0 %v1954
        %2426 = vmatprep.mubr.bf16.mxu0 %v1060
        %2427 = vmatmul.mubr.bf16.gmra.mrb[0].mxu0 %v1058
        %v2428 = vpop.f32.mrb[0].mxu0
        %v2429 = vadd.f32 %v2362, %v2428
        %v2430 = vpop.f32.mrb[0].mxu0
        %v2431 = vadd.f32 %v2363, %v2430
        %v2432 = vpop.f32.mrb[0].mxu0
        %v2433 = vadd.f32 %v2362, %v2432
        %v2434 = vpop.f32.mrb[0].mxu0
        %v2435 = vadd.f32 %v2363, %v2434
        %2436 = vdwg.mxu0
        %2437 = vmatprep.subr.bf16.mxu0 %v1963
        %2438 = vmatpush1.bf16.msra.mxu0 %v1962
        %2439 = vmatprep.subr.bf16.mxu0 %v1971
        %2440 = vmatpush1.bf16.msra.mxu0 %v1970
        %2441 = vmatprep.subr.bf16.mxu0 %v1979
        %2442 = vmatpush1.bf16.msra.mxu0 %v1978
        %2443 = vmatprep.subr.bf16.mxu0 %v1987
        %2444 = vmatpush1.bf16.msra.mxu0 %v1986
        %2445 = vmatprep.subr.bf16.mxu0 %v1995
        %2446 = vmatpush1.bf16.msra.mxu0 %v1994
        %2447 = vmatprep.subr.bf16.mxu0 %v2003
        %2448 = vmatpush1.bf16.msra.mxu0 %v2002
        %2449 = vmatprep.subr.bf16.mxu0 %v2011
        %2450 = vmatpush1.bf16.msra.mxu0 %v2010
        %2451 = vmatprep.subr.bf16.mxu0 %v2019
        %2452 = vmatpush1.bf16.msra.mxu0 %v2018
        %2453 = vmatprep.subr.bf16.mxu0 %v2027
        %2454 = vmatpush1.bf16.msra.mxu0 %v2026
        %2455 = vmatprep.subr.bf16.mxu0 %v2035
        %2456 = vmatpush1.bf16.msra.mxu0 %v2034
        %2457 = vmatprep.subr.bf16.mxu0 %v2043
        %2458 = vmatpush1.bf16.msra.mxu0 %v2042
        %2459 = vmatprep.subr.bf16.mxu0 %v2051
        %2460 = vmatpush1.bf16.msra.mxu0 %v2050
        %2461 = vmatprep.subr.bf16.mxu0 %v2059
        %2462 = vmatpush1.bf16.msra.mxu0 %v2058
        %2463 = vmatprep.subr.bf16.mxu0 %v2067
        %2464 = vmatpush1.bf16.msra.mxu0 %v2066
        %2465 = vmatprep.subr.bf16.mxu0 %v2075
        %2466 = vmatpush1.bf16.msra.mxu0 %v2074
        %2467 = vmatprep.subr.bf16.mxu0 %v2083
        %2468 = vmatpush1.bf16.msra.mxu0 %v2082
        %2469 = vmatprep.mubr.bf16.mxu0 %v1061
        %2470 = vmatmul.mubr.bf16.gmra.mrb[0].mxu0 %v1059
        %v2471 = vpop.f32.mrb[0].mxu0
        %v2472 = vadd.f32 %v2429, %v2471
        %v2473 = vpop.f32.mrb[0].mxu0
        %v2474 = vadd.f32 %v2431, %v2473
        %v2475 = vpop.f32.mrb[0].mxu0
        %v2476 = vadd.f32 %v2433, %v2475
        %v2477 = vpop.f32.mrb[0].mxu0
        %v2478 = vadd.f32 %v2435, %v2477
        %2479 = vdwg.mxu0
        %2480 = vmatprep.subr.bf16.mxu0 %v1837
        %2481 = vmatpush1.bf16.msra.mxu0 %v1836
        %2482 = vmatprep.subr.bf16.mxu0 %v1845
        %2483 = vmatpush1.bf16.msra.mxu0 %v1844
        %2484 = vmatprep.subr.bf16.mxu0 %v1853
        %2485 = vmatpush1.bf16.msra.mxu0 %v1852
        %2486 = vmatprep.subr.bf16.mxu0 %v1861
        %2487 = vmatpush1.bf16.msra.mxu0 %v1860
        %2488 = vmatprep.subr.bf16.mxu0 %v1869
        %2489 = vmatpush1.bf16.msra.mxu0 %v1868
        %2490 = vmatprep.subr.bf16.mxu0 %v1877
        %2491 = vmatpush1.bf16.msra.mxu0 %v1876
        %2492 = vmatprep.subr.bf16.mxu0 %v1885
        %2493 = vmatpush1.bf16.msra.mxu0 %v1884
        %2494 = vmatprep.subr.bf16.mxu0 %v1893
        %2495 = vmatpush1.bf16.msra.mxu0 %v1892
        %2496 = vmatprep.subr.bf16.mxu0 %v1901
        %2497 = vmatpush1.bf16.msra.mxu0 %v1900
        %2498 = vmatprep.subr.bf16.mxu0 %v1909
        %2499 = vmatpush1.bf16.msra.mxu0 %v1908
        %2500 = vmatprep.subr.bf16.mxu0 %v1917
        %2501 = vmatpush1.bf16.msra.mxu0 %v1916
        %2502 = vmatprep.subr.bf16.mxu0 %v1925
        %2503 = vmatpush1.bf16.msra.mxu0 %v1924
        %2504 = vmatprep.subr.bf16.mxu0 %v1933
        %2505 = vmatpush1.bf16.msra.mxu0 %v1932
        %2506 = vmatprep.subr.bf16.mxu0 %v1941
        %2507 = vmatpush1.bf16.msra.mxu0 %v1940
        %2508 = vmatprep.subr.bf16.mxu0 %v1949
        %2509 = vmatpush1.bf16.msra.mxu0 %v1948
        %2510 = vmatprep.subr.bf16.mxu0 %v1957
        %2511 = vmatpush1.bf16.msra.mxu0 %v1956
        %2512 = vmatprep.mubr.bf16.mxu0 %v1060
        %2513 = vmatmul.mubr.bf16.gmra.mrb[0].mxu0 %v1058
        %v2514 = vpop.f32.mrb[0].mxu0
        %v2515 = vadd.f32 %v2364, %v2514
        %v2516 = vpop.f32.mrb[0].mxu0
        %v2517 = vadd.f32 %v2365, %v2516
        %v2518 = vpop.f32.mrb[0].mxu0
        %v2519 = vadd.f32 %v2364, %v2518
        %v2520 = vpop.f32.mrb[0].mxu0
        %v2521 = vadd.f32 %v2365, %v2520
        %2522 = vdwg.mxu0
        %2523 = vmatprep.subr.bf16.mxu0 %v1965
        %2524 = vmatpush1.bf16.msra.mxu0 %v1964
        %2525 = vmatprep.subr.bf16.mxu0 %v1973
        %2526 = vmatpush1.bf16.msra.mxu0 %v1972
        %2527 = vmatprep.subr.bf16.mxu0 %v1981
        %2528 = vmatpush1.bf16.msra.mxu0 %v1980
        %2529 = vmatprep.subr.bf16.mxu0 %v1989
        %2530 = vmatpush1.bf16.msra.mxu0 %v1988
        %2531 = vmatprep.subr.bf16.mxu0 %v1997
        %2532 = vmatpush1.bf16.msra.mxu0 %v1996
        %2533 = vmatprep.subr.bf16.mxu0 %v2005
        %2534 = vmatpush1.bf16.msra.mxu0 %v2004
        %2535 = vmatprep.subr.bf16.mxu0 %v2013
        %2536 = vmatpush1.bf16.msra.mxu0 %v2012
        %2537 = vmatprep.subr.bf16.mxu0 %v2021
        %2538 = vmatpush1.bf16.msra.mxu0 %v2020
        %2539 = vmatprep.subr.bf16.mxu0 %v2029
        %2540 = vmatpush1.bf16.msra.mxu0 %v2028
        %2541 = vmatprep.subr.bf16.mxu0 %v2037
        %2542 = vmatpush1.bf16.msra.mxu0 %v2036
        %2543 = vmatprep.subr.bf16.mxu0 %v2045
        %2544 = vmatpush1.bf16.msra.mxu0 %v2044
        %2545 = vmatprep.subr.bf16.mxu0 %v2053
        %2546 = vmatpush1.bf16.msra.mxu0 %v2052
        %2547 = vmatprep.subr.bf16.mxu0 %v2061
        %2548 = vmatpush1.bf16.msra.mxu0 %v2060
        %2549 = vmatprep.subr.bf16.mxu0 %v2069
        %2550 = vmatpush1.bf16.msra.mxu0 %v2068
        %2551 = vmatprep.subr.bf16.mxu0 %v2077
        %2552 = vmatpush1.bf16.msra.mxu0 %v2076
        %2553 = vmatprep.subr.bf16.mxu0 %v2085
        %2554 = vmatpush1.bf16.msra.mxu0 %v2084
        %2555 = vmatprep.mubr.bf16.mxu0 %v1061
        %2556 = vmatmul.mubr.bf16.gmra.mrb[0].mxu0 %v1059
        %v2557 = vpop.f32.mrb[0].mxu0
        %v2558 = vadd.f32 %v2515, %v2557
        %v2559 = vpop.f32.mrb[0].mxu0
        %v2560 = vadd.f32 %v2517, %v2559
        %v2561 = vpop.f32.mrb[0].mxu0
        %v2562 = vadd.f32 %v2519, %v2561
        %v2563 = vpop.f32.mrb[0].mxu0
        %v2564 = vadd.f32 %v2521, %v2563
        %2565 = vdwg.mxu0
        %2566 = vmatprep.subr.bf16.mxu0 %v1839
        %2567 = vmatpush1.bf16.msra.mxu0 %v1838
        %2568 = vmatprep.subr.bf16.mxu0 %v1847
        %2569 = vmatpush1.bf16.msra.mxu0 %v1846
        %2570 = vmatprep.subr.bf16.mxu0 %v1855
        %2571 = vmatpush1.bf16.msra.mxu0 %v1854
        %2572 = vmatprep.subr.bf16.mxu0 %v1863
        %2573 = vmatpush1.bf16.msra.mxu0 %v1862
        %2574 = vmatprep.subr.bf16.mxu0 %v1871
        %2575 = vmatpush1.bf16.msra.mxu0 %v1870
        %2576 = vmatprep.subr.bf16.mxu0 %v1879
        %2577 = vmatpush1.bf16.msra.mxu0 %v1878
        %2578 = vmatprep.subr.bf16.mxu0 %v1887
        %2579 = vmatpush1.bf16.msra.mxu0 %v1886
        %2580 = vmatprep.subr.bf16.mxu0 %v1895
        %2581 = vmatpush1.bf16.msra.mxu0 %v1894
        %2582 = vmatprep.subr.bf16.mxu0 %v1903
        %2583 = vmatpush1.bf16.msra.mxu0 %v1902
        %2584 = vmatprep.subr.bf16.mxu0 %v1911
        %2585 = vmatpush1.bf16.msra.mxu0 %v1910
        %2586 = vmatprep.subr.bf16.mxu0 %v1919
        %2587 = vmatpush1.bf16.msra.mxu0 %v1918
        %2588 = vmatprep.subr.bf16.mxu0 %v1927
        %2589 = vmatpush1.bf16.msra.mxu0 %v1926
        %2590 = vmatprep.subr.bf16.mxu0 %v1935
        %2591 = vmatpush1.bf16.msra.mxu0 %v1934
        %2592 = vmatprep.subr.bf16.mxu0 %v1943
        %2593 = vmatpush1.bf16.msra.mxu0 %v1942
        %2594 = vmatprep.subr.bf16.mxu0 %v1951
        %2595 = vmatpush1.bf16.msra.mxu0 %v1950
        %2596 = vmatprep.subr.bf16.mxu0 %v1959
        %2597 = vmatpush1.bf16.msra.mxu0 %v1958
        %2598 = vmatprep.mubr.bf16.mxu0 %v1060
        %2599 = vmatmul.mubr.bf16.gmra.mrb[0].mxu0 %v1058
        %v2600 = vpop.f32.mrb[0].mxu0
        %v2601 = vadd.f32 %v2382, %v2600
        %v2602 = vpop.f32.mrb[0].mxu0
        %v2603 = vadd.f32 %v2383, %v2602
        %v2604 = vpop.f32.mrb[0].mxu0
        %v2605 = vadd.f32 %v2382, %v2604
        %v2606 = vpop.f32.mrb[0].mxu0
        %v2607 = vadd.f32 %v2383, %v2606
        %2608 = vdwg.mxu0
        %2609 = vmatprep.subr.bf16.mxu0 %v1967
        %2610 = vmatpush1.bf16.msra.mxu0 %v1966
        %2611 = vmatprep.subr.bf16.mxu0 %v1975
        %2612 = vmatpush1.bf16.msra.mxu0 %v1974
        %2613 = vmatprep.subr.bf16.mxu0 %v1983
        %2614 = vmatpush1.bf16.msra.mxu0 %v1982
        %2615 = vmatprep.subr.bf16.mxu0 %v1991
        %2616 = vmatpush1.bf16.msra.mxu0 %v1990
        %2617 = vmatprep.subr.bf16.mxu0 %v1999
        %2618 = vmatpush1.bf16.msra.mxu0 %v1998
        %2619 = vmatprep.subr.bf16.mxu0 %v2007
        %2620 = vmatpush1.bf16.msra.mxu0 %v2006
        %2621 = vmatprep.subr.bf16.mxu0 %v2015
        %2622 = vmatpush1.bf16.msra.mxu0 %v2014
        %2623 = vmatprep.subr.bf16.mxu0 %v2023
        %2624 = vmatpush1.bf16.msra.mxu0 %v2022
        %2625 = vmatprep.subr.bf16.mxu0 %v2031
        %2626 = vmatpush1.bf16.msra.mxu0 %v2030
        %2627 = vmatprep.subr.bf16.mxu0 %v2039
        %2628 = vmatpush1.bf16.msra.mxu0 %v2038
        %2629 = vmatprep.subr.bf16.mxu0 %v2047
        %2630 = vmatpush1.bf16.msra.mxu0 %v2046
        %2631 = vmatprep.subr.bf16.mxu0 %v2055
        %2632 = vmatpush1.bf16.msra.mxu0 %v2054
        %2633 = vmatprep.subr.bf16.mxu0 %v2063
        %2634 = vmatpush1.bf16.msra.mxu0 %v2062
        %2635 = vmatprep.subr.bf16.mxu0 %v2071
        %2636 = vmatpush1.bf16.msra.mxu0 %v2070
        %2637 = vmatprep.subr.bf16.mxu0 %v2079
        %2638 = vmatpush1.bf16.msra.mxu0 %v2078
        %2639 = vmatprep.subr.bf16.mxu0 %v2087
        %2640 = vmatpush1.bf16.msra.mxu0 %v2086
        %2641 = vmatprep.mubr.bf16.mxu0 %v1061
        %2642 = vmatmul.mubr.bf16.gmra.mrb[0].mxu0 %v1059
        %v2643 = vpop.f32.mrb[0].mxu0
        %v2644 = vadd.f32 %v2601, %v2643
        %v2645 = vpop.f32.mrb[0].mxu0
        %v2646 = vadd.f32 %v2603, %v2645
        %v2647 = vpop.f32.mrb[0].mxu0
        %v2648 = vadd.f32 %v2605, %v2647
        %v2649 = vpop.f32.mrb[0].mxu0
        %v2650 = vadd.f32 %v2607, %v2649
        %2651 = vdwg.mxu0
        %2652 = vmatprep.subr.bf16.mxu0 %v1841
        %2653 = vmatpush1.bf16.msra.mxu0 %v1840
        %2654 = vmatprep.subr.bf16.mxu0 %v1849
        %2655 = vmatpush1.bf16.msra.mxu0 %v1848
        %2656 = vmatprep.subr.bf16.mxu0 %v1857
        %2657 = vmatpush1.bf16.msra.mxu0 %v1856
        %2658 = vmatprep.subr.bf16.mxu0 %v1865
        %2659 = vmatpush1.bf16.msra.mxu0 %v1864
        %2660 = vmatprep.subr.bf16.mxu0 %v1873
        %2661 = vmatpush1.bf16.msra.mxu0 %v1872
        %2662 = vmatprep.subr.bf16.mxu0 %v1881
        %2663 = vmatpush1.bf16.msra.mxu0 %v1880
        %2664 = vmatprep.subr.bf16.mxu0 %v1889
        %2665 = vmatpush1.bf16.msra.mxu0 %v1888
        %2666 = vmatprep.subr.bf16.mxu0 %v1897
        %2667 = vmatpush1.bf16.msra.mxu0 %v1896
        %2668 = vmatprep.subr.bf16.mxu0 %v1905
        %2669 = vmatpush1.bf16.msra.mxu0 %v1904
        %2670 = vmatprep.subr.bf16.mxu0 %v1913
        %2671 = vmatpush1.bf16.msra.mxu0 %v1912
        %2672 = vmatprep.subr.bf16.mxu0 %v1921
        %2673 = vmatpush1.bf16.msra.mxu0 %v1920
        %2674 = vmatprep.subr.bf16.mxu0 %v1929
        %2675 = vmatpush1.bf16.msra.mxu0 %v1928
        %2676 = vmatprep.subr.bf16.mxu0 %v1937
        %2677 = vmatpush1.bf16.msra.mxu0 %v1936
        %2678 = vmatprep.subr.bf16.mxu0 %v1945
        %2679 = vmatpush1.bf16.msra.mxu0 %v1944
        %2680 = vmatprep.subr.bf16.mxu0 %v1953
        %2681 = vmatpush1.bf16.msra.mxu0 %v1952
        %2682 = vmatprep.subr.bf16.mxu0 %v1961
        %2683 = vmatpush1.bf16.msra.mxu0 %v1960
        %2684 = vmatprep.mubr.bf16.mxu0 %v1060
        %2685 = vmatmul.mubr.bf16.gmra.mrb[0].mxu0 %v1058
        %v2686 = vpop.f32.mrb[0].mxu0
        %v2687 = vadd.f32 %v2384, %v2686
        %v2688 = vpop.f32.mrb[0].mxu0
        %v2689 = vadd.f32 %v2385, %v2688
        %v2690 = vpop.f32.mrb[0].mxu0
        %v2691 = vadd.f32 %v2384, %v2690
        %v2692 = vpop.f32.mrb[0].mxu0
        %v2693 = vadd.f32 %v2385, %v2692
        %2694 = vdwg.mxu0
        %2695 = vmatprep.subr.bf16.mxu0 %v1969
        %2696 = vmatpush1.bf16.msra.mxu0 %v1968
        %2697 = vmatprep.subr.bf16.mxu0 %v1977
        %2698 = vmatpush1.bf16.msra.mxu0 %v1976
        %2699 = vmatprep.subr.bf16.mxu0 %v1985
        %2700 = vmatpush1.bf16.msra.mxu0 %v1984
        %2701 = vmatprep.subr.bf16.mxu0 %v1993
        %2702 = vmatpush1.bf16.msra.mxu0 %v1992
        %2703 = vmatprep.subr.bf16.mxu0 %v2001
        %2704 = vmatpush1.bf16.msra.mxu0 %v2000
        %2705 = vmatprep.subr.bf16.mxu0 %v2009
        %2706 = vmatpush1.bf16.msra.mxu0 %v2008
        %2707 = vmatprep.subr.bf16.mxu0 %v2017
        %2708 = vmatpush1.bf16.msra.mxu0 %v2016
        %2709 = vmatprep.subr.bf16.mxu0 %v2025
        %2710 = vmatpush1.bf16.msra.mxu0 %v2024
        %2711 = vmatprep.subr.bf16.mxu0 %v2033
        %2712 = vmatpush1.bf16.msra.mxu0 %v2032
        %2713 = vmatprep.subr.bf16.mxu0 %v2041
        %2714 = vmatpush1.bf16.msra.mxu0 %v2040
        %2715 = vmatprep.subr.bf16.mxu0 %v2049
        %2716 = vmatpush1.bf16.msra.mxu0 %v2048
        %2717 = vmatprep.subr.bf16.mxu0 %v2057
        %2718 = vmatpush1.bf16.msra.mxu0 %v2056
        %2719 = vmatprep.subr.bf16.mxu0 %v2065
        %2720 = vmatpush1.bf16.msra.mxu0 %v2064
        %2721 = vmatprep.subr.bf16.mxu0 %v2073
        %2722 = vmatpush1.bf16.msra.mxu0 %v2072
        %2723 = vmatprep.subr.bf16.mxu0 %v2081
        %2724 = vmatpush1.bf16.msra.mxu0 %v2080
        %2725 = vmatprep.subr.bf16.mxu0 %v2089
        %2726 = vmatpush1.bf16.msra.mxu0 %v2088
        %2727 = vmatprep.mubr.bf16.mxu0 %v1061
        %2728 = vmatmul.mubr.bf16.gmra.mrb[0].mxu0 %v1059
        %v2729 = vpop.f32.mrb[0].mxu0
        %v2730 = vadd.f32 %v2687, %v2729
        %v2731 = vpop.f32.mrb[0].mxu0
        %v2732 = vadd.f32 %v2689, %v2731
        %v2733 = vpop.f32.mrb[0].mxu0
        %v2734 = vadd.f32 %v2691, %v2733
        %v2735 = vpop.f32.mrb[0].mxu0
        %v2736 = vadd.f32 %v2693, %v2735
        %2737 = vdwg.mxu0
        %v2754 = vcombine.low %v2472, %v2474
        %v2755 = vcombine.high %v2472, %v2474
        %v2756 = vcombine.low %v2558, %v2560
        %v2757 = vcombine.high %v2558, %v2560
        %v2759 = vunpack.c.l.s4 1983009808
        %v2760 = vunpack.c.0.s8 %v2759
        %v2761 = vlaneseq
        %v2762 = vshrl.u32 %v2761, 7
        %v2763 = vsub.s32 %v2760, %v2762
        %v2764 = vrot.slane %v2754, %v2763
        %v2766 = vunpack.c.l.s4 1983009808
        %v2767 = vunpack.c.0.s8 %v2766
        %v2768 = vlaneseq
        %v2769 = vshrl.u32 %v2768, 7
        %v2770 = vsub.s32 %v2767, %v2769
        %v2771 = vrot.slane %v2755, %v2770
        %v2773 = vunpack.c.l.s4 1983009808
        %v2774 = vunpack.c.0.s8 %v2773
        %v2775 = vlaneseq
        %v2776 = vshrl.u32 %v2775, 7
        %v2777 = vsub.s32 %v2774, %v2776
        %v2778 = vrot.slane %v2756, %v2777
        %v2780 = vunpack.c.l.s4 1983009808
        %v2781 = vunpack.c.0.s8 %v2780
        %v2782 = vlaneseq
        %v2783 = vshrl.u32 %v2782, 7
        %v2784 = vsub.s32 %v2781, %v2783
        %v2785 = vrot.slane %v2757, %v2784
        %v2786 = vcombine.low %v2764, %v2778
        %v2787 = vcombine.high %v2764, %v2778
        %v2788 = vcombine.low %v2771, %v2785
        %v2789 = vcombine.high %v2771, %v2785
        %v2790 = vcombine.low %v2644, %v2646
        %v2791 = vcombine.high %v2644, %v2646
        %v2792 = vcombine.low %v2730, %v2732
        %v2793 = vcombine.high %v2730, %v2732
        %v2795 = vunpack.c.l.s4 1983009808
        %v2796 = vunpack.c.0.s8 %v2795
        %v2797 = vlaneseq
        %v2798 = vshrl.u32 %v2797, 7
        %v2799 = vsub.s32 %v2796, %v2798
        %v2800 = vrot.slane %v2790, %v2799
        %v2802 = vunpack.c.l.s4 1983009808
        %v2803 = vunpack.c.0.s8 %v2802
        %v2804 = vlaneseq
        %v2805 = vshrl.u32 %v2804, 7
        %v2806 = vsub.s32 %v2803, %v2805
        %v2807 = vrot.slane %v2791, %v2806
        %v2809 = vunpack.c.l.s4 1983009808
        %v2810 = vunpack.c.0.s8 %v2809
        %v2811 = vlaneseq
        %v2812 = vshrl.u32 %v2811, 7
        %v2813 = vsub.s32 %v2810, %v2812
        %v2814 = vrot.slane %v2792, %v2813
        %v2816 = vunpack.c.l.s4 1983009808
        %v2817 = vunpack.c.0.s8 %v2816
        %v2818 = vlaneseq
        %v2819 = vshrl.u32 %v2818, 7
        %v2820 = vsub.s32 %v2817, %v2819
        %v2821 = vrot.slane %v2793, %v2820
        %v2822 = vcombine.low %v2800, %v2814
        %v2823 = vcombine.high %v2800, %v2814
        %v2824 = vcombine.low %v2807, %v2821
        %v2825 = vcombine.high %v2807, %v2821
        %v2826 = vcombine.low %v2476, %v2478
        %v2827 = vcombine.high %v2476, %v2478
        %v2828 = vcombine.low %v2562, %v2564
        %v2829 = vcombine.high %v2562, %v2564
        %v2831 = vunpack.c.l.s4 1983009808
        %v2832 = vunpack.c.0.s8 %v2831
        %v2833 = vlaneseq
        %v2834 = vshrl.u32 %v2833, 7
        %v2835 = vsub.s32 %v2832, %v2834
        %v2836 = vrot.slane %v2826, %v2835
        %v2838 = vunpack.c.l.s4 1983009808
        %v2839 = vunpack.c.0.s8 %v2838
        %v2840 = vlaneseq
        %v2841 = vshrl.u32 %v2840, 7
        %v2842 = vsub.s32 %v2839, %v2841
        %v2843 = vrot.slane %v2827, %v2842
        %v2845 = vunpack.c.l.s4 1983009808
        %v2846 = vunpack.c.0.s8 %v2845
        %v2847 = vlaneseq
        %v2848 = vshrl.u32 %v2847, 7
        %v2849 = vsub.s32 %v2846, %v2848
        %v2850 = vrot.slane %v2828, %v2849
        %v2852 = vunpack.c.l.s4 1983009808
        %v2853 = vunpack.c.0.s8 %v2852
        %v2854 = vlaneseq
        %v2855 = vshrl.u32 %v2854, 7
        %v2856 = vsub.s32 %v2853, %v2855
        %v2857 = vrot.slane %v2829, %v2856
        %v2858 = vcombine.low %v2836, %v2850
        %v2859 = vcombine.high %v2836, %v2850
        %v2860 = vcombine.low %v2843, %v2857
        %v2861 = vcombine.high %v2843, %v2857
        %v2862 = vcombine.low %v2648, %v2650
        %v2863 = vcombine.high %v2648, %v2650
        %v2864 = vcombine.low %v2734, %v2736
        %v2865 = vcombine.high %v2734, %v2736
        %v2867 = vunpack.c.l.s4 1983009808
        %v2868 = vunpack.c.0.s8 %v2867
        %v2869 = vlaneseq
        %v2870 = vshrl.u32 %v2869, 7
        %v2871 = vsub.s32 %v2868, %v2870
        %v2872 = vrot.slane %v2862, %v2871
        %v2874 = vunpack.c.l.s4 1983009808
        %v2875 = vunpack.c.0.s8 %v2874
        %v2876 = vlaneseq
        %v2877 = vshrl.u32 %v2876, 7
        %v2878 = vsub.s32 %v2875, %v2877
        %v2879 = vrot.slane %v2863, %v2878
        %v2881 = vunpack.c.l.s4 1983009808
        %v2882 = vunpack.c.0.s8 %v2881
        %v2883 = vlaneseq
        %v2884 = vshrl.u32 %v2883, 7
        %v2885 = vsub.s32 %v2882, %v2884
        %v2886 = vrot.slane %v2864, %v2885
        %v2888 = vunpack.c.l.s4 1983009808
        %v2889 = vunpack.c.0.s8 %v2888
        %v2890 = vlaneseq
        %v2891 = vshrl.u32 %v2890, 7
        %v2892 = vsub.s32 %v2889, %v2891
        %v2893 = vrot.slane %v2865, %v2892
        %v2894 = vcombine.low %v2872, %v2886
        %v2895 = vcombine.high %v2872, %v2886
        %v2896 = vcombine.low %v2879, %v2893
        %v2897 = vcombine.high %v2879, %v2893
        %2914 = vst [vmem:[#allocation2] sm:$0xff] %v2786
        %2915 = vst [vmem:[#allocation2 + $0x8] sm:$0xff] %v2822
        %2916 = vst [vmem:[#allocation2 + $0x10] sm:$0xff] %v2787
        %2917 = vst [vmem:[#allocation2 + $0x18] sm:$0xff] %v2823
        %2918 = vst [vmem:[#allocation2 + $0x20] sm:$0xff] %v2788
        %2919 = vst [vmem:[#allocation2 + $0x28] sm:$0xff] %v2824
        %2920 = vst [vmem:[#allocation2 + $0x30] sm:$0xff] %v2789
        %2921 = vst [vmem:[#allocation2 + $0x38] sm:$0xff] %v2825
        %2922 = vst [vmem:[#allocation2 + $0x40] sm:$0xff] %v2858
        %2923 = vst [vmem:[#allocation2 + $0x48] sm:$0xff] %v2894
        %2924 = vst [vmem:[#allocation2 + $0x50] sm:$0xff] %v2859
        %2925 = vst [vmem:[#allocation2 + $0x58] sm:$0xff] %v2895
        %2926 = vst [vmem:[#allocation2 + $0x60] sm:$0xff] %v2860
        %2927 = vst [vmem:[#allocation2 + $0x68] sm:$0xff] %v2896
        %2928 = vst [vmem:[#allocation2 + $0x70] sm:$0xff] %v2861
        %2929 = vst [vmem:[#allocation2 + $0x78] sm:$0xff] %v2897
        %v2930 = vld [vmem:[%s224] sm:$0xff]
        %v2931 = vld [vmem:[%s224 + $0x8] sm:$0xff]
        %v2932 = vld [vmem:[%s224 + $0x10] sm:$0xff]
        %v2933 = vld [vmem:[%s224 + $0x18] sm:$0xff]
        %v2934 = vld [vmem:[%s224 + $0x20] sm:$0xff]
        %v2935 = vld [vmem:[%s224 + $0x28] sm:$0xff]
        %v2936 = vld [vmem:[%s224 + $0x30] sm:$0xff]
        %v2937 = vld [vmem:[%s224 + $0x38] sm:$0xff]
        %v2938 = vld [vmem:[%s224 + $0x40] sm:$0xff]
        %v2939 = vld [vmem:[%s224 + $0x48] sm:$0xff]
        %v2940 = vld [vmem:[%s224 + $0x50] sm:$0xff]
        %v2941 = vld [vmem:[%s224 + $0x58] sm:$0xff]
        %v2942 = vld [vmem:[%s224 + $0x60] sm:$0xff]
        %v2943 = vld [vmem:[%s224 + $0x68] sm:$0xff]
        %v2944 = vld [vmem:[%s224 + $0x70] sm:$0xff]
        %v2945 = vld [vmem:[%s224 + $0x78] sm:$0xff]
        %v2946 = vld [vmem:[%s224 + $0x80] sm:$0xff]
        %v2947 = vld [vmem:[%s224 + $0x88] sm:$0xff]
        %v2948 = vld [vmem:[%s224 + $0x90] sm:$0xff]
        %v2949 = vld [vmem:[%s224 + $0x98] sm:$0xff]
        %v2950 = vld [vmem:[%s224 + $0xa0] sm:$0xff]
        %v2951 = vld [vmem:[%s224 + $0xa8] sm:$0xff]
        %v2952 = vld [vmem:[%s224 + $0xb0] sm:$0xff]
        %v2953 = vld [vmem:[%s224 + $0xb8] sm:$0xff]
        %v2954 = vld [vmem:[%s224 + $0xc0] sm:$0xff]
        %v2955 = vld [vmem:[%s224 + $0xc8] sm:$0xff]
        %v2956 = vld [vmem:[%s224 + $0xd0] sm:$0xff]
        %v2957 = vld [vmem:[%s224 + $0xd8] sm:$0xff]
        %v2958 = vld [vmem:[%s224 + $0xe0] sm:$0xff]
        %v2959 = vld [vmem:[%s224 + $0xe8] sm:$0xff]
        %v2960 = vld [vmem:[%s224 + $0xf0] sm:$0xff]
        %v2961 = vld [vmem:[%s224 + $0xf8] sm:$0xff]
        %v2962 = vld [vmem:[%s224 + $0x100] sm:$0xff]
        %v2963 = vld [vmem:[%s224 + $0x108] sm:$0xff]
        %v2964 = vld [vmem:[%s224 + $0x110] sm:$0xff]
        %v2965 = vld [vmem:[%s224 + $0x118] sm:$0xff]
        %v2966 = vld [vmem:[%s224 + $0x120] sm:$0xff]
        %v2967 = vld [vmem:[%s224 + $0x128] sm:$0xff]
        %v2968 = vld [vmem:[%s224 + $0x130] sm:$0xff]
        %v2969 = vld [vmem:[%s224 + $0x138] sm:$0xff]
        %v2970 = vld [vmem:[%s224 + $0x140] sm:$0xff]
        %v2971 = vld [vmem:[%s224 + $0x148] sm:$0xff]
        %v2972 = vld [vmem:[%s224 + $0x150] sm:$0xff]
        %v2973 = vld [vmem:[%s224 + $0x158] sm:$0xff]
        %v2974 = vld [vmem:[%s224 + $0x160] sm:$0xff]
        %v2975 = vld [vmem:[%s224 + $0x168] sm:$0xff]
        %v2976 = vld [vmem:[%s224 + $0x170] sm:$0xff]
        %v2977 = vld [vmem:[%s224 + $0x178] sm:$0xff]
        %v2978 = vld [vmem:[%s224 + $0x180] sm:$0xff]
        %v2979 = vld [vmem:[%s224 + $0x188] sm:$0xff]
        %v2980 = vld [vmem:[%s224 + $0x190] sm:$0xff]
        %v2981 = vld [vmem:[%s224 + $0x198] sm:$0xff]
        %v2982 = vld [vmem:[%s224 + $0x1a0] sm:$0xff]
        %v2983 = vld [vmem:[%s224 + $0x1a8] sm:$0xff]
        %v2984 = vld [vmem:[%s224 + $0x1b0] sm:$0xff]
        %v2985 = vld [vmem:[%s224 + $0x1b8] sm:$0xff]
        %v2986 = vld [vmem:[%s224 + $0x1c0] sm:$0xff]
        %v2987 = vld [vmem:[%s224 + $0x1c8] sm:$0xff]
        %v2988 = vld [vmem:[%s224 + $0x1d0] sm:$0xff]
        %v2989 = vld [vmem:[%s224 + $0x1d8] sm:$0xff]
        %v2990 = vld [vmem:[%s224 + $0x1e0] sm:$0xff]
        %v2991 = vld [vmem:[%s224 + $0x1e8] sm:$0xff]
        %v2992 = vld [vmem:[%s224 + $0x1f0] sm:$0xff]
        %v2993 = vld [vmem:[%s224 + $0x1f8] sm:$0xff]
        %v2994 = vld [vmem:[%s224 + $0x200] sm:$0xff]
        %v2995 = vld [vmem:[%s224 + $0x208] sm:$0xff]
        %v2996 = vld [vmem:[%s224 + $0x210] sm:$0xff]
        %v2997 = vld [vmem:[%s224 + $0x218] sm:$0xff]
        %v2998 = vld [vmem:[%s224 + $0x220] sm:$0xff]
        %v2999 = vld [vmem:[%s224 + $0x228] sm:$0xff]
        %v3000 = vld [vmem:[%s224 + $0x230] sm:$0xff]
        %v3001 = vld [vmem:[%s224 + $0x238] sm:$0xff]
        %v3002 = vld [vmem:[%s224 + $0x240] sm:$0xff]
        %v3003 = vld [vmem:[%s224 + $0x248] sm:$0xff]
        %v3004 = vld [vmem:[%s224 + $0x250] sm:$0xff]
        %v3005 = vld [vmem:[%s224 + $0x258] sm:$0xff]
        %v3006 = vld [vmem:[%s224 + $0x260] sm:$0xff]
        %v3007 = vld [vmem:[%s224 + $0x268] sm:$0xff]
        %v3008 = vld [vmem:[%s224 + $0x270] sm:$0xff]
        %v3009 = vld [vmem:[%s224 + $0x278] sm:$0xff]
        %v3010 = vld [vmem:[%s224 + $0x280] sm:$0xff]
        %v3011 = vld [vmem:[%s224 + $0x288] sm:$0xff]
        %v3012 = vld [vmem:[%s224 + $0x290] sm:$0xff]
        %v3013 = vld [vmem:[%s224 + $0x298] sm:$0xff]
        %v3014 = vld [vmem:[%s224 + $0x2a0] sm:$0xff]
        %v3015 = vld [vmem:[%s224 + $0x2a8] sm:$0xff]
        %v3016 = vld [vmem:[%s224 + $0x2b0] sm:$0xff]
        %v3017 = vld [vmem:[%s224 + $0x2b8] sm:$0xff]
        %v3018 = vld [vmem:[%s224 + $0x2c0] sm:$0xff]
        %v3019 = vld [vmem:[%s224 + $0x2c8] sm:$0xff]
        %v3020 = vld [vmem:[%s224 + $0x2d0] sm:$0xff]
        %v3021 = vld [vmem:[%s224 + $0x2d8] sm:$0xff]
        %v3022 = vld [vmem:[%s224 + $0x2e0] sm:$0xff]
        %v3023 = vld [vmem:[%s224 + $0x2e8] sm:$0xff]
        %v3024 = vld [vmem:[%s224 + $0x2f0] sm:$0xff]
        %v3025 = vld [vmem:[%s224 + $0x2f8] sm:$0xff]
        %v3026 = vld [vmem:[%s224 + $0x300] sm:$0xff]
        %v3027 = vld [vmem:[%s224 + $0x308] sm:$0xff]
        %v3028 = vld [vmem:[%s224 + $0x310] sm:$0xff]
        %v3029 = vld [vmem:[%s224 + $0x318] sm:$0xff]
        %v3030 = vld [vmem:[%s224 + $0x320] sm:$0xff]
        %v3031 = vld [vmem:[%s224 + $0x328] sm:$0xff]
        %v3032 = vld [vmem:[%s224 + $0x330] sm:$0xff]
        %v3033 = vld [vmem:[%s224 + $0x338] sm:$0xff]
        %v3034 = vld [vmem:[%s224 + $0x340] sm:$0xff]
        %v3035 = vld [vmem:[%s224 + $0x348] sm:$0xff]
        %v3036 = vld [vmem:[%s224 + $0x350] sm:$0xff]
        %v3037 = vld [vmem:[%s224 + $0x358] sm:$0xff]
        %v3038 = vld [vmem:[%s224 + $0x360] sm:$0xff]
        %v3039 = vld [vmem:[%s224 + $0x368] sm:$0xff]
        %v3040 = vld [vmem:[%s224 + $0x370] sm:$0xff]
        %v3041 = vld [vmem:[%s224 + $0x378] sm:$0xff]
        %v3042 = vld [vmem:[%s224 + $0x380] sm:$0xff]
        %v3043 = vld [vmem:[%s224 + $0x388] sm:$0xff]
        %v3044 = vld [vmem:[%s224 + $0x390] sm:$0xff]
        %v3045 = vld [vmem:[%s224 + $0x398] sm:$0xff]
        %v3046 = vld [vmem:[%s224 + $0x3a0] sm:$0xff]
        %v3047 = vld [vmem:[%s224 + $0x3a8] sm:$0xff]
        %v3048 = vld [vmem:[%s224 + $0x3b0] sm:$0xff]
        %v3049 = vld [vmem:[%s224 + $0x3b8] sm:$0xff]
        %v3050 = vld [vmem:[%s224 + $0x3c0] sm:$0xff]
        %v3051 = vld [vmem:[%s224 + $0x3c8] sm:$0xff]
        %v3052 = vld [vmem:[%s224 + $0x3d0] sm:$0xff]
        %v3053 = vld [vmem:[%s224 + $0x3d8] sm:$0xff]
        %v3054 = vld [vmem:[%s224 + $0x3e0] sm:$0xff]
        %v3055 = vld [vmem:[%s224 + $0x3e8] sm:$0xff]
        %v3056 = vld [vmem:[%s224 + $0x3f0] sm:$0xff]
        %v3057 = vld [vmem:[%s224 + $0x3f8] sm:$0xff]
        %v3058 = vld [vmem:[%s224 + $0x400] sm:$0xff]
        %v3059 = vld [vmem:[%s224 + $0x408] sm:$0xff]
        %v3060 = vld [vmem:[%s224 + $0x410] sm:$0xff]
        %v3061 = vld [vmem:[%s224 + $0x418] sm:$0xff]
        %v3062 = vld [vmem:[%s224 + $0x420] sm:$0xff]
        %v3063 = vld [vmem:[%s224 + $0x428] sm:$0xff]
        %v3064 = vld [vmem:[%s224 + $0x430] sm:$0xff]
        %v3065 = vld [vmem:[%s224 + $0x438] sm:$0xff]
        %v3066 = vld [vmem:[%s224 + $0x440] sm:$0xff]
        %v3067 = vld [vmem:[%s224 + $0x448] sm:$0xff]
        %v3068 = vld [vmem:[%s224 + $0x450] sm:$0xff]
        %v3069 = vld [vmem:[%s224 + $0x458] sm:$0xff]
        %v3070 = vld [vmem:[%s224 + $0x460] sm:$0xff]
        %v3071 = vld [vmem:[%s224 + $0x468] sm:$0xff]
        %v3072 = vld [vmem:[%s224 + $0x470] sm:$0xff]
        %v3073 = vld [vmem:[%s224 + $0x478] sm:$0xff]
        %v3074 = vld [vmem:[%s224 + $0x480] sm:$0xff]
        %v3075 = vld [vmem:[%s224 + $0x488] sm:$0xff]
        %v3076 = vld [vmem:[%s224 + $0x490] sm:$0xff]
        %v3077 = vld [vmem:[%s224 + $0x498] sm:$0xff]
        %v3078 = vld [vmem:[%s224 + $0x4a0] sm:$0xff]
        %v3079 = vld [vmem:[%s224 + $0x4a8] sm:$0xff]
        %v3080 = vld [vmem:[%s224 + $0x4b0] sm:$0xff]
        %v3081 = vld [vmem:[%s224 + $0x4b8] sm:$0xff]
        %v3082 = vld [vmem:[%s224 + $0x4c0] sm:$0xff]
        %v3083 = vld [vmem:[%s224 + $0x4c8] sm:$0xff]
        %v3084 = vld [vmem:[%s224 + $0x4d0] sm:$0xff]
        %v3085 = vld [vmem:[%s224 + $0x4d8] sm:$0xff]
        %v3086 = vld [vmem:[%s224 + $0x4e0] sm:$0xff]
        %v3087 = vld [vmem:[%s224 + $0x4e8] sm:$0xff]
        %v3088 = vld [vmem:[%s224 + $0x4f0] sm:$0xff]
        %v3089 = vld [vmem:[%s224 + $0x4f8] sm:$0xff]
        %v3090 = vld [vmem:[%s224 + $0x500] sm:$0xff]
        %v3091 = vld [vmem:[%s224 + $0x508] sm:$0xff]
        %v3092 = vld [vmem:[%s224 + $0x510] sm:$0xff]
        %v3093 = vld [vmem:[%s224 + $0x518] sm:$0xff]
        %v3094 = vld [vmem:[%s224 + $0x520] sm:$0xff]
        %v3095 = vld [vmem:[%s224 + $0x528] sm:$0xff]
        %v3096 = vld [vmem:[%s224 + $0x530] sm:$0xff]
        %v3097 = vld [vmem:[%s224 + $0x538] sm:$0xff]
        %v3098 = vld [vmem:[%s224 + $0x540] sm:$0xff]
        %v3099 = vld [vmem:[%s224 + $0x548] sm:$0xff]
        %v3100 = vld [vmem:[%s224 + $0x550] sm:$0xff]
        %v3101 = vld [vmem:[%s224 + $0x558] sm:$0xff]
        %v3102 = vld [vmem:[%s224 + $0x560] sm:$0xff]
        %v3103 = vld [vmem:[%s224 + $0x568] sm:$0xff]
        %v3104 = vld [vmem:[%s224 + $0x570] sm:$0xff]
        %v3105 = vld [vmem:[%s224 + $0x578] sm:$0xff]
        %v3106 = vld [vmem:[%s224 + $0x580] sm:$0xff]
        %v3107 = vld [vmem:[%s224 + $0x588] sm:$0xff]
        %v3108 = vld [vmem:[%s224 + $0x590] sm:$0xff]
        %v3109 = vld [vmem:[%s224 + $0x598] sm:$0xff]
        %v3110 = vld [vmem:[%s224 + $0x5a0] sm:$0xff]
        %v3111 = vld [vmem:[%s224 + $0x5a8] sm:$0xff]
        %v3112 = vld [vmem:[%s224 + $0x5b0] sm:$0xff]
        %v3113 = vld [vmem:[%s224 + $0x5b8] sm:$0xff]
        %v3114 = vld [vmem:[%s224 + $0x5c0] sm:$0xff]
        %v3115 = vld [vmem:[%s224 + $0x5c8] sm:$0xff]
        %v3116 = vld [vmem:[%s224 + $0x5d0] sm:$0xff]
        %v3117 = vld [vmem:[%s224 + $0x5d8] sm:$0xff]
        %v3118 = vld [vmem:[%s224 + $0x5e0] sm:$0xff]
        %v3119 = vld [vmem:[%s224 + $0x5e8] sm:$0xff]
        %v3120 = vld [vmem:[%s224 + $0x5f0] sm:$0xff]
        %v3121 = vld [vmem:[%s224 + $0x5f8] sm:$0xff]
        %v3122 = vld [vmem:[%s224 + $0x600] sm:$0xff]
        %v3123 = vld [vmem:[%s224 + $0x608] sm:$0xff]
        %v3124 = vld [vmem:[%s224 + $0x610] sm:$0xff]
        %v3125 = vld [vmem:[%s224 + $0x618] sm:$0xff]
        %v3126 = vld [vmem:[%s224 + $0x620] sm:$0xff]
        %v3127 = vld [vmem:[%s224 + $0x628] sm:$0xff]
        %v3128 = vld [vmem:[%s224 + $0x630] sm:$0xff]
        %v3129 = vld [vmem:[%s224 + $0x638] sm:$0xff]
        %v3130 = vld [vmem:[%s224 + $0x640] sm:$0xff]
        %v3131 = vld [vmem:[%s224 + $0x648] sm:$0xff]
        %v3132 = vld [vmem:[%s224 + $0x650] sm:$0xff]
        %v3133 = vld [vmem:[%s224 + $0x658] sm:$0xff]
        %v3134 = vld [vmem:[%s224 + $0x660] sm:$0xff]
        %v3135 = vld [vmem:[%s224 + $0x668] sm:$0xff]
        %v3136 = vld [vmem:[%s224 + $0x670] sm:$0xff]
        %v3137 = vld [vmem:[%s224 + $0x678] sm:$0xff]
        %v3138 = vld [vmem:[%s224 + $0x680] sm:$0xff]
        %v3139 = vld [vmem:[%s224 + $0x688] sm:$0xff]
        %v3140 = vld [vmem:[%s224 + $0x690] sm:$0xff]
        %v3141 = vld [vmem:[%s224 + $0x698] sm:$0xff]
        %v3142 = vld [vmem:[%s224 + $0x6a0] sm:$0xff]
        %v3143 = vld [vmem:[%s224 + $0x6a8] sm:$0xff]
        %v3144 = vld [vmem:[%s224 + $0x6b0] sm:$0xff]
        %v3145 = vld [vmem:[%s224 + $0x6b8] sm:$0xff]
        %v3146 = vld [vmem:[%s224 + $0x6c0] sm:$0xff]
        %v3147 = vld [vmem:[%s224 + $0x6c8] sm:$0xff]
        %v3148 = vld [vmem:[%s224 + $0x6d0] sm:$0xff]
        %v3149 = vld [vmem:[%s224 + $0x6d8] sm:$0xff]
        %v3150 = vld [vmem:[%s224 + $0x6e0] sm:$0xff]
        %v3151 = vld [vmem:[%s224 + $0x6e8] sm:$0xff]
        %v3152 = vld [vmem:[%s224 + $0x6f0] sm:$0xff]
        %v3153 = vld [vmem:[%s224 + $0x6f8] sm:$0xff]
        %v3154 = vld [vmem:[%s224 + $0x700] sm:$0xff]
        %v3155 = vld [vmem:[%s224 + $0x708] sm:$0xff]
        %v3156 = vld [vmem:[%s224 + $0x710] sm:$0xff]
        %v3157 = vld [vmem:[%s224 + $0x718] sm:$0xff]
        %v3158 = vld [vmem:[%s224 + $0x720] sm:$0xff]
        %v3159 = vld [vmem:[%s224 + $0x728] sm:$0xff]
        %v3160 = vld [vmem:[%s224 + $0x730] sm:$0xff]
        %v3161 = vld [vmem:[%s224 + $0x738] sm:$0xff]
        %v3162 = vld [vmem:[%s224 + $0x740] sm:$0xff]
        %v3163 = vld [vmem:[%s224 + $0x748] sm:$0xff]
        %v3164 = vld [vmem:[%s224 + $0x750] sm:$0xff]
        %v3165 = vld [vmem:[%s224 + $0x758] sm:$0xff]
        %v3166 = vld [vmem:[%s224 + $0x760] sm:$0xff]
        %v3167 = vld [vmem:[%s224 + $0x768] sm:$0xff]
        %v3168 = vld [vmem:[%s224 + $0x770] sm:$0xff]
        %v3169 = vld [vmem:[%s224 + $0x778] sm:$0xff]
        %v3170 = vld [vmem:[%s224 + $0x780] sm:$0xff]
        %v3171 = vld [vmem:[%s224 + $0x788] sm:$0xff]
        %v3172 = vld [vmem:[%s224 + $0x790] sm:$0xff]
        %v3173 = vld [vmem:[%s224 + $0x798] sm:$0xff]
        %v3174 = vld [vmem:[%s224 + $0x7a0] sm:$0xff]
        %v3175 = vld [vmem:[%s224 + $0x7a8] sm:$0xff]
        %v3176 = vld [vmem:[%s224 + $0x7b0] sm:$0xff]
        %v3177 = vld [vmem:[%s224 + $0x7b8] sm:$0xff]
        %v3178 = vld [vmem:[%s224 + $0x7c0] sm:$0xff]
        %v3179 = vld [vmem:[%s224 + $0x7c8] sm:$0xff]
        %v3180 = vld [vmem:[%s224 + $0x7d0] sm:$0xff]
        %v3181 = vld [vmem:[%s224 + $0x7d8] sm:$0xff]
        %v3182 = vld [vmem:[%s224 + $0x7e0] sm:$0xff]
        %v3183 = vld [vmem:[%s224 + $0x7e8] sm:$0xff]
        %v3184 = vld [vmem:[%s224 + $0x7f0] sm:$0xff]
        %v3185 = vld [vmem:[%s224 + $0x7f8] sm:$0xff]
        loop: start=0, step=1, limit=8
        $region37: #{generator_forward.6} parent=35 // loop_pre_header
          _
        $region38: #{generator_forward.6} parent=35 // loop_header
          %s3187 = sphi 0, %s3191
          %p3188 = scmp.ge.s32.totalorder %s3187, 8
          %v3192 = vphi 0.0, %v3572
          %v3193 = vphi 0.0, %v3570
        $region39: #{generator_forward.6} parent=35 // loop_header_branch
          %3190 = sbr.rel (%p3188) target = $region43
        $region40: #{generator_forward.6} parent=35 // loop_body
          %p3194 = scmp.eq.s32.totalorder %s15, 0
          %s3195 = ssub.s32 7, %s3187
          %s3196 = scalar_select %p3194, %s3187, %s3195
          %s3197 = smul.u32 %s3196, 8
          %s3198 = smul.addr %s3197, 2
          %s3199 = scalar_lea.vmem [#allocation2], %s3198
          %v3200 = vld [vmem:[%s3199] sm:$0xff]
          %v3201 = vld [vmem:[%s3199 + $0x8] sm:$0xff]
          %v3204 = vunpack.c.l.s4 1983009808
          %v3205 = vunpack.c.0.s8 %v3204
          %v3206 = vlaneseq
          %v3207 = vshrl.u32 %v3206, 7
          %v3208 = vsub.s32 %v3205, %v3207
          %v3209 = vrot.slane %v3192, %v3208
          %v3210 = vcombine.high %v3209, %v3209
          %3213 = vmatprep.subr.mxu0 %v2931
          %3214 = vmatpush1.msra.mxu0 %v2930
          %3215 = vmatprep.subr.mxu0 %v2939
          %3216 = vmatpush1.msra.mxu0 %v2938
          %3217 = vmatprep.subr.mxu0 %v2947
          %3218 = vmatpush1.msra.mxu0 %v2946
          %3219 = vmatprep.subr.mxu0 %v2955
          %3220 = vmatpush1.msra.mxu0 %v2954
          %3221 = vmatprep.subr.mxu0 %v2963
          %3222 = vmatpush1.msra.mxu0 %v2962
          %3223 = vmatprep.subr.mxu0 %v2971
          %3224 = vmatpush1.msra.mxu0 %v2970
          %3225 = vmatprep.subr.mxu0 %v2979
          %3226 = vmatpush1.msra.mxu0 %v2978
          %3227 = vmatprep.subr.mxu0 %v2987
          %3228 = vmatpush1.msra.mxu0 %v2986
          %3229 = vmatprep.subr.mxu0 %v2995
          %3230 = vmatpush1.msra.mxu0 %v2994
          %3231 = vmatprep.subr.mxu0 %v3003
          %3232 = vmatpush1.msra.mxu0 %v3002
          %3233 = vmatprep.subr.mxu0 %v3011
          %3234 = vmatpush1.msra.mxu0 %v3010
          %3235 = vmatprep.subr.mxu0 %v3019
          %3236 = vmatpush1.msra.mxu0 %v3018
          %3237 = vmatprep.subr.mxu0 %v3027
          %3238 = vmatpush1.msra.mxu0 %v3026
          %3239 = vmatprep.subr.mxu0 %v3035
          %3240 = vmatpush1.msra.mxu0 %v3034
          %3241 = vmatprep.subr.mxu0 %v3043
          %3242 = vmatpush1.msra.mxu0 %v3042
          %3243 = vmatprep.subr.mxu0 %v3051
          %3244 = vmatpush1.msra.mxu0 %v3050
          %3245 = vmatprep.subr.mxu0 %v3059
          %3246 = vmatpush1.msra.mxu0 %v3058
          %3247 = vmatprep.subr.mxu0 %v3067
          %3248 = vmatpush1.msra.mxu0 %v3066
          %3249 = vmatprep.subr.mxu0 %v3075
          %3250 = vmatpush1.msra.mxu0 %v3074
          %3251 = vmatprep.subr.mxu0 %v3083
          %3252 = vmatpush1.msra.mxu0 %v3082
          %3253 = vmatprep.subr.mxu0 %v3091
          %3254 = vmatpush1.msra.mxu0 %v3090
          %3255 = vmatprep.subr.mxu0 %v3099
          %3256 = vmatpush1.msra.mxu0 %v3098
          %3257 = vmatprep.subr.mxu0 %v3107
          %3258 = vmatpush1.msra.mxu0 %v3106
          %3259 = vmatprep.subr.mxu0 %v3115
          %3260 = vmatpush1.msra.mxu0 %v3114
          %3261 = vmatprep.subr.mxu0 %v3123
          %3262 = vmatpush1.msra.mxu0 %v3122
          %3263 = vmatprep.subr.mxu0 %v3131
          %3264 = vmatpush1.msra.mxu0 %v3130
          %3265 = vmatprep.subr.mxu0 %v3139
          %3266 = vmatpush1.msra.mxu0 %v3138
          %3267 = vmatprep.subr.mxu0 %v3147
          %3268 = vmatpush1.msra.mxu0 %v3146
          %3269 = vmatprep.subr.mxu0 %v3155
          %3270 = vmatpush1.msra.mxu0 %v3154
          %3271 = vmatprep.subr.mxu0 %v3163
          %3272 = vmatpush1.msra.mxu0 %v3162
          %3273 = vmatprep.subr.mxu0 %v3171
          %3274 = vmatpush1.msra.mxu0 %v3170
          %3275 = vmatprep.subr.mxu0 %v3179
          %3276 = vmatpush1.msra.mxu0 %v3178
          %3277 = vmatprep.mubr.f32.mxu0 %v3210
          %3278 = vmatmul.mubr.f32.gmra.mrb[0].mxu0 %v3209
          %v3279 = vpop.f32.mrb[0].mxu0
          %v3280 = vadd.f32 0.0, %v3279
          %v3281 = vpop.f32.mrb[0].mxu0
          %v3282 = vadd.f32 0.0, %v3281
          %3283 = vdwg.mxu0
          %3284 = vmatprep.subr.mxu0 %v2933
          %3285 = vmatpush1.msra.mxu0 %v2932
          %3286 = vmatprep.subr.mxu0 %v2941
          %3287 = vmatpush1.msra.mxu0 %v2940
          %3288 = vmatprep.subr.mxu0 %v2949
          %3289 = vmatpush1.msra.mxu0 %v2948
          %3290 = vmatprep.subr.mxu0 %v2957
          %3291 = vmatpush1.msra.mxu0 %v2956
          %3292 = vmatprep.subr.mxu0 %v2965
          %3293 = vmatpush1.msra.mxu0 %v2964
          %3294 = vmatprep.subr.mxu0 %v2973
          %3295 = vmatpush1.msra.mxu0 %v2972
          %3296 = vmatprep.subr.mxu0 %v2981
          %3297 = vmatpush1.msra.mxu0 %v2980
          %3298 = vmatprep.subr.mxu0 %v2989
          %3299 = vmatpush1.msra.mxu0 %v2988
          %3300 = vmatprep.subr.mxu0 %v2997
          %3301 = vmatpush1.msra.mxu0 %v2996
          %3302 = vmatprep.subr.mxu0 %v3005
          %3303 = vmatpush1.msra.mxu0 %v3004
          %3304 = vmatprep.subr.mxu0 %v3013
          %3305 = vmatpush1.msra.mxu0 %v3012
          %3306 = vmatprep.subr.mxu0 %v3021
          %3307 = vmatpush1.msra.mxu0 %v3020
          %3308 = vmatprep.subr.mxu0 %v3029
          %3309 = vmatpush1.msra.mxu0 %v3028
          %3310 = vmatprep.subr.mxu0 %v3037
          %3311 = vmatpush1.msra.mxu0 %v3036
          %3312 = vmatprep.subr.mxu0 %v3045
          %3313 = vmatpush1.msra.mxu0 %v3044
          %3314 = vmatprep.subr.mxu0 %v3053
          %3315 = vmatpush1.msra.mxu0 %v3052
          %3316 = vmatprep.subr.mxu0 %v3061
          %3317 = vmatpush1.msra.mxu0 %v3060
          %3318 = vmatprep.subr.mxu0 %v3069
          %3319 = vmatpush1.msra.mxu0 %v3068
          %3320 = vmatprep.subr.mxu0 %v3077
          %3321 = vmatpush1.msra.mxu0 %v3076
          %3322 = vmatprep.subr.mxu0 %v3085
          %3323 = vmatpush1.msra.mxu0 %v3084
          %3324 = vmatprep.subr.mxu0 %v3093
          %3325 = vmatpush1.msra.mxu0 %v3092
          %3326 = vmatprep.subr.mxu0 %v3101
          %3327 = vmatpush1.msra.mxu0 %v3100
          %3328 = vmatprep.subr.mxu0 %v3109
          %3329 = vmatpush1.msra.mxu0 %v3108
          %3330 = vmatprep.subr.mxu0 %v3117
          %3331 = vmatpush1.msra.mxu0 %v3116
          %3332 = vmatprep.subr.mxu0 %v3125
          %3333 = vmatpush1.msra.mxu0 %v3124
          %3334 = vmatprep.subr.mxu0 %v3133
          %3335 = vmatpush1.msra.mxu0 %v3132
          %3336 = vmatprep.subr.mxu0 %v3141
          %3337 = vmatpush1.msra.mxu0 %v3140
          %3338 = vmatprep.subr.mxu0 %v3149
          %3339 = vmatpush1.msra.mxu0 %v3148
          %3340 = vmatprep.subr.mxu0 %v3157
          %3341 = vmatpush1.msra.mxu0 %v3156
          %3342 = vmatprep.subr.mxu0 %v3165
          %3343 = vmatpush1.msra.mxu0 %v3164
          %3344 = vmatprep.subr.mxu0 %v3173
          %3345 = vmatpush1.msra.mxu0 %v3172
          %3346 = vmatprep.subr.mxu0 %v3181
          %3347 = vmatpush1.msra.mxu0 %v3180
          %3348 = vmatprep.mubr.f32.mxu0 %v3210
          %3349 = vmatmul.mubr.f32.gmra.mrb[0].mxu0 %v3209
          %v3350 = vpop.f32.mrb[0].mxu0
          %v3351 = vadd.f32 0.0, %v3350
          %v3352 = vpop.f32.mrb[0].mxu0
          %v3353 = vadd.f32 0.0, %v3352
          %3354 = vdwg.mxu0
          %3355 = vmatprep.subr.mxu0 %v2935
          %3356 = vmatpush1.msra.mxu0 %v2934
          %3357 = vmatprep.subr.mxu0 %v2943
          %3358 = vmatpush1.msra.mxu0 %v2942
          %3359 = vmatprep.subr.mxu0 %v2951
          %3360 = vmatpush1.msra.mxu0 %v2950
          %3361 = vmatprep.subr.mxu0 %v2959
          %3362 = vmatpush1.msra.mxu0 %v2958
          %3363 = vmatprep.subr.mxu0 %v2967
          %3364 = vmatpush1.msra.mxu0 %v2966
          %3365 = vmatprep.subr.mxu0 %v2975
          %3366 = vmatpush1.msra.mxu0 %v2974
          %3367 = vmatprep.subr.mxu0 %v2983
          %3368 = vmatpush1.msra.mxu0 %v2982
          %3369 = vmatprep.subr.mxu0 %v2991
          %3370 = vmatpush1.msra.mxu0 %v2990
          %3371 = vmatprep.subr.mxu0 %v2999
          %3372 = vmatpush1.msra.mxu0 %v2998
          %3373 = vmatprep.subr.mxu0 %v3007
          %3374 = vmatpush1.msra.mxu0 %v3006
          %3375 = vmatprep.subr.mxu0 %v3015
          %3376 = vmatpush1.msra.mxu0 %v3014
          %3377 = vmatprep.subr.mxu0 %v3023
          %3378 = vmatpush1.msra.mxu0 %v3022
          %3379 = vmatprep.subr.mxu0 %v3031
          %3380 = vmatpush1.msra.mxu0 %v3030
          %3381 = vmatprep.subr.mxu0 %v3039
          %3382 = vmatpush1.msra.mxu0 %v3038
          %3383 = vmatprep.subr.mxu0 %v3047
          %3384 = vmatpush1.msra.mxu0 %v3046
          %3385 = vmatprep.subr.mxu0 %v3055
          %3386 = vmatpush1.msra.mxu0 %v3054
          %3387 = vmatprep.subr.mxu0 %v3063
          %3388 = vmatpush1.msra.mxu0 %v3062
          %3389 = vmatprep.subr.mxu0 %v3071
          %3390 = vmatpush1.msra.mxu0 %v3070
          %3391 = vmatprep.subr.mxu0 %v3079
          %3392 = vmatpush1.msra.mxu0 %v3078
          %3393 = vmatprep.subr.mxu0 %v3087
          %3394 = vmatpush1.msra.mxu0 %v3086
          %3395 = vmatprep.subr.mxu0 %v3095
          %3396 = vmatpush1.msra.mxu0 %v3094
          %3397 = vmatprep.subr.mxu0 %v3103
          %3398 = vmatpush1.msra.mxu0 %v3102
          %3399 = vmatprep.subr.mxu0 %v3111
          %3400 = vmatpush1.msra.mxu0 %v3110
          %3401 = vmatprep.subr.mxu0 %v3119
          %3402 = vmatpush1.msra.mxu0 %v3118
          %3403 = vmatprep.subr.mxu0 %v3127
          %3404 = vmatpush1.msra.mxu0 %v3126
          %3405 = vmatprep.subr.mxu0 %v3135
          %3406 = vmatpush1.msra.mxu0 %v3134
          %3407 = vmatprep.subr.mxu0 %v3143
          %3408 = vmatpush1.msra.mxu0 %v3142
          %3409 = vmatprep.subr.mxu0 %v3151
          %3410 = vmatpush1.msra.mxu0 %v3150
          %3411 = vmatprep.subr.mxu0 %v3159
          %3412 = vmatpush1.msra.mxu0 %v3158
          %3413 = vmatprep.subr.mxu0 %v3167
          %3414 = vmatpush1.msra.mxu0 %v3166
          %3415 = vmatprep.subr.mxu0 %v3175
          %3416 = vmatpush1.msra.mxu0 %v3174
          %3417 = vmatprep.subr.mxu0 %v3183
          %3418 = vmatpush1.msra.mxu0 %v3182
          %3419 = vmatprep.mubr.f32.mxu0 %v3210
          %3420 = vmatmul.mubr.f32.gmra.mrb[0].mxu0 %v3209
          %v3421 = vpop.f32.mrb[0].mxu0
          %v3422 = vadd.f32 0.0, %v3421
          %v3423 = vpop.f32.mrb[0].mxu0
          %v3424 = vadd.f32 0.0, %v3423
          %3425 = vdwg.mxu0
          %3426 = vmatprep.subr.mxu0 %v2937
          %3427 = vmatpush1.msra.mxu0 %v2936
          %3428 = vmatprep.subr.mxu0 %v2945
          %3429 = vmatpush1.msra.mxu0 %v2944
          %3430 = vmatprep.subr.mxu0 %v2953
          %3431 = vmatpush1.msra.mxu0 %v2952
          %3432 = vmatprep.subr.mxu0 %v2961
          %3433 = vmatpush1.msra.mxu0 %v2960
          %3434 = vmatprep.subr.mxu0 %v2969
          %3435 = vmatpush1.msra.mxu0 %v2968
          %3436 = vmatprep.subr.mxu0 %v2977
          %3437 = vmatpush1.msra.mxu0 %v2976
          %3438 = vmatprep.subr.mxu0 %v2985
          %3439 = vmatpush1.msra.mxu0 %v2984
          %3440 = vmatprep.subr.mxu0 %v2993
          %3441 = vmatpush1.msra.mxu0 %v2992
          %3442 = vmatprep.subr.mxu0 %v3001
          %3443 = vmatpush1.msra.mxu0 %v3000
          %3444 = vmatprep.subr.mxu0 %v3009
          %3445 = vmatpush1.msra.mxu0 %v3008
          %3446 = vmatprep.subr.mxu0 %v3017
          %3447 = vmatpush1.msra.mxu0 %v3016
          %3448 = vmatprep.subr.mxu0 %v3025
          %3449 = vmatpush1.msra.mxu0 %v3024
          %3450 = vmatprep.subr.mxu0 %v3033
          %3451 = vmatpush1.msra.mxu0 %v3032
          %3452 = vmatprep.subr.mxu0 %v3041
          %3453 = vmatpush1.msra.mxu0 %v3040
          %3454 = vmatprep.subr.mxu0 %v3049
          %3455 = vmatpush1.msra.mxu0 %v3048
          %3456 = vmatprep.subr.mxu0 %v3057
          %3457 = vmatpush1.msra.mxu0 %v3056
          %3458 = vmatprep.subr.mxu0 %v3065
          %3459 = vmatpush1.msra.mxu0 %v3064
          %3460 = vmatprep.subr.mxu0 %v3073
          %3461 = vmatpush1.msra.mxu0 %v3072
          %3462 = vmatprep.subr.mxu0 %v3081
          %3463 = vmatpush1.msra.mxu0 %v3080
          %3464 = vmatprep.subr.mxu0 %v3089
          %3465 = vmatpush1.msra.mxu0 %v3088
          %3466 = vmatprep.subr.mxu0 %v3097
          %3467 = vmatpush1.msra.mxu0 %v3096
          %3468 = vmatprep.subr.mxu0 %v3105
          %3469 = vmatpush1.msra.mxu0 %v3104
          %3470 = vmatprep.subr.mxu0 %v3113
          %3471 = vmatpush1.msra.mxu0 %v3112
          %3472 = vmatprep.subr.mxu0 %v3121
          %3473 = vmatpush1.msra.mxu0 %v3120
          %3474 = vmatprep.subr.mxu0 %v3129
          %3475 = vmatpush1.msra.mxu0 %v3128
          %3476 = vmatprep.subr.mxu0 %v3137
          %3477 = vmatpush1.msra.mxu0 %v3136
          %3478 = vmatprep.subr.mxu0 %v3145
          %3479 = vmatpush1.msra.mxu0 %v3144
          %3480 = vmatprep.subr.mxu0 %v3153
          %3481 = vmatpush1.msra.mxu0 %v3152
          %3482 = vmatprep.subr.mxu0 %v3161
          %3483 = vmatpush1.msra.mxu0 %v3160
          %3484 = vmatprep.subr.mxu0 %v3169
          %3485 = vmatpush1.msra.mxu0 %v3168
          %3486 = vmatprep.subr.mxu0 %v3177
          %3487 = vmatpush1.msra.mxu0 %v3176
          %3488 = vmatprep.subr.mxu0 %v3185
          %3489 = vmatpush1.msra.mxu0 %v3184
          %3490 = vmatprep.mubr.f32.mxu0 %v3210
          %3491 = vmatmul.mubr.f32.gmra.mrb[0].mxu0 %v3209
          %v3492 = vpop.f32.mrb[0].mxu0
          %v3493 = vadd.f32 0.0, %v3492
          %v3494 = vpop.f32.mrb[0].mxu0
          %v3495 = vadd.f32 0.0, %v3494
          %3496 = vdwg.mxu0
          %v3505 = vcombine.low %v3280, %v3282
          %v3506 = vcombine.low %v3351, %v3353
          %v3508 = vunpack.c.l.s4 1983009808
          %v3509 = vunpack.c.0.s8 %v3508
          %v3510 = vlaneseq
          %v3511 = vshrl.u32 %v3510, 7
          %v3512 = vsub.s32 %v3509, %v3511
          %v3513 = vrot.slane %v3505, %v3512
          %v3515 = vunpack.c.l.s4 1983009808
          %v3516 = vunpack.c.0.s8 %v3515
          %v3517 = vlaneseq
          %v3518 = vshrl.u32 %v3517, 7
          %v3519 = vsub.s32 %v3516, %v3518
          %v3520 = vrot.slane %v3506, %v3519
          %v3521 = vcombine.low %v3513, %v3520
          %v3522 = vcombine.low %v3422, %v3424
          %v3523 = vcombine.low %v3493, %v3495
          %v3525 = vunpack.c.l.s4 1983009808
          %v3526 = vunpack.c.0.s8 %v3525
          %v3527 = vlaneseq
          %v3528 = vshrl.u32 %v3527, 7
          %v3529 = vsub.s32 %v3526, %v3528
          %v3530 = vrot.slane %v3522, %v3529
          %v3532 = vunpack.c.l.s4 1983009808
          %v3533 = vunpack.c.0.s8 %v3532
          %v3534 = vlaneseq
          %v3535 = vshrl.u32 %v3534, 7
          %v3536 = vsub.s32 %v3533, %v3535
          %v3537 = vrot.slane %v3523, %v3536
          %v3538 = vcombine.low %v3530, %v3537
          %v3541 = vadd.f32 %v3200, %v3521
          %v3542 = vadd.f32 %v3201, %v3538
          %v3543 = vxor.u32 %v3541, 2147483648
          %v3544 = vmul.f32 %v3543, 1.442695
          %v3545 = vpow.pop %v3544
          %v3546 = vadd.f32 %v3545, 1.0
          %v3547 = vrcp.pop %v3546
          %v3548 = vmul.f32 1.0, %v3547
          %v3550 = vrot.slane %v3541, 4
          %v3552 = vxor.u32 %v3550, 2147483648
          %v3553 = vmul.f32 %v3552, 1.442695
          %v3554 = vpow.pop %v3553
          %v3555 = vadd.f32 %v3554, 1.0
          %v3556 = vrcp.pop %v3555
          %v3557 = vmul.f32 1.0, %v3556
          %v3558 = vtanh.pop %v3542
          %v3560 = vrot.slane %v3542, 4
          %v3562 = vxor.u32 %v3560, 2147483648
          %v3563 = vmul.f32 %v3562, 1.442695
          %v3564 = vpow.pop %v3563
          %v3565 = vadd.f32 %v3564, 1.0
          %v3566 = vrcp.pop %v3565
          %v3567 = vmul.f32 1.0, %v3566
          %v3568 = vmul.f32 %v3557, %v3193
          %v3569 = vmul.f32 %v3548, %v3558
          %v3570 = vadd.f32 %v3568, %v3569
          %v3571 = vtanh.pop %v3570
          %v3572 = vmul.f32 %v3567, %v3571
          %s3573 = smul.u32 %s3196, 2
          %s3574 = smul.addr %s3573, 2
          %s3575 = scalar_lea.vmem %s214, %s3574 [#allocation3]
          %3576 = vst [vmem:[%s3575] sm:$0xf] %v3572
        $region41: #{generator_forward.6} parent=35 // loop_footer
          %s3191 = sadd.s32 1, %s3187
        $region42: #{generator_forward.6} parent=35 // loop_footer_branch
          %3186 = sbr.rel target = $region38
        $region43: #{generator_forward.6} parent=35 // loop_exit
          _
        %s3577 = sand.u32 %s122, 1
        %s3578 = sand.u32 %s122, 1
        %s3579 = smul.addr %s3578, 32
        %s3580 = scalar_lea.vmem [#allocation3], %s3579
        // Predicated region
        $region44: #{generator_forward.6} parent=35 // pred_check
          %p3581 = pneg %p132
        $region45: #{generator_forward.6} parent=35 // pred_check_branch
          %3583 = sbr.rel (%p3581) target = $region47
        $region46: #{generator_forward.6} parent=35 // pred_region
          %s3584 = smul.u32 2, %s15
          %s3585 = smul.addr %s3584, 2
          %s3586 = scalar_lea.vmem %s4, %s3585
          // Predicated region
          $region48: #{generator_forward.6} parent=46 // pred_check
            _
          $region49: #{generator_forward.6} parent=46 // pred_check_branch
            %3588 = sbr.rel (0) target = $region51
          $region50: #{generator_forward.6} parent=46 // pred_region
            // Predicated region
            $region52: #{generator_forward.6} parent=50 // pred_check
              _
            $region53: #{generator_forward.6} parent=50 // pred_check_branch
              %3590 = sbr.rel target = $region55
            $region54: #{generator_forward.6} parent=50 // pred_region
              // Predicated region
              $region67: #{generator_forward.6} parent=54 // pred_check
                _
              $region68: #{generator_forward.6} parent=54 // pred_check_branch
                %3619 = sbr.rel (0) target = $region70
              $region69: #{generator_forward.6} parent=54 // pred_region
                loop: start=0, step=1, limit=1
                $region71: #{generator_forward.6} parent=69 // loop_pre_header
                  _
                $region72: #{generator_forward.6} parent=69 // loop_header
                  %s3621 = sphi 0, %s3625
                  %p3622 = scmp.ge.s32.totalorder %s3621, 1
                  %s3626 = sphi %s3580, %s3580
                  %s3627 = sphi %s3586, %s3586
                $region73: #{generator_forward.6} parent=69 // loop_header_branch
                  %3624 = sbr.rel (%p3622) target = $region77
                $region74: #{generator_forward.6} parent=69 // loop_body
                  _
                $region75: #{generator_forward.6} parent=69 // loop_footer
                  %s3625 = sadd.s32 1, %s3621
                $region76: #{generator_forward.6} parent=69 // loop_footer_branch
                  %3620 = sbr.rel target = $region72
                $region77: #{generator_forward.6} parent=69 // loop_exit
                  _
                loop: start=0, step=1, limit=1
                $region78: #{generator_forward.6} parent=69 // loop_pre_header
                  _
                $region79: #{generator_forward.6} parent=69 // loop_header
                  %s3630 = sphi 0, %s3634
                  %p3631 = scmp.ge.s32.totalorder %s3630, 1
                  %s3635 = sphi %s3580, %s3580
                  %s3636 = sphi %s3586, %s3586
                $region80: #{generator_forward.6} parent=69 // loop_header_branch
                  %3633 = sbr.rel (%p3631) target = $region84
                $region81: #{generator_forward.6} parent=69 // loop_body
                  %v3637 = vld [vmem:[%s3635] sm:$0xf]
                  %3638 = vst [vmem:[%s3636] sm:$0xf] %v3637
                  %v3639 = vld [vmem:[%s3635 + $0x4] sm:$0xf]
                  %3640 = vst [vmem:[%s3636 + $0x8] sm:$0xf] %v3639
                  %v3641 = vld [vmem:[%s3635 + $0x8] sm:$0xf]
                  %3642 = vst [vmem:[%s3636 + $0x10] sm:$0xf] %v3641
                  %v3643 = vld [vmem:[%s3635 + $0xc] sm:$0xf]
                  %3644 = vst [vmem:[%s3636 + $0x18] sm:$0xf] %v3643
                  %v3645 = vld [vmem:[%s3635 + $0x10] sm:$0xf]
                  %3646 = vst [vmem:[%s3636 + $0x20] sm:$0xf] %v3645
                  %v3647 = vld [vmem:[%s3635 + $0x14] sm:$0xf]
                  %3648 = vst [vmem:[%s3636 + $0x28] sm:$0xf] %v3647
                  %v3649 = vld [vmem:[%s3635 + $0x18] sm:$0xf]
                  %3650 = vst [vmem:[%s3636 + $0x30] sm:$0xf] %v3649
                  %v3651 = vld [vmem:[%s3635 + $0x1c] sm:$0xf]
                  %3652 = vst [vmem:[%s3636 + $0x38] sm:$0xf] %v3651
                $region82: #{generator_forward.6} parent=69 // loop_footer
                  %s3634 = sadd.s32 1, %s3630
                $region83: #{generator_forward.6} parent=69 // loop_footer_branch
                  %3629 = sbr.rel target = $region79
                $region84: #{generator_forward.6} parent=69 // loop_exit
                  _
              $region70: #{generator_forward.6} parent=54 // pred_fallthru
                _
            $region55: #{generator_forward.6} parent=50 // pred_fallthru
              _
            // Predicated region
            $region56: #{generator_forward.6} parent=50 // pred_check
              _
            $region57: #{generator_forward.6} parent=50 // pred_check_branch
              %3592 = sbr.rel (0) target = $region59
            $region58: #{generator_forward.6} parent=50 // pred_region
              loop: start=0, step=1, limit=1
              $region60: #{generator_forward.6} parent=58 // loop_pre_header
                _
              $region61: #{generator_forward.6} parent=58 // loop_header
                %s3595 = sphi 0, %s3599
                %p3596 = scmp.ge.s32.totalorder %s3595, 1
                %s3600 = sphi %s3580, %s3580
                %s3601 = sphi %s3586, %s3586
              $region62: #{generator_forward.6} parent=58 // loop_header_branch
                %3598 = sbr.rel (%p3596) target = $region66
              $region63: #{generator_forward.6} parent=58 // loop_body
                %v3602 = vld [vmem:[%s3600] sm:$0xf]
                %3603 = vst [vmem:[%s3601] sm:$0xf] %v3602
                %v3604 = vld [vmem:[%s3600 + $0x4] sm:$0xf]
                %3605 = vst [vmem:[%s3601 + $0x8] sm:$0xf] %v3604
                %v3606 = vld [vmem:[%s3600 + $0x8] sm:$0xf]
                %3607 = vst [vmem:[%s3601 + $0x10] sm:$0xf] %v3606
                %v3608 = vld [vmem:[%s3600 + $0xc] sm:$0xf]
                %3609 = vst [vmem:[%s3601 + $0x18] sm:$0xf] %v3608
                %v3610 = vld [vmem:[%s3600 + $0x10] sm:$0xf]
                %3611 = vst [vmem:[%s3601 + $0x20] sm:$0xf] %v3610
                %v3612 = vld [vmem:[%s3600 + $0x14] sm:$0xf]
                %3613 = vst [vmem:[%s3601 + $0x28] sm:$0xf] %v3612
                %v3614 = vld [vmem:[%s3600 + $0x18] sm:$0xf]
                %3615 = vst [vmem:[%s3601 + $0x30] sm:$0xf] %v3614
                %v3616 = vld [vmem:[%s3600 + $0x1c] sm:$0xf]
                %3617 = vst [vmem:[%s3601 + $0x38] sm:$0xf] %v3616
              $region64: #{generator_forward.6} parent=58 // loop_footer
                %s3599 = sadd.s32 1, %s3595
              $region65: #{generator_forward.6} parent=58 // loop_footer_branch
                %3594 = sbr.rel target = $region61
              $region66: #{generator_forward.6} parent=58 // loop_exit
                _
            $region59: #{generator_forward.6} parent=50 // pred_fallthru
              _
          $region51: #{generator_forward.6} parent=46 // pred_fallthru
            _
          %3653 = vnop
        $region47: #{generator_forward.6} parent=35 // pred_fallthru
          _
      $region36: #{generator_forward.6} parent=5 // pred_fallthru
        _
      %p3654 = scmp.le.s32.totalorder 2, %s10
      // Predicated region
      $region85: #{generator_forward.6} parent=5 // pred_check
        %p3655 = pneg %p3654
      $region86: #{generator_forward.6} parent=5 // pred_check_branch
        %3657 = sbr.rel (%p3655) target = $region88
      $region87: #{generator_forward.6} parent=5 // pred_region
        %s3658 = ssub.s32 %s10, 2
        // Predicated region
        $region89: #{generator_forward.6} parent=87 // pred_check
          %p3659 = pneg %p138
        $region90: #{generator_forward.6} parent=87 // pred_check_branch
          %3661 = sbr.rel (%p3659) target = $region92
        $region91: #{generator_forward.6} parent=87 // pred_region
          %s3662 = sand.u32 %s123, 1
          %s3663 = sand.u32 %s123, 1
          %s3664 = smul.addr %s3663, 32
          %s3665 = scalar_lea.vmem [#allocation3], %s3664
        $region92: #{generator_forward.6} parent=87 // pred_fallthru
          _
      $region88: #{generator_forward.6} parent=5 // pred_fallthru
        _
    $region6: #{generator_forward.6} parent=1 // loop_footer
      %s14 = sadd.s32 1, %s10
    $region7: #{generator_forward.6} parent=1 // loop_footer_branch
      %9 = sbr.rel target = $region3
    $region8: #{generator_forward.6} parent=1 // loop_exit
      _

// kernel: generator_forward.5
$region0: #{generator_forward.5}
  #allocation0 [shape = 'u32[]', space=smem, size = 0x4, offset = 0x4, fixed_abs, tag = 'smem constant byte address 0x4 - core index']
  #allocation1 [shape = 'u32[144,128]{1,0:T(1,128)}', space=vmem, size = 0x12000, scoped, tag = 'internal scratch']
  #allocation2 [shape = 'f32[8,2,1024]{2,1,0:T(2,128)}', space=vmem, size = 0x10000, scoped, tag = 'scratch operand']
  %s0 = inlined_call_operand.vmem [shape: f32[8,2,384], index: 0, kind: input, shape index: {}]
  %s1 = inlined_call_operand.vmem [shape: bf16[2,384,1024], index: 1, kind: input, shape index: {}]
  %s2 = inlined_call_operand.vmem [shape: f32[2,256,1024], index: 2, kind: input, shape index: {}]
  %s3 = inlined_call_operand.vmem [shape: f32[2,1,1024], index: 3, kind: input, shape index: {}]
  %s4 = inlined_call_operand.vmem [shape: f32[8,2,512], index: 4, kind: output, shape index: {}]
  %s5 = sld [smem:[#allocation0]]
  $region93: #{generator_forward.5} parent=0
    _
  %s7 = ssub.s32 1, %s5
  %s8 = scalar_select 0, %s7, %s5
  $region1: #{generator_forward.5} parent=0
    #allocation3 [shape = 'u8[32768]{0}', space=vmem, size = 0x8000, scoped, tag = 'output window, operand 0']
    loop: start=0, step=1, limit=4
    $region2: #{generator_forward.5} parent=1 // loop_pre_header
      _
    $region3: #{generator_forward.5} parent=1 // loop_header
      %s10 = sphi 0, %s14
      %p11 = scmp.ge.s32.totalorder %s10, 4
      %s18 = sphi 0, %s18
      %s20 = sphi 0, %s18
      %s21 = sphi 0, %s20
      %s35 = sphi 0, %s21
      %s41 = sphi 0, %s43
      %s44 = sphi 0, %s41
      %s45 = sphi 0, %s44
      %s61 = sphi 0, %s45
      %s67 = sphi 0, %s69
      %s70 = sphi 0, %s67
      %s71 = sphi 0, %s70
      %s87 = sphi 0, %s71
      %s93 = sphi 0, %s95
      %s96 = sphi 0, %s93
      %s97 = sphi 0, %s96
      %s113 = sphi 0, %s97
      %s119 = sphi 0, %s121
      %s122 = sphi 0, %s119
      %s123 = sphi 0, %s122
      %s139 = sphi 0, %s123
    $region4: #{generator_forward.5} parent=1 // loop_header_branch
      %13 = sbr.rel (%p11) target = $region8
    $region5: #{generator_forward.5} parent=1 // loop_body
      %s15 = ssub.s32 %s10, 1
      %s16 = ssub.s32 %s10, 2
      %s17 = sadd.s32 %s10, 1
      %s19 = sadd.s32 %s18, 1
      %p22 = scmp.eq.s32.totalorder %s10, 1
      %p23 = scmp.ne.s32.totalorder %s18, %s20
      %p24 = scmp.eq.s32.totalorder %s10, 0
      %p25 = por %p23, %p24
      %p26 = scmp.ne.s32.totalorder %s18, %s20
      %p27 = scmp.eq.s32.totalorder %s15, 1
      %p28 = por %p26, %p27
      %p29 = scmp.ne.s32.totalorder %s20, %s21
      %p30 = scmp.eq.s32.totalorder %s15, 0
      %p31 = por %p29, %p30
      %p32 = scmp.ne.s32.totalorder %s20, %s21
      %p33 = scmp.eq.s32.totalorder %s16, 1
      %p34 = por %p32, %p33
      %p36 = scmp.ne.s32.totalorder %s21, %s35
      %p37 = scmp.eq.s32.totalorder %s16, 0
      %p38 = por %p36, %p37
      %s39 = ssub.s32 %s10, %s17
      %p40 = scmp.eq.s32.totalorder %s39, 0
      %s42 = sadd.s32 %s41, 1
      %s43 = scalar_select %p40, %s41, %s42
      %p46 = pneg %p40
      %p47 = scmp.eq.s32.totalorder %s10, 1
      %p48 = por %p46, %p47
      %p49 = scmp.ne.s32.totalorder %s41, %s44
      %p50 = scmp.eq.s32.totalorder %s10, 0
      %p51 = por %p49, %p50
      %p52 = scmp.ne.s32.totalorder %s41, %s44
      %p53 = scmp.eq.s32.totalorder %s15, 1
      %p54 = por %p52, %p53
      %p55 = scmp.ne.s32.totalorder %s44, %s45
      %p56 = scmp.eq.s32.totalorder %s15, 0
      %p57 = por %p55, %p56
      %p58 = scmp.ne.s32.totalorder %s44, %s45
      %p59 = scmp.eq.s32.totalorder %s16, 1
      %p60 = por %p58, %p59
      %p62 = scmp.ne.s32.totalorder %s45, %s61
      %p63 = scmp.eq.s32.totalorder %s16, 0
      %p64 = por %p62, %p63
      %s65 = ssub.s32 %s10, %s17
      %p66 = scmp.eq.s32.totalorder %s65, 0
      %s68 = sadd.s32 %s67, 1
      %s69 = scalar_select %p66, %s67, %s68
      %p72 = pneg %p66
      %p73 = scmp.eq.s32.totalorder %s10, 1
      %p74 = por %p72, %p73
      %p75 = scmp.ne.s32.totalorder %s67, %s70
      %p76 = scmp.eq.s32.totalorder %s10, 0
      %p77 = por %p75, %p76
      %p78 = scmp.ne.s32.totalorder %s67, %s70
      %p79 = scmp.eq.s32.totalorder %s15, 1
      %p80 = por %p78, %p79
      %p81 = scmp.ne.s32.totalorder %s70, %s71
      %p82 = scmp.eq.s32.totalorder %s15, 0
      %p83 = por %p81, %p82
      %p84 = scmp.ne.s32.totalorder %s70, %s71
      %p85 = scmp.eq.s32.totalorder %s16, 1
      %p86 = por %p84, %p85
      %p88 = scmp.ne.s32.totalorder %s71, %s87
      %p89 = scmp.eq.s32.totalorder %s16, 0
      %p90 = por %p88, %p89
      %s91 = ssub.s32 %s10, %s17
      %p92 = scmp.eq.s32.totalorder %s91, 0
      %s94 = sadd.s32 %s93, 1
      %s95 = scalar_select %p92, %s93, %s94
      %p98 = pneg %p92
      %p99 = scmp.eq.s32.totalorder %s10, 1
      %p100 = por %p98, %p99
      %p101 = scmp.ne.s32.totalorder %s93, %s96
      %p102 = scmp.eq.s32.totalorder %s10, 0
      %p103 = por %p101, %p102
      %p104 = scmp.ne.s32.totalorder %s93, %s96
      %p105 = scmp.eq.s32.totalorder %s15, 1
      %p106 = por %p104, %p105
      %p107 = scmp.ne.s32.totalorder %s96, %s97
      %p108 = scmp.eq.s32.totalorder %s15, 0
      %p109 = por %p107, %p108
      %p110 = scmp.ne.s32.totalorder %s96, %s97
      %p111 = scmp.eq.s32.totalorder %s16, 1
      %p112 = por %p110, %p111
      %p114 = scmp.ne.s32.totalorder %s97, %s113
      %p115 = scmp.eq.s32.totalorder %s16, 0
      %p116 = por %p114, %p115
      %s117 = ssub.s32 %s10, %s17
      %p118 = scmp.eq.s32.totalorder %s117, 0
      %s120 = sadd.s32 %s119, 1
      %s121 = scalar_select %p118, %s119, %s120
      %p124 = pneg %p118
      %p125 = scmp.eq.s32.totalorder %s10, 1
      %p126 = por %p124, %p125
      %p127 = scmp.ne.s32.totalorder %s119, %s122
      %p128 = scmp.eq.s32.totalorder %s10, 0
      %p129 = por %p127, %p128
      %p130 = scmp.ne.s32.totalorder %s119, %s122
      %p131 = scmp.eq.s32.totalorder %s15, 1
      %p132 = por %p130, %p131
      %p133 = scmp.ne.s32.totalorder %s122, %s123
      %p134 = scmp.eq.s32.totalorder %s15, 0
      %p135 = por %p133, %p134
      %p136 = scmp.ne.s32.totalorder %s122, %s123
      %p137 = scmp.eq.s32.totalorder %s16, 1
      %p138 = por %p136, %p137
      %p140 = scmp.ne.s32.totalorder %s123, %s139
      %p141 = scmp.eq.s32.totalorder %s16, 0
      %p142 = por %p140, %p141
      %p143 = scmp.le.s32.totalorder 1, %s10
      %p144 = scmp.lt.s32.totalorder %s10, 3
      %p145 = pnand %p143, %p144
      %p146 = pneg %p145
      // Predicated region
      $region9: #{generator_forward.5} parent=5 // pred_check
        _
      $region10: #{generator_forward.5} parent=5 // pred_check_branch
        %148 = sbr.rel (%p145) target = $region12
      $region11: #{generator_forward.5} parent=5 // pred_region
        %s149 = ssub.s32 %s10, 1
        // Predicated region
        $region13: #{generator_forward.5} parent=11 // pred_check
          %p150 = pneg %p31
        $region14: #{generator_forward.5} parent=11 // pred_check_branch
          %152 = sbr.rel (%p150) target = $region16
        $region15: #{generator_forward.5} parent=11 // pred_region
          _
        $region16: #{generator_forward.5} parent=11 // pred_fallthru
          _
      $region12: #{generator_forward.5} parent=5 // pred_fallthru
        _
      %p153 = scmp.lt.s32.totalorder %s10, 2
      // Predicated region
      $region17: #{generator_forward.5} parent=5 // pred_check
        %p154 = pneg %p153
      $region18: #{generator_forward.5} parent=5 // pred_check_branch
        %156 = sbr.rel (%p154) target = $region20
      $region19: #{generator_forward.5} parent=5 // pred_region
        // Predicated region
        $region21: #{generator_forward.5} parent=19 // pred_check
          %p157 = pneg %p51
        $region22: #{generator_forward.5} parent=19 // pred_check_branch
          %159 = sbr.rel (%p157) target = $region24
        $region23: #{generator_forward.5} parent=19 // pred_region
          %p160 = scmp.lt.s32.totalorder %s10, 1
          %s161 = scalar_select %p160, %s10, 1
          %s162 = smul.addr %s161, 384
          %s163 = smul.addr %s162, 4
          %s164 = scalar_lea.vmem %s1, %s163
        $region24: #{generator_forward.5} parent=19 // pred_fallthru
          _
        // Predicated region
        $region25: #{generator_forward.5} parent=19 // pred_check
          %p165 = pneg %p77
        $region26: #{generator_forward.5} parent=19 // pred_check_branch
          %167 = sbr.rel (%p165) target = $region28
        $region27: #{generator_forward.5} parent=19 // pred_region
          %p168 = scmp.lt.s32.totalorder %s10, 1
          %s169 = scalar_select %p168, %s10, 1
          %s170 = smul.addr %s169, 256
          %s171 = smul.addr %s170, 8
          %s172 = scalar_lea.vmem %s2, %s171
        $region28: #{generator_forward.5} parent=19 // pred_fallthru
          _
        // Predicated region
        $region29: #{generator_forward.5} parent=19 // pred_check
          %p173 = pneg %p103
        $region30: #{generator_forward.5} parent=19 // pred_check_branch
          %175 = sbr.rel (%p173) target = $region32
        $region31: #{generator_forward.5} parent=19 // pred_region
          %p176 = scmp.lt.s32.totalorder %s10, 1
          %s177 = scalar_select %p176, %s10, 1
          %s178 = smul.addr %s177, 8
          %s179 = scalar_lea.vmem %s3, %s178
        $region32: #{generator_forward.5} parent=19 // pred_fallthru
          _
      $region20: #{generator_forward.5} parent=5 // pred_fallthru
        _
      %p180 = scmp.le.s32.totalorder 1, %s10
      %p181 = scmp.lt.s32.totalorder %s10, 3
      %p182 = pnand %p180, %p181
      %p183 = pneg %p182
      // Predicated region
      $region33: #{generator_forward.5} parent=5 // pred_check
        _
      $region34: #{generator_forward.5} parent=5 // pred_check_branch
        %185 = sbr.rel (%p182) target = $region36
      $region35: #{generator_forward.5} parent=5 // pred_region
        %s186 = ssub.s32 %s10, 1
        %p187 = pneg %p31
        %p188 = pneg %p28
        %p189 = scmp.lt.s32.totalorder %s15, 1
        %s190 = scalar_select %p189, %s15, 1
        %s191 = smul.addr %s190, 384
        %s192 = smul.addr %s191, 4
        %s193 = scalar_lea.vmem %s1, %s192
        %p194 = pneg %p57
        %p195 = pneg %p54
        %p196 = scmp.lt.s32.totalorder %s15, 1
        %s197 = scalar_select %p196, %s15, 1
        %s198 = smul.addr %s197, 256
        %s199 = smul.addr %s198, 8
        %s200 = scalar_lea.vmem %s2, %s199
        %p201 = pneg %p83
        %p202 = pneg %p80
        %p203 = scmp.lt.s32.totalorder %s15, 1
        %s204 = scalar_select %p203, %s15, 1
        %s205 = smul.addr %s204, 8
        %s206 = scalar_lea.vmem %s3, %s205
        %p207 = pneg %p109
        %p208 = pneg %p106
        %p209 = pneg %p135
        %p210 = pneg %p132
        %s211 = sand.u32 %s122, 1
        %s212 = sand.u32 %s122, 1
        %s213 = smul.addr %s212, 32
        %s214 = scalar_lea.vmem [#allocation3], %s213
        %p215 = scmp.lt.s32.totalorder %s15, 1
        %s216 = scalar_select %p215, %s15, 1
        %s217 = smul.addr %s216, 384
        %s218 = smul.addr %s217, 4
        %s219 = scalar_lea.vmem %s1, %s218
        %p220 = scmp.lt.s32.totalorder %s15, 1
        %s221 = scalar_select %p220, %s15, 1
        %s222 = smul.addr %s221, 256
        %s223 = smul.addr %s222, 8
        %s224 = scalar_lea.vmem %s2, %s223
        %p225 = scmp.lt.s32.totalorder %s15, 1
        %s226 = scalar_select %p225, %s15, 1
        %s227 = smul.addr %s226, 8
        %s228 = scalar_lea.vmem %s3, %s227
        %s229 = smul.u32 2, %s15
        %v231 = vld [vmem:[%s0] sm:$0x3f]
        %v232 = vld [vmem:[%s0 + $0x6] sm:$0x3f]
        %v233 = vld [vmem:[%s0 + $0xc] sm:$0x3f]
        %v234 = vld [vmem:[%s0 + $0x12] sm:$0x3f]
        %v235 = vld [vmem:[%s0 + $0x18] sm:$0x3f]
        %v236 = vld [vmem:[%s0 + $0x1e] sm:$0x3f]
        %v237 = vld [vmem:[%s0 + $0x24] sm:$0x3f]
        %v238 = vld [vmem:[%s0 + $0x2a] sm:$0x3f]
        %v247 = vcombine.high %v231, %v231
        %v249 = vunpack.c.l.s4 1983009808
        %v250 = vunpack.c.0.s8 %v249
        %v251 = vlaneseq
        %v252 = vshrl.u32 %v251, 7
        %v253 = vsub.s32 %v250, %v252
        %v254 = vrot.slane %v231, %v253
        %v256 = vunpack.c.l.s4 1983009808
        %v257 = vunpack.c.0.s8 %v256
        %v258 = vlaneseq
        %v259 = vshrl.u32 %v258, 7
        %v260 = vsub.s32 %v257, %v259
        %v261 = vrot.slane %v247, %v260
        %v262 = vcombine.high %v254, %v254
        %v263 = vcombine.high %v232, %v232
        %v265 = vunpack.c.l.s4 1983009808
        %v266 = vunpack.c.0.s8 %v265
        %v267 = vlaneseq
        %v268 = vshrl.u32 %v267, 7
        %v269 = vsub.s32 %v266, %v268
        %v270 = vrot.slane %v232, %v269
        %v272 = vunpack.c.l.s4 1983009808
        %v273 = vunpack.c.0.s8 %v272
        %v274 = vlaneseq
        %v275 = vshrl.u32 %v274, 7
        %v276 = vsub.s32 %v273, %v275
        %v277 = vrot.slane %v263, %v276
        %v278 = vcombine.high %v270, %v270
        %v279 = vcombine.high %v233, %v233
        %v281 = vunpack.c.l.s4 1983009808
        %v282 = vunpack.c.0.s8 %v281
        %v283 = vlaneseq
        %v284 = vshrl.u32 %v283, 7
        %v285 = vsub.s32 %v282, %v284
        %v286 = vrot.slane %v233, %v285
        %v288 = vunpack.c.l.s4 1983009808
        %v289 = vunpack.c.0.s8 %v288
        %v290 = vlaneseq
        %v291 = vshrl.u32 %v290, 7
        %v292 = vsub.s32 %v289, %v291
        %v293 = vrot.slane %v279, %v292
        %v294 = vcombine.high %v286, %v286
        %v295 = vcombine.high %v234, %v234
        %v297 = vunpack.c.l.s4 1983009808
        %v298 = vunpack.c.0.s8 %v297
        %v299 = vlaneseq
        %v300 = vshrl.u32 %v299, 7
        %v301 = vsub.s32 %v298, %v300
        %v302 = vrot.slane %v234, %v301
        %v304 = vunpack.c.l.s4 1983009808
        %v305 = vunpack.c.0.s8 %v304
        %v306 = vlaneseq
        %v307 = vshrl.u32 %v306, 7
        %v308 = vsub.s32 %v305, %v307
        %v309 = vrot.slane %v295, %v308
        %v310 = vcombine.high %v302, %v302
        %v311 = vcombine.high %v235, %v235
        %v313 = vunpack.c.l.s4 1983009808
        %v314 = vunpack.c.0.s8 %v313
        %v315 = vlaneseq
        %v316 = vshrl.u32 %v315, 7
        %v317 = vsub.s32 %v314, %v316
        %v318 = vrot.slane %v235, %v317
        %v320 = vunpack.c.l.s4 1983009808
        %v321 = vunpack.c.0.s8 %v320
        %v322 = vlaneseq
        %v323 = vshrl.u32 %v322, 7
        %v324 = vsub.s32 %v321, %v323
        %v325 = vrot.slane %v311, %v324
        %v326 = vcombine.high %v318, %v318
        %v327 = vcombine.high %v236, %v236
        %v329 = vunpack.c.l.s4 1983009808
        %v330 = vunpack.c.0.s8 %v329
        %v331 = vlaneseq
        %v332 = vshrl.u32 %v331, 7
        %v333 = vsub.s32 %v330, %v332
        %v334 = vrot.slane %v236, %v333
        %v336 = vunpack.c.l.s4 1983009808
        %v337 = vunpack.c.0.s8 %v336
        %v338 = vlaneseq
        %v339 = vshrl.u32 %v338, 7
        %v340 = vsub.s32 %v337, %v339
        %v341 = vrot.slane %v327, %v340
        %v342 = vcombine.high %v334, %v334
        %v343 = vcombine.high %v237, %v237
        %v345 = vunpack.c.l.s4 1983009808
        %v346 = vunpack.c.0.s8 %v345
        %v347 = vlaneseq
        %v348 = vshrl.u32 %v347, 7
        %v349 = vsub.s32 %v346, %v348
        %v350 = vrot.slane %v237, %v349
        %v352 = vunpack.c.l.s4 1983009808
        %v353 = vunpack.c.0.s8 %v352
        %v354 = vlaneseq
        %v355 = vshrl.u32 %v354, 7
        %v356 = vsub.s32 %v353, %v355
        %v357 = vrot.slane %v343, %v356
        %v358 = vcombine.high %v350, %v350
        %v359 = vcombine.high %v238, %v238
        %v361 = vunpack.c.l.s4 1983009808
        %v362 = vunpack.c.0.s8 %v361
        %v363 = vlaneseq
        %v364 = vshrl.u32 %v363, 7
        %v365 = vsub.s32 %v362, %v364
        %v366 = vrot.slane %v238, %v365
        %v368 = vunpack.c.l.s4 1983009808
        %v369 = vunpack.c.0.s8 %v368
        %v370 = vlaneseq
        %v371 = vshrl.u32 %v370, 7
        %v372 = vsub.s32 %v369, %v371
        %v373 = vrot.slane %v359, %v372
        %v374 = vcombine.high %v366, %v366
        %v399 = vpack.c.bf16 %v254, %v254
        %v400 = vpack.c.bf16 %v262, %v262
        %v401 = vpack.c.bf16 %v261, %v261
        %v402 = vpack.c.bf16 %v270, %v270
        %v403 = vpack.c.bf16 %v278, %v278
        %v404 = vpack.c.bf16 %v277, %v277
        %v405 = vpack.c.bf16 %v286, %v286
        %v406 = vpack.c.bf16 %v294, %v294
        %v407 = vpack.c.bf16 %v293, %v293
        %v408 = vpack.c.bf16 %v302, %v302
        %v409 = vpack.c.bf16 %v310, %v310
        %v410 = vpack.c.bf16 %v309, %v309
        %v411 = vpack.c.bf16 %v318, %v318
        %v412 = vpack.c.bf16 %v326, %v326
        %v413 = vpack.c.bf16 %v325, %v325
        %v414 = vpack.c.bf16 %v334, %v334
        %v415 = vpack.c.bf16 %v342, %v342
        %v416 = vpack.c.bf16 %v341, %v341
        %v417 = vpack.c.bf16 %v350, %v350
        %v418 = vpack.c.bf16 %v358, %v358
        %v419 = vpack.c.bf16 %v357, %v357
        %v420 = vpack.c.bf16 %v366, %v366
        %v421 = vpack.c.bf16 %v374, %v374
        %v422 = vpack.c.bf16 %v373, %v373
        %v423 = vld [vmem:[%s219] sm:$0xff]
        %v424 = vld [vmem:[%s219 + $0x8] sm:$0xff]
        %v425 = vld [vmem:[%s219 + $0x10] sm:$0xff]
        %v426 = vld [vmem:[%s219 + $0x18] sm:$0xff]
        %v427 = vld [vmem:[%s219 + $0x20] sm:$0xff]
        %v428 = vld [vmem:[%s219 + $0x28] sm:$0xff]
        %v429 = vld [vmem:[%s219 + $0x30] sm:$0xff]
        %v430 = vld [vmem:[%s219 + $0x38] sm:$0xff]
        %v431 = vld [vmem:[%s219 + $0x40] sm:$0xff]
        %v432 = vld [vmem:[%s219 + $0x48] sm:$0xff]
        %v433 = vld [vmem:[%s219 + $0x50] sm:$0xff]
        %v434 = vld [vmem:[%s219 + $0x58] sm:$0xff]
        %v435 = vld [vmem:[%s219 + $0x60] sm:$0xff]
        %v436 = vld [vmem:[%s219 + $0x68] sm:$0xff]
        %v437 = vld [vmem:[%s219 + $0x70] sm:$0xff]
        %v438 = vld [vmem:[%s219 + $0x78] sm:$0xff]
        %v439 = vld [vmem:[%s219 + $0x80] sm:$0xff]
        %v440 = vld [vmem:[%s219 + $0x88] sm:$0xff]
        %v441 = vld [vmem:[%s219 + $0x90] sm:$0xff]
        %v442 = vld [vmem:[%s219 + $0x98] sm:$0xff]
        %v443 = vld [vmem:[%s219 + $0xa0] sm:$0xff]
        %v444 = vld [vmem:[%s219 + $0xa8] sm:$0xff]
        %v445 = vld [vmem:[%s219 + $0xb0] sm:$0xff]
        %v446 = vld [vmem:[%s219 + $0xb8] sm:$0xff]
        %v447 = vld [vmem:[%s219 + $0xc0] sm:$0xff]
        %v448 = vld [vmem:[%s219 + $0xc8] sm:$0xff]
        %v449 = vld [vmem:[%s219 + $0xd0] sm:$0xff]
        %v450 = vld [vmem:[%s219 + $0xd8] sm:$0xff]
        %v451 = vld [vmem:[%s219 + $0xe0] sm:$0xff]
        %v452 = vld [vmem:[%s219 + $0xe8] sm:$0xff]
        %v453 = vld [vmem:[%s219 + $0xf0] sm:$0xff]
        %v454 = vld [vmem:[%s219 + $0xf8] sm:$0xff]
        %v455 = vld [vmem:[%s219 + $0x100] sm:$0xff]
        %v456 = vld [vmem:[%s219 + $0x108] sm:$0xff]
        %v457 = vld [vmem:[%s219 + $0x110] sm:$0xff]
        %v458 = vld [vmem:[%s219 + $0x118] sm:$0xff]
        %v459 = vld [vmem:[%s219 + $0x120] sm:$0xff]
        %v460 = vld [vmem:[%s219 + $0x128] sm:$0xff]
        %v461 = vld [vmem:[%s219 + $0x130] sm:$0xff]
        %v462 = vld [vmem:[%s219 + $0x138] sm:$0xff]
        %v463 = vld [vmem:[%s219 + $0x140] sm:$0xff]
        %v464 = vld [vmem:[%s219 + $0x148] sm:$0xff]
        %v465 = vld [vmem:[%s219 + $0x150] sm:$0xff]
        %v466 = vld [vmem:[%s219 + $0x158] sm:$0xff]
        %v467 = vld [vmem:[%s219 + $0x160] sm:$0xff]
        %v468 = vld [vmem:[%s219 + $0x168] sm:$0xff]
        %v469 = vld [vmem:[%s219 + $0x170] sm:$0xff]
        %v470 = vld [vmem:[%s219 + $0x178] sm:$0xff]
        %v471 = vld [vmem:[%s219 + $0x180] sm:$0xff]
        %v472 = vld [vmem:[%s219 + $0x188] sm:$0xff]
        %v473 = vld [vmem:[%s219 + $0x190] sm:$0xff]
        %v474 = vld [vmem:[%s219 + $0x198] sm:$0xff]
        %v475 = vld [vmem:[%s219 + $0x1a0] sm:$0xff]
        %v476 = vld [vmem:[%s219 + $0x1a8] sm:$0xff]
        %v477 = vld [vmem:[%s219 + $0x1b0] sm:$0xff]
        %v478 = vld [vmem:[%s219 + $0x1b8] sm:$0xff]
        %v479 = vld [vmem:[%s219 + $0x1c0] sm:$0xff]
        %v480 = vld [vmem:[%s219 + $0x1c8] sm:$0xff]
        %v481 = vld [vmem:[%s219 + $0x1d0] sm:$0xff]
        %v482 = vld [vmem:[%s219 + $0x1d8] sm:$0xff]
        %v483 = vld [vmem:[%s219 + $0x1e0] sm:$0xff]
        %v484 = vld [vmem:[%s219 + $0x1e8] sm:$0xff]
        %v485 = vld [vmem:[%s219 + $0x1f0] sm:$0xff]
        %v486 = vld [vmem:[%s219 + $0x1f8] sm:$0xff]
        %v487 = vld [vmem:[%s219 + $0x200] sm:$0xff]
        %v488 = vld [vmem:[%s219 + $0x208] sm:$0xff]
        %v489 = vld [vmem:[%s219 + $0x210] sm:$0xff]
        %v490 = vld [vmem:[%s219 + $0x218] sm:$0xff]
        %v491 = vld [vmem:[%s219 + $0x220] sm:$0xff]
        %v492 = vld [vmem:[%s219 + $0x228] sm:$0xff]
        %v493 = vld [vmem:[%s219 + $0x230] sm:$0xff]
        %v494 = vld [vmem:[%s219 + $0x238] sm:$0xff]
        %v495 = vld [vmem:[%s219 + $0x240] sm:$0xff]
        %v496 = vld [vmem:[%s219 + $0x248] sm:$0xff]
        %v497 = vld [vmem:[%s219 + $0x250] sm:$0xff]
        %v498 = vld [vmem:[%s219 + $0x258] sm:$0xff]
        %v499 = vld [vmem:[%s219 + $0x260] sm:$0xff]
        %v500 = vld [vmem:[%s219 + $0x268] sm:$0xff]
        %v501 = vld [vmem:[%s219 + $0x270] sm:$0xff]
        %v502 = vld [vmem:[%s219 + $0x278] sm:$0xff]
        %v503 = vld [vmem:[%s219 + $0x280] sm:$0xff]
        %v504 = vld [vmem:[%s219 + $0x288] sm:$0xff]
        %v505 = vld [vmem:[%s219 + $0x290] sm:$0xff]
        %v506 = vld [vmem:[%s219 + $0x298] sm:$0xff]
        %v507 = vld [vmem:[%s219 + $0x2a0] sm:$0xff]
        %v508 = vld [vmem:[%s219 + $0x2a8] sm:$0xff]
        %v509 = vld [vmem:[%s219 + $0x2b0] sm:$0xff]
        %v510 = vld [vmem:[%s219 + $0x2b8] sm:$0xff]
        %v511 = vld [vmem:[%s219 + $0x2c0] sm:$0xff]
        %v512 = vld [vmem:[%s219 + $0x2c8] sm:$0xff]
        %v513 = vld [vmem:[%s219 + $0x2d0] sm:$0xff]
        %v514 = vld [vmem:[%s219 + $0x2d8] sm:$0xff]
        %v515 = vld [vmem:[%s219 + $0x2e0] sm:$0xff]
        %v516 = vld [vmem:[%s219 + $0x2e8] sm:$0xff]
        %v517 = vld [vmem:[%s219 + $0x2f0] sm:$0xff]
        %v518 = vld [vmem:[%s219 + $0x2f8] sm:$0xff]
        %v519 = vld [vmem:[%s219 + $0x300] sm:$0xff]
        %v520 = vld [vmem:[%s219 + $0x308] sm:$0xff]
        %v521 = vld [vmem:[%s219 + $0x310] sm:$0xff]
        %v522 = vld [vmem:[%s219 + $0x318] sm:$0xff]
        %v523 = vld [vmem:[%s219 + $0x320] sm:$0xff]
        %v524 = vld [vmem:[%s219 + $0x328] sm:$0xff]
        %v525 = vld [vmem:[%s219 + $0x330] sm:$0xff]
        %v526 = vld [vmem:[%s219 + $0x338] sm:$0xff]
        %v527 = vld [vmem:[%s219 + $0x340] sm:$0xff]
        %v528 = vld [vmem:[%s219 + $0x348] sm:$0xff]
        %v529 = vld [vmem:[%s219 + $0x350] sm:$0xff]
        %v530 = vld [vmem:[%s219 + $0x358] sm:$0xff]
        %v531 = vld [vmem:[%s219 + $0x360] sm:$0xff]
        %v532 = vld [vmem:[%s219 + $0x368] sm:$0xff]
        %v533 = vld [vmem:[%s219 + $0x370] sm:$0xff]
        %v534 = vld [vmem:[%s219 + $0x378] sm:$0xff]
        %v535 = vld [vmem:[%s219 + $0x380] sm:$0xff]
        %v536 = vld [vmem:[%s219 + $0x388] sm:$0xff]
        %v537 = vld [vmem:[%s219 + $0x390] sm:$0xff]
        %v538 = vld [vmem:[%s219 + $0x398] sm:$0xff]
        %v539 = vld [vmem:[%s219 + $0x3a0] sm:$0xff]
        %v540 = vld [vmem:[%s219 + $0x3a8] sm:$0xff]
        %v541 = vld [vmem:[%s219 + $0x3b0] sm:$0xff]
        %v542 = vld [vmem:[%s219 + $0x3b8] sm:$0xff]
        %v543 = vld [vmem:[%s219 + $0x3c0] sm:$0xff]
        %v544 = vld [vmem:[%s219 + $0x3c8] sm:$0xff]
        %v545 = vld [vmem:[%s219 + $0x3d0] sm:$0xff]
        %v546 = vld [vmem:[%s219 + $0x3d8] sm:$0xff]
        %v547 = vld [vmem:[%s219 + $0x3e0] sm:$0xff]
        %v548 = vld [vmem:[%s219 + $0x3e8] sm:$0xff]
        %v549 = vld [vmem:[%s219 + $0x3f0] sm:$0xff]
        %v550 = vld [vmem:[%s219 + $0x3f8] sm:$0xff]
        %v551 = vld [vmem:[%s219 + $0x400] sm:$0xff]
        %v552 = vld [vmem:[%s219 + $0x408] sm:$0xff]
        %v553 = vld [vmem:[%s219 + $0x410] sm:$0xff]
        %v554 = vld [vmem:[%s219 + $0x418] sm:$0xff]
        %v555 = vld [vmem:[%s219 + $0x420] sm:$0xff]
        %v556 = vld [vmem:[%s219 + $0x428] sm:$0xff]
        %v557 = vld [vmem:[%s219 + $0x430] sm:$0xff]
        %v558 = vld [vmem:[%s219 + $0x438] sm:$0xff]
        %v559 = vld [vmem:[%s219 + $0x440] sm:$0xff]
        %v560 = vld [vmem:[%s219 + $0x448] sm:$0xff]
        %v561 = vld [vmem:[%s219 + $0x450] sm:$0xff]
        %v562 = vld [vmem:[%s219 + $0x458] sm:$0xff]
        %v563 = vld [vmem:[%s219 + $0x460] sm:$0xff]
        %v564 = vld [vmem:[%s219 + $0x468] sm:$0xff]
        %v565 = vld [vmem:[%s219 + $0x470] sm:$0xff]
        %v566 = vld [vmem:[%s219 + $0x478] sm:$0xff]
        %v567 = vld [vmem:[%s219 + $0x480] sm:$0xff]
        %v568 = vld [vmem:[%s219 + $0x488] sm:$0xff]
        %v569 = vld [vmem:[%s219 + $0x490] sm:$0xff]
        %v570 = vld [vmem:[%s219 + $0x498] sm:$0xff]
        %v571 = vld [vmem:[%s219 + $0x4a0] sm:$0xff]
        %v572 = vld [vmem:[%s219 + $0x4a8] sm:$0xff]
        %v573 = vld [vmem:[%s219 + $0x4b0] sm:$0xff]
        %v574 = vld [vmem:[%s219 + $0x4b8] sm:$0xff]
        %v575 = vld [vmem:[%s219 + $0x4c0] sm:$0xff]
        %v576 = vld [vmem:[%s219 + $0x4c8] sm:$0xff]
        %v577 = vld [vmem:[%s219 + $0x4d0] sm:$0xff]
        %v578 = vld [vmem:[%s219 + $0x4d8] sm:$0xff]
        %v579 = vld [vmem:[%s219 + $0x4e0] sm:$0xff]
        %v580 = vld [vmem:[%s219 + $0x4e8] sm:$0xff]
        %v581 = vld [vmem:[%s219 + $0x4f0] sm:$0xff]
        %v582 = vld [vmem:[%s219 + $0x4f8] sm:$0xff]
        %v583 = vld [vmem:[%s219 + $0x500] sm:$0xff]
        %v584 = vld [vmem:[%s219 + $0x508] sm:$0xff]
        %v585 = vld [vmem:[%s219 + $0x510] sm:$0xff]
        %v586 = vld [vmem:[%s219 + $0x518] sm:$0xff]
        %v587 = vld [vmem:[%s219 + $0x520] sm:$0xff]
        %v588 = vld [vmem:[%s219 + $0x528] sm:$0xff]
        %v589 = vld [vmem:[%s219 + $0x530] sm:$0xff]
        %v590 = vld [vmem:[%s219 + $0x538] sm:$0xff]
        %v591 = vld [vmem:[%s219 + $0x540] sm:$0xff]
        %v592 = vld [vmem:[%s219 + $0x548] sm:$0xff]
        %v593 = vld [vmem:[%s219 + $0x550] sm:$0xff]
        %v594 = vld [vmem:[%s219 + $0x558] sm:$0xff]
        %v595 = vld [vmem:[%s219 + $0x560] sm:$0xff]
        %v596 = vld [vmem:[%s219 + $0x568] sm:$0xff]
        %v597 = vld [vmem:[%s219 + $0x570] sm:$0xff]
        %v598 = vld [vmem:[%s219 + $0x578] sm:$0xff]
        %v599 = vld [vmem:[%s219 + $0x580] sm:$0xff]
        %v600 = vld [vmem:[%s219 + $0x588] sm:$0xff]
        %v601 = vld [vmem:[%s219 + $0x590] sm:$0xff]
        %v602 = vld [vmem:[%s219 + $0x598] sm:$0xff]
        %v603 = vld [vmem:[%s219 + $0x5a0] sm:$0xff]
        %v604 = vld [vmem:[%s219 + $0x5a8] sm:$0xff]
        %v605 = vld [vmem:[%s219 + $0x5b0] sm:$0xff]
        %v606 = vld [vmem:[%s219 + $0x5b8] sm:$0xff]
        %v607 = vld [vmem:[%s219 + $0x5c0] sm:$0xff]
        %v608 = vld [vmem:[%s219 + $0x5c8] sm:$0xff]
        %v609 = vld [vmem:[%s219 + $0x5d0] sm:$0xff]
        %v610 = vld [vmem:[%s219 + $0x5d8] sm:$0xff]
        %v611 = vld [vmem:[%s219 + $0x5e0] sm:$0xff]
        %v612 = vld [vmem:[%s219 + $0x5e8] sm:$0xff]
        %v613 = vld [vmem:[%s219 + $0x5f0] sm:$0xff]
        %v614 = vld [vmem:[%s219 + $0x5f8] sm:$0xff]
        %v615 = vld [vmem:[%s228] sm:$0xff]
        %v617 = vlaneseq
        %v618 = vshrl.u32 %v617, 7
        %v619 = vsub.s32 0, %v618
        %v620 = vrot.slane %v615, %v619
        %v621 = vlaneseq
        %v622 = vshrl.u32 %v621, 7
        %v623 = vsub.s32 1, %v622
        %v624 = vrot.slane %v615, %v623
        %v625 = vlaneseq
        %v626 = vshrl.u32 %v625, 7
        %v627 = vsub.s32 2, %v626
        %v628 = vrot.slane %v615, %v627
        %v629 = vlaneseq
        %v630 = vshrl.u32 %v629, 7
        %v631 = vsub.s32 3, %v630
        %v632 = vrot.slane %v615, %v631
        %v633 = vlaneseq
        %v634 = vshrl.u32 %v633, 7
        %v635 = vsub.s32 4, %v634
        %v636 = vrot.slane %v615, %v635
        %v637 = vlaneseq
        %v638 = vshrl.u32 %v637, 7
        %v639 = vsub.s32 5, %v638
        %v640 = vrot.slane %v615, %v639
        %v641 = vlaneseq
        %v642 = vshrl.u32 %v641, 7
        %v643 = vsub.s32 6, %v642
        %v644 = vrot.slane %v615, %v643
        %v645 = vlaneseq
        %v646 = vshrl.u32 %v645, 7
        %v647 = vsub.s32 7, %v646
        %v648 = vrot.slane %v615, %v647
        %v673 = vcombine.low %v399, %v400
        %v675 = vunpack.c.l.s4 1966171168
        %v676 = vunpack.c.0.s8 %v675
        %v677 = vlaneseq
        %v678 = vshrl.u32 %v677, 7
        %v679 = vsub.s32 %v676, %v678
        %v680 = vrot.slane %v673, %v679
        %v682 = vunpack.c.l.s4 1966171168
        %v683 = vunpack.c.0.s8 %v682
        %v684 = vlaneseq
        %v685 = vshrl.u32 %v684, 7
        %v686 = vsub.s32 %v683, %v685
        %v687 = vrot.slane %v401, %v686
        %v688 = vcombine.low %v680, %v687
        %v690 = vunpack.c.l.s4 1966171168
        %v691 = vunpack.c.0.s8 %v690
        %v692 = vlaneseq
        %v693 = vshrl.u32 %v692, 7
        %v694 = vsub.s32 %v691, %v693
        %v695 = vrot.slane %v688, %v694
        %v696 = vcombine.low %v402, %v403
        %v698 = vunpack.c.l.s4 1966171168
        %v699 = vunpack.c.0.s8 %v698
        %v700 = vlaneseq
        %v701 = vshrl.u32 %v700, 7
        %v702 = vsub.s32 %v699, %v701
        %v703 = vrot.slane %v696, %v702
        %v705 = vunpack.c.l.s4 1966171168
        %v706 = vunpack.c.0.s8 %v705
        %v707 = vlaneseq
        %v708 = vshrl.u32 %v707, 7
        %v709 = vsub.s32 %v706, %v708
        %v710 = vrot.slane %v404, %v709
        %v711 = vcombine.low %v703, %v710
        %v713 = vunpack.c.l.s4 1966171168
        %v714 = vunpack.c.0.s8 %v713
        %v715 = vlaneseq
        %v716 = vshrl.u32 %v715, 7
        %v717 = vsub.s32 %v714, %v716
        %v718 = vrot.slane %v711, %v717
        %v719 = vcombine.low %v405, %v406
        %v721 = vunpack.c.l.s4 1966171168
        %v722 = vunpack.c.0.s8 %v721
        %v723 = vlaneseq
        %v724 = vshrl.u32 %v723, 7
        %v725 = vsub.s32 %v722, %v724
        %v726 = vrot.slane %v719, %v725
        %v728 = vunpack.c.l.s4 1966171168
        %v729 = vunpack.c.0.s8 %v728
        %v730 = vlaneseq
        %v731 = vshrl.u32 %v730, 7
        %v732 = vsub.s32 %v729, %v731
        %v733 = vrot.slane %v407, %v732
        %v734 = vcombine.low %v726, %v733
        %v736 = vunpack.c.l.s4 1966171168
        %v737 = vunpack.c.0.s8 %v736
        %v738 = vlaneseq
        %v739 = vshrl.u32 %v738, 7
        %v740 = vsub.s32 %v737, %v739
        %v741 = vrot.slane %v734, %v740
        %v742 = vcombine.low %v408, %v409
        %v744 = vunpack.c.l.s4 1966171168
        %v745 = vunpack.c.0.s8 %v744
        %v746 = vlaneseq
        %v747 = vshrl.u32 %v746, 7
        %v748 = vsub.s32 %v745, %v747
        %v749 = vrot.slane %v742, %v748
        %v751 = vunpack.c.l.s4 1966171168
        %v752 = vunpack.c.0.s8 %v751
        %v753 = vlaneseq
        %v754 = vshrl.u32 %v753, 7
        %v755 = vsub.s32 %v752, %v754
        %v756 = vrot.slane %v410, %v755
        %v757 = vcombine.low %v749, %v756
        %v759 = vunpack.c.l.s4 1966171168
        %v760 = vunpack.c.0.s8 %v759
        %v761 = vlaneseq
        %v762 = vshrl.u32 %v761, 7
        %v763 = vsub.s32 %v760, %v762
        %v764 = vrot.slane %v757, %v763
        %v765 = vcombine.low %v411, %v412
        %v767 = vunpack.c.l.s4 1966171168
        %v768 = vunpack.c.0.s8 %v767
        %v769 = vlaneseq
        %v770 = vshrl.u32 %v769, 7
        %v771 = vsub.s32 %v768, %v770
        %v772 = vrot.slane %v765, %v771
        %v774 = vunpack.c.l.s4 1966171168
        %v775 = vunpack.c.0.s8 %v774
        %v776 = vlaneseq
        %v777 = vshrl.u32 %v776, 7
        %v778 = vsub.s32 %v775, %v777
        %v779 = vrot.slane %v413, %v778
        %v780 = vcombine.low %v772, %v779
        %v782 = vunpack.c.l.s4 1966171168
        %v783 = vunpack.c.0.s8 %v782
        %v784 = vlaneseq
        %v785 = vshrl.u32 %v784, 7
        %v786 = vsub.s32 %v783, %v785
        %v787 = vrot.slane %v780, %v786
        %v788 = vcombine.low %v414, %v415
        %v790 = vunpack.c.l.s4 1966171168
        %v791 = vunpack.c.0.s8 %v790
        %v792 = vlaneseq
        %v793 = vshrl.u32 %v792, 7
        %v794 = vsub.s32 %v791, %v793
        %v795 = vrot.slane %v788, %v794
        %v797 = vunpack.c.l.s4 1966171168
        %v798 = vunpack.c.0.s8 %v797
        %v799 = vlaneseq
        %v800 = vshrl.u32 %v799, 7
        %v801 = vsub.s32 %v798, %v800
        %v802 = vrot.slane %v416, %v801
        %v803 = vcombine.low %v795, %v802
        %v805 = vunpack.c.l.s4 1966171168
        %v806 = vunpack.c.0.s8 %v805
        %v807 = vlaneseq
        %v808 = vshrl.u32 %v807, 7
        %v809 = vsub.s32 %v806, %v808
        %v810 = vrot.slane %v803, %v809
        %v811 = vcombine.low %v417, %v418
        %v813 = vunpack.c.l.s4 1966171168
        %v814 = vunpack.c.0.s8 %v813
        %v815 = vlaneseq
        %v816 = vshrl.u32 %v815, 7
        %v817 = vsub.s32 %v814, %v816
        %v818 = vrot.slane %v811, %v817
        %v820 = vunpack.c.l.s4 1966171168
        %v821 = vunpack.c.0.s8 %v820
        %v822 = vlaneseq
        %v823 = vshrl.u32 %v822, 7
        %v824 = vsub.s32 %v821, %v823
        %v825 = vrot.slane %v419, %v824
        %v826 = vcombine.low %v818, %v825
        %v828 = vunpack.c.l.s4 1966171168
        %v829 = vunpack.c.0.s8 %v828
        %v830 = vlaneseq
        %v831 = vshrl.u32 %v830, 7
        %v832 = vsub.s32 %v829, %v831
        %v833 = vrot.slane %v826, %v832
        %v834 = vcombine.low %v420, %v421
        %v836 = vunpack.c.l.s4 1966171168
        %v837 = vunpack.c.0.s8 %v836
        %v838 = vlaneseq
        %v839 = vshrl.u32 %v838, 7
        %v840 = vsub.s32 %v837, %v839
        %v841 = vrot.slane %v834, %v840
        %v843 = vunpack.c.l.s4 1966171168
        %v844 = vunpack.c.0.s8 %v843
        %v845 = vlaneseq
        %v846 = vshrl.u32 %v845, 7
        %v847 = vsub.s32 %v844, %v846
        %v848 = vrot.slane %v422, %v847
        %v849 = vcombine.low %v841, %v848
        %v851 = vunpack.c.l.s4 1966171168
        %v852 = vunpack.c.0.s8 %v851
        %v853 = vlaneseq
        %v854 = vshrl.u32 %v853, 7
        %v855 = vsub.s32 %v852, %v854
        %v856 = vrot.slane %v849, %v855
        %v857 = vcombine.low %v620, %v624
        %v858 = vcombine.low %v628, %v632
        %v860 = vunpack.c.l.s4 1983009808
        %v861 = vunpack.c.0.s8 %v860
        %v862 = vlaneseq
        %v863 = vshrl.u32 %v862, 7
        %v864 = vsub.s32 %v861, %v863
        %v865 = vrot.slane %v857, %v864
        %v867 = vunpack.c.l.s4 1983009808
        %v868 = vunpack.c.0.s8 %v867
        %v869 = vlaneseq
        %v870 = vshrl.u32 %v869, 7
        %v871 = vsub.s32 %v868, %v870
        %v872 = vrot.slane %v858, %v871
        %v873 = vcombine.low %v865, %v872
        %v874 = vcombine.low %v636, %v640
        %v875 = vcombine.low %v644, %v648
        %v877 = vunpack.c.l.s4 1983009808
        %v878 = vunpack.c.0.s8 %v877
        %v879 = vlaneseq
        %v880 = vshrl.u32 %v879, 7
        %v881 = vsub.s32 %v878, %v880
        %v882 = vrot.slane %v874, %v881
        %v884 = vunpack.c.l.s4 1983009808
        %v885 = vunpack.c.0.s8 %v884
        %v886 = vlaneseq
        %v887 = vshrl.u32 %v886, 7
        %v888 = vsub.s32 %v885, %v887
        %v889 = vrot.slane %v875, %v888
        %v890 = vcombine.low %v882, %v889
        %v891 = vcombine.low %v695, %v718
        %v892 = vcombine.low %v741, %v764
        %v893 = vcombine.low %v787, %v810
        %v894 = vcombine.low %v833, %v856
        %v896 = vunpack.c.l.s4 1966171168
        %v897 = vunpack.c.0.s8 %v896
        %v898 = vlaneseq
        %v899 = vshrl.u32 %v898, 7
        %v900 = vsub.s32 %v897, %v899
        %v901 = vrot.slane %v891, %v900
        %v903 = vunpack.c.l.s4 1966171168
        %v904 = vunpack.c.0.s8 %v903
        %v905 = vlaneseq
        %v906 = vshrl.u32 %v905, 7
        %v907 = vsub.s32 %v904, %v906
        %v908 = vrot.slane %v892, %v907
        %v910 = vunpack.c.l.s4 1966171168
        %v911 = vunpack.c.0.s8 %v910
        %v912 = vlaneseq
        %v913 = vshrl.u32 %v912, 7
        %v914 = vsub.s32 %v911, %v913
        %v915 = vrot.slane %v893, %v914
        %v917 = vunpack.c.l.s4 1966171168
        %v918 = vunpack.c.0.s8 %v917
        %v919 = vlaneseq
        %v920 = vshrl.u32 %v919, 7
        %v921 = vsub.s32 %v918, %v920
        %v922 = vrot.slane %v894, %v921
        %v923 = vcombine.low %v901, %v908
        %v924 = vcombine.high %v901, %v908
        %v925 = vcombine.low %v915, %v922
        %v926 = vcombine.high %v915, %v922
        %v928 = vunpack.c.l.s4 1966171168
        %v929 = vunpack.c.0.s8 %v928
        %v930 = vlaneseq
        %v931 = vshrl.u32 %v930, 7
        %v932 = vsub.s32 %v929, %v931
        %v933 = vrot.slane %v923, %v932
        %v935 = vunpack.c.l.s4 1966171168
        %v936 = vunpack.c.0.s8 %v935
        %v937 = vlaneseq
        %v938 = vshrl.u32 %v937, 7
        %v939 = vsub.s32 %v936, %v938
        %v940 = vrot.slane %v924, %v939
        %v942 = vunpack.c.l.s4 1966171168
        %v943 = vunpack.c.0.s8 %v942
        %v944 = vlaneseq
        %v945 = vshrl.u32 %v944, 7
        %v946 = vsub.s32 %v943, %v945
        %v947 = vrot.slane %v925, %v946
        %v949 = vunpack.c.l.s4 1966171168
        %v950 = vunpack.c.0.s8 %v949
        %v951 = vlaneseq
        %v952 = vshrl.u32 %v951, 7
        %v953 = vsub.s32 %v950, %v952
        %v954 = vrot.slane %v926, %v953
        %v955 = vcombine.low %v933, %v947
        %v956 = vcombine.high %v933, %v947
        %v957 = vcombine.low %v940, %v954
        %v1153 = vunpack.c.l.b16 %v423
        %v1154 = vunpack.c.h.b16 %v423
        %v1155 = vunpack.c.l.b16 %v424
        %v1156 = vunpack.c.h.b16 %v424
        %v1157 = vunpack.c.l.b16 %v425
        %v1158 = vunpack.c.h.b16 %v425
        %v1159 = vunpack.c.l.b16 %v426
        %v1160 = vunpack.c.h.b16 %v426
        %v1161 = vunpack.c.l.b16 %v427
        %v1162 = vunpack.c.h.b16 %v427
        %v1163 = vunpack.c.l.b16 %v428
        %v1164 = vunpack.c.h.b16 %v428
        %v1165 = vunpack.c.l.b16 %v429
        %v1166 = vunpack.c.h.b16 %v429
        %v1167 = vunpack.c.l.b16 %v430
        %v1168 = vunpack.c.h.b16 %v430
        %v1169 = vunpack.c.l.b16 %v431
        %v1170 = vunpack.c.h.b16 %v431
        %v1171 = vunpack.c.l.b16 %v432
        %v1172 = vunpack.c.h.b16 %v432
        %v1173 = vunpack.c.l.b16 %v433
        %v1174 = vunpack.c.h.b16 %v433
        %v1175 = vunpack.c.l.b16 %v434
        %v1176 = vunpack.c.h.b16 %v434
        %v1177 = vunpack.c.l.b16 %v435
        %v1178 = vunpack.c.h.b16 %v435
        %v1179 = vunpack.c.l.b16 %v436
        %v1180 = vunpack.c.h.b16 %v436
        %v1181 = vunpack.c.l.b16 %v437
        %v1182 = vunpack.c.h.b16 %v437
        %v1183 = vunpack.c.l.b16 %v438
        %v1184 = vunpack.c.h.b16 %v438
        %v1185 = vunpack.c.l.b16 %v439
        %v1186 = vunpack.c.h.b16 %v439
        %v1187 = vunpack.c.l.b16 %v440
        %v1188 = vunpack.c.h.b16 %v440
        %v1189 = vunpack.c.l.b16 %v441
        %v1190 = vunpack.c.h.b16 %v441
        %v1191 = vunpack.c.l.b16 %v442
        %v1192 = vunpack.c.h.b16 %v442
        %v1193 = vunpack.c.l.b16 %v443
        %v1194 = vunpack.c.h.b16 %v443
        %v1195 = vunpack.c.l.b16 %v444
        %v1196 = vunpack.c.h.b16 %v444
        %v1197 = vunpack.c.l.b16 %v445
        %v1198 = vunpack.c.h.b16 %v445
        %v1199 = vunpack.c.l.b16 %v446
        %v1200 = vunpack.c.h.b16 %v446
        %v1201 = vunpack.c.l.b16 %v447
        %v1202 = vunpack.c.h.b16 %v447
        %v1203 = vunpack.c.l.b16 %v448
        %v1204 = vunpack.c.h.b16 %v448
        %v1205 = vunpack.c.l.b16 %v449
        %v1206 = vunpack.c.h.b16 %v449
        %v1207 = vunpack.c.l.b16 %v450
        %v1208 = vunpack.c.h.b16 %v450
        %v1209 = vunpack.c.l.b16 %v451
        %v1210 = vunpack.c.h.b16 %v451
        %v1211 = vunpack.c.l.b16 %v452
        %v1212 = vunpack.c.h.b16 %v452
        %v1213 = vunpack.c.l.b16 %v453
        %v1214 = vunpack.c.h.b16 %v453
        %v1215 = vunpack.c.l.b16 %v454
        %v1216 = vunpack.c.h.b16 %v454
        %v1217 = vunpack.c.l.b16 %v455
        %v1218 = vunpack.c.h.b16 %v455
        %v1219 = vunpack.c.l.b16 %v456
        %v1220 = vunpack.c.h.b16 %v456
        %v1221 = vunpack.c.l.b16 %v457
        %v1222 = vunpack.c.h.b16 %v457
        %v1223 = vunpack.c.l.b16 %v458
        %v1224 = vunpack.c.h.b16 %v458
        %v1225 = vunpack.c.l.b16 %v459
        %v1226 = vunpack.c.h.b16 %v459
        %v1227 = vunpack.c.l.b16 %v460
        %v1228 = vunpack.c.h.b16 %v460
        %v1229 = vunpack.c.l.b16 %v461
        %v1230 = vunpack.c.h.b16 %v461
        %v1231 = vunpack.c.l.b16 %v462
        %v1232 = vunpack.c.h.b16 %v462
        %v1233 = vunpack.c.l.b16 %v463
        %v1234 = vunpack.c.h.b16 %v463
        %v1235 = vunpack.c.l.b16 %v464
        %v1236 = vunpack.c.h.b16 %v464
        %v1237 = vunpack.c.l.b16 %v465
        %v1238 = vunpack.c.h.b16 %v465
        %v1239 = vunpack.c.l.b16 %v466
        %v1240 = vunpack.c.h.b16 %v466
        %v1241 = vunpack.c.l.b16 %v467
        %v1242 = vunpack.c.h.b16 %v467
        %v1243 = vunpack.c.l.b16 %v468
        %v1244 = vunpack.c.h.b16 %v468
        %v1245 = vunpack.c.l.b16 %v469
        %v1246 = vunpack.c.h.b16 %v469
        %v1247 = vunpack.c.l.b16 %v470
        %v1248 = vunpack.c.h.b16 %v470
        %v1249 = vunpack.c.l.b16 %v471
        %v1250 = vunpack.c.h.b16 %v471
        %v1251 = vunpack.c.l.b16 %v472
        %v1252 = vunpack.c.h.b16 %v472
        %v1253 = vunpack.c.l.b16 %v473
        %v1254 = vunpack.c.h.b16 %v473
        %v1255 = vunpack.c.l.b16 %v474
        %v1256 = vunpack.c.h.b16 %v474
        %v1257 = vunpack.c.l.b16 %v475
        %v1258 = vunpack.c.h.b16 %v475
        %v1259 = vunpack.c.l.b16 %v476
        %v1260 = vunpack.c.h.b16 %v476
        %v1261 = vunpack.c.l.b16 %v477
        %v1262 = vunpack.c.h.b16 %v477
        %v1263 = vunpack.c.l.b16 %v478
        %v1264 = vunpack.c.h.b16 %v478
        %v1265 = vunpack.c.l.b16 %v479
        %v1266 = vunpack.c.h.b16 %v479
        %v1267 = vunpack.c.l.b16 %v480
        %v1268 = vunpack.c.h.b16 %v480
        %v1269 = vunpack.c.l.b16 %v481
        %v1270 = vunpack.c.h.b16 %v481
        %v1271 = vunpack.c.l.b16 %v482
        %v1272 = vunpack.c.h.b16 %v482
        %v1273 = vunpack.c.l.b16 %v483
        %v1274 = vunpack.c.h.b16 %v483
        %v1275 = vunpack.c.l.b16 %v484
        %v1276 = vunpack.c.h.b16 %v484
        %v1277 = vunpack.c.l.b16 %v485
        %v1278 = vunpack.c.h.b16 %v485
        %v1279 = vunpack.c.l.b16 %v486
        %v1280 = vunpack.c.h.b16 %v486
        %v1281 = vunpack.c.l.b16 %v487
        %v1282 = vunpack.c.h.b16 %v487
        %v1283 = vunpack.c.l.b16 %v488
        %v1284 = vunpack.c.h.b16 %v488
        %v1285 = vunpack.c.l.b16 %v489
        %v1286 = vunpack.c.h.b16 %v489
        %v1287 = vunpack.c.l.b16 %v490
        %v1288 = vunpack.c.h.b16 %v490
        %v1289 = vunpack.c.l.b16 %v491
        %v1290 = vunpack.c.h.b16 %v491
        %v1291 = vunpack.c.l.b16 %v492
        %v1292 = vunpack.c.h.b16 %v492
        %v1293 = vunpack.c.l.b16 %v493
        %v1294 = vunpack.c.h.b16 %v493
        %v1295 = vunpack.c.l.b16 %v494
        %v1296 = vunpack.c.h.b16 %v494
        %v1297 = vunpack.c.l.b16 %v495
        %v1298 = vunpack.c.h.b16 %v495
        %v1299 = vunpack.c.l.b16 %v496
        %v1300 = vunpack.c.h.b16 %v496
        %v1301 = vunpack.c.l.b16 %v497
        %v1302 = vunpack.c.h.b16 %v497
        %v1303 = vunpack.c.l.b16 %v498
        %v1304 = vunpack.c.h.b16 %v498
        %v1305 = vunpack.c.l.b16 %v499
        %v1306 = vunpack.c.h.b16 %v499
        %v1307 = vunpack.c.l.b16 %v500
        %v1308 = vunpack.c.h.b16 %v500
        %v1309 = vunpack.c.l.b16 %v501
        %v1310 = vunpack.c.h.b16 %v501
        %v1311 = vunpack.c.l.b16 %v502
        %v1312 = vunpack.c.h.b16 %v502
        %v1313 = vunpack.c.l.b16 %v503
        %v1314 = vunpack.c.h.b16 %v503
        %v1315 = vunpack.c.l.b16 %v504
        %v1316 = vunpack.c.h.b16 %v504
        %v1317 = vunpack.c.l.b16 %v505
        %v1318 = vunpack.c.h.b16 %v505
        %v1319 = vunpack.c.l.b16 %v506
        %v1320 = vunpack.c.h.b16 %v506
        %v1321 = vunpack.c.l.b16 %v507
        %v1322 = vunpack.c.h.b16 %v507
        %v1323 = vunpack.c.l.b16 %v508
        %v1324 = vunpack.c.h.b16 %v508
        %v1325 = vunpack.c.l.b16 %v509
        %v1326 = vunpack.c.h.b16 %v509
        %v1327 = vunpack.c.l.b16 %v510
        %v1328 = vunpack.c.h.b16 %v510
        %v1329 = vunpack.c.l.b16 %v511
        %v1330 = vunpack.c.h.b16 %v511
        %v1331 = vunpack.c.l.b16 %v512
        %v1332 = vunpack.c.h.b16 %v512
        %v1333 = vunpack.c.l.b16 %v513
        %v1334 = vunpack.c.h.b16 %v513
        %v1335 = vunpack.c.l.b16 %v514
        %v1336 = vunpack.c.h.b16 %v514
        %v1337 = vunpack.c.l.b16 %v515
        %v1338 = vunpack.c.h.b16 %v515
        %v1339 = vunpack.c.l.b16 %v516
        %v1340 = vunpack.c.h.b16 %v516
        %v1341 = vunpack.c.l.b16 %v517
        %v1342 = vunpack.c.h.b16 %v517
        %v1343 = vunpack.c.l.b16 %v518
        %v1344 = vunpack.c.h.b16 %v518
        %v1345 = vunpack.c.l.b16 %v519
        %v1346 = vunpack.c.h.b16 %v519
        %v1347 = vunpack.c.l.b16 %v520
        %v1348 = vunpack.c.h.b16 %v520
        %v1349 = vunpack.c.l.b16 %v521
        %v1350 = vunpack.c.h.b16 %v521
        %v1351 = vunpack.c.l.b16 %v522
        %v1352 = vunpack.c.h.b16 %v522
        %v1353 = vunpack.c.l.b16 %v523
        %v1354 = vunpack.c.h.b16 %v523
        %v1355 = vunpack.c.l.b16 %v524
        %v1356 = vunpack.c.h.b16 %v524
        %v1357 = vunpack.c.l.b16 %v525
        %v1358 = vunpack.c.h.b16 %v525
        %v1359 = vunpack.c.l.b16 %v526
        %v1360 = vunpack.c.h.b16 %v526
        %v1361 = vunpack.c.l.b16 %v527
        %v1362 = vunpack.c.h.b16 %v527
        %v1363 = vunpack.c.l.b16 %v528
        %v1364 = vunpack.c.h.b16 %v528
        %v1365 = vunpack.c.l.b16 %v529
        %v1366 = vunpack.c.h.b16 %v529
        %v1367 = vunpack.c.l.b16 %v530
        %v1368 = vunpack.c.h.b16 %v530
        %v1369 = vunpack.c.l.b16 %v531
        %v1370 = vunpack.c.h.b16 %v531
        %v1371 = vunpack.c.l.b16 %v532
        %v1372 = vunpack.c.h.b16 %v532
        %v1373 = vunpack.c.l.b16 %v533
        %v1374 = vunpack.c.h.b16 %v533
        %v1375 = vunpack.c.l.b16 %v534
        %v1376 = vunpack.c.h.b16 %v534
        %v1377 = vunpack.c.l.b16 %v535
        %v1378 = vunpack.c.h.b16 %v535
        %v1379 = vunpack.c.l.b16 %v536
        %v1380 = vunpack.c.h.b16 %v536
        %v1381 = vunpack.c.l.b16 %v537
        %v1382 = vunpack.c.h.b16 %v537
        %v1383 = vunpack.c.l.b16 %v538
        %v1384 = vunpack.c.h.b16 %v538
        %v1385 = vunpack.c.l.b16 %v539
        %v1386 = vunpack.c.h.b16 %v539
        %v1387 = vunpack.c.l.b16 %v540
        %v1388 = vunpack.c.h.b16 %v540
        %v1389 = vunpack.c.l.b16 %v541
        %v1390 = vunpack.c.h.b16 %v541
        %v1391 = vunpack.c.l.b16 %v542
        %v1392 = vunpack.c.h.b16 %v542
        %v1393 = vunpack.c.l.b16 %v543
        %v1394 = vunpack.c.h.b16 %v543
        %v1395 = vunpack.c.l.b16 %v544
        %v1396 = vunpack.c.h.b16 %v544
        %v1397 = vunpack.c.l.b16 %v545
        %v1398 = vunpack.c.h.b16 %v545
        %v1399 = vunpack.c.l.b16 %v546
        %v1400 = vunpack.c.h.b16 %v546
        %v1401 = vunpack.c.l.b16 %v547
        %v1402 = vunpack.c.h.b16 %v547
        %v1403 = vunpack.c.l.b16 %v548
        %v1404 = vunpack.c.h.b16 %v548
        %v1405 = vunpack.c.l.b16 %v549
        %v1406 = vunpack.c.h.b16 %v549
        %v1407 = vunpack.c.l.b16 %v550
        %v1408 = vunpack.c.h.b16 %v550
        %v1409 = vunpack.c.l.b16 %v551
        %v1410 = vunpack.c.h.b16 %v551
        %v1411 = vunpack.c.l.b16 %v552
        %v1412 = vunpack.c.h.b16 %v552
        %v1413 = vunpack.c.l.b16 %v553
        %v1414 = vunpack.c.h.b16 %v553
        %v1415 = vunpack.c.l.b16 %v554
        %v1416 = vunpack.c.h.b16 %v554
        %v1417 = vunpack.c.l.b16 %v555
        %v1418 = vunpack.c.h.b16 %v555
        %v1419 = vunpack.c.l.b16 %v556
        %v1420 = vunpack.c.h.b16 %v556
        %v1421 = vunpack.c.l.b16 %v557
        %v1422 = vunpack.c.h.b16 %v557
        %v1423 = vunpack.c.l.b16 %v558
        %v1424 = vunpack.c.h.b16 %v558
        %v1425 = vunpack.c.l.b16 %v559
        %v1426 = vunpack.c.h.b16 %v559
        %v1427 = vunpack.c.l.b16 %v560
        %v1428 = vunpack.c.h.b16 %v560
        %v1429 = vunpack.c.l.b16 %v561
        %v1430 = vunpack.c.h.b16 %v561
        %v1431 = vunpack.c.l.b16 %v562
        %v1432 = vunpack.c.h.b16 %v562
        %v1433 = vunpack.c.l.b16 %v563
        %v1434 = vunpack.c.h.b16 %v563
        %v1435 = vunpack.c.l.b16 %v564
        %v1436 = vunpack.c.h.b16 %v564
        %v1437 = vunpack.c.l.b16 %v565
        %v1438 = vunpack.c.h.b16 %v565
        %v1439 = vunpack.c.l.b16 %v566
        %v1440 = vunpack.c.h.b16 %v566
        %v1441 = vunpack.c.l.b16 %v567
        %v1442 = vunpack.c.h.b16 %v567
        %v1443 = vunpack.c.l.b16 %v568
        %v1444 = vunpack.c.h.b16 %v568
        %v1445 = vunpack.c.l.b16 %v569
        %v1446 = vunpack.c.h.b16 %v569
        %v1447 = vunpack.c.l.b16 %v570
        %v1448 = vunpack.c.h.b16 %v570
        %v1449 = vunpack.c.l.b16 %v571
        %v1450 = vunpack.c.h.b16 %v571
        %v1451 = vunpack.c.l.b16 %v572
        %v1452 = vunpack.c.h.b16 %v572
        %v1453 = vunpack.c.l.b16 %v573
        %v1454 = vunpack.c.h.b16 %v573
        %v1455 = vunpack.c.l.b16 %v574
        %v1456 = vunpack.c.h.b16 %v574
        %v1457 = vunpack.c.l.b16 %v575
        %v1458 = vunpack.c.h.b16 %v575
        %v1459 = vunpack.c.l.b16 %v576
        %v1460 = vunpack.c.h.b16 %v576
        %v1461 = vunpack.c.l.b16 %v577
        %v1462 = vunpack.c.h.b16 %v577
        %v1463 = vunpack.c.l.b16 %v578
        %v1464 = vunpack.c.h.b16 %v578
        %v1465 = vunpack.c.l.b16 %v579
        %v1466 = vunpack.c.h.b16 %v579
        %v1467 = vunpack.c.l.b16 %v580
        %v1468 = vunpack.c.h.b16 %v580
        %v1469 = vunpack.c.l.b16 %v581
        %v1470 = vunpack.c.h.b16 %v581
        %v1471 = vunpack.c.l.b16 %v582
        %v1472 = vunpack.c.h.b16 %v582
        %v1473 = vunpack.c.l.b16 %v583
        %v1474 = vunpack.c.h.b16 %v583
        %v1475 = vunpack.c.l.b16 %v584
        %v1476 = vunpack.c.h.b16 %v584
        %v1477 = vunpack.c.l.b16 %v585
        %v1478 = vunpack.c.h.b16 %v585
        %v1479 = vunpack.c.l.b16 %v586
        %v1480 = vunpack.c.h.b16 %v586
        %v1481 = vunpack.c.l.b16 %v587
        %v1482 = vunpack.c.h.b16 %v587
        %v1483 = vunpack.c.l.b16 %v588
        %v1484 = vunpack.c.h.b16 %v588
        %v1485 = vunpack.c.l.b16 %v589
        %v1486 = vunpack.c.h.b16 %v589
        %v1487 = vunpack.c.l.b16 %v590
        %v1488 = vunpack.c.h.b16 %v590
        %v1489 = vunpack.c.l.b16 %v591
        %v1490 = vunpack.c.h.b16 %v591
        %v1491 = vunpack.c.l.b16 %v592
        %v1492 = vunpack.c.h.b16 %v592
        %v1493 = vunpack.c.l.b16 %v593
        %v1494 = vunpack.c.h.b16 %v593
        %v1495 = vunpack.c.l.b16 %v594
        %v1496 = vunpack.c.h.b16 %v594
        %v1497 = vunpack.c.l.b16 %v595
        %v1498 = vunpack.c.h.b16 %v595
        %v1499 = vunpack.c.l.b16 %v596
        %v1500 = vunpack.c.h.b16 %v596
        %v1501 = vunpack.c.l.b16 %v597
        %v1502 = vunpack.c.h.b16 %v597
        %v1503 = vunpack.c.l.b16 %v598
        %v1504 = vunpack.c.h.b16 %v598
        %v1505 = vunpack.c.l.b16 %v599
        %v1506 = vunpack.c.h.b16 %v599
        %v1507 = vunpack.c.l.b16 %v600
        %v1508 = vunpack.c.h.b16 %v600
        %v1509 = vunpack.c.l.b16 %v601
        %v1510 = vunpack.c.h.b16 %v601
        %v1511 = vunpack.c.l.b16 %v602
        %v1512 = vunpack.c.h.b16 %v602
        %v1513 = vunpack.c.l.b16 %v603
        %v1514 = vunpack.c.h.b16 %v603
        %v1515 = vunpack.c.l.b16 %v604
        %v1516 = vunpack.c.h.b16 %v604
        %v1517 = vunpack.c.l.b16 %v605
        %v1518 = vunpack.c.h.b16 %v605
        %v1519 = vunpack.c.l.b16 %v606
        %v1520 = vunpack.c.h.b16 %v606
        %v1521 = vunpack.c.l.b16 %v607
        %v1522 = vunpack.c.h.b16 %v607
        %v1523 = vunpack.c.l.b16 %v608
        %v1524 = vunpack.c.h.b16 %v608
        %v1525 = vunpack.c.l.b16 %v609
        %v1526 = vunpack.c.h.b16 %v609
        %v1527 = vunpack.c.l.b16 %v610
        %v1528 = vunpack.c.h.b16 %v610
        %v1529 = vunpack.c.l.b16 %v611
        %v1530 = vunpack.c.h.b16 %v611
        %v1531 = vunpack.c.l.b16 %v612
        %v1532 = vunpack.c.h.b16 %v612
        %v1533 = vunpack.c.l.b16 %v613
        %v1534 = vunpack.c.h.b16 %v613
        %v1535 = vunpack.c.l.b16 %v614
        %v1536 = vunpack.c.h.b16 %v614
        %v1537 = vpack.c.b16 %v1161, %v1153
        %v1538 = vpack.c.b16 %v1162, %v1154
        %v1539 = vpack.c.b16 %v1163, %v1155
        %v1540 = vpack.c.b16 %v1164, %v1156
        %v1541 = vpack.c.b16 %v1165, %v1157
        %v1542 = vpack.c.b16 %v1166, %v1158
        %v1543 = vpack.c.b16 %v1167, %v1159
        %v1544 = vpack.c.b16 %v1168, %v1160
        %v1545 = vpack.c.b16 %v1177, %v1169
        %v1546 = vpack.c.b16 %v1178, %v1170
        %v1547 = vpack.c.b16 %v1179, %v1171
        %v1548 = vpack.c.b16 %v1180, %v1172
        %v1549 = vpack.c.b16 %v1181, %v1173
        %v1550 = vpack.c.b16 %v1182, %v1174
        %v1551 = vpack.c.b16 %v1183, %v1175
        %v1552 = vpack.c.b16 %v1184, %v1176
        %v1553 = vpack.c.b16 %v1193, %v1185
        %v1554 = vpack.c.b16 %v1194, %v1186
        %v1555 = vpack.c.b16 %v1195, %v1187
        %v1556 = vpack.c.b16 %v1196, %v1188
        %v1557 = vpack.c.b16 %v1197, %v1189
        %v1558 = vpack.c.b16 %v1198, %v1190
        %v1559 = vpack.c.b16 %v1199, %v1191
        %v1560 = vpack.c.b16 %v1200, %v1192
        %v1561 = vpack.c.b16 %v1209, %v1201
        %v1562 = vpack.c.b16 %v1210, %v1202
        %v1563 = vpack.c.b16 %v1211, %v1203
        %v1564 = vpack.c.b16 %v1212, %v1204
        %v1565 = vpack.c.b16 %v1213, %v1205
        %v1566 = vpack.c.b16 %v1214, %v1206
        %v1567 = vpack.c.b16 %v1215, %v1207
        %v1568 = vpack.c.b16 %v1216, %v1208
        %v1569 = vpack.c.b16 %v1225, %v1217
        %v1570 = vpack.c.b16 %v1226, %v1218
        %v1571 = vpack.c.b16 %v1227, %v1219
        %v1572 = vpack.c.b16 %v1228, %v1220
        %v1573 = vpack.c.b16 %v1229, %v1221
        %v1574 = vpack.c.b16 %v1230, %v1222
        %v1575 = vpack.c.b16 %v1231, %v1223
        %v1576 = vpack.c.b16 %v1232, %v1224
        %v1577 = vpack.c.b16 %v1241, %v1233
        %v1578 = vpack.c.b16 %v1242, %v1234
        %v1579 = vpack.c.b16 %v1243, %v1235
        %v1580 = vpack.c.b16 %v1244, %v1236
        %v1581 = vpack.c.b16 %v1245, %v1237
        %v1582 = vpack.c.b16 %v1246, %v1238
        %v1583 = vpack.c.b16 %v1247, %v1239
        %v1584 = vpack.c.b16 %v1248, %v1240
        %v1585 = vpack.c.b16 %v1257, %v1249
        %v1586 = vpack.c.b16 %v1258, %v1250
        %v1587 = vpack.c.b16 %v1259, %v1251
        %v1588 = vpack.c.b16 %v1260, %v1252
        %v1589 = vpack.c.b16 %v1261, %v1253
        %v1590 = vpack.c.b16 %v1262, %v1254
        %v1591 = vpack.c.b16 %v1263, %v1255
        %v1592 = vpack.c.b16 %v1264, %v1256
        %v1593 = vpack.c.b16 %v1273, %v1265
        %v1594 = vpack.c.b16 %v1274, %v1266
        %v1595 = vpack.c.b16 %v1275, %v1267
        %v1596 = vpack.c.b16 %v1276, %v1268
        %v1597 = vpack.c.b16 %v1277, %v1269
        %v1598 = vpack.c.b16 %v1278, %v1270
        %v1599 = vpack.c.b16 %v1279, %v1271
        %v1600 = vpack.c.b16 %v1280, %v1272
        %v1601 = vpack.c.b16 %v1289, %v1281
        %v1602 = vpack.c.b16 %v1290, %v1282
        %v1603 = vpack.c.b16 %v1291, %v1283
        %v1604 = vpack.c.b16 %v1292, %v1284
        %v1605 = vpack.c.b16 %v1293, %v1285
        %v1606 = vpack.c.b16 %v1294, %v1286
        %v1607 = vpack.c.b16 %v1295, %v1287
        %v1608 = vpack.c.b16 %v1296, %v1288
        %v1609 = vpack.c.b16 %v1305, %v1297
        %v1610 = vpack.c.b16 %v1306, %v1298
        %v1611 = vpack.c.b16 %v1307, %v1299
        %v1612 = vpack.c.b16 %v1308, %v1300
        %v1613 = vpack.c.b16 %v1309, %v1301
        %v1614 = vpack.c.b16 %v1310, %v1302
        %v1615 = vpack.c.b16 %v1311, %v1303
        %v1616 = vpack.c.b16 %v1312, %v1304
        %v1617 = vpack.c.b16 %v1321, %v1313
        %v1618 = vpack.c.b16 %v1322, %v1314
        %v1619 = vpack.c.b16 %v1323, %v1315
        %v1620 = vpack.c.b16 %v1324, %v1316
        %v1621 = vpack.c.b16 %v1325, %v1317
        %v1622 = vpack.c.b16 %v1326, %v1318
        %v1623 = vpack.c.b16 %v1327, %v1319
        %v1624 = vpack.c.b16 %v1328, %v1320
        %v1625 = vpack.c.b16 %v1337, %v1329
        %v1626 = vpack.c.b16 %v1338, %v1330
        %v1627 = vpack.c.b16 %v1339, %v1331
        %v1628 = vpack.c.b16 %v1340, %v1332
        %v1629 = vpack.c.b16 %v1341, %v1333
        %v1630 = vpack.c.b16 %v1342, %v1334
        %v1631 = vpack.c.b16 %v1343, %v1335
        %v1632 = vpack.c.b16 %v1344, %v1336
        %v1633 = vpack.c.b16 %v1353, %v1345
        %v1634 = vpack.c.b16 %v1354, %v1346
        %v1635 = vpack.c.b16 %v1355, %v1347
        %v1636 = vpack.c.b16 %v1356, %v1348
        %v1637 = vpack.c.b16 %v1357, %v1349
        %v1638 = vpack.c.b16 %v1358, %v1350
        %v1639 = vpack.c.b16 %v1359, %v1351
        %v1640 = vpack.c.b16 %v1360, %v1352
        %v1641 = vpack.c.b16 %v1369, %v1361
        %v1642 = vpack.c.b16 %v1370, %v1362
        %v1643 = vpack.c.b16 %v1371, %v1363
        %v1644 = vpack.c.b16 %v1372, %v1364
        %v1645 = vpack.c.b16 %v1373, %v1365
        %v1646 = vpack.c.b16 %v1374, %v1366
        %v1647 = vpack.c.b16 %v1375, %v1367
        %v1648 = vpack.c.b16 %v1376, %v1368
        %v1649 = vpack.c.b16 %v1385, %v1377
        %v1650 = vpack.c.b16 %v1386, %v1378
        %v1651 = vpack.c.b16 %v1387, %v1379
        %v1652 = vpack.c.b16 %v1388, %v1380
        %v1653 = vpack.c.b16 %v1389, %v1381
        %v1654 = vpack.c.b16 %v1390, %v1382
        %v1655 = vpack.c.b16 %v1391, %v1383
        %v1656 = vpack.c.b16 %v1392, %v1384
        %v1657 = vpack.c.b16 %v1401, %v1393
        %v1658 = vpack.c.b16 %v1402, %v1394
        %v1659 = vpack.c.b16 %v1403, %v1395
        %v1660 = vpack.c.b16 %v1404, %v1396
        %v1661 = vpack.c.b16 %v1405, %v1397
        %v1662 = vpack.c.b16 %v1406, %v1398
        %v1663 = vpack.c.b16 %v1407, %v1399
        %v1664 = vpack.c.b16 %v1408, %v1400
        %v1665 = vpack.c.b16 %v1417, %v1409
        %v1666 = vpack.c.b16 %v1418, %v1410
        %v1667 = vpack.c.b16 %v1419, %v1411
        %v1668 = vpack.c.b16 %v1420, %v1412
        %v1669 = vpack.c.b16 %v1421, %v1413
        %v1670 = vpack.c.b16 %v1422, %v1414
        %v1671 = vpack.c.b16 %v1423, %v1415
        %v1672 = vpack.c.b16 %v1424, %v1416
        %v1673 = vpack.c.b16 %v1433, %v1425
        %v1674 = vpack.c.b16 %v1434, %v1426
        %v1675 = vpack.c.b16 %v1435, %v1427
        %v1676 = vpack.c.b16 %v1436, %v1428
        %v1677 = vpack.c.b16 %v1437, %v1429
        %v1678 = vpack.c.b16 %v1438, %v1430
        %v1679 = vpack.c.b16 %v1439, %v1431
        %v1680 = vpack.c.b16 %v1440, %v1432
        %v1681 = vpack.c.b16 %v1449, %v1441
        %v1682 = vpack.c.b16 %v1450, %v1442
        %v1683 = vpack.c.b16 %v1451, %v1443
        %v1684 = vpack.c.b16 %v1452, %v1444
        %v1685 = vpack.c.b16 %v1453, %v1445
        %v1686 = vpack.c.b16 %v1454, %v1446
        %v1687 = vpack.c.b16 %v1455, %v1447
        %v1688 = vpack.c.b16 %v1456, %v1448
        %v1689 = vpack.c.b16 %v1465, %v1457
        %v1690 = vpack.c.b16 %v1466, %v1458
        %v1691 = vpack.c.b16 %v1467, %v1459
        %v1692 = vpack.c.b16 %v1468, %v1460
        %v1693 = vpack.c.b16 %v1469, %v1461
        %v1694 = vpack.c.b16 %v1470, %v1462
        %v1695 = vpack.c.b16 %v1471, %v1463
        %v1696 = vpack.c.b16 %v1472, %v1464
        %v1697 = vpack.c.b16 %v1481, %v1473
        %v1698 = vpack.c.b16 %v1482, %v1474
        %v1699 = vpack.c.b16 %v1483, %v1475
        %v1700 = vpack.c.b16 %v1484, %v1476
        %v1701 = vpack.c.b16 %v1485, %v1477
        %v1702 = vpack.c.b16 %v1486, %v1478
        %v1703 = vpack.c.b16 %v1487, %v1479
        %v1704 = vpack.c.b16 %v1488, %v1480
        %v1705 = vpack.c.b16 %v1497, %v1489
        %v1706 = vpack.c.b16 %v1498, %v1490
        %v1707 = vpack.c.b16 %v1499, %v1491
        %v1708 = vpack.c.b16 %v1500, %v1492
        %v1709 = vpack.c.b16 %v1501, %v1493
        %v1710 = vpack.c.b16 %v1502, %v1494
        %v1711 = vpack.c.b16 %v1503, %v1495
        %v1712 = vpack.c.b16 %v1504, %v1496
        %v1713 = vpack.c.b16 %v1513, %v1505
        %v1714 = vpack.c.b16 %v1514, %v1506
        %v1715 = vpack.c.b16 %v1515, %v1507
        %v1716 = vpack.c.b16 %v1516, %v1508
        %v1717 = vpack.c.b16 %v1517, %v1509
        %v1718 = vpack.c.b16 %v1518, %v1510
        %v1719 = vpack.c.b16 %v1519, %v1511
        %v1720 = vpack.c.b16 %v1520, %v1512
        %v1721 = vpack.c.b16 %v1529, %v1521
        %v1722 = vpack.c.b16 %v1530, %v1522
        %v1723 = vpack.c.b16 %v1531, %v1523
        %v1724 = vpack.c.b16 %v1532, %v1524
        %v1725 = vpack.c.b16 %v1533, %v1525
        %v1726 = vpack.c.b16 %v1534, %v1526
        %v1727 = vpack.c.b16 %v1535, %v1527
        %v1728 = vpack.c.b16 %v1536, %v1528
        %v1921 = vcombine.low %v873, %v873
        %v1922 = vcombine.high %v873, %v873
        %v1924 = vunpack.c.l.s4 1983009808
        %v1925 = vunpack.c.0.s8 %v1924
        %v1926 = vlaneseq
        %v1927 = vshrl.u32 %v1926, 7
        %v1928 = vsub.s32 %v1925, %v1927
        %v1929 = vrot.slane %v1921, %v1928
        %v1931 = vunpack.c.l.s4 1983009808
        %v1932 = vunpack.c.0.s8 %v1931
        %v1933 = vlaneseq
        %v1934 = vshrl.u32 %v1933, 7
        %v1935 = vsub.s32 %v1932, %v1934
        %v1936 = vrot.slane %v1922, %v1935
        %v1937 = vcombine.low %v1929, %v1929
        %v1938 = vcombine.high %v1929, %v1929
        %v1939 = vcombine.low %v1936, %v1936
        %v1940 = vcombine.high %v1936, %v1936
        %v1941 = vcombine.low %v890, %v890
        %v1942 = vcombine.high %v890, %v890
        %v1944 = vunpack.c.l.s4 1983009808
        %v1945 = vunpack.c.0.s8 %v1944
        %v1946 = vlaneseq
        %v1947 = vshrl.u32 %v1946, 7
        %v1948 = vsub.s32 %v1945, %v1947
        %v1949 = vrot.slane %v1941, %v1948
        %v1951 = vunpack.c.l.s4 1983009808
        %v1952 = vunpack.c.0.s8 %v1951
        %v1953 = vlaneseq
        %v1954 = vshrl.u32 %v1953, 7
        %v1955 = vsub.s32 %v1952, %v1954
        %v1956 = vrot.slane %v1942, %v1955
        %v1957 = vcombine.low %v1949, %v1949
        %v1958 = vcombine.high %v1949, %v1949
        %v1959 = vcombine.low %v1956, %v1956
        %v1960 = vcombine.high %v1956, %v1956
        %1969 = vmatprep.subr.bf16.mxu0 %v1538
        %1970 = vmatpush1.bf16.msra.mxu0 %v1537
        %1971 = vmatprep.subr.bf16.mxu0 %v1546
        %1972 = vmatpush1.bf16.msra.mxu0 %v1545
        %1973 = vmatprep.subr.bf16.mxu0 %v1554
        %1974 = vmatpush1.bf16.msra.mxu0 %v1553
        %1975 = vmatprep.subr.bf16.mxu0 %v1562
        %1976 = vmatpush1.bf16.msra.mxu0 %v1561
        %1977 = vmatprep.subr.bf16.mxu0 %v1570
        %1978 = vmatpush1.bf16.msra.mxu0 %v1569
        %1979 = vmatprep.subr.bf16.mxu0 %v1578
        %1980 = vmatpush1.bf16.msra.mxu0 %v1577
        %1981 = vmatprep.subr.bf16.mxu0 %v1586
        %1982 = vmatpush1.bf16.msra.mxu0 %v1585
        %1983 = vmatprep.subr.bf16.mxu0 %v1594
        %1984 = vmatpush1.bf16.msra.mxu0 %v1593
        %1985 = vmatprep.subr.bf16.mxu0 %v1602
        %1986 = vmatpush1.bf16.msra.mxu0 %v1601
        %1987 = vmatprep.subr.bf16.mxu0 %v1610
        %1988 = vmatpush1.bf16.msra.mxu0 %v1609
        %1989 = vmatprep.subr.bf16.mxu0 %v1618
        %1990 = vmatpush1.bf16.msra.mxu0 %v1617
        %1991 = vmatprep.subr.bf16.mxu0 %v1626
        %1992 = vmatpush1.bf16.msra.mxu0 %v1625
        %1993 = vmatprep.subr.bf16.mxu0 %v1634
        %1994 = vmatpush1.bf16.msra.mxu0 %v1633
        %1995 = vmatprep.subr.bf16.mxu0 %v1642
        %1996 = vmatpush1.bf16.msra.mxu0 %v1641
        %1997 = vmatprep.subr.bf16.mxu0 %v1650
        %1998 = vmatpush1.bf16.msra.mxu0 %v1649
        %1999 = vmatprep.subr.bf16.mxu0 %v1658
        %2000 = vmatpush1.bf16.msra.mxu0 %v1657
        %2001 = vmatprep.mubr.bf16.mxu0 %v957
        %2002 = vmatmul.mubr.bf16.gmra.mrb[0].mxu0 %v955
        %v2003 = vpop.f32.mrb[0].mxu0
        %v2004 = vadd.f32 %v1937, %v2003
        %v2005 = vpop.f32.mrb[0].mxu0
        %v2006 = vadd.f32 %v1938, %v2005
        %v2007 = vpop.f32.mrb[0].mxu0
        %v2008 = vadd.f32 %v1937, %v2007
        %v2009 = vpop.f32.mrb[0].mxu0
        %v2010 = vadd.f32 %v1938, %v2009
        %2011 = vdwg.mxu0
        %2012 = vmatprep.subr.bf16.mxu0 %v1666
        %2013 = vmatpush1.bf16.msra.mxu0 %v1665
        %2014 = vmatprep.subr.bf16.mxu0 %v1674
        %2015 = vmatpush1.bf16.msra.mxu0 %v1673
        %2016 = vmatprep.subr.bf16.mxu0 %v1682
        %2017 = vmatpush1.bf16.msra.mxu0 %v1681
        %2018 = vmatprep.subr.bf16.mxu0 %v1690
        %2019 = vmatpush1.bf16.msra.mxu0 %v1689
        %2020 = vmatprep.subr.bf16.mxu0 %v1698
        %2021 = vmatpush1.bf16.msra.mxu0 %v1697
        %2022 = vmatprep.subr.bf16.mxu0 %v1706
        %2023 = vmatpush1.bf16.msra.mxu0 %v1705
        %2024 = vmatprep.subr.bf16.mxu0 %v1714
        %2025 = vmatpush1.bf16.msra.mxu0 %v1713
        %2026 = vmatprep.subr.bf16.mxu0 %v1722
        %2027 = vmatpush1.bf16.msra.mxu0 %v1721
        %2028 = vmatprep.subr.bf16.mxu0 0
        %2029 = vmatpush1.bf16.msra.mxu0 0
        %2030 = vmatprep.subr.bf16.mxu0 0
        %2031 = vmatpush1.bf16.msra.mxu0 0
        %2032 = vmatprep.subr.bf16.mxu0 0
        %2033 = vmatpush1.bf16.msra.mxu0 0
        %2034 = vmatprep.subr.bf16.mxu0 0
        %2035 = vmatpush1.bf16.msra.mxu0 0
        %2036 = vmatprep.subr.bf16.mxu0 0
        %2037 = vmatpush1.bf16.msra.mxu0 0
        %2038 = vmatprep.subr.bf16.mxu0 0
        %2039 = vmatpush1.bf16.msra.mxu0 0
        %2040 = vmatprep.subr.bf16.mxu0 0
        %2041 = vmatpush1.bf16.msra.mxu0 0
        %2042 = vmatprep.subr.bf16.mxu0 0
        %2043 = vmatpush1.bf16.msra.mxu0 0
        %2044 = vmatprep.mubr.bf16.mxu0 0
        %2045 = vmatmul.mubr.bf16.gmra.mrb[0].mxu0 %v956
        %v2046 = vpop.f32.mrb[0].mxu0
        %v2047 = vadd.f32 %v2004, %v2046
        %v2048 = vpop.f32.mrb[0].mxu0
        %v2049 = vadd.f32 %v2006, %v2048
        %v2050 = vpop.f32.mrb[0].mxu0
        %v2051 = vadd.f32 %v2008, %v2050
        %v2052 = vpop.f32.mrb[0].mxu0
        %v2053 = vadd.f32 %v2010, %v2052
        %2054 = vdwg.mxu0
        %2055 = vmatprep.subr.bf16.mxu0 %v1540
        %2056 = vmatpush1.bf16.msra.mxu0 %v1539
        %2057 = vmatprep.subr.bf16.mxu0 %v1548
        %2058 = vmatpush1.bf16.msra.mxu0 %v1547
        %2059 = vmatprep.subr.bf16.mxu0 %v1556
        %2060 = vmatpush1.bf16.msra.mxu0 %v1555
        %2061 = vmatprep.subr.bf16.mxu0 %v1564
        %2062 = vmatpush1.bf16.msra.mxu0 %v1563
        %2063 = vmatprep.subr.bf16.mxu0 %v1572
        %2064 = vmatpush1.bf16.msra.mxu0 %v1571
        %2065 = vmatprep.subr.bf16.mxu0 %v1580
        %2066 = vmatpush1.bf16.msra.mxu0 %v1579
        %2067 = vmatprep.subr.bf16.mxu0 %v1588
        %2068 = vmatpush1.bf16.msra.mxu0 %v1587
        %2069 = vmatprep.subr.bf16.mxu0 %v1596
        %2070 = vmatpush1.bf16.msra.mxu0 %v1595
        %2071 = vmatprep.subr.bf16.mxu0 %v1604
        %2072 = vmatpush1.bf16.msra.mxu0 %v1603
        %2073 = vmatprep.subr.bf16.mxu0 %v1612
        %2074 = vmatpush1.bf16.msra.mxu0 %v1611
        %2075 = vmatprep.subr.bf16.mxu0 %v1620
        %2076 = vmatpush1.bf16.msra.mxu0 %v1619
        %2077 = vmatprep.subr.bf16.mxu0 %v1628
        %2078 = vmatpush1.bf16.msra.mxu0 %v1627
        %2079 = vmatprep.subr.bf16.mxu0 %v1636
        %2080 = vmatpush1.bf16.msra.mxu0 %v1635
        %2081 = vmatprep.subr.bf16.mxu0 %v1644
        %2082 = vmatpush1.bf16.msra.mxu0 %v1643
        %2083 = vmatprep.subr.bf16.mxu0 %v1652
        %2084 = vmatpush1.bf16.msra.mxu0 %v1651
        %2085 = vmatprep.subr.bf16.mxu0 %v1660
        %2086 = vmatpush1.bf16.msra.mxu0 %v1659
        %2087 = vmatprep.mubr.bf16.mxu0 %v957
        %2088 = vmatmul.mubr.bf16.gmra.mrb[0].mxu0 %v955
        %v2089 = vpop.f32.mrb[0].mxu0
        %v2090 = vadd.f32 %v1939, %v2089
        %v2091 = vpop.f32.mrb[0].mxu0
        %v2092 = vadd.f32 %v1940, %v2091
        %v2093 = vpop.f32.mrb[0].mxu0
        %v2094 = vadd.f32 %v1939, %v2093
        %v2095 = vpop.f32.mrb[0].mxu0
        %v2096 = vadd.f32 %v1940, %v2095
        %2097 = vdwg.mxu0
        %2098 = vmatprep.subr.bf16.mxu0 %v1668
        %2099 = vmatpush1.bf16.msra.mxu0 %v1667
        %2100 = vmatprep.subr.bf16.mxu0 %v1676
        %2101 = vmatpush1.bf16.msra.mxu0 %v1675
        %2102 = vmatprep.subr.bf16.mxu0 %v1684
        %2103 = vmatpush1.bf16.msra.mxu0 %v1683
        %2104 = vmatprep.subr.bf16.mxu0 %v1692
        %2105 = vmatpush1.bf16.msra.mxu0 %v1691
        %2106 = vmatprep.subr.bf16.mxu0 %v1700
        %2107 = vmatpush1.bf16.msra.mxu0 %v1699
        %2108 = vmatprep.subr.bf16.mxu0 %v1708
        %2109 = vmatpush1.bf16.msra.mxu0 %v1707
        %2110 = vmatprep.subr.bf16.mxu0 %v1716
        %2111 = vmatpush1.bf16.msra.mxu0 %v1715
        %2112 = vmatprep.subr.bf16.mxu0 %v1724
        %2113 = vmatpush1.bf16.msra.mxu0 %v1723
        %2114 = vmatprep.subr.bf16.mxu0 0
        %2115 = vmatpush1.bf16.msra.mxu0 0
        %2116 = vmatprep.subr.bf16.mxu0 0
        %2117 = vmatpush1.bf16.msra.mxu0 0
        %2118 = vmatprep.subr.bf16.mxu0 0
        %2119 = vmatpush1.bf16.msra.mxu0 0
        %2120 = vmatprep.subr.bf16.mxu0 0
        %2121 = vmatpush1.bf16.msra.mxu0 0
        %2122 = vmatprep.subr.bf16.mxu0 0
        %2123 = vmatpush1.bf16.msra.mxu0 0
        %2124 = vmatprep.subr.bf16.mxu0 0
        %2125 = vmatpush1.bf16.msra.mxu0 0
        %2126 = vmatprep.subr.bf16.mxu0 0
        %2127 = vmatpush1.bf16.msra.mxu0 0
        %2128 = vmatprep.subr.bf16.mxu0 0
        %2129 = vmatpush1.bf16.msra.mxu0 0
        %2130 = vmatprep.mubr.bf16.mxu0 0
        %2131 = vmatmul.mubr.bf16.gmra.mrb[0].mxu0 %v956
        %v2132 = vpop.f32.mrb[0].mxu0
        %v2133 = vadd.f32 %v2090, %v2132
        %v2134 = vpop.f32.mrb[0].mxu0
        %v2135 = vadd.f32 %v2092, %v2134
        %v2136 = vpop.f32.mrb[0].mxu0
        %v2137 = vadd.f32 %v2094, %v2136
        %v2138 = vpop.f32.mrb[0].mxu0
        %v2139 = vadd.f32 %v2096, %v2138
        %2140 = vdwg.mxu0
        %2141 = vmatprep.subr.bf16.mxu0 %v1542
        %2142 = vmatpush1.bf16.msra.mxu0 %v1541
        %2143 = vmatprep.subr.bf16.mxu0 %v1550
        %2144 = vmatpush1.bf16.msra.mxu0 %v1549
        %2145 = vmatprep.subr.bf16.mxu0 %v1558
        %2146 = vmatpush1.bf16.msra.mxu0 %v1557
        %2147 = vmatprep.subr.bf16.mxu0 %v1566
        %2148 = vmatpush1.bf16.msra.mxu0 %v1565
        %2149 = vmatprep.subr.bf16.mxu0 %v1574
        %2150 = vmatpush1.bf16.msra.mxu0 %v1573
        %2151 = vmatprep.subr.bf16.mxu0 %v1582
        %2152 = vmatpush1.bf16.msra.mxu0 %v1581
        %2153 = vmatprep.subr.bf16.mxu0 %v1590
        %2154 = vmatpush1.bf16.msra.mxu0 %v1589
        %2155 = vmatprep.subr.bf16.mxu0 %v1598
        %2156 = vmatpush1.bf16.msra.mxu0 %v1597
        %2157 = vmatprep.subr.bf16.mxu0 %v1606
        %2158 = vmatpush1.bf16.msra.mxu0 %v1605
        %2159 = vmatprep.subr.bf16.mxu0 %v1614
        %2160 = vmatpush1.bf16.msra.mxu0 %v1613
        %2161 = vmatprep.subr.bf16.mxu0 %v1622
        %2162 = vmatpush1.bf16.msra.mxu0 %v1621
        %2163 = vmatprep.subr.bf16.mxu0 %v1630
        %2164 = vmatpush1.bf16.msra.mxu0 %v1629
        %2165 = vmatprep.subr.bf16.mxu0 %v1638
        %2166 = vmatpush1.bf16.msra.mxu0 %v1637
        %2167 = vmatprep.subr.bf16.mxu0 %v1646
        %2168 = vmatpush1.bf16.msra.mxu0 %v1645
        %2169 = vmatprep.subr.bf16.mxu0 %v1654
        %2170 = vmatpush1.bf16.msra.mxu0 %v1653
        %2171 = vmatprep.subr.bf16.mxu0 %v1662
        %2172 = vmatpush1.bf16.msra.mxu0 %v1661
        %2173 = vmatprep.mubr.bf16.mxu0 %v957
        %2174 = vmatmul.mubr.bf16.gmra.mrb[0].mxu0 %v955
        %v2175 = vpop.f32.mrb[0].mxu0
        %v2176 = vadd.f32 %v1957, %v2175
        %v2177 = vpop.f32.mrb[0].mxu0
        %v2178 = vadd.f32 %v1958, %v2177
        %v2179 = vpop.f32.mrb[0].mxu0
        %v2180 = vadd.f32 %v1957, %v2179
        %v2181 = vpop.f32.mrb[0].mxu0
        %v2182 = vadd.f32 %v1958, %v2181
        %2183 = vdwg.mxu0
        %2184 = vmatprep.subr.bf16.mxu0 %v1670
        %2185 = vmatpush1.bf16.msra.mxu0 %v1669
        %2186 = vmatprep.subr.bf16.mxu0 %v1678
        %2187 = vmatpush1.bf16.msra.mxu0 %v1677
        %2188 = vmatprep.subr.bf16.mxu0 %v1686
        %2189 = vmatpush1.bf16.msra.mxu0 %v1685
        %2190 = vmatprep.subr.bf16.mxu0 %v1694
        %2191 = vmatpush1.bf16.msra.mxu0 %v1693
        %2192 = vmatprep.subr.bf16.mxu0 %v1702
        %2193 = vmatpush1.bf16.msra.mxu0 %v1701
        %2194 = vmatprep.subr.bf16.mxu0 %v1710
        %2195 = vmatpush1.bf16.msra.mxu0 %v1709
        %2196 = vmatprep.subr.bf16.mxu0 %v1718
        %2197 = vmatpush1.bf16.msra.mxu0 %v1717
        %2198 = vmatprep.subr.bf16.mxu0 %v1726
        %2199 = vmatpush1.bf16.msra.mxu0 %v1725
        %2200 = vmatprep.subr.bf16.mxu0 0
        %2201 = vmatpush1.bf16.msra.mxu0 0
        %2202 = vmatprep.subr.bf16.mxu0 0
        %2203 = vmatpush1.bf16.msra.mxu0 0
        %2204 = vmatprep.subr.bf16.mxu0 0
        %2205 = vmatpush1.bf16.msra.mxu0 0
        %2206 = vmatprep.subr.bf16.mxu0 0
        %2207 = vmatpush1.bf16.msra.mxu0 0
        %2208 = vmatprep.subr.bf16.mxu0 0
        %2209 = vmatpush1.bf16.msra.mxu0 0
        %2210 = vmatprep.subr.bf16.mxu0 0
        %2211 = vmatpush1.bf16.msra.mxu0 0
        %2212 = vmatprep.subr.bf16.mxu0 0
        %2213 = vmatpush1.bf16.msra.mxu0 0
        %2214 = vmatprep.subr.bf16.mxu0 0
        %2215 = vmatpush1.bf16.msra.mxu0 0
        %2216 = vmatprep.mubr.bf16.mxu0 0
        %2217 = vmatmul.mubr.bf16.gmra.mrb[0].mxu0 %v956
        %v2218 = vpop.f32.mrb[0].mxu0
        %v2219 = vadd.f32 %v2176, %v2218
        %v2220 = vpop.f32.mrb[0].mxu0
        %v2221 = vadd.f32 %v2178, %v2220
        %v2222 = vpop.f32.mrb[0].mxu0
        %v2223 = vadd.f32 %v2180, %v2222
        %v2224 = vpop.f32.mrb[0].mxu0
        %v2225 = vadd.f32 %v2182, %v2224
        %2226 = vdwg.mxu0
        %2227 = vmatprep.subr.bf16.mxu0 %v1544
        %2228 = vmatpush1.bf16.msra.mxu0 %v1543
        %2229 = vmatprep.subr.bf16.mxu0 %v1552
        %2230 = vmatpush1.bf16.msra.mxu0 %v1551
        %2231 = vmatprep.subr.bf16.mxu0 %v1560
        %2232 = vmatpush1.bf16.msra.mxu0 %v1559
        %2233 = vmatprep.subr.bf16.mxu0 %v1568
        %2234 = vmatpush1.bf16.msra.mxu0 %v1567
        %2235 = vmatprep.subr.bf16.mxu0 %v1576
        %2236 = vmatpush1.bf16.msra.mxu0 %v1575
        %2237 = vmatprep.subr.bf16.mxu0 %v1584
        %2238 = vmatpush1.bf16.msra.mxu0 %v1583
        %2239 = vmatprep.subr.bf16.mxu0 %v1592
        %2240 = vmatpush1.bf16.msra.mxu0 %v1591
        %2241 = vmatprep.subr.bf16.mxu0 %v1600
        %2242 = vmatpush1.bf16.msra.mxu0 %v1599
        %2243 = vmatprep.subr.bf16.mxu0 %v1608
        %2244 = vmatpush1.bf16.msra.mxu0 %v1607
        %2245 = vmatprep.subr.bf16.mxu0 %v1616
        %2246 = vmatpush1.bf16.msra.mxu0 %v1615
        %2247 = vmatprep.subr.bf16.mxu0 %v1624
        %2248 = vmatpush1.bf16.msra.mxu0 %v1623
        %2249 = vmatprep.subr.bf16.mxu0 %v1632
        %2250 = vmatpush1.bf16.msra.mxu0 %v1631
        %2251 = vmatprep.subr.bf16.mxu0 %v1640
        %2252 = vmatpush1.bf16.msra.mxu0 %v1639
        %2253 = vmatprep.subr.bf16.mxu0 %v1648
        %2254 = vmatpush1.bf16.msra.mxu0 %v1647
        %2255 = vmatprep.subr.bf16.mxu0 %v1656
        %2256 = vmatpush1.bf16.msra.mxu0 %v1655
        %2257 = vmatprep.subr.bf16.mxu0 %v1664
        %2258 = vmatpush1.bf16.msra.mxu0 %v1663
        %2259 = vmatprep.mubr.bf16.mxu0 %v957
        %2260 = vmatmul.mubr.bf16.gmra.mrb[0].mxu0 %v955
        %v2261 = vpop.f32.mrb[0].mxu0
        %v2262 = vadd.f32 %v1959, %v2261
        %v2263 = vpop.f32.mrb[0].mxu0
        %v2264 = vadd.f32 %v1960, %v2263
        %v2265 = vpop.f32.mrb[0].mxu0
        %v2266 = vadd.f32 %v1959, %v2265
        %v2267 = vpop.f32.mrb[0].mxu0
        %v2268 = vadd.f32 %v1960, %v2267
        %2269 = vdwg.mxu0
        %2270 = vmatprep.subr.bf16.mxu0 %v1672
        %2271 = vmatpush1.bf16.msra.mxu0 %v1671
        %2272 = vmatprep.subr.bf16.mxu0 %v1680
        %2273 = vmatpush1.bf16.msra.mxu0 %v1679
        %2274 = vmatprep.subr.bf16.mxu0 %v1688
        %2275 = vmatpush1.bf16.msra.mxu0 %v1687
        %2276 = vmatprep.subr.bf16.mxu0 %v1696
        %2277 = vmatpush1.bf16.msra.mxu0 %v1695
        %2278 = vmatprep.subr.bf16.mxu0 %v1704
        %2279 = vmatpush1.bf16.msra.mxu0 %v1703
        %2280 = vmatprep.subr.bf16.mxu0 %v1712
        %2281 = vmatpush1.bf16.msra.mxu0 %v1711
        %2282 = vmatprep.subr.bf16.mxu0 %v1720
        %2283 = vmatpush1.bf16.msra.mxu0 %v1719
        %2284 = vmatprep.subr.bf16.mxu0 %v1728
        %2285 = vmatpush1.bf16.msra.mxu0 %v1727
        %2286 = vmatprep.subr.bf16.mxu0 0
        %2287 = vmatpush1.bf16.msra.mxu0 0
        %2288 = vmatprep.subr.bf16.mxu0 0
        %2289 = vmatpush1.bf16.msra.mxu0 0
        %2290 = vmatprep.subr.bf16.mxu0 0
        %2291 = vmatpush1.bf16.msra.mxu0 0
        %2292 = vmatprep.subr.bf16.mxu0 0
        %2293 = vmatpush1.bf16.msra.mxu0 0
        %2294 = vmatprep.subr.bf16.mxu0 0
        %2295 = vmatpush1.bf16.msra.mxu0 0
        %2296 = vmatprep.subr.bf16.mxu0 0
        %2297 = vmatpush1.bf16.msra.mxu0 0
        %2298 = vmatprep.subr.bf16.mxu0 0
        %2299 = vmatpush1.bf16.msra.mxu0 0
        %2300 = vmatprep.subr.bf16.mxu0 0
        %2301 = vmatpush1.bf16.msra.mxu0 0
        %2302 = vmatprep.mubr.bf16.mxu0 0
        %2303 = vmatmul.mubr.bf16.gmra.mrb[0].mxu0 %v956
        %v2304 = vpop.f32.mrb[0].mxu0
        %v2305 = vadd.f32 %v2262, %v2304
        %v2306 = vpop.f32.mrb[0].mxu0
        %v2307 = vadd.f32 %v2264, %v2306
        %v2308 = vpop.f32.mrb[0].mxu0
        %v2309 = vadd.f32 %v2266, %v2308
        %v2310 = vpop.f32.mrb[0].mxu0
        %v2311 = vadd.f32 %v2268, %v2310
        %2312 = vdwg.mxu0
        %v2329 = vcombine.low %v2047, %v2049
        %v2330 = vcombine.high %v2047, %v2049
        %v2331 = vcombine.low %v2133, %v2135
        %v2332 = vcombine.high %v2133, %v2135
        %v2334 = vunpack.c.l.s4 1983009808
        %v2335 = vunpack.c.0.s8 %v2334
        %v2336 = vlaneseq
        %v2337 = vshrl.u32 %v2336, 7
        %v2338 = vsub.s32 %v2335, %v2337
        %v2339 = vrot.slane %v2329, %v2338
        %v2341 = vunpack.c.l.s4 1983009808
        %v2342 = vunpack.c.0.s8 %v2341
        %v2343 = vlaneseq
        %v2344 = vshrl.u32 %v2343, 7
        %v2345 = vsub.s32 %v2342, %v2344
        %v2346 = vrot.slane %v2330, %v2345
        %v2348 = vunpack.c.l.s4 1983009808
        %v2349 = vunpack.c.0.s8 %v2348
        %v2350 = vlaneseq
        %v2351 = vshrl.u32 %v2350, 7
        %v2352 = vsub.s32 %v2349, %v2351
        %v2353 = vrot.slane %v2331, %v2352
        %v2355 = vunpack.c.l.s4 1983009808
        %v2356 = vunpack.c.0.s8 %v2355
        %v2357 = vlaneseq
        %v2358 = vshrl.u32 %v2357, 7
        %v2359 = vsub.s32 %v2356, %v2358
        %v2360 = vrot.slane %v2332, %v2359
        %v2361 = vcombine.low %v2339, %v2353
        %v2362 = vcombine.high %v2339, %v2353
        %v2363 = vcombine.low %v2346, %v2360
        %v2364 = vcombine.high %v2346, %v2360
        %v2365 = vcombine.low %v2219, %v2221
        %v2366 = vcombine.high %v2219, %v2221
        %v2367 = vcombine.low %v2305, %v2307
        %v2368 = vcombine.high %v2305, %v2307
        %v2370 = vunpack.c.l.s4 1983009808
        %v2371 = vunpack.c.0.s8 %v2370
        %v2372 = vlaneseq
        %v2373 = vshrl.u32 %v2372, 7
        %v2374 = vsub.s32 %v2371, %v2373
        %v2375 = vrot.slane %v2365, %v2374
        %v2377 = vunpack.c.l.s4 1983009808
        %v2378 = vunpack.c.0.s8 %v2377
        %v2379 = vlaneseq
        %v2380 = vshrl.u32 %v2379, 7
        %v2381 = vsub.s32 %v2378, %v2380
        %v2382 = vrot.slane %v2366, %v2381
        %v2384 = vunpack.c.l.s4 1983009808
        %v2385 = vunpack.c.0.s8 %v2384
        %v2386 = vlaneseq
        %v2387 = vshrl.u32 %v2386, 7
        %v2388 = vsub.s32 %v2385, %v2387
        %v2389 = vrot.slane %v2367, %v2388
        %v2391 = vunpack.c.l.s4 1983009808
        %v2392 = vunpack.c.0.s8 %v2391
        %v2393 = vlaneseq
        %v2394 = vshrl.u32 %v2393, 7
        %v2395 = vsub.s32 %v2392, %v2394
        %v2396 = vrot.slane %v2368, %v2395
        %v2397 = vcombine.low %v2375, %v2389
        %v2398 = vcombine.high %v2375, %v2389
        %v2399 = vcombine.low %v2382, %v2396
        %v2400 = vcombine.high %v2382, %v2396
        %v2401 = vcombine.low %v2051, %v2053
        %v2402 = vcombine.high %v2051, %v2053
        %v2403 = vcombine.low %v2137, %v2139
        %v2404 = vcombine.high %v2137, %v2139
        %v2406 = vunpack.c.l.s4 1983009808
        %v2407 = vunpack.c.0.s8 %v2406
        %v2408 = vlaneseq
        %v2409 = vshrl.u32 %v2408, 7
        %v2410 = vsub.s32 %v2407, %v2409
        %v2411 = vrot.slane %v2401, %v2410
        %v2413 = vunpack.c.l.s4 1983009808
        %v2414 = vunpack.c.0.s8 %v2413
        %v2415 = vlaneseq
        %v2416 = vshrl.u32 %v2415, 7
        %v2417 = vsub.s32 %v2414, %v2416
        %v2418 = vrot.slane %v2402, %v2417
        %v2420 = vunpack.c.l.s4 1983009808
        %v2421 = vunpack.c.0.s8 %v2420
        %v2422 = vlaneseq
        %v2423 = vshrl.u32 %v2422, 7
        %v2424 = vsub.s32 %v2421, %v2423
        %v2425 = vrot.slane %v2403, %v2424
        %v2427 = vunpack.c.l.s4 1983009808
        %v2428 = vunpack.c.0.s8 %v2427
        %v2429 = vlaneseq
        %v2430 = vshrl.u32 %v2429, 7
        %v2431 = vsub.s32 %v2428, %v2430
        %v2432 = vrot.slane %v2404, %v2431
        %v2433 = vcombine.low %v2411, %v2425
        %v2434 = vcombine.high %v2411, %v2425
        %v2435 = vcombine.low %v2418, %v2432
        %v2436 = vcombine.high %v2418, %v2432
        %v2437 = vcombine.low %v2223, %v2225
        %v2438 = vcombine.high %v2223, %v2225
        %v2439 = vcombine.low %v2309, %v2311
        %v2440 = vcombine.high %v2309, %v2311
        %v2442 = vunpack.c.l.s4 1983009808
        %v2443 = vunpack.c.0.s8 %v2442
        %v2444 = vlaneseq
        %v2445 = vshrl.u32 %v2444, 7
        %v2446 = vsub.s32 %v2443, %v2445
        %v2447 = vrot.slane %v2437, %v2446
        %v2449 = vunpack.c.l.s4 1983009808
        %v2450 = vunpack.c.0.s8 %v2449
        %v2451 = vlaneseq
        %v2452 = vshrl.u32 %v2451, 7
        %v2453 = vsub.s32 %v2450, %v2452
        %v2454 = vrot.slane %v2438, %v2453
        %v2456 = vunpack.c.l.s4 1983009808
        %v2457 = vunpack.c.0.s8 %v2456
        %v2458 = vlaneseq
        %v2459 = vshrl.u32 %v2458, 7
        %v2460 = vsub.s32 %v2457, %v2459
        %v2461 = vrot.slane %v2439, %v2460
        %v2463 = vunpack.c.l.s4 1983009808
        %v2464 = vunpack.c.0.s8 %v2463
        %v2465 = vlaneseq
        %v2466 = vshrl.u32 %v2465, 7
        %v2467 = vsub.s32 %v2464, %v2466
        %v2468 = vrot.slane %v2440, %v2467
        %v2469 = vcombine.low %v2447, %v2461
        %v2470 = vcombine.high %v2447, %v2461
        %v2471 = vcombine.low %v2454, %v2468
        %v2472 = vcombine.high %v2454, %v2468
        %2489 = vst [vmem:[#allocation2] sm:$0xff] %v2361
        %2490 = vst [vmem:[#allocation2 + $0x8] sm:$0xff] %v2397
        %2491 = vst [vmem:[#allocation2 + $0x10] sm:$0xff] %v2362
        %2492 = vst [vmem:[#allocation2 + $0x18] sm:$0xff] %v2398
        %2493 = vst [vmem:[#allocation2 + $0x20] sm:$0xff] %v2363
        %2494 = vst [vmem:[#allocation2 + $0x28] sm:$0xff] %v2399
        %2495 = vst [vmem:[#allocation2 + $0x30] sm:$0xff] %v2364
        %2496 = vst [vmem:[#allocation2 + $0x38] sm:$0xff] %v2400
        %2497 = vst [vmem:[#allocation2 + $0x40] sm:$0xff] %v2433
        %2498 = vst [vmem:[#allocation2 + $0x48] sm:$0xff] %v2469
        %2499 = vst [vmem:[#allocation2 + $0x50] sm:$0xff] %v2434
        %2500 = vst [vmem:[#allocation2 + $0x58] sm:$0xff] %v2470
        %2501 = vst [vmem:[#allocation2 + $0x60] sm:$0xff] %v2435
        %2502 = vst [vmem:[#allocation2 + $0x68] sm:$0xff] %v2471
        %2503 = vst [vmem:[#allocation2 + $0x70] sm:$0xff] %v2436
        %2504 = vst [vmem:[#allocation2 + $0x78] sm:$0xff] %v2472
        %v2505 = vld [vmem:[%s224] sm:$0xff]
        %v2506 = vld [vmem:[%s224 + $0x8] sm:$0xff]
        %v2507 = vld [vmem:[%s224 + $0x10] sm:$0xff]
        %v2508 = vld [vmem:[%s224 + $0x18] sm:$0xff]
        %v2509 = vld [vmem:[%s224 + $0x20] sm:$0xff]
        %v2510 = vld [vmem:[%s224 + $0x28] sm:$0xff]
        %v2511 = vld [vmem:[%s224 + $0x30] sm:$0xff]
        %v2512 = vld [vmem:[%s224 + $0x38] sm:$0xff]
        %v2513 = vld [vmem:[%s224 + $0x40] sm:$0xff]
        %v2514 = vld [vmem:[%s224 + $0x48] sm:$0xff]
        %v2515 = vld [vmem:[%s224 + $0x50] sm:$0xff]
        %v2516 = vld [vmem:[%s224 + $0x58] sm:$0xff]
        %v2517 = vld [vmem:[%s224 + $0x60] sm:$0xff]
        %v2518 = vld [vmem:[%s224 + $0x68] sm:$0xff]
        %v2519 = vld [vmem:[%s224 + $0x70] sm:$0xff]
        %v2520 = vld [vmem:[%s224 + $0x78] sm:$0xff]
        %v2521 = vld [vmem:[%s224 + $0x80] sm:$0xff]
        %v2522 = vld [vmem:[%s224 + $0x88] sm:$0xff]
        %v2523 = vld [vmem:[%s224 + $0x90] sm:$0xff]
        %v2524 = vld [vmem:[%s224 + $0x98] sm:$0xff]
        %v2525 = vld [vmem:[%s224 + $0xa0] sm:$0xff]
        %v2526 = vld [vmem:[%s224 + $0xa8] sm:$0xff]
        %v2527 = vld [vmem:[%s224 + $0xb0] sm:$0xff]
        %v2528 = vld [vmem:[%s224 + $0xb8] sm:$0xff]
        %v2529 = vld [vmem:[%s224 + $0xc0] sm:$0xff]
        %v2530 = vld [vmem:[%s224 + $0xc8] sm:$0xff]
        %v2531 = vld [vmem:[%s224 + $0xd0] sm:$0xff]
        %v2532 = vld [vmem:[%s224 + $0xd8] sm:$0xff]
        %v2533 = vld [vmem:[%s224 + $0xe0] sm:$0xff]
        %v2534 = vld [vmem:[%s224 + $0xe8] sm:$0xff]
        %v2535 = vld [vmem:[%s224 + $0xf0] sm:$0xff]
        %v2536 = vld [vmem:[%s224 + $0xf8] sm:$0xff]
        %v2537 = vld [vmem:[%s224 + $0x100] sm:$0xff]
        %v2538 = vld [vmem:[%s224 + $0x108] sm:$0xff]
        %v2539 = vld [vmem:[%s224 + $0x110] sm:$0xff]
        %v2540 = vld [vmem:[%s224 + $0x118] sm:$0xff]
        %v2541 = vld [vmem:[%s224 + $0x120] sm:$0xff]
        %v2542 = vld [vmem:[%s224 + $0x128] sm:$0xff]
        %v2543 = vld [vmem:[%s224 + $0x130] sm:$0xff]
        %v2544 = vld [vmem:[%s224 + $0x138] sm:$0xff]
        %v2545 = vld [vmem:[%s224 + $0x140] sm:$0xff]
        %v2546 = vld [vmem:[%s224 + $0x148] sm:$0xff]
        %v2547 = vld [vmem:[%s224 + $0x150] sm:$0xff]
        %v2548 = vld [vmem:[%s224 + $0x158] sm:$0xff]
        %v2549 = vld [vmem:[%s224 + $0x160] sm:$0xff]
        %v2550 = vld [vmem:[%s224 + $0x168] sm:$0xff]
        %v2551 = vld [vmem:[%s224 + $0x170] sm:$0xff]
        %v2552 = vld [vmem:[%s224 + $0x178] sm:$0xff]
        %v2553 = vld [vmem:[%s224 + $0x180] sm:$0xff]
        %v2554 = vld [vmem:[%s224 + $0x188] sm:$0xff]
        %v2555 = vld [vmem:[%s224 + $0x190] sm:$0xff]
        %v2556 = vld [vmem:[%s224 + $0x198] sm:$0xff]
        %v2557 = vld [vmem:[%s224 + $0x1a0] sm:$0xff]
        %v2558 = vld [vmem:[%s224 + $0x1a8] sm:$0xff]
        %v2559 = vld [vmem:[%s224 + $0x1b0] sm:$0xff]
        %v2560 = vld [vmem:[%s224 + $0x1b8] sm:$0xff]
        %v2561 = vld [vmem:[%s224 + $0x1c0] sm:$0xff]
        %v2562 = vld [vmem:[%s224 + $0x1c8] sm:$0xff]
        %v2563 = vld [vmem:[%s224 + $0x1d0] sm:$0xff]
        %v2564 = vld [vmem:[%s224 + $0x1d8] sm:$0xff]
        %v2565 = vld [vmem:[%s224 + $0x1e0] sm:$0xff]
        %v2566 = vld [vmem:[%s224 + $0x1e8] sm:$0xff]
        %v2567 = vld [vmem:[%s224 + $0x1f0] sm:$0xff]
        %v2568 = vld [vmem:[%s224 + $0x1f8] sm:$0xff]
        %v2569 = vld [vmem:[%s224 + $0x200] sm:$0xff]
        %v2570 = vld [vmem:[%s224 + $0x208] sm:$0xff]
        %v2571 = vld [vmem:[%s224 + $0x210] sm:$0xff]
        %v2572 = vld [vmem:[%s224 + $0x218] sm:$0xff]
        %v2573 = vld [vmem:[%s224 + $0x220] sm:$0xff]
        %v2574 = vld [vmem:[%s224 + $0x228] sm:$0xff]
        %v2575 = vld [vmem:[%s224 + $0x230] sm:$0xff]
        %v2576 = vld [vmem:[%s224 + $0x238] sm:$0xff]
        %v2577 = vld [vmem:[%s224 + $0x240] sm:$0xff]
        %v2578 = vld [vmem:[%s224 + $0x248] sm:$0xff]
        %v2579 = vld [vmem:[%s224 + $0x250] sm:$0xff]
        %v2580 = vld [vmem:[%s224 + $0x258] sm:$0xff]
        %v2581 = vld [vmem:[%s224 + $0x260] sm:$0xff]
        %v2582 = vld [vmem:[%s224 + $0x268] sm:$0xff]
        %v2583 = vld [vmem:[%s224 + $0x270] sm:$0xff]
        %v2584 = vld [vmem:[%s224 + $0x278] sm:$0xff]
        %v2585 = vld [vmem:[%s224 + $0x280] sm:$0xff]
        %v2586 = vld [vmem:[%s224 + $0x288] sm:$0xff]
        %v2587 = vld [vmem:[%s224 + $0x290] sm:$0xff]
        %v2588 = vld [vmem:[%s224 + $0x298] sm:$0xff]
        %v2589 = vld [vmem:[%s224 + $0x2a0] sm:$0xff]
        %v2590 = vld [vmem:[%s224 + $0x2a8] sm:$0xff]
        %v2591 = vld [vmem:[%s224 + $0x2b0] sm:$0xff]
        %v2592 = vld [vmem:[%s224 + $0x2b8] sm:$0xff]
        %v2593 = vld [vmem:[%s224 + $0x2c0] sm:$0xff]
        %v2594 = vld [vmem:[%s224 + $0x2c8] sm:$0xff]
        %v2595 = vld [vmem:[%s224 + $0x2d0] sm:$0xff]
        %v2596 = vld [vmem:[%s224 + $0x2d8] sm:$0xff]
        %v2597 = vld [vmem:[%s224 + $0x2e0] sm:$0xff]
        %v2598 = vld [vmem:[%s224 + $0x2e8] sm:$0xff]
        %v2599 = vld [vmem:[%s224 + $0x2f0] sm:$0xff]
        %v2600 = vld [vmem:[%s224 + $0x2f8] sm:$0xff]
        %v2601 = vld [vmem:[%s224 + $0x300] sm:$0xff]
        %v2602 = vld [vmem:[%s224 + $0x308] sm:$0xff]
        %v2603 = vld [vmem:[%s224 + $0x310] sm:$0xff]
        %v2604 = vld [vmem:[%s224 + $0x318] sm:$0xff]
        %v2605 = vld [vmem:[%s224 + $0x320] sm:$0xff]
        %v2606 = vld [vmem:[%s224 + $0x328] sm:$0xff]
        %v2607 = vld [vmem:[%s224 + $0x330] sm:$0xff]
        %v2608 = vld [vmem:[%s224 + $0x338] sm:$0xff]
        %v2609 = vld [vmem:[%s224 + $0x340] sm:$0xff]
        %v2610 = vld [vmem:[%s224 + $0x348] sm:$0xff]
        %v2611 = vld [vmem:[%s224 + $0x350] sm:$0xff]
        %v2612 = vld [vmem:[%s224 + $0x358] sm:$0xff]
        %v2613 = vld [vmem:[%s224 + $0x360] sm:$0xff]
        %v2614 = vld [vmem:[%s224 + $0x368] sm:$0xff]
        %v2615 = vld [vmem:[%s224 + $0x370] sm:$0xff]
        %v2616 = vld [vmem:[%s224 + $0x378] sm:$0xff]
        %v2617 = vld [vmem:[%s224 + $0x380] sm:$0xff]
        %v2618 = vld [vmem:[%s224 + $0x388] sm:$0xff]
        %v2619 = vld [vmem:[%s224 + $0x390] sm:$0xff]
        %v2620 = vld [vmem:[%s224 + $0x398] sm:$0xff]
        %v2621 = vld [vmem:[%s224 + $0x3a0] sm:$0xff]
        %v2622 = vld [vmem:[%s224 + $0x3a8] sm:$0xff]
        %v2623 = vld [vmem:[%s224 + $0x3b0] sm:$0xff]
        %v2624 = vld [vmem:[%s224 + $0x3b8] sm:$0xff]
        %v2625 = vld [vmem:[%s224 + $0x3c0] sm:$0xff]
        %v2626 = vld [vmem:[%s224 + $0x3c8] sm:$0xff]
        %v2627 = vld [vmem:[%s224 + $0x3d0] sm:$0xff]
        %v2628 = vld [vmem:[%s224 + $0x3d8] sm:$0xff]
        %v2629 = vld [vmem:[%s224 + $0x3e0] sm:$0xff]
        %v2630 = vld [vmem:[%s224 + $0x3e8] sm:$0xff]
        %v2631 = vld [vmem:[%s224 + $0x3f0] sm:$0xff]
        %v2632 = vld [vmem:[%s224 + $0x3f8] sm:$0xff]
        %v2633 = vld [vmem:[%s224 + $0x400] sm:$0xff]
        %v2634 = vld [vmem:[%s224 + $0x408] sm:$0xff]
        %v2635 = vld [vmem:[%s224 + $0x410] sm:$0xff]
        %v2636 = vld [vmem:[%s224 + $0x418] sm:$0xff]
        %v2637 = vld [vmem:[%s224 + $0x420] sm:$0xff]
        %v2638 = vld [vmem:[%s224 + $0x428] sm:$0xff]
        %v2639 = vld [vmem:[%s224 + $0x430] sm:$0xff]
        %v2640 = vld [vmem:[%s224 + $0x438] sm:$0xff]
        %v2641 = vld [vmem:[%s224 + $0x440] sm:$0xff]
        %v2642 = vld [vmem:[%s224 + $0x448] sm:$0xff]
        %v2643 = vld [vmem:[%s224 + $0x450] sm:$0xff]
        %v2644 = vld [vmem:[%s224 + $0x458] sm:$0xff]
        %v2645 = vld [vmem:[%s224 + $0x460] sm:$0xff]
        %v2646 = vld [vmem:[%s224 + $0x468] sm:$0xff]
        %v2647 = vld [vmem:[%s224 + $0x470] sm:$0xff]
        %v2648 = vld [vmem:[%s224 + $0x478] sm:$0xff]
        %v2649 = vld [vmem:[%s224 + $0x480] sm:$0xff]
        %v2650 = vld [vmem:[%s224 + $0x488] sm:$0xff]
        %v2651 = vld [vmem:[%s224 + $0x490] sm:$0xff]
        %v2652 = vld [vmem:[%s224 + $0x498] sm:$0xff]
        %v2653 = vld [vmem:[%s224 + $0x4a0] sm:$0xff]
        %v2654 = vld [vmem:[%s224 + $0x4a8] sm:$0xff]
        %v2655 = vld [vmem:[%s224 + $0x4b0] sm:$0xff]
        %v2656 = vld [vmem:[%s224 + $0x4b8] sm:$0xff]
        %v2657 = vld [vmem:[%s224 + $0x4c0] sm:$0xff]
        %v2658 = vld [vmem:[%s224 + $0x4c8] sm:$0xff]
        %v2659 = vld [vmem:[%s224 + $0x4d0] sm:$0xff]
        %v2660 = vld [vmem:[%s224 + $0x4d8] sm:$0xff]
        %v2661 = vld [vmem:[%s224 + $0x4e0] sm:$0xff]
        %v2662 = vld [vmem:[%s224 + $0x4e8] sm:$0xff]
        %v2663 = vld [vmem:[%s224 + $0x4f0] sm:$0xff]
        %v2664 = vld [vmem:[%s224 + $0x4f8] sm:$0xff]
        %v2665 = vld [vmem:[%s224 + $0x500] sm:$0xff]
        %v2666 = vld [vmem:[%s224 + $0x508] sm:$0xff]
        %v2667 = vld [vmem:[%s224 + $0x510] sm:$0xff]
        %v2668 = vld [vmem:[%s224 + $0x518] sm:$0xff]
        %v2669 = vld [vmem:[%s224 + $0x520] sm:$0xff]
        %v2670 = vld [vmem:[%s224 + $0x528] sm:$0xff]
        %v2671 = vld [vmem:[%s224 + $0x530] sm:$0xff]
        %v2672 = vld [vmem:[%s224 + $0x538] sm:$0xff]
        %v2673 = vld [vmem:[%s224 + $0x540] sm:$0xff]
        %v2674 = vld [vmem:[%s224 + $0x548] sm:$0xff]
        %v2675 = vld [vmem:[%s224 + $0x550] sm:$0xff]
        %v2676 = vld [vmem:[%s224 + $0x558] sm:$0xff]
        %v2677 = vld [vmem:[%s224 + $0x560] sm:$0xff]
        %v2678 = vld [vmem:[%s224 + $0x568] sm:$0xff]
        %v2679 = vld [vmem:[%s224 + $0x570] sm:$0xff]
        %v2680 = vld [vmem:[%s224 + $0x578] sm:$0xff]
        %v2681 = vld [vmem:[%s224 + $0x580] sm:$0xff]
        %v2682 = vld [vmem:[%s224 + $0x588] sm:$0xff]
        %v2683 = vld [vmem:[%s224 + $0x590] sm:$0xff]
        %v2684 = vld [vmem:[%s224 + $0x598] sm:$0xff]
        %v2685 = vld [vmem:[%s224 + $0x5a0] sm:$0xff]
        %v2686 = vld [vmem:[%s224 + $0x5a8] sm:$0xff]
        %v2687 = vld [vmem:[%s224 + $0x5b0] sm:$0xff]
        %v2688 = vld [vmem:[%s224 + $0x5b8] sm:$0xff]
        %v2689 = vld [vmem:[%s224 + $0x5c0] sm:$0xff]
        %v2690 = vld [vmem:[%s224 + $0x5c8] sm:$0xff]
        %v2691 = vld [vmem:[%s224 + $0x5d0] sm:$0xff]
        %v2692 = vld [vmem:[%s224 + $0x5d8] sm:$0xff]
        %v2693 = vld [vmem:[%s224 + $0x5e0] sm:$0xff]
        %v2694 = vld [vmem:[%s224 + $0x5e8] sm:$0xff]
        %v2695 = vld [vmem:[%s224 + $0x5f0] sm:$0xff]
        %v2696 = vld [vmem:[%s224 + $0x5f8] sm:$0xff]
        %v2697 = vld [vmem:[%s224 + $0x600] sm:$0xff]
        %v2698 = vld [vmem:[%s224 + $0x608] sm:$0xff]
        %v2699 = vld [vmem:[%s224 + $0x610] sm:$0xff]
        %v2700 = vld [vmem:[%s224 + $0x618] sm:$0xff]
        %v2701 = vld [vmem:[%s224 + $0x620] sm:$0xff]
        %v2702 = vld [vmem:[%s224 + $0x628] sm:$0xff]
        %v2703 = vld [vmem:[%s224 + $0x630] sm:$0xff]
        %v2704 = vld [vmem:[%s224 + $0x638] sm:$0xff]
        %v2705 = vld [vmem:[%s224 + $0x640] sm:$0xff]
        %v2706 = vld [vmem:[%s224 + $0x648] sm:$0xff]
        %v2707 = vld [vmem:[%s224 + $0x650] sm:$0xff]
        %v2708 = vld [vmem:[%s224 + $0x658] sm:$0xff]
        %v2709 = vld [vmem:[%s224 + $0x660] sm:$0xff]
        %v2710 = vld [vmem:[%s224 + $0x668] sm:$0xff]
        %v2711 = vld [vmem:[%s224 + $0x670] sm:$0xff]
        %v2712 = vld [vmem:[%s224 + $0x678] sm:$0xff]
        %v2713 = vld [vmem:[%s224 + $0x680] sm:$0xff]
        %v2714 = vld [vmem:[%s224 + $0x688] sm:$0xff]
        %v2715 = vld [vmem:[%s224 + $0x690] sm:$0xff]
        %v2716 = vld [vmem:[%s224 + $0x698] sm:$0xff]
        %v2717 = vld [vmem:[%s224 + $0x6a0] sm:$0xff]
        %v2718 = vld [vmem:[%s224 + $0x6a8] sm:$0xff]
        %v2719 = vld [vmem:[%s224 + $0x6b0] sm:$0xff]
        %v2720 = vld [vmem:[%s224 + $0x6b8] sm:$0xff]
        %v2721 = vld [vmem:[%s224 + $0x6c0] sm:$0xff]
        %v2722 = vld [vmem:[%s224 + $0x6c8] sm:$0xff]
        %v2723 = vld [vmem:[%s224 + $0x6d0] sm:$0xff]
        %v2724 = vld [vmem:[%s224 + $0x6d8] sm:$0xff]
        %v2725 = vld [vmem:[%s224 + $0x6e0] sm:$0xff]
        %v2726 = vld [vmem:[%s224 + $0x6e8] sm:$0xff]
        %v2727 = vld [vmem:[%s224 + $0x6f0] sm:$0xff]
        %v2728 = vld [vmem:[%s224 + $0x6f8] sm:$0xff]
        %v2729 = vld [vmem:[%s224 + $0x700] sm:$0xff]
        %v2730 = vld [vmem:[%s224 + $0x708] sm:$0xff]
        %v2731 = vld [vmem:[%s224 + $0x710] sm:$0xff]
        %v2732 = vld [vmem:[%s224 + $0x718] sm:$0xff]
        %v2733 = vld [vmem:[%s224 + $0x720] sm:$0xff]
        %v2734 = vld [vmem:[%s224 + $0x728] sm:$0xff]
        %v2735 = vld [vmem:[%s224 + $0x730] sm:$0xff]
        %v2736 = vld [vmem:[%s224 + $0x738] sm:$0xff]
        %v2737 = vld [vmem:[%s224 + $0x740] sm:$0xff]
        %v2738 = vld [vmem:[%s224 + $0x748] sm:$0xff]
        %v2739 = vld [vmem:[%s224 + $0x750] sm:$0xff]
        %v2740 = vld [vmem:[%s224 + $0x758] sm:$0xff]
        %v2741 = vld [vmem:[%s224 + $0x760] sm:$0xff]
        %v2742 = vld [vmem:[%s224 + $0x768] sm:$0xff]
        %v2743 = vld [vmem:[%s224 + $0x770] sm:$0xff]
        %v2744 = vld [vmem:[%s224 + $0x778] sm:$0xff]
        %v2745 = vld [vmem:[%s224 + $0x780] sm:$0xff]
        %v2746 = vld [vmem:[%s224 + $0x788] sm:$0xff]
        %v2747 = vld [vmem:[%s224 + $0x790] sm:$0xff]
        %v2748 = vld [vmem:[%s224 + $0x798] sm:$0xff]
        %v2749 = vld [vmem:[%s224 + $0x7a0] sm:$0xff]
        %v2750 = vld [vmem:[%s224 + $0x7a8] sm:$0xff]
        %v2751 = vld [vmem:[%s224 + $0x7b0] sm:$0xff]
        %v2752 = vld [vmem:[%s224 + $0x7b8] sm:$0xff]
        %v2753 = vld [vmem:[%s224 + $0x7c0] sm:$0xff]
        %v2754 = vld [vmem:[%s224 + $0x7c8] sm:$0xff]
        %v2755 = vld [vmem:[%s224 + $0x7d0] sm:$0xff]
        %v2756 = vld [vmem:[%s224 + $0x7d8] sm:$0xff]
        %v2757 = vld [vmem:[%s224 + $0x7e0] sm:$0xff]
        %v2758 = vld [vmem:[%s224 + $0x7e8] sm:$0xff]
        %v2759 = vld [vmem:[%s224 + $0x7f0] sm:$0xff]
        %v2760 = vld [vmem:[%s224 + $0x7f8] sm:$0xff]
        loop: start=0, step=1, limit=8
        $region37: #{generator_forward.5} parent=35 // loop_pre_header
          _
        $region38: #{generator_forward.5} parent=35 // loop_header
          %s2762 = sphi 0, %s2766
          %p2763 = scmp.ge.s32.totalorder %s2762, 8
          %v2767 = vphi 0.0, %v3147
          %v2768 = vphi 0.0, %v3145
        $region39: #{generator_forward.5} parent=35 // loop_header_branch
          %2765 = sbr.rel (%p2763) target = $region43
        $region40: #{generator_forward.5} parent=35 // loop_body
          %p2769 = scmp.eq.s32.totalorder %s15, 0
          %s2770 = ssub.s32 7, %s2762
          %s2771 = scalar_select %p2769, %s2762, %s2770
          %s2772 = smul.u32 %s2771, 8
          %s2773 = smul.addr %s2772, 2
          %s2774 = scalar_lea.vmem [#allocation2], %s2773
          %v2775 = vld [vmem:[%s2774] sm:$0xff]
          %v2776 = vld [vmem:[%s2774 + $0x8] sm:$0xff]
          %v2779 = vunpack.c.l.s4 1983009808
          %v2780 = vunpack.c.0.s8 %v2779
          %v2781 = vlaneseq
          %v2782 = vshrl.u32 %v2781, 7
          %v2783 = vsub.s32 %v2780, %v2782
          %v2784 = vrot.slane %v2767, %v2783
          %v2785 = vcombine.high %v2784, %v2784
          %2788 = vmatprep.subr.mxu0 %v2506
          %2789 = vmatpush1.msra.mxu0 %v2505
          %2790 = vmatprep.subr.mxu0 %v2514
          %2791 = vmatpush1.msra.mxu0 %v2513
          %2792 = vmatprep.subr.mxu0 %v2522
          %2793 = vmatpush1.msra.mxu0 %v2521
          %2794 = vmatprep.subr.mxu0 %v2530
          %2795 = vmatpush1.msra.mxu0 %v2529
          %2796 = vmatprep.subr.mxu0 %v2538
          %2797 = vmatpush1.msra.mxu0 %v2537
          %2798 = vmatprep.subr.mxu0 %v2546
          %2799 = vmatpush1.msra.mxu0 %v2545
          %2800 = vmatprep.subr.mxu0 %v2554
          %2801 = vmatpush1.msra.mxu0 %v2553
          %2802 = vmatprep.subr.mxu0 %v2562
          %2803 = vmatpush1.msra.mxu0 %v2561
          %2804 = vmatprep.subr.mxu0 %v2570
          %2805 = vmatpush1.msra.mxu0 %v2569
          %2806 = vmatprep.subr.mxu0 %v2578
          %2807 = vmatpush1.msra.mxu0 %v2577
          %2808 = vmatprep.subr.mxu0 %v2586
          %2809 = vmatpush1.msra.mxu0 %v2585
          %2810 = vmatprep.subr.mxu0 %v2594
          %2811 = vmatpush1.msra.mxu0 %v2593
          %2812 = vmatprep.subr.mxu0 %v2602
          %2813 = vmatpush1.msra.mxu0 %v2601
          %2814 = vmatprep.subr.mxu0 %v2610
          %2815 = vmatpush1.msra.mxu0 %v2609
          %2816 = vmatprep.subr.mxu0 %v2618
          %2817 = vmatpush1.msra.mxu0 %v2617
          %2818 = vmatprep.subr.mxu0 %v2626
          %2819 = vmatpush1.msra.mxu0 %v2625
          %2820 = vmatprep.subr.mxu0 %v2634
          %2821 = vmatpush1.msra.mxu0 %v2633
          %2822 = vmatprep.subr.mxu0 %v2642
          %2823 = vmatpush1.msra.mxu0 %v2641
          %2824 = vmatprep.subr.mxu0 %v2650
          %2825 = vmatpush1.msra.mxu0 %v2649
          %2826 = vmatprep.subr.mxu0 %v2658
          %2827 = vmatpush1.msra.mxu0 %v2657
          %2828 = vmatprep.subr.mxu0 %v2666
          %2829 = vmatpush1.msra.mxu0 %v2665
          %2830 = vmatprep.subr.mxu0 %v2674
          %2831 = vmatpush1.msra.mxu0 %v2673
          %2832 = vmatprep.subr.mxu0 %v2682
          %2833 = vmatpush1.msra.mxu0 %v2681
          %2834 = vmatprep.subr.mxu0 %v2690
          %2835 = vmatpush1.msra.mxu0 %v2689
          %2836 = vmatprep.subr.mxu0 %v2698
          %2837 = vmatpush1.msra.mxu0 %v2697
          %2838 = vmatprep.subr.mxu0 %v2706
          %2839 = vmatpush1.msra.mxu0 %v2705
          %2840 = vmatprep.subr.mxu0 %v2714
          %2841 = vmatpush1.msra.mxu0 %v2713
          %2842 = vmatprep.subr.mxu0 %v2722
          %2843 = vmatpush1.msra.mxu0 %v2721
          %2844 = vmatprep.subr.mxu0 %v2730
          %2845 = vmatpush1.msra.mxu0 %v2729
          %2846 = vmatprep.subr.mxu0 %v2738
          %2847 = vmatpush1.msra.mxu0 %v2737
          %2848 = vmatprep.subr.mxu0 %v2746
          %2849 = vmatpush1.msra.mxu0 %v2745
          %2850 = vmatprep.subr.mxu0 %v2754
          %2851 = vmatpush1.msra.mxu0 %v2753
          %2852 = vmatprep.mubr.f32.mxu0 %v2785
          %2853 = vmatmul.mubr.f32.gmra.mrb[0].mxu0 %v2784
          %v2854 = vpop.f32.mrb[0].mxu0
          %v2855 = vadd.f32 0.0, %v2854
          %v2856 = vpop.f32.mrb[0].mxu0
          %v2857 = vadd.f32 0.0, %v2856
          %2858 = vdwg.mxu0
          %2859 = vmatprep.subr.mxu0 %v2508
          %2860 = vmatpush1.msra.mxu0 %v2507
          %2861 = vmatprep.subr.mxu0 %v2516
          %2862 = vmatpush1.msra.mxu0 %v2515
          %2863 = vmatprep.subr.mxu0 %v2524
          %2864 = vmatpush1.msra.mxu0 %v2523
          %2865 = vmatprep.subr.mxu0 %v2532
          %2866 = vmatpush1.msra.mxu0 %v2531
          %2867 = vmatprep.subr.mxu0 %v2540
          %2868 = vmatpush1.msra.mxu0 %v2539
          %2869 = vmatprep.subr.mxu0 %v2548
          %2870 = vmatpush1.msra.mxu0 %v2547
          %2871 = vmatprep.subr.mxu0 %v2556
          %2872 = vmatpush1.msra.mxu0 %v2555
          %2873 = vmatprep.subr.mxu0 %v2564
          %2874 = vmatpush1.msra.mxu0 %v2563
          %2875 = vmatprep.subr.mxu0 %v2572
          %2876 = vmatpush1.msra.mxu0 %v2571
          %2877 = vmatprep.subr.mxu0 %v2580
          %2878 = vmatpush1.msra.mxu0 %v2579
          %2879 = vmatprep.subr.mxu0 %v2588
          %2880 = vmatpush1.msra.mxu0 %v2587
          %2881 = vmatprep.subr.mxu0 %v2596
          %2882 = vmatpush1.msra.mxu0 %v2595
          %2883 = vmatprep.subr.mxu0 %v2604
          %2884 = vmatpush1.msra.mxu0 %v2603
          %2885 = vmatprep.subr.mxu0 %v2612
          %2886 = vmatpush1.msra.mxu0 %v2611
          %2887 = vmatprep.subr.mxu0 %v2620
          %2888 = vmatpush1.msra.mxu0 %v2619
          %2889 = vmatprep.subr.mxu0 %v2628
          %2890 = vmatpush1.msra.mxu0 %v2627
          %2891 = vmatprep.subr.mxu0 %v2636
          %2892 = vmatpush1.msra.mxu0 %v2635
          %2893 = vmatprep.subr.mxu0 %v2644
          %2894 = vmatpush1.msra.mxu0 %v2643
          %2895 = vmatprep.subr.mxu0 %v2652
          %2896 = vmatpush1.msra.mxu0 %v2651
          %2897 = vmatprep.subr.mxu0 %v2660
          %2898 = vmatpush1.msra.mxu0 %v2659
          %2899 = vmatprep.subr.mxu0 %v2668
          %2900 = vmatpush1.msra.mxu0 %v2667
          %2901 = vmatprep.subr.mxu0 %v2676
          %2902 = vmatpush1.msra.mxu0 %v2675
          %2903 = vmatprep.subr.mxu0 %v2684
          %2904 = vmatpush1.msra.mxu0 %v2683
          %2905 = vmatprep.subr.mxu0 %v2692
          %2906 = vmatpush1.msra.mxu0 %v2691
          %2907 = vmatprep.subr.mxu0 %v2700
          %2908 = vmatpush1.msra.mxu0 %v2699
          %2909 = vmatprep.subr.mxu0 %v2708
          %2910 = vmatpush1.msra.mxu0 %v2707
          %2911 = vmatprep.subr.mxu0 %v2716
          %2912 = vmatpush1.msra.mxu0 %v2715
          %2913 = vmatprep.subr.mxu0 %v2724
          %2914 = vmatpush1.msra.mxu0 %v2723
          %2915 = vmatprep.subr.mxu0 %v2732
          %2916 = vmatpush1.msra.mxu0 %v2731
          %2917 = vmatprep.subr.mxu0 %v2740
          %2918 = vmatpush1.msra.mxu0 %v2739
          %2919 = vmatprep.subr.mxu0 %v2748
          %2920 = vmatpush1.msra.mxu0 %v2747
          %2921 = vmatprep.subr.mxu0 %v2756
          %2922 = vmatpush1.msra.mxu0 %v2755
          %2923 = vmatprep.mubr.f32.mxu0 %v2785
          %2924 = vmatmul.mubr.f32.gmra.mrb[0].mxu0 %v2784
          %v2925 = vpop.f32.mrb[0].mxu0
          %v2926 = vadd.f32 0.0, %v2925
          %v2927 = vpop.f32.mrb[0].mxu0
          %v2928 = vadd.f32 0.0, %v2927
          %2929 = vdwg.mxu0
          %2930 = vmatprep.subr.mxu0 %v2510
          %2931 = vmatpush1.msra.mxu0 %v2509
          %2932 = vmatprep.subr.mxu0 %v2518
          %2933 = vmatpush1.msra.mxu0 %v2517
          %2934 = vmatprep.subr.mxu0 %v2526
          %2935 = vmatpush1.msra.mxu0 %v2525
          %2936 = vmatprep.subr.mxu0 %v2534
          %2937 = vmatpush1.msra.mxu0 %v2533
          %2938 = vmatprep.subr.mxu0 %v2542
          %2939 = vmatpush1.msra.mxu0 %v2541
          %2940 = vmatprep.subr.mxu0 %v2550
          %2941 = vmatpush1.msra.mxu0 %v2549
          %2942 = vmatprep.subr.mxu0 %v2558
          %2943 = vmatpush1.msra.mxu0 %v2557
          %2944 = vmatprep.subr.mxu0 %v2566
          %2945 = vmatpush1.msra.mxu0 %v2565
          %2946 = vmatprep.subr.mxu0 %v2574
          %2947 = vmatpush1.msra.mxu0 %v2573
          %2948 = vmatprep.subr.mxu0 %v2582
          %2949 = vmatpush1.msra.mxu0 %v2581
          %2950 = vmatprep.subr.mxu0 %v2590
          %2951 = vmatpush1.msra.mxu0 %v2589
          %2952 = vmatprep.subr.mxu0 %v2598
          %2953 = vmatpush1.msra.mxu0 %v2597
          %2954 = vmatprep.subr.mxu0 %v2606
          %2955 = vmatpush1.msra.mxu0 %v2605
          %2956 = vmatprep.subr.mxu0 %v2614
          %2957 = vmatpush1.msra.mxu0 %v2613
          %2958 = vmatprep.subr.mxu0 %v2622
          %2959 = vmatpush1.msra.mxu0 %v2621
          %2960 = vmatprep.subr.mxu0 %v2630
          %2961 = vmatpush1.msra.mxu0 %v2629
          %2962 = vmatprep.subr.mxu0 %v2638
          %2963 = vmatpush1.msra.mxu0 %v2637
          %2964 = vmatprep.subr.mxu0 %v2646
          %2965 = vmatpush1.msra.mxu0 %v2645
          %2966 = vmatprep.subr.mxu0 %v2654
          %2967 = vmatpush1.msra.mxu0 %v2653
          %2968 = vmatprep.subr.mxu0 %v2662
          %2969 = vmatpush1.msra.mxu0 %v2661
          %2970 = vmatprep.subr.mxu0 %v2670
          %2971 = vmatpush1.msra.mxu0 %v2669
          %2972 = vmatprep.subr.mxu0 %v2678
          %2973 = vmatpush1.msra.mxu0 %v2677
          %2974 = vmatprep.subr.mxu0 %v2686
          %2975 = vmatpush1.msra.mxu0 %v2685
          %2976 = vmatprep.subr.mxu0 %v2694
          %2977 = vmatpush1.msra.mxu0 %v2693
          %2978 = vmatprep.subr.mxu0 %v2702
          %2979 = vmatpush1.msra.mxu0 %v2701
          %2980 = vmatprep.subr.mxu0 %v2710
          %2981 = vmatpush1.msra.mxu0 %v2709
          %2982 = vmatprep.subr.mxu0 %v2718
          %2983 = vmatpush1.msra.mxu0 %v2717
          %2984 = vmatprep.subr.mxu0 %v2726
          %2985 = vmatpush1.msra.mxu0 %v2725
          %2986 = vmatprep.subr.mxu0 %v2734
          %2987 = vmatpush1.msra.mxu0 %v2733
          %2988 = vmatprep.subr.mxu0 %v2742
          %2989 = vmatpush1.msra.mxu0 %v2741
          %2990 = vmatprep.subr.mxu0 %v2750
          %2991 = vmatpush1.msra.mxu0 %v2749
          %2992 = vmatprep.subr.mxu0 %v2758
          %2993 = vmatpush1.msra.mxu0 %v2757
          %2994 = vmatprep.mubr.f32.mxu0 %v2785
          %2995 = vmatmul.mubr.f32.gmra.mrb[0].mxu0 %v2784
          %v2996 = vpop.f32.mrb[0].mxu0
          %v2997 = vadd.f32 0.0, %v2996
          %v2998 = vpop.f32.mrb[0].mxu0
          %v2999 = vadd.f32 0.0, %v2998
          %3000 = vdwg.mxu0
          %3001 = vmatprep.subr.mxu0 %v2512
          %3002 = vmatpush1.msra.mxu0 %v2511
          %3003 = vmatprep.subr.mxu0 %v2520
          %3004 = vmatpush1.msra.mxu0 %v2519
          %3005 = vmatprep.subr.mxu0 %v2528
          %3006 = vmatpush1.msra.mxu0 %v2527
          %3007 = vmatprep.subr.mxu0 %v2536
          %3008 = vmatpush1.msra.mxu0 %v2535
          %3009 = vmatprep.subr.mxu0 %v2544
          %3010 = vmatpush1.msra.mxu0 %v2543
          %3011 = vmatprep.subr.mxu0 %v2552
          %3012 = vmatpush1.msra.mxu0 %v2551
          %3013 = vmatprep.subr.mxu0 %v2560
          %3014 = vmatpush1.msra.mxu0 %v2559
          %3015 = vmatprep.subr.mxu0 %v2568
          %3016 = vmatpush1.msra.mxu0 %v2567
          %3017 = vmatprep.subr.mxu0 %v2576
          %3018 = vmatpush1.msra.mxu0 %v2575
          %3019 = vmatprep.subr.mxu0 %v2584
          %3020 = vmatpush1.msra.mxu0 %v2583
          %3021 = vmatprep.subr.mxu0 %v2592
          %3022 = vmatpush1.msra.mxu0 %v2591
          %3023 = vmatprep.subr.mxu0 %v2600
          %3024 = vmatpush1.msra.mxu0 %v2599
          %3025 = vmatprep.subr.mxu0 %v2608
          %3026 = vmatpush1.msra.mxu0 %v2607
          %3027 = vmatprep.subr.mxu0 %v2616
          %3028 = vmatpush1.msra.mxu0 %v2615
          %3029 = vmatprep.subr.mxu0 %v2624
          %3030 = vmatpush1.msra.mxu0 %v2623
          %3031 = vmatprep.subr.mxu0 %v2632
          %3032 = vmatpush1.msra.mxu0 %v2631
          %3033 = vmatprep.subr.mxu0 %v2640
          %3034 = vmatpush1.msra.mxu0 %v2639
          %3035 = vmatprep.subr.mxu0 %v2648
          %3036 = vmatpush1.msra.mxu0 %v2647
          %3037 = vmatprep.subr.mxu0 %v2656
          %3038 = vmatpush1.msra.mxu0 %v2655
          %3039 = vmatprep.subr.mxu0 %v2664
          %3040 = vmatpush1.msra.mxu0 %v2663
          %3041 = vmatprep.subr.mxu0 %v2672
          %3042 = vmatpush1.msra.mxu0 %v2671
          %3043 = vmatprep.subr.mxu0 %v2680
          %3044 = vmatpush1.msra.mxu0 %v2679
          %3045 = vmatprep.subr.mxu0 %v2688
          %3046 = vmatpush1.msra.mxu0 %v2687
          %3047 = vmatprep.subr.mxu0 %v2696
          %3048 = vmatpush1.msra.mxu0 %v2695
          %3049 = vmatprep.subr.mxu0 %v2704
          %3050 = vmatpush1.msra.mxu0 %v2703
          %3051 = vmatprep.subr.mxu0 %v2712
          %3052 = vmatpush1.msra.mxu0 %v2711
          %3053 = vmatprep.subr.mxu0 %v2720
          %3054 = vmatpush1.msra.mxu0 %v2719
          %3055 = vmatprep.subr.mxu0 %v2728
          %3056 = vmatpush1.msra.mxu0 %v2727
          %3057 = vmatprep.subr.mxu0 %v2736
          %3058 = vmatpush1.msra.mxu0 %v2735
          %3059 = vmatprep.subr.mxu0 %v2744
          %3060 = vmatpush1.msra.mxu0 %v2743
          %3061 = vmatprep.subr.mxu0 %v2752
          %3062 = vmatpush1.msra.mxu0 %v2751
          %3063 = vmatprep.subr.mxu0 %v2760
          %3064 = vmatpush1.msra.mxu0 %v2759
          %3065 = vmatprep.mubr.f32.mxu0 %v2785
          %3066 = vmatmul.mubr.f32.gmra.mrb[0].mxu0 %v2784
          %v3067 = vpop.f32.mrb[0].mxu0
          %v3068 = vadd.f32 0.0, %v3067
          %v3069 = vpop.f32.mrb[0].mxu0
          %v3070 = vadd.f32 0.0, %v3069
          %3071 = vdwg.mxu0
          %v3080 = vcombine.low %v2855, %v2857
          %v3081 = vcombine.low %v2926, %v2928
          %v3083 = vunpack.c.l.s4 1983009808
          %v3084 = vunpack.c.0.s8 %v3083
          %v3085 = vlaneseq
          %v3086 = vshrl.u32 %v3085, 7
          %v3087 = vsub.s32 %v3084, %v3086
          %v3088 = vrot.slane %v3080, %v3087
          %v3090 = vunpack.c.l.s4 1983009808
          %v3091 = vunpack.c.0.s8 %v3090
          %v3092 = vlaneseq
          %v3093 = vshrl.u32 %v3092, 7
          %v3094 = vsub.s32 %v3091, %v3093
          %v3095 = vrot.slane %v3081, %v3094
          %v3096 = vcombine.low %v3088, %v3095
          %v3097 = vcombine.low %v2997, %v2999
          %v3098 = vcombine.low %v3068, %v3070
          %v3100 = vunpack.c.l.s4 1983009808
          %v3101 = vunpack.c.0.s8 %v3100
          %v3102 = vlaneseq
          %v3103 = vshrl.u32 %v3102, 7
          %v3104 = vsub.s32 %v3101, %v3103
          %v3105 = vrot.slane %v3097, %v3104
          %v3107 = vunpack.c.l.s4 1983009808
          %v3108 = vunpack.c.0.s8 %v3107
          %v3109 = vlaneseq
          %v3110 = vshrl.u32 %v3109, 7
          %v3111 = vsub.s32 %v3108, %v3110
          %v3112 = vrot.slane %v3098, %v3111
          %v3113 = vcombine.low %v3105, %v3112
          %v3116 = vadd.f32 %v2775, %v3096
          %v3117 = vadd.f32 %v2776, %v3113
          %v3118 = vxor.u32 %v3116, 2147483648
          %v3119 = vmul.f32 %v3118, 1.442695
          %v3120 = vpow.pop %v3119
          %v3121 = vadd.f32 %v3120, 1.0
          %v3122 = vrcp.pop %v3121
          %v3123 = vmul.f32 1.0, %v3122
          %v3125 = vrot.slane %v3116, 4
          %v3127 = vxor.u32 %v3125, 2147483648
          %v3128 = vmul.f32 %v3127, 1.442695
          %v3129 = vpow.pop %v3128
          %v3130 = vadd.f32 %v3129, 1.0
          %v3131 = vrcp.pop %v3130
          %v3132 = vmul.f32 1.0, %v3131
          %v3133 = vtanh.pop %v3117
          %v3135 = vrot.slane %v3117, 4
          %v3137 = vxor.u32 %v3135, 2147483648
          %v3138 = vmul.f32 %v3137, 1.442695
          %v3139 = vpow.pop %v3138
          %v3140 = vadd.f32 %v3139, 1.0
          %v3141 = vrcp.pop %v3140
          %v3142 = vmul.f32 1.0, %v3141
          %v3143 = vmul.f32 %v3132, %v2768
          %v3144 = vmul.f32 %v3123, %v3133
          %v3145 = vadd.f32 %v3143, %v3144
          %v3146 = vtanh.pop %v3145
          %v3147 = vmul.f32 %v3142, %v3146
          %s3148 = smul.u32 %s2771, 2
          %s3149 = smul.addr %s3148, 2
          %s3150 = scalar_lea.vmem %s214, %s3149 [#allocation3]
          %3151 = vst [vmem:[%s3150] sm:$0xf] %v3147
        $region41: #{generator_forward.5} parent=35 // loop_footer
          %s2766 = sadd.s32 1, %s2762
        $region42: #{generator_forward.5} parent=35 // loop_footer_branch
          %2761 = sbr.rel target = $region38
        $region43: #{generator_forward.5} parent=35 // loop_exit
          _
        %s3152 = sand.u32 %s122, 1
        %s3153 = sand.u32 %s122, 1
        %s3154 = smul.addr %s3153, 32
        %s3155 = scalar_lea.vmem [#allocation3], %s3154
        // Predicated region
        $region44: #{generator_forward.5} parent=35 // pred_check
          %p3156 = pneg %p132
        $region45: #{generator_forward.5} parent=35 // pred_check_branch
          %3158 = sbr.rel (%p3156) target = $region47
        $region46: #{generator_forward.5} parent=35 // pred_region
          %s3159 = smul.u32 2, %s15
          %s3160 = smul.addr %s3159, 2
          %s3161 = scalar_lea.vmem %s4, %s3160
          // Predicated region
          $region48: #{generator_forward.5} parent=46 // pred_check
            _
          $region49: #{generator_forward.5} parent=46 // pred_check_branch
            %3163 = sbr.rel (0) target = $region51
          $region50: #{generator_forward.5} parent=46 // pred_region
            // Predicated region
            $region52: #{generator_forward.5} parent=50 // pred_check
              _
            $region53: #{generator_forward.5} parent=50 // pred_check_branch
              %3165 = sbr.rel target = $region55
            $region54: #{generator_forward.5} parent=50 // pred_region
              // Predicated region
              $region67: #{generator_forward.5} parent=54 // pred_check
                _
              $region68: #{generator_forward.5} parent=54 // pred_check_branch
                %3194 = sbr.rel (0) target = $region70
              $region69: #{generator_forward.5} parent=54 // pred_region
                loop: start=0, step=1, limit=1
                $region71: #{generator_forward.5} parent=69 // loop_pre_header
                  _
                $region72: #{generator_forward.5} parent=69 // loop_header
                  %s3196 = sphi 0, %s3200
                  %p3197 = scmp.ge.s32.totalorder %s3196, 1
                  %s3201 = sphi %s3155, %s3155
                  %s3202 = sphi %s3161, %s3161
                $region73: #{generator_forward.5} parent=69 // loop_header_branch
                  %3199 = sbr.rel (%p3197) target = $region77
                $region74: #{generator_forward.5} parent=69 // loop_body
                  _
                $region75: #{generator_forward.5} parent=69 // loop_footer
                  %s3200 = sadd.s32 1, %s3196
                $region76: #{generator_forward.5} parent=69 // loop_footer_branch
                  %3195 = sbr.rel target = $region72
                $region77: #{generator_forward.5} parent=69 // loop_exit
                  _
                loop: start=0, step=1, limit=1
                $region78: #{generator_forward.5} parent=69 // loop_pre_header
                  _
                $region79: #{generator_forward.5} parent=69 // loop_header
                  %s3205 = sphi 0, %s3209
                  %p3206 = scmp.ge.s32.totalorder %s3205, 1
                  %s3210 = sphi %s3155, %s3155
                  %s3211 = sphi %s3161, %s3161
                $region80: #{generator_forward.5} parent=69 // loop_header_branch
                  %3208 = sbr.rel (%p3206) target = $region84
                $region81: #{generator_forward.5} parent=69 // loop_body
                  %v3212 = vld [vmem:[%s3210] sm:$0xf]
                  %3213 = vst [vmem:[%s3211] sm:$0xf] %v3212
                  %v3214 = vld [vmem:[%s3210 + $0x4] sm:$0xf]
                  %3215 = vst [vmem:[%s3211 + $0x8] sm:$0xf] %v3214
                  %v3216 = vld [vmem:[%s3210 + $0x8] sm:$0xf]
                  %3217 = vst [vmem:[%s3211 + $0x10] sm:$0xf] %v3216
                  %v3218 = vld [vmem:[%s3210 + $0xc] sm:$0xf]
                  %3219 = vst [vmem:[%s3211 + $0x18] sm:$0xf] %v3218
                  %v3220 = vld [vmem:[%s3210 + $0x10] sm:$0xf]
                  %3221 = vst [vmem:[%s3211 + $0x20] sm:$0xf] %v3220
                  %v3222 = vld [vmem:[%s3210 + $0x14] sm:$0xf]
                  %3223 = vst [vmem:[%s3211 + $0x28] sm:$0xf] %v3222
                  %v3224 = vld [vmem:[%s3210 + $0x18] sm:$0xf]
                  %3225 = vst [vmem:[%s3211 + $0x30] sm:$0xf] %v3224
                  %v3226 = vld [vmem:[%s3210 + $0x1c] sm:$0xf]
                  %3227 = vst [vmem:[%s3211 + $0x38] sm:$0xf] %v3226
                $region82: #{generator_forward.5} parent=69 // loop_footer
                  %s3209 = sadd.s32 1, %s3205
                $region83: #{generator_forward.5} parent=69 // loop_footer_branch
                  %3204 = sbr.rel target = $region79
                $region84: #{generator_forward.5} parent=69 // loop_exit
                  _
              $region70: #{generator_forward.5} parent=54 // pred_fallthru
                _
            $region55: #{generator_forward.5} parent=50 // pred_fallthru
              _
            // Predicated region
            $region56: #{generator_forward.5} parent=50 // pred_check
              _
            $region57: #{generator_forward.5} parent=50 // pred_check_branch
              %3167 = sbr.rel (0) target = $region59
            $region58: #{generator_forward.5} parent=50 // pred_region
              loop: start=0, step=1, limit=1
              $region60: #{generator_forward.5} parent=58 // loop_pre_header
                _
              $region61: #{generator_forward.5} parent=58 // loop_header
                %s3170 = sphi 0, %s3174
                %p3171 = scmp.ge.s32.totalorder %s3170, 1
                %s3175 = sphi %s3155, %s3155
                %s3176 = sphi %s3161, %s3161
              $region62: #{generator_forward.5} parent=58 // loop_header_branch
                %3173 = sbr.rel (%p3171) target = $region66
              $region63: #{generator_forward.5} parent=58 // loop_body
                %v3177 = vld [vmem:[%s3175] sm:$0xf]
                %3178 = vst [vmem:[%s3176] sm:$0xf] %v3177
                %v3179 = vld [vmem:[%s3175 + $0x4] sm:$0xf]
                %3180 = vst [vmem:[%s3176 + $0x8] sm:$0xf] %v3179
                %v3181 = vld [vmem:[%s3175 + $0x8] sm:$0xf]
                %3182 = vst [vmem:[%s3176 + $0x10] sm:$0xf] %v3181
                %v3183 = vld [vmem:[%s3175 + $0xc] sm:$0xf]
                %3184 = vst [vmem:[%s3176 + $0x18] sm:$0xf] %v3183
                %v3185 = vld [vmem:[%s3175 + $0x10] sm:$0xf]
                %3186 = vst [vmem:[%s3176 + $0x20] sm:$0xf] %v3185
                %v3187 = vld [vmem:[%s3175 + $0x14] sm:$0xf]
                %3188 = vst [vmem:[%s3176 + $0x28] sm:$0xf] %v3187
                %v3189 = vld [vmem:[%s3175 + $0x18] sm:$0xf]
                %3190 = vst [vmem:[%s3176 + $0x30] sm:$0xf] %v3189
                %v3191 = vld [vmem:[%s3175 + $0x1c] sm:$0xf]
                %3192 = vst [vmem:[%s3176 + $0x38] sm:$0xf] %v3191
              $region64: #{generator_forward.5} parent=58 // loop_footer
                %s3174 = sadd.s32 1, %s3170
              $region65: #{generator_forward.5} parent=58 // loop_footer_branch
                %3169 = sbr.rel target = $region61
              $region66: #{generator_forward.5} parent=58 // loop_exit
                _
            $region59: #{generator_forward.5} parent=50 // pred_fallthru
              _
          $region51: #{generator_forward.5} parent=46 // pred_fallthru
            _
          %3228 = vnop
        $region47: #{generator_forward.5} parent=35 // pred_fallthru
          _
      $region36: #{generator_forward.5} parent=5 // pred_fallthru
        _
      %p3229 = scmp.le.s32.totalorder 2, %s10
      // Predicated region
      $region85: #{generator_forward.5} parent=5 // pred_check
        %p3230 = pneg %p3229
      $region86: #{generator_forward.5} parent=5 // pred_check_branch
        %3232 = sbr.rel (%p3230) target = $region88
      $region87: #{generator_forward.5} parent=5 // pred_region
        %s3233 = ssub.s32 %s10, 2
        // Predicated region
        $region89: #{generator_forward.5} parent=87 // pred_check
          %p3234 = pneg %p138
        $region90: #{generator_forward.5} parent=87 // pred_check_branch
          %3236 = sbr.rel (%p3234) target = $region92
        $region91: #{generator_forward.5} parent=87 // pred_region
          %s3237 = sand.u32 %s123, 1
          %s3238 = sand.u32 %s123, 1
          %s3239 = smul.addr %s3238, 32
          %s3240 = scalar_lea.vmem [#allocation3], %s3239
        $region92: #{generator_forward.5} parent=87 // pred_fallthru
          _
      $region88: #{generator_forward.5} parent=5 // pred_fallthru
        _
    $region6: #{generator_forward.5} parent=1 // loop_footer
      %s14 = sadd.s32 1, %s10
    $region7: #{generator_forward.5} parent=1 // loop_footer_branch
      %9 = sbr.rel target = $region3
    $region8: #{generator_forward.5} parent=1 // loop_exit
      _

// kernel: generator_forward.7
$region0: #{generator_forward.7}
  #allocation0 [shape = 'u32[]', space=smem, size = 0x4, offset = 0x4, fixed_abs, tag = 'smem constant byte address 0x4 - core index']
  #allocation1 [shape = 'u32[144,128]{1,0:T(1,128)}', space=vmem, size = 0x12000, scoped, tag = 'internal scratch']
  %s0 = inlined_call_operand.vmem [shape: f32[16,512], index: 0, kind: input, shape index: {}]
  %s1 = inlined_call_operand.vmem [shape: f32[16,768], index: 1, kind: input, shape index: {}]
  %s2 = inlined_call_operand.vmem [shape: bf16[512,384], index: 2, kind: input, shape index: {}]
  %s3 = inlined_call_operand.vmem [shape: f32[1,384], index: 3, kind: input, shape index: {}]
  %s4 = inlined_call_operand.vmem [shape: bf16[384,384], index: 4, kind: input, shape index: {}]
  %s5 = inlined_call_operand.vmem [shape: f32[1,384], index: 5, kind: input, shape index: {}]
  %s6 = inlined_call_operand.vmem [shape: bf16[384,512], index: 6, kind: input, shape index: {}]
  %s7 = inlined_call_operand.vmem [shape: bf16[384,512], index: 7, kind: input, shape index: {}]
  %s8 = inlined_call_operand.vmem [shape: f32[16,512], index: 8, kind: output, shape index: {}]
  %s9 = sld [smem:[#allocation0]]
  $region42: #{generator_forward.7} parent=0
    _
  %s11 = ssub.s32 1, %s9
  %s12 = scalar_select 0, %s11, %s9
  // Predicated region
  $region2: #{generator_forward.7} parent=0 // pred_check
    _
  $region3: #{generator_forward.7} parent=0 // pred_check_branch
    %14 = sbr.rel (0) target = $region5
  $region4: #{generator_forward.7} parent=0 // pred_region
    _
  $region5: #{generator_forward.7} parent=0 // pred_fallthru
    _
  // Predicated region
  $region6: #{generator_forward.7} parent=0 // pred_check
    _
  $region7: #{generator_forward.7} parent=0 // pred_check_branch
    %16 = sbr.rel (0) target = $region9
  $region8: #{generator_forward.7} parent=0 // pred_region
    _
  $region9: #{generator_forward.7} parent=0 // pred_fallthru
    _
  // Predicated region
  $region10: #{generator_forward.7} parent=0 // pred_check
    _
  $region11: #{generator_forward.7} parent=0 // pred_check_branch
    %18 = sbr.rel (0) target = $region13
  $region12: #{generator_forward.7} parent=0 // pred_region
    _
  $region13: #{generator_forward.7} parent=0 // pred_fallthru
    _
  // Predicated region
  $region14: #{generator_forward.7} parent=0 // pred_check
    _
  $region15: #{generator_forward.7} parent=0 // pred_check_branch
    %20 = sbr.rel (0) target = $region17
  $region16: #{generator_forward.7} parent=0 // pred_region
    _
  $region17: #{generator_forward.7} parent=0 // pred_fallthru
    _
  // Predicated region
  $region18: #{generator_forward.7} parent=0 // pred_check
    _
  $region19: #{generator_forward.7} parent=0 // pred_check_branch
    %22 = sbr.rel (0) target = $region21
  $region20: #{generator_forward.7} parent=0 // pred_region
    _
  $region21: #{generator_forward.7} parent=0 // pred_fallthru
    _
  // Predicated region
  $region22: #{generator_forward.7} parent=0 // pred_check
    _
  $region23: #{generator_forward.7} parent=0 // pred_check_branch
    %24 = sbr.rel (0) target = $region25
  $region24: #{generator_forward.7} parent=0 // pred_region
    _
  $region25: #{generator_forward.7} parent=0 // pred_fallthru
    _
  // Predicated region
  $region26: #{generator_forward.7} parent=0 // pred_check
    _
  $region27: #{generator_forward.7} parent=0 // pred_check_branch
    %26 = sbr.rel (0) target = $region29
  $region28: #{generator_forward.7} parent=0 // pred_region
    _
  $region29: #{generator_forward.7} parent=0 // pred_fallthru
    _
  // Predicated region
  $region30: #{generator_forward.7} parent=0 // pred_check
    _
  $region31: #{generator_forward.7} parent=0 // pred_check_branch
    %28 = sbr.rel (0) target = $region33
  $region32: #{generator_forward.7} parent=0 // pred_region
    _
  $region33: #{generator_forward.7} parent=0 // pred_fallthru
    _
  %v30 = vld [vmem:[%s0] sm:$0xff]
  %v31 = vld [vmem:[%s0 + $0x8] sm:$0xff]
  %v32 = vld [vmem:[%s0 + $0x10] sm:$0xff]
  %v33 = vld [vmem:[%s0 + $0x18] sm:$0xff]
  %v34 = vld [vmem:[%s0 + $0x20] sm:$0xff]
  %v35 = vld [vmem:[%s0 + $0x28] sm:$0xff]
  %v36 = vld [vmem:[%s0 + $0x30] sm:$0xff]
  %v37 = vld [vmem:[%s0 + $0x38] sm:$0xff]
  %v38 = vpack.c.bf16 %v34, %v30
  %v39 = vpack.c.bf16 %v35, %v31
  %v40 = vpack.c.bf16 %v36, %v32
  %v41 = vpack.c.bf16 %v37, %v33
  %v42 = vld [vmem:[%s2] sm:$0xff]
  %v43 = vld [vmem:[%s2 + $0x8] sm:$0xf]
  %v44 = vld [vmem:[%s2 + $0xc] sm:$0xff]
  %v45 = vld [vmem:[%s2 + $0x14] sm:$0xf]
  %v46 = vld [vmem:[%s2 + $0x18] sm:$0xff]
  %v47 = vld [vmem:[%s2 + $0x20] sm:$0xf]
  %v48 = vld [vmem:[%s2 + $0x24] sm:$0xff]
  %v49 = vld [vmem:[%s2 + $0x2c] sm:$0xf]
  %v50 = vld [vmem:[%s2 + $0x30] sm:$0xff]
  %v51 = vld [vmem:[%s2 + $0x38] sm:$0xf]
  %v52 = vld [vmem:[%s2 + $0x3c] sm:$0xff]
  %v53 = vld [vmem:[%s2 + $0x44] sm:$0xf]
  %v54 = vld [vmem:[%s2 + $0x48] sm:$0xff]
  %v55 = vld [vmem:[%s2 + $0x50] sm:$0xf]
  %v56 = vld [vmem:[%s2 + $0x54] sm:$0xff]
  %v57 = vld [vmem:[%s2 + $0x5c] sm:$0xf]
  %v58 = vld [vmem:[%s2 + $0x60] sm:$0xff]
  %v59 = vld [vmem:[%s2 + $0x68] sm:$0xf]
  %v60 = vld [vmem:[%s2 + $0x6c] sm:$0xff]
  %v61 = vld [vmem:[%s2 + $0x74] sm:$0xf]
  %v62 = vld [vmem:[%s2 + $0x78] sm:$0xff]
  %v63 = vld [vmem:[%s2 + $0x80] sm:$0xf]
  %v64 = vld [vmem:[%s2 + $0x84] sm:$0xff]
  %v65 = vld [vmem:[%s2 + $0x8c] sm:$0xf]
  %v66 = vld [vmem:[%s2 + $0x90] sm:$0xff]
  %v67 = vld [vmem:[%s2 + $0x98] sm:$0xf]
  %v68 = vld [vmem:[%s2 + $0x9c] sm:$0xff]
  %v69 = vld [vmem:[%s2 + $0xa4] sm:$0xf]
  %v70 = vld [vmem:[%s2 + $0xa8] sm:$0xff]
  %v71 = vld [vmem:[%s2 + $0xb0] sm:$0xf]
  %v72 = vld [vmem:[%s2 + $0xb4] sm:$0xff]
  %v73 = vld [vmem:[%s2 + $0xbc] sm:$0xf]
  %v74 = vld [vmem:[%s2 + $0xc0] sm:$0xff]
  %v75 = vld [vmem:[%s2 + $0xc8] sm:$0xf]
  %v76 = vld [vmem:[%s2 + $0xcc] sm:$0xff]
  %v77 = vld [vmem:[%s2 + $0xd4] sm:$0xf]
  %v78 = vld [vmem:[%s2 + $0xd8] sm:$0xff]
  %v79 = vld [vmem:[%s2 + $0xe0] sm:$0xf]
  %v80 = vld [vmem:[%s2 + $0xe4] sm:$0xff]
  %v81 = vld [vmem:[%s2 + $0xec] sm:$0xf]
  %v82 = vld [vmem:[%s2 + $0xf0] sm:$0xff]
  %v83 = vld [vmem:[%s2 + $0xf8] sm:$0xf]
  %v84 = vld [vmem:[%s2 + $0xfc] sm:$0xff]
  %v85 = vld [vmem:[%s2 + $0x104] sm:$0xf]
  %v86 = vld [vmem:[%s2 + $0x108] sm:$0xff]
  %v87 = vld [vmem:[%s2 + $0x110] sm:$0xf]
  %v88 = vld [vmem:[%s2 + $0x114] sm:$0xff]
  %v89 = vld [vmem:[%s2 + $0x11c] sm:$0xf]
  %v90 = vld [vmem:[%s2 + $0x120] sm:$0xff]
  %v91 = vld [vmem:[%s2 + $0x128] sm:$0xf]
  %v92 = vld [vmem:[%s2 + $0x12c] sm:$0xff]
  %v93 = vld [vmem:[%s2 + $0x134] sm:$0xf]
  %v94 = vld [vmem:[%s2 + $0x138] sm:$0xff]
  %v95 = vld [vmem:[%s2 + $0x140] sm:$0xf]
  %v96 = vld [vmem:[%s2 + $0x144] sm:$0xff]
  %v97 = vld [vmem:[%s2 + $0x14c] sm:$0xf]
  %v98 = vld [vmem:[%s2 + $0x150] sm:$0xff]
  %v99 = vld [vmem:[%s2 + $0x158] sm:$0xf]
  %v100 = vld [vmem:[%s2 + $0x15c] sm:$0xff]
  %v101 = vld [vmem:[%s2 + $0x164] sm:$0xf]
  %v102 = vld [vmem:[%s2 + $0x168] sm:$0xff]
  %v103 = vld [vmem:[%s2 + $0x170] sm:$0xf]
  %v104 = vld [vmem:[%s2 + $0x174] sm:$0xff]
  %v105 = vld [vmem:[%s2 + $0x17c] sm:$0xf]
  %v106 = vld [vmem:[%s2 + $0x180] sm:$0xff]
  %v107 = vld [vmem:[%s2 + $0x188] sm:$0xf]
  %v108 = vld [vmem:[%s2 + $0x18c] sm:$0xff]
  %v109 = vld [vmem:[%s2 + $0x194] sm:$0xf]
  %v110 = vld [vmem:[%s2 + $0x198] sm:$0xff]
  %v111 = vld [vmem:[%s2 + $0x1a0] sm:$0xf]
  %v112 = vld [vmem:[%s2 + $0x1a4] sm:$0xff]
  %v113 = vld [vmem:[%s2 + $0x1ac] sm:$0xf]
  %v114 = vld [vmem:[%s2 + $0x1b0] sm:$0xff]
  %v115 = vld [vmem:[%s2 + $0x1b8] sm:$0xf]
  %v116 = vld [vmem:[%s2 + $0x1bc] sm:$0xff]
  %v117 = vld [vmem:[%s2 + $0x1c4] sm:$0xf]
  %v118 = vld [vmem:[%s2 + $0x1c8] sm:$0xff]
  %v119 = vld [vmem:[%s2 + $0x1d0] sm:$0xf]
  %v120 = vld [vmem:[%s2 + $0x1d4] sm:$0xff]
  %v121 = vld [vmem:[%s2 + $0x1dc] sm:$0xf]
  %v122 = vld [vmem:[%s2 + $0x1e0] sm:$0xff]
  %v123 = vld [vmem:[%s2 + $0x1e8] sm:$0xf]
  %v124 = vld [vmem:[%s2 + $0x1ec] sm:$0xff]
  %v125 = vld [vmem:[%s2 + $0x1f4] sm:$0xf]
  %v126 = vld [vmem:[%s2 + $0x1f8] sm:$0xff]
  %v127 = vld [vmem:[%s2 + $0x200] sm:$0xf]
  %v128 = vld [vmem:[%s2 + $0x204] sm:$0xff]
  %v129 = vld [vmem:[%s2 + $0x20c] sm:$0xf]
  %v130 = vld [vmem:[%s2 + $0x210] sm:$0xff]
  %v131 = vld [vmem:[%s2 + $0x218] sm:$0xf]
  %v132 = vld [vmem:[%s2 + $0x21c] sm:$0xff]
  %v133 = vld [vmem:[%s2 + $0x224] sm:$0xf]
  %v134 = vld [vmem:[%s2 + $0x228] sm:$0xff]
  %v135 = vld [vmem:[%s2 + $0x230] sm:$0xf]
  %v136 = vld [vmem:[%s2 + $0x234] sm:$0xff]
  %v137 = vld [vmem:[%s2 + $0x23c] sm:$0xf]
  %v138 = vld [vmem:[%s2 + $0x240] sm:$0xff]
  %v139 = vld [vmem:[%s2 + $0x248] sm:$0xf]
  %v140 = vld [vmem:[%s2 + $0x24c] sm:$0xff]
  %v141 = vld [vmem:[%s2 + $0x254] sm:$0xf]
  %v142 = vld [vmem:[%s2 + $0x258] sm:$0xff]
  %v143 = vld [vmem:[%s2 + $0x260] sm:$0xf]
  %v144 = vld [vmem:[%s2 + $0x264] sm:$0xff]
  %v145 = vld [vmem:[%s2 + $0x26c] sm:$0xf]
  %v146 = vld [vmem:[%s2 + $0x270] sm:$0xff]
  %v147 = vld [vmem:[%s2 + $0x278] sm:$0xf]
  %v148 = vld [vmem:[%s2 + $0x27c] sm:$0xff]
  %v149 = vld [vmem:[%s2 + $0x284] sm:$0xf]
  %v150 = vld [vmem:[%s2 + $0x288] sm:$0xff]
  %v151 = vld [vmem:[%s2 + $0x290] sm:$0xf]
  %v152 = vld [vmem:[%s2 + $0x294] sm:$0xff]
  %v153 = vld [vmem:[%s2 + $0x29c] sm:$0xf]
  %v154 = vld [vmem:[%s2 + $0x2a0] sm:$0xff]
  %v155 = vld [vmem:[%s2 + $0x2a8] sm:$0xf]
  %v156 = vld [vmem:[%s2 + $0x2ac] sm:$0xff]
  %v157 = vld [vmem:[%s2 + $0x2b4] sm:$0xf]
  %v158 = vld [vmem:[%s2 + $0x2b8] sm:$0xff]
  %v159 = vld [vmem:[%s2 + $0x2c0] sm:$0xf]
  %v160 = vld [vmem:[%s2 + $0x2c4] sm:$0xff]
  %v161 = vld [vmem:[%s2 + $0x2cc] sm:$0xf]
  %v162 = vld [vmem:[%s2 + $0x2d0] sm:$0xff]
  %v163 = vld [vmem:[%s2 + $0x2d8] sm:$0xf]
  %v164 = vld [vmem:[%s2 + $0x2dc] sm:$0xff]
  %v165 = vld [vmem:[%s2 + $0x2e4] sm:$0xf]
  %v166 = vld [vmem:[%s2 + $0x2e8] sm:$0xff]
  %v167 = vld [vmem:[%s2 + $0x2f0] sm:$0xf]
  %v168 = vld [vmem:[%s2 + $0x2f4] sm:$0xff]
  %v169 = vld [vmem:[%s2 + $0x2fc] sm:$0xf]
  %v170 = vld [vmem:[%s3] sm:$0x7]
  %v172 = vlaneseq
  %v173 = vshrl.u32 %v172, 7
  %v174 = vsub.s32 0, %v173
  %v175 = vrot.slane %v170, %v174
  %v176 = vlaneseq
  %v177 = vshrl.u32 %v176, 7
  %v178 = vsub.s32 1, %v177
  %v179 = vrot.slane %v170, %v178
  %v180 = vlaneseq
  %v181 = vshrl.u32 %v180, 7
  %v182 = vsub.s32 2, %v181
  %v183 = vrot.slane %v170, %v182
  %v315 = vunpack.c.l.b16 %v42
  %v316 = vunpack.c.h.b16 %v42
  %v317 = vunpack.c.l.b16 %v43
  %v318 = vunpack.c.l.b16 %v44
  %v319 = vunpack.c.h.b16 %v44
  %v320 = vunpack.c.l.b16 %v45
  %v321 = vunpack.c.l.b16 %v46
  %v322 = vunpack.c.h.b16 %v46
  %v323 = vunpack.c.l.b16 %v47
  %v324 = vunpack.c.l.b16 %v48
  %v325 = vunpack.c.h.b16 %v48
  %v326 = vunpack.c.l.b16 %v49
  %v327 = vunpack.c.l.b16 %v50
  %v328 = vunpack.c.h.b16 %v50
  %v329 = vunpack.c.l.b16 %v51
  %v330 = vunpack.c.l.b16 %v52
  %v331 = vunpack.c.h.b16 %v52
  %v332 = vunpack.c.l.b16 %v53
  %v333 = vunpack.c.l.b16 %v54
  %v334 = vunpack.c.h.b16 %v54
  %v335 = vunpack.c.l.b16 %v55
  %v336 = vunpack.c.l.b16 %v56
  %v337 = vunpack.c.h.b16 %v56
  %v338 = vunpack.c.l.b16 %v57
  %v339 = vunpack.c.l.b16 %v58
  %v340 = vunpack.c.h.b16 %v58
  %v341 = vunpack.c.l.b16 %v59
  %v342 = vunpack.c.l.b16 %v60
  %v343 = vunpack.c.h.b16 %v60
  %v344 = vunpack.c.l.b16 %v61
  %v345 = vunpack.c.l.b16 %v62
  %v346 = vunpack.c.h.b16 %v62
  %v347 = vunpack.c.l.b16 %v63
  %v348 = vunpack.c.l.b16 %v64
  %v349 = vunpack.c.h.b16 %v64
  %v350 = vunpack.c.l.b16 %v65
  %v351 = vunpack.c.l.b16 %v66
  %v352 = vunpack.c.h.b16 %v66
  %v353 = vunpack.c.l.b16 %v67
  %v354 = vunpack.c.l.b16 %v68
  %v355 = vunpack.c.h.b16 %v68
  %v356 = vunpack.c.l.b16 %v69
  %v357 = vunpack.c.l.b16 %v70
  %v358 = vunpack.c.h.b16 %v70
  %v359 = vunpack.c.l.b16 %v71
  %v360 = vunpack.c.l.b16 %v72
  %v361 = vunpack.c.h.b16 %v72
  %v362 = vunpack.c.l.b16 %v73
  %v363 = vunpack.c.l.b16 %v74
  %v364 = vunpack.c.h.b16 %v74
  %v365 = vunpack.c.l.b16 %v75
  %v366 = vunpack.c.l.b16 %v76
  %v367 = vunpack.c.h.b16 %v76
  %v368 = vunpack.c.l.b16 %v77
  %v369 = vunpack.c.l.b16 %v78
  %v370 = vunpack.c.h.b16 %v78
  %v371 = vunpack.c.l.b16 %v79
  %v372 = vunpack.c.l.b16 %v80
  %v373 = vunpack.c.h.b16 %v80
  %v374 = vunpack.c.l.b16 %v81
  %v375 = vunpack.c.l.b16 %v82
  %v376 = vunpack.c.h.b16 %v82
  %v377 = vunpack.c.l.b16 %v83
  %v378 = vunpack.c.l.b16 %v84
  %v379 = vunpack.c.h.b16 %v84
  %v380 = vunpack.c.l.b16 %v85
  %v381 = vunpack.c.l.b16 %v86
  %v382 = vunpack.c.h.b16 %v86
  %v383 = vunpack.c.l.b16 %v87
  %v384 = vunpack.c.l.b16 %v88
  %v385 = vunpack.c.h.b16 %v88
  %v386 = vunpack.c.l.b16 %v89
  %v387 = vunpack.c.l.b16 %v90
  %v388 = vunpack.c.h.b16 %v90
  %v389 = vunpack.c.l.b16 %v91
  %v390 = vunpack.c.l.b16 %v92
  %v391 = vunpack.c.h.b16 %v92
  %v392 = vunpack.c.l.b16 %v93
  %v393 = vunpack.c.l.b16 %v94
  %v394 = vunpack.c.h.b16 %v94
  %v395 = vunpack.c.l.b16 %v95
  %v396 = vunpack.c.l.b16 %v96
  %v397 = vunpack.c.h.b16 %v96
  %v398 = vunpack.c.l.b16 %v97
  %v399 = vunpack.c.l.b16 %v98
  %v400 = vunpack.c.h.b16 %v98
  %v401 = vunpack.c.l.b16 %v99
  %v402 = vunpack.c.l.b16 %v100
  %v403 = vunpack.c.h.b16 %v100
  %v404 = vunpack.c.l.b16 %v101
  %v405 = vunpack.c.l.b16 %v102
  %v406 = vunpack.c.h.b16 %v102
  %v407 = vunpack.c.l.b16 %v103
  %v408 = vunpack.c.l.b16 %v104
  %v409 = vunpack.c.h.b16 %v104
  %v410 = vunpack.c.l.b16 %v105
  %v411 = vunpack.c.l.b16 %v106
  %v412 = vunpack.c.h.b16 %v106
  %v413 = vunpack.c.l.b16 %v107
  %v414 = vunpack.c.l.b16 %v108
  %v415 = vunpack.c.h.b16 %v108
  %v416 = vunpack.c.l.b16 %v109
  %v417 = vunpack.c.l.b16 %v110
  %v418 = vunpack.c.h.b16 %v110
  %v419 = vunpack.c.l.b16 %v111
  %v420 = vunpack.c.l.b16 %v112
  %v421 = vunpack.c.h.b16 %v112
  %v422 = vunpack.c.l.b16 %v113
  %v423 = vunpack.c.l.b16 %v114
  %v424 = vunpack.c.h.b16 %v114
  %v425 = vunpack.c.l.b16 %v115
  %v426 = vunpack.c.l.b16 %v116
  %v427 = vunpack.c.h.b16 %v116
  %v428 = vunpack.c.l.b16 %v117
  %v429 = vunpack.c.l.b16 %v118
  %v430 = vunpack.c.h.b16 %v118
  %v431 = vunpack.c.l.b16 %v119
  %v432 = vunpack.c.l.b16 %v120
  %v433 = vunpack.c.h.b16 %v120
  %v434 = vunpack.c.l.b16 %v121
  %v435 = vunpack.c.l.b16 %v122
  %v436 = vunpack.c.h.b16 %v122
  %v437 = vunpack.c.l.b16 %v123
  %v438 = vunpack.c.l.b16 %v124
  %v439 = vunpack.c.h.b16 %v124
  %v440 = vunpack.c.l.b16 %v125
  %v441 = vunpack.c.l.b16 %v126
  %v442 = vunpack.c.h.b16 %v126
  %v443 = vunpack.c.l.b16 %v127
  %v444 = vunpack.c.l.b16 %v128
  %v445 = vunpack.c.h.b16 %v128
  %v446 = vunpack.c.l.b16 %v129
  %v447 = vunpack.c.l.b16 %v130
  %v448 = vunpack.c.h.b16 %v130
  %v449 = vunpack.c.l.b16 %v131
  %v450 = vunpack.c.l.b16 %v132
  %v451 = vunpack.c.h.b16 %v132
  %v452 = vunpack.c.l.b16 %v133
  %v453 = vunpack.c.l.b16 %v134
  %v454 = vunpack.c.h.b16 %v134
  %v455 = vunpack.c.l.b16 %v135
  %v456 = vunpack.c.l.b16 %v136
  %v457 = vunpack.c.h.b16 %v136
  %v458 = vunpack.c.l.b16 %v137
  %v459 = vunpack.c.l.b16 %v138
  %v460 = vunpack.c.h.b16 %v138
  %v461 = vunpack.c.l.b16 %v139
  %v462 = vunpack.c.l.b16 %v140
  %v463 = vunpack.c.h.b16 %v140
  %v464 = vunpack.c.l.b16 %v141
  %v465 = vunpack.c.l.b16 %v142
  %v466 = vunpack.c.h.b16 %v142
  %v467 = vunpack.c.l.b16 %v143
  %v468 = vunpack.c.l.b16 %v144
  %v469 = vunpack.c.h.b16 %v144
  %v470 = vunpack.c.l.b16 %v145
  %v471 = vunpack.c.l.b16 %v146
  %v472 = vunpack.c.h.b16 %v146
  %v473 = vunpack.c.l.b16 %v147
  %v474 = vunpack.c.l.b16 %v148
  %v475 = vunpack.c.h.b16 %v148
  %v476 = vunpack.c.l.b16 %v149
  %v477 = vunpack.c.l.b16 %v150
  %v478 = vunpack.c.h.b16 %v150
  %v479 = vunpack.c.l.b16 %v151
  %v480 = vunpack.c.l.b16 %v152
  %v481 = vunpack.c.h.b16 %v152
  %v482 = vunpack.c.l.b16 %v153
  %v483 = vunpack.c.l.b16 %v154
  %v484 = vunpack.c.h.b16 %v154
  %v485 = vunpack.c.l.b16 %v155
  %v486 = vunpack.c.l.b16 %v156
  %v487 = vunpack.c.h.b16 %v156
  %v488 = vunpack.c.l.b16 %v157
  %v489 = vunpack.c.l.b16 %v158
  %v490 = vunpack.c.h.b16 %v158
  %v491 = vunpack.c.l.b16 %v159
  %v492 = vunpack.c.l.b16 %v160
  %v493 = vunpack.c.h.b16 %v160
  %v494 = vunpack.c.l.b16 %v161
  %v495 = vunpack.c.l.b16 %v162
  %v496 = vunpack.c.h.b16 %v162
  %v497 = vunpack.c.l.b16 %v163
  %v498 = vunpack.c.l.b16 %v164
  %v499 = vunpack.c.h.b16 %v164
  %v500 = vunpack.c.l.b16 %v165
  %v501 = vunpack.c.l.b16 %v166
  %v502 = vunpack.c.h.b16 %v166
  %v503 = vunpack.c.l.b16 %v167
  %v504 = vunpack.c.l.b16 %v168
  %v505 = vunpack.c.h.b16 %v168
  %v506 = vunpack.c.l.b16 %v169
  %v507 = vpack.c.b16 %v318, %v315
  %v508 = vpack.c.b16 %v319, %v316
  %v509 = vpack.c.b16 %v320, %v317
  %v510 = vpack.c.b16 %v324, %v321
  %v511 = vpack.c.b16 %v325, %v322
  %v512 = vpack.c.b16 %v326, %v323
  %v513 = vpack.c.b16 %v330, %v327
  %v514 = vpack.c.b16 %v331, %v328
  %v515 = vpack.c.b16 %v332, %v329
  %v516 = vpack.c.b16 %v336, %v333
  %v517 = vpack.c.b16 %v337, %v334
  %v518 = vpack.c.b16 %v338, %v335
  %v519 = vpack.c.b16 %v342, %v339
  %v520 = vpack.c.b16 %v343, %v340
  %v521 = vpack.c.b16 %v344, %v341
  %v522 = vpack.c.b16 %v348, %v345
  %v523 = vpack.c.b16 %v349, %v346
  %v524 = vpack.c.b16 %v350, %v347
  %v525 = vpack.c.b16 %v354, %v351
  %v526 = vpack.c.b16 %v355, %v352
  %v527 = vpack.c.b16 %v356, %v353
  %v528 = vpack.c.b16 %v360, %v357
  %v529 = vpack.c.b16 %v361, %v358
  %v530 = vpack.c.b16 %v362, %v359
  %v531 = vpack.c.b16 %v366, %v363
  %v532 = vpack.c.b16 %v367, %v364
  %v533 = vpack.c.b16 %v368, %v365
  %v534 = vpack.c.b16 %v372, %v369
  %v535 = vpack.c.b16 %v373, %v370
  %v536 = vpack.c.b16 %v374, %v371
  %v537 = vpack.c.b16 %v378, %v375
  %v538 = vpack.c.b16 %v379, %v376
  %v539 = vpack.c.b16 %v380, %v377
  %v540 = vpack.c.b16 %v384, %v381
  %v541 = vpack.c.b16 %v385, %v382
  %v542 = vpack.c.b16 %v386, %v383
  %v543 = vpack.c.b16 %v390, %v387
  %v544 = vpack.c.b16 %v391, %v388
  %v545 = vpack.c.b16 %v392, %v389
  %v546 = vpack.c.b16 %v396, %v393
  %v547 = vpack.c.b16 %v397, %v394
  %v548 = vpack.c.b16 %v398, %v395
  %v549 = vpack.c.b16 %v402, %v399
  %v550 = vpack.c.b16 %v403, %v400
  %v551 = vpack.c.b16 %v404, %v401
  %v552 = vpack.c.b16 %v408, %v405
  %v553 = vpack.c.b16 %v409, %v406
  %v554 = vpack.c.b16 %v410, %v407
  %v555 = vpack.c.b16 %v414, %v411
  %v556 = vpack.c.b16 %v415, %v412
  %v557 = vpack.c.b16 %v416, %v413
  %v558 = vpack.c.b16 %v420, %v417
  %v559 = vpack.c.b16 %v421, %v418
  %v560 = vpack.c.b16 %v422, %v419
  %v561 = vpack.c.b16 %v426, %v423
  %v562 = vpack.c.b16 %v427, %v424
  %v563 = vpack.c.b16 %v428, %v425
  %v564 = vpack.c.b16 %v432, %v429
  %v565 = vpack.c.b16 %v433, %v430
  %v566 = vpack.c.b16 %v434, %v431
  %v567 = vpack.c.b16 %v438, %v435
  %v568 = vpack.c.b16 %v439, %v436
  %v569 = vpack.c.b16 %v440, %v437
  %v570 = vpack.c.b16 %v444, %v441
  %v571 = vpack.c.b16 %v445, %v442
  %v572 = vpack.c.b16 %v446, %v443
  %v573 = vpack.c.b16 %v450, %v447
  %v574 = vpack.c.b16 %v451, %v448
  %v575 = vpack.c.b16 %v452, %v449
  %v576 = vpack.c.b16 %v456, %v453
  %v577 = vpack.c.b16 %v457, %v454
  %v578 = vpack.c.b16 %v458, %v455
  %v579 = vpack.c.b16 %v462, %v459
  %v580 = vpack.c.b16 %v463, %v460
  %v581 = vpack.c.b16 %v464, %v461
  %v582 = vpack.c.b16 %v468, %v465
  %v583 = vpack.c.b16 %v469, %v466
  %v584 = vpack.c.b16 %v470, %v467
  %v585 = vpack.c.b16 %v474, %v471
  %v586 = vpack.c.b16 %v475, %v472
  %v587 = vpack.c.b16 %v476, %v473
  %v588 = vpack.c.b16 %v480, %v477
  %v589 = vpack.c.b16 %v481, %v478
  %v590 = vpack.c.b16 %v482, %v479
  %v591 = vpack.c.b16 %v486, %v483
  %v592 = vpack.c.b16 %v487, %v484
  %v593 = vpack.c.b16 %v488, %v485
  %v594 = vpack.c.b16 %v492, %v489
  %v595 = vpack.c.b16 %v493, %v490
  %v596 = vpack.c.b16 %v494, %v491
  %v597 = vpack.c.b16 %v498, %v495
  %v598 = vpack.c.b16 %v499, %v496
  %v599 = vpack.c.b16 %v500, %v497
  %v600 = vpack.c.b16 %v504, %v501
  %v601 = vpack.c.b16 %v505, %v502
  %v602 = vpack.c.b16 %v506, %v503
  %699 = vmatprep.subr.bf16.mxu0 %v508
  %700 = vmatpush1.bf16.msra.mxu0 %v507
  %701 = vmatprep.subr.bf16.mxu0 %v511
  %702 = vmatpush1.bf16.msra.mxu0 %v510
  %703 = vmatprep.subr.bf16.mxu0 %v514
  %704 = vmatpush1.bf16.msra.mxu0 %v513
  %705 = vmatprep.subr.bf16.mxu0 %v517
  %706 = vmatpush1.bf16.msra.mxu0 %v516
  %707 = vmatprep.subr.bf16.mxu0 %v520
  %708 = vmatpush1.bf16.msra.mxu0 %v519
  %709 = vmatprep.subr.bf16.mxu0 %v523
  %710 = vmatpush1.bf16.msra.mxu0 %v522
  %711 = vmatprep.subr.bf16.mxu0 %v526
  %712 = vmatpush1.bf16.msra.mxu0 %v525
  %713 = vmatprep.subr.bf16.mxu0 %v529
  %714 = vmatpush1.bf16.msra.mxu0 %v528
  %715 = vmatprep.subr.bf16.mxu0 %v532
  %716 = vmatpush1.bf16.msra.mxu0 %v531
  %717 = vmatprep.subr.bf16.mxu0 %v535
  %718 = vmatpush1.bf16.msra.mxu0 %v534
  %719 = vmatprep.subr.bf16.mxu0 %v538
  %720 = vmatpush1.bf16.msra.mxu0 %v537
  %721 = vmatprep.subr.bf16.mxu0 %v541
  %722 = vmatpush1.bf16.msra.mxu0 %v540
  %723 = vmatprep.subr.bf16.mxu0 %v544
  %724 = vmatpush1.bf16.msra.mxu0 %v543
  %725 = vmatprep.subr.bf16.mxu0 %v547
  %726 = vmatpush1.bf16.msra.mxu0 %v546
  %727 = vmatprep.subr.bf16.mxu0 %v550
  %728 = vmatpush1.bf16.msra.mxu0 %v549
  %729 = vmatprep.subr.bf16.mxu0 %v553
  %730 = vmatpush1.bf16.msra.mxu0 %v552
  %731 = vmatprep.mubr.bf16.mxu0 %v39
  %732 = vmatmul.mubr.bf16.gmra.mrb[0].mxu0 %v38
  %v733 = vpop.f32.mrb[0].mxu0
  %v734 = vadd.f32 %v175, %v733
  %v735 = vpop.f32.mrb[0].mxu0
  %v736 = vadd.f32 %v179, %v735
  %v737 = vpop.f32.mrb[0].mxu0
  %v738 = vadd.f32 %v175, %v737
  %v739 = vpop.f32.mrb[0].mxu0
  %v740 = vadd.f32 %v179, %v739
  %741 = vdwg.mxu0
  %742 = vmatprep.subr.bf16.mxu0 %v556
  %743 = vmatpush1.bf16.msra.mxu0 %v555
  %744 = vmatprep.subr.bf16.mxu0 %v559
  %745 = vmatpush1.bf16.msra.mxu0 %v558
  %746 = vmatprep.subr.bf16.mxu0 %v562
  %747 = vmatpush1.bf16.msra.mxu0 %v561
  %748 = vmatprep.subr.bf16.mxu0 %v565
  %749 = vmatpush1.bf16.msra.mxu0 %v564
  %750 = vmatprep.subr.bf16.mxu0 %v568
  %751 = vmatpush1.bf16.msra.mxu0 %v567
  %752 = vmatprep.subr.bf16.mxu0 %v571
  %753 = vmatpush1.bf16.msra.mxu0 %v570
  %754 = vmatprep.subr.bf16.mxu0 %v574
  %755 = vmatpush1.bf16.msra.mxu0 %v573
  %756 = vmatprep.subr.bf16.mxu0 %v577
  %757 = vmatpush1.bf16.msra.mxu0 %v576
  %758 = vmatprep.subr.bf16.mxu0 %v580
  %759 = vmatpush1.bf16.msra.mxu0 %v579
  %760 = vmatprep.subr.bf16.mxu0 %v583
  %761 = vmatpush1.bf16.msra.mxu0 %v582
  %762 = vmatprep.subr.bf16.mxu0 %v586
  %763 = vmatpush1.bf16.msra.mxu0 %v585
  %764 = vmatprep.subr.bf16.mxu0 %v589
  %765 = vmatpush1.bf16.msra.mxu0 %v588
  %766 = vmatprep.subr.bf16.mxu0 %v592
  %767 = vmatpush1.bf16.msra.mxu0 %v591
  %768 = vmatprep.subr.bf16.mxu0 %v595
  %769 = vmatpush1.bf16.msra.mxu0 %v594
  %770 = vmatprep.subr.bf16.mxu0 %v598
  %771 = vmatpush1.bf16.msra.mxu0 %v597
  %772 = vmatprep.subr.bf16.mxu0 %v601
  %773 = vmatpush1.bf16.msra.mxu0 %v600
  %774 = vmatprep.mubr.bf16.mxu0 %v41
  %775 = vmatmul.mubr.bf16.gmra.mrb[0].mxu0 %v40
  %v776 = vpop.f32.mrb[0].mxu0
  %v777 = vadd.f32 %v734, %v776
  %v778 = vpop.f32.mrb[0].mxu0
  %v779 = vadd.f32 %v736, %v778
  %v780 = vpop.f32.mrb[0].mxu0
  %v781 = vadd.f32 %v738, %v780
  %v782 = vpop.f32.mrb[0].mxu0
  %v783 = vadd.f32 %v740, %v782
  %784 = vdwg.mxu0
  %785 = vmatprep.subr.bf16.mxu0 0
  %786 = vmatpush1.bf16.msra.mxu0 %v509
  %787 = vmatprep.subr.bf16.mxu0 0
  %788 = vmatpush1.bf16.msra.mxu0 %v512
  %789 = vmatprep.subr.bf16.mxu0 0
  %790 = vmatpush1.bf16.msra.mxu0 %v515
  %791 = vmatprep.subr.bf16.mxu0 0
  %792 = vmatpush1.bf16.msra.mxu0 %v518
  %793 = vmatprep.subr.bf16.mxu0 0
  %794 = vmatpush1.bf16.msra.mxu0 %v521
  %795 = vmatprep.subr.bf16.mxu0 0
  %796 = vmatpush1.bf16.msra.mxu0 %v524
  %797 = vmatprep.subr.bf16.mxu0 0
  %798 = vmatpush1.bf16.msra.mxu0 %v527
  %799 = vmatprep.subr.bf16.mxu0 0
  %800 = vmatpush1.bf16.msra.mxu0 %v530
  %801 = vmatprep.subr.bf16.mxu0 0
  %802 = vmatpush1.bf16.msra.mxu0 %v533
  %803 = vmatprep.subr.bf16.mxu0 0
  %804 = vmatpush1.bf16.msra.mxu0 %v536
  %805 = vmatprep.subr.bf16.mxu0 0
  %806 = vmatpush1.bf16.msra.mxu0 %v539
  %807 = vmatprep.subr.bf16.mxu0 0
  %808 = vmatpush1.bf16.msra.mxu0 %v542
  %809 = vmatprep.subr.bf16.mxu0 0
  %810 = vmatpush1.bf16.msra.mxu0 %v545
  %811 = vmatprep.subr.bf16.mxu0 0
  %812 = vmatpush1.bf16.msra.mxu0 %v548
  %813 = vmatprep.subr.bf16.mxu0 0
  %814 = vmatpush1.bf16.msra.mxu0 %v551
  %815 = vmatprep.subr.bf16.mxu0 0
  %816 = vmatpush1.bf16.msra.mxu0 %v554
  %817 = vmatprep.mubr.bf16.mxu0 %v39
  %818 = vmatmul.mubr.bf16.gmra.mrb[0].mxu0 %v38
  %v819 = vpop.f32.mrb[0].mxu0
  %v820 = vadd.f32 %v183, %v819
  %v821 = vpop.f32.mrb[0].mxu0
  %v822 = vpop.f32.mrb[0].mxu0
  %v823 = vadd.f32 %v183, %v822
  %v824 = vpop.f32.mrb[0].mxu0
  %825 = vdwg.mxu0
  %826 = vmatprep.subr.bf16.mxu0 0
  %827 = vmatpush1.bf16.msra.mxu0 %v557
  %828 = vmatprep.subr.bf16.mxu0 0
  %829 = vmatpush1.bf16.msra.mxu0 %v560
  %830 = vmatprep.subr.bf16.mxu0 0
  %831 = vmatpush1.bf16.msra.mxu0 %v563
  %832 = vmatprep.subr.bf16.mxu0 0
  %833 = vmatpush1.bf16.msra.mxu0 %v566
  %834 = vmatprep.subr.bf16.mxu0 0
  %835 = vmatpush1.bf16.msra.mxu0 %v569
  %836 = vmatprep.subr.bf16.mxu0 0
  %837 = vmatpush1.bf16.msra.mxu0 %v572
  %838 = vmatprep.subr.bf16.mxu0 0
  %839 = vmatpush1.bf16.msra.mxu0 %v575
  %840 = vmatprep.subr.bf16.mxu0 0
  %841 = vmatpush1.bf16.msra.mxu0 %v578
  %842 = vmatprep.subr.bf16.mxu0 0
  %843 = vmatpush1.bf16.msra.mxu0 %v581
  %844 = vmatprep.subr.bf16.mxu0 0
  %845 = vmatpush1.bf16.msra.mxu0 %v584
  %846 = vmatprep.subr.bf16.mxu0 0
  %847 = vmatpush1.bf16.msra.mxu0 %v587
  %848 = vmatprep.subr.bf16.mxu0 0
  %849 = vmatpush1.bf16.msra.mxu0 %v590
  %850 = vmatprep.subr.bf16.mxu0 0
  %851 = vmatpush1.bf16.msra.mxu0 %v593
  %852 = vmatprep.subr.bf16.mxu0 0
  %853 = vmatpush1.bf16.msra.mxu0 %v596
  %854 = vmatprep.subr.bf16.mxu0 0
  %855 = vmatpush1.bf16.msra.mxu0 %v599
  %856 = vmatprep.subr.bf16.mxu0 0
  %857 = vmatpush1.bf16.msra.mxu0 %v602
  %858 = vmatprep.mubr.bf16.mxu0 %v41
  %859 = vmatmul.mubr.bf16.gmra.mrb[0].mxu0 %v40
  %v860 = vpop.f32.mrb[0].mxu0
  %v861 = vadd.f32 %v820, %v860
  %v862 = vpop.f32.mrb[0].mxu0
  %v863 = vpop.f32.mrb[0].mxu0
  %v864 = vadd.f32 %v823, %v863
  %v865 = vpop.f32.mrb[0].mxu0
  %866 = vdwg.mxu0
  %vm867 = vcmp.ge.f32.partialorder %v777, 0.0
  %vm868 = vcmp.ge.f32.partialorder %v779, 0.0
  %vm869 = vcmp.ge.f32.partialorder %v861, 0.0
  %vm870 = vcmp.ge.f32.partialorder %v781, 0.0
  %vm871 = vcmp.ge.f32.partialorder %v783, 0.0
  %vm872 = vcmp.ge.f32.partialorder %v864, 0.0
  %v873 = vmul.f32 %v777, 0.3
  %v874 = vmul.f32 %v779, 0.3
  %v875 = vmul.f32 %v861, 0.3
  %v876 = vmul.f32 %v781, 0.3
  %v877 = vmul.f32 %v783, 0.3
  %v878 = vmul.f32 %v864, 0.3
  %v879 = vsel %vm867, %v777, %v873
  %v880 = vsel %vm868, %v779, %v874
  %v881 = vsel %vm869, %v861, %v875
  %v882 = vsel %vm870, %v781, %v876
  %v883 = vsel %vm871, %v783, %v877
  %v884 = vsel %vm872, %v864, %v878
  %v885 = vpack.c.bf16 %v882, %v879
  %v886 = vpack.c.bf16 %v883, %v880
  %v887 = vpack.c.bf16 %v884, %v881
  %v888 = vld [vmem:[%s4] sm:$0xff]
  %v889 = vld [vmem:[%s4 + $0x8] sm:$0xf]
  %v890 = vld [vmem:[%s4 + $0xc] sm:$0xff]
  %v891 = vld [vmem:[%s4 + $0x14] sm:$0xf]
  %v892 = vld [vmem:[%s4 + $0x18] sm:$0xff]
  %v893 = vld [vmem:[%s4 + $0x20] sm:$0xf]
  %v894 = vld [vmem:[%s4 + $0x24] sm:$0xff]
  %v895 = vld [vmem:[%s4 + $0x2c] sm:$0xf]
  %v896 = vld [vmem:[%s4 + $0x30] sm:$0xff]
  %v897 = vld [vmem:[%s4 + $0x38] sm:$0xf]
  %v898 = vld [vmem:[%s4 + $0x3c] sm:$0xff]
  %v899 = vld [vmem:[%s4 + $0x44] sm:$0xf]
  %v900 = vld [vmem:[%s4 + $0x48] sm:$0xff]
  %v901 = vld [vmem:[%s4 + $0x50] sm:$0xf]
  %v902 = vld [vmem:[%s4 + $0x54] sm:$0xff]
  %v903 = vld [vmem:[%s4 + $0x5c] sm:$0xf]
  %v904 = vld [vmem:[%s4 + $0x60] sm:$0xff]
  %v905 = vld [vmem:[%s4 + $0x68] sm:$0xf]
  %v906 = vld [vmem:[%s4 + $0x6c] sm:$0xff]
  %v907 = vld [vmem:[%s4 + $0x74] sm:$0xf]
  %v908 = vld [vmem:[%s4 + $0x78] sm:$0xff]
  %v909 = vld [vmem:[%s4 + $0x80] sm:$0xf]
  %v910 = vld [vmem:[%s4 + $0x84] sm:$0xff]
  %v911 = vld [vmem:[%s4 + $0x8c] sm:$0xf]
  %v912 = vld [vmem:[%s4 + $0x90] sm:$0xff]
  %v913 = vld [vmem:[%s4 + $0x98] sm:$0xf]
  %v914 = vld [vmem:[%s4 + $0x9c] sm:$0xff]
  %v915 = vld [vmem:[%s4 + $0xa4] sm:$0xf]
  %v916 = vld [vmem:[%s4 + $0xa8] sm:$0xff]
  %v917 = vld [vmem:[%s4 + $0xb0] sm:$0xf]
  %v918 = vld [vmem:[%s4 + $0xb4] sm:$0xff]
  %v919 = vld [vmem:[%s4 + $0xbc] sm:$0xf]
  %v920 = vld [vmem:[%s4 + $0xc0] sm:$0xff]
  %v921 = vld [vmem:[%s4 + $0xc8] sm:$0xf]
  %v922 = vld [vmem:[%s4 + $0xcc] sm:$0xff]
  %v923 = vld [vmem:[%s4 + $0xd4] sm:$0xf]
  %v924 = vld [vmem:[%s4 + $0xd8] sm:$0xff]
  %v925 = vld [vmem:[%s4 + $0xe0] sm:$0xf]
  %v926 = vld [vmem:[%s4 + $0xe4] sm:$0xff]
  %v927 = vld [vmem:[%s4 + $0xec] sm:$0xf]
  %v928 = vld [vmem:[%s4 + $0xf0] sm:$0xff]
  %v929 = vld [vmem:[%s4 + $0xf8] sm:$0xf]
  %v930 = vld [vmem:[%s4 + $0xfc] sm:$0xff]
  %v931 = vld [vmem:[%s4 + $0x104] sm:$0xf]
  %v932 = vld [vmem:[%s4 + $0x108] sm:$0xff]
  %v933 = vld [vmem:[%s4 + $0x110] sm:$0xf]
  %v934 = vld [vmem:[%s4 + $0x114] sm:$0xff]
  %v935 = vld [vmem:[%s4 + $0x11c] sm:$0xf]
  %v936 = vld [vmem:[%s4 + $0x120] sm:$0xff]
  %v937 = vld [vmem:[%s4 + $0x128] sm:$0xf]
  %v938 = vld [vmem:[%s4 + $0x12c] sm:$0xff]
  %v939 = vld [vmem:[%s4 + $0x134] sm:$0xf]
  %v940 = vld [vmem:[%s4 + $0x138] sm:$0xff]
  %v941 = vld [vmem:[%s4 + $0x140] sm:$0xf]
  %v942 = vld [vmem:[%s4 + $0x144] sm:$0xff]
  %v943 = vld [vmem:[%s4 + $0x14c] sm:$0xf]
  %v944 = vld [vmem:[%s4 + $0x150] sm:$0xff]
  %v945 = vld [vmem:[%s4 + $0x158] sm:$0xf]
  %v946 = vld [vmem:[%s4 + $0x15c] sm:$0xff]
  %v947 = vld [vmem:[%s4 + $0x164] sm:$0xf]
  %v948 = vld [vmem:[%s4 + $0x168] sm:$0xff]
  %v949 = vld [vmem:[%s4 + $0x170] sm:$0xf]
  %v950 = vld [vmem:[%s4 + $0x174] sm:$0xff]
  %v951 = vld [vmem:[%s4 + $0x17c] sm:$0xf]
  %v952 = vld [vmem:[%s4 + $0x180] sm:$0xff]
  %v953 = vld [vmem:[%s4 + $0x188] sm:$0xf]
  %v954 = vld [vmem:[%s4 + $0x18c] sm:$0xff]
  %v955 = vld [vmem:[%s4 + $0x194] sm:$0xf]
  %v956 = vld [vmem:[%s4 + $0x198] sm:$0xff]
  %v957 = vld [vmem:[%s4 + $0x1a0] sm:$0xf]
  %v958 = vld [vmem:[%s4 + $0x1a4] sm:$0xff]
  %v959 = vld [vmem:[%s4 + $0x1ac] sm:$0xf]
  %v960 = vld [vmem:[%s4 + $0x1b0] sm:$0xff]
  %v961 = vld [vmem:[%s4 + $0x1b8] sm:$0xf]
  %v962 = vld [vmem:[%s4 + $0x1bc] sm:$0xff]
  %v963 = vld [vmem:[%s4 + $0x1c4] sm:$0xf]
  %v964 = vld [vmem:[%s4 + $0x1c8] sm:$0xff]
  %v965 = vld [vmem:[%s4 + $0x1d0] sm:$0xf]
  %v966 = vld [vmem:[%s4 + $0x1d4] sm:$0xff]
  %v967 = vld [vmem:[%s4 + $0x1dc] sm:$0xf]
  %v968 = vld [vmem:[%s4 + $0x1e0] sm:$0xff]
  %v969 = vld [vmem:[%s4 + $0x1e8] sm:$0xf]
  %v970 = vld [vmem:[%s4 + $0x1ec] sm:$0xff]
  %v971 = vld [vmem:[%s4 + $0x1f4] sm:$0xf]
  %v972 = vld [vmem:[%s4 + $0x1f8] sm:$0xff]
  %v973 = vld [vmem:[%s4 + $0x200] sm:$0xf]
  %v974 = vld [vmem:[%s4 + $0x204] sm:$0xff]
  %v975 = vld [vmem:[%s4 + $0x20c] sm:$0xf]
  %v976 = vld [vmem:[%s4 + $0x210] sm:$0xff]
  %v977 = vld [vmem:[%s4 + $0x218] sm:$0xf]
  %v978 = vld [vmem:[%s4 + $0x21c] sm:$0xff]
  %v979 = vld [vmem:[%s4 + $0x224] sm:$0xf]
  %v980 = vld [vmem:[%s4 + $0x228] sm:$0xff]
  %v981 = vld [vmem:[%s4 + $0x230] sm:$0xf]
  %v982 = vld [vmem:[%s4 + $0x234] sm:$0xff]
  %v983 = vld [vmem:[%s4 + $0x23c] sm:$0xf]
  %v984 = vld [vmem:[%s5] sm:$0x7]
  %v986 = vlaneseq
  %v987 = vshrl.u32 %v986, 7
  %v988 = vsub.s32 0, %v987
  %v989 = vrot.slane %v984, %v988
  %v990 = vlaneseq
  %v991 = vshrl.u32 %v990, 7
  %v992 = vsub.s32 1, %v991
  %v993 = vrot.slane %v984, %v992
  %v994 = vlaneseq
  %v995 = vshrl.u32 %v994, 7
  %v996 = vsub.s32 2, %v995
  %v997 = vrot.slane %v984, %v996
  %v1097 = vunpack.c.l.b16 %v888
  %v1098 = vunpack.c.h.b16 %v888
  %v1099 = vunpack.c.l.b16 %v889
  %v1100 = vunpack.c.l.b16 %v890
  %v1101 = vunpack.c.h.b16 %v890
  %v1102 = vunpack.c.l.b16 %v891
  %v1103 = vunpack.c.l.b16 %v892
  %v1104 = vunpack.c.h.b16 %v892
  %v1105 = vunpack.c.l.b16 %v893
  %v1106 = vunpack.c.l.b16 %v894
  %v1107 = vunpack.c.h.b16 %v894
  %v1108 = vunpack.c.l.b16 %v895
  %v1109 = vunpack.c.l.b16 %v896
  %v1110 = vunpack.c.h.b16 %v896
  %v1111 = vunpack.c.l.b16 %v897
  %v1112 = vunpack.c.l.b16 %v898
  %v1113 = vunpack.c.h.b16 %v898
  %v1114 = vunpack.c.l.b16 %v899
  %v1115 = vunpack.c.l.b16 %v900
  %v1116 = vunpack.c.h.b16 %v900
  %v1117 = vunpack.c.l.b16 %v901
  %v1118 = vunpack.c.l.b16 %v902
  %v1119 = vunpack.c.h.b16 %v902
  %v1120 = vunpack.c.l.b16 %v903
  %v1121 = vunpack.c.l.b16 %v904
  %v1122 = vunpack.c.h.b16 %v904
  %v1123 = vunpack.c.l.b16 %v905
  %v1124 = vunpack.c.l.b16 %v906
  %v1125 = vunpack.c.h.b16 %v906
  %v1126 = vunpack.c.l.b16 %v907
  %v1127 = vunpack.c.l.b16 %v908
  %v1128 = vunpack.c.h.b16 %v908
  %v1129 = vunpack.c.l.b16 %v909
  %v1130 = vunpack.c.l.b16 %v910
  %v1131 = vunpack.c.h.b16 %v910
  %v1132 = vunpack.c.l.b16 %v911
  %v1133 = vunpack.c.l.b16 %v912
  %v1134 = vunpack.c.h.b16 %v912
  %v1135 = vunpack.c.l.b16 %v913
  %v1136 = vunpack.c.l.b16 %v914
  %v1137 = vunpack.c.h.b16 %v914
  %v1138 = vunpack.c.l.b16 %v915
  %v1139 = vunpack.c.l.b16 %v916
  %v1140 = vunpack.c.h.b16 %v916
  %v1141 = vunpack.c.l.b16 %v917
  %v1142 = vunpack.c.l.b16 %v918
  %v1143 = vunpack.c.h.b16 %v918
  %v1144 = vunpack.c.l.b16 %v919
  %v1145 = vunpack.c.l.b16 %v920
  %v1146 = vunpack.c.h.b16 %v920
  %v1147 = vunpack.c.l.b16 %v921
  %v1148 = vunpack.c.l.b16 %v922
  %v1149 = vunpack.c.h.b16 %v922
  %v1150 = vunpack.c.l.b16 %v923
  %v1151 = vunpack.c.l.b16 %v924
  %v1152 = vunpack.c.h.b16 %v924
  %v1153 = vunpack.c.l.b16 %v925
  %v1154 = vunpack.c.l.b16 %v926
  %v1155 = vunpack.c.h.b16 %v926
  %v1156 = vunpack.c.l.b16 %v927
  %v1157 = vunpack.c.l.b16 %v928
  %v1158 = vunpack.c.h.b16 %v928
  %v1159 = vunpack.c.l.b16 %v929
  %v1160 = vunpack.c.l.b16 %v930
  %v1161 = vunpack.c.h.b16 %v930
  %v1162 = vunpack.c.l.b16 %v931
  %v1163 = vunpack.c.l.b16 %v932
  %v1164 = vunpack.c.h.b16 %v932
  %v1165 = vunpack.c.l.b16 %v933
  %v1166 = vunpack.c.l.b16 %v934
  %v1167 = vunpack.c.h.b16 %v934
  %v1168 = vunpack.c.l.b16 %v935
  %v1169 = vunpack.c.l.b16 %v936
  %v1170 = vunpack.c.h.b16 %v936
  %v1171 = vunpack.c.l.b16 %v937
  %v1172 = vunpack.c.l.b16 %v938
  %v1173 = vunpack.c.h.b16 %v938
  %v1174 = vunpack.c.l.b16 %v939
  %v1175 = vunpack.c.l.b16 %v940
  %v1176 = vunpack.c.h.b16 %v940
  %v1177 = vunpack.c.l.b16 %v941
  %v1178 = vunpack.c.l.b16 %v942
  %v1179 = vunpack.c.h.b16 %v942
  %v1180 = vunpack.c.l.b16 %v943
  %v1181 = vunpack.c.l.b16 %v944
  %v1182 = vunpack.c.h.b16 %v944
  %v1183 = vunpack.c.l.b16 %v945
  %v1184 = vunpack.c.l.b16 %v946
  %v1185 = vunpack.c.h.b16 %v946
  %v1186 = vunpack.c.l.b16 %v947
  %v1187 = vunpack.c.l.b16 %v948
  %v1188 = vunpack.c.h.b16 %v948
  %v1189 = vunpack.c.l.b16 %v949
  %v1190 = vunpack.c.l.b16 %v950
  %v1191 = vunpack.c.h.b16 %v950
  %v1192 = vunpack.c.l.b16 %v951
  %v1193 = vunpack.c.l.b16 %v952
  %v1194 = vunpack.c.h.b16 %v952
  %v1195 = vunpack.c.l.b16 %v953
  %v1196 = vunpack.c.l.b16 %v954
  %v1197 = vunpack.c.h.b16 %v954
  %v1198 = vunpack.c.l.b16 %v955
  %v1199 = vunpack.c.l.b16 %v956
  %v1200 = vunpack.c.h.b16 %v956
  %v1201 = vunpack.c.l.b16 %v957
  %v1202 = vunpack.c.l.b16 %v958
  %v1203 = vunpack.c.h.b16 %v958
  %v1204 = vunpack.c.l.b16 %v959
  %v1205 = vunpack.c.l.b16 %v960
  %v1206 = vunpack.c.h.b16 %v960
  %v1207 = vunpack.c.l.b16 %v961
  %v1208 = vunpack.c.l.b16 %v962
  %v1209 = vunpack.c.h.b16 %v962
  %v1210 = vunpack.c.l.b16 %v963
  %v1211 = vunpack.c.l.b16 %v964
  %v1212 = vunpack.c.h.b16 %v964
  %v1213 = vunpack.c.l.b16 %v965
  %v1214 = vunpack.c.l.b16 %v966
  %v1215 = vunpack.c.h.b16 %v966
  %v1216 = vunpack.c.l.b16 %v967
  %v1217 = vunpack.c.l.b16 %v968
  %v1218 = vunpack.c.h.b16 %v968
  %v1219 = vunpack.c.l.b16 %v969
  %v1220 = vunpack.c.l.b16 %v970
  %v1221 = vunpack.c.h.b16 %v970
  %v1222 = vunpack.c.l.b16 %v971
  %v1223 = vunpack.c.l.b16 %v972
  %v1224 = vunpack.c.h.b16 %v972
  %v1225 = vunpack.c.l.b16 %v973
  %v1226 = vunpack.c.l.b16 %v974
  %v1227 = vunpack.c.h.b16 %v974
  %v1228 = vunpack.c.l.b16 %v975
  %v1229 = vunpack.c.l.b16 %v976
  %v1230 = vunpack.c.h.b16 %v976
  %v1231 = vunpack.c.l.b16 %v977
  %v1232 = vunpack.c.l.b16 %v978
  %v1233 = vunpack.c.h.b16 %v978
  %v1234 = vunpack.c.l.b16 %v979
  %v1235 = vunpack.c.l.b16 %v980
  %v1236 = vunpack.c.h.b16 %v980
  %v1237 = vunpack.c.l.b16 %v981
  %v1238 = vunpack.c.l.b16 %v982
  %v1239 = vunpack.c.h.b16 %v982
  %v1240 = vunpack.c.l.b16 %v983
  %v1241 = vpack.c.b16 %v1100, %v1097
  %v1242 = vpack.c.b16 %v1101, %v1098
  %v1243 = vpack.c.b16 %v1102, %v1099
  %v1244 = vpack.c.b16 %v1106, %v1103
  %v1245 = vpack.c.b16 %v1107, %v1104
  %v1246 = vpack.c.b16 %v1108, %v1105
  %v1247 = vpack.c.b16 %v1112, %v1109
  %v1248 = vpack.c.b16 %v1113, %v1110
  %v1249 = vpack.c.b16 %v1114, %v1111
  %v1250 = vpack.c.b16 %v1118, %v1115
  %v1251 = vpack.c.b16 %v1119, %v1116
  %v1252 = vpack.c.b16 %v1120, %v1117
  %v1253 = vpack.c.b16 %v1124, %v1121
  %v1254 = vpack.c.b16 %v1125, %v1122
  %v1255 = vpack.c.b16 %v1126, %v1123
  %v1256 = vpack.c.b16 %v1130, %v1127
  %v1257 = vpack.c.b16 %v1131, %v1128
  %v1258 = vpack.c.b16 %v1132, %v1129
  %v1259 = vpack.c.b16 %v1136, %v1133
  %v1260 = vpack.c.b16 %v1137, %v1134
  %v1261 = vpack.c.b16 %v1138, %v1135
  %v1262 = vpack.c.b16 %v1142, %v1139
  %v1263 = vpack.c.b16 %v1143, %v1140
  %v1264 = vpack.c.b16 %v1144, %v1141
  %v1265 = vpack.c.b16 %v1148, %v1145
  %v1266 = vpack.c.b16 %v1149, %v1146
  %v1267 = vpack.c.b16 %v1150, %v1147
  %v1268 = vpack.c.b16 %v1154, %v1151
  %v1269 = vpack.c.b16 %v1155, %v1152
  %v1270 = vpack.c.b16 %v1156, %v1153
  %v1271 = vpack.c.b16 %v1160, %v1157
  %v1272 = vpack.c.b16 %v1161, %v1158
  %v1273 = vpack.c.b16 %v1162, %v1159
  %v1274 = vpack.c.b16 %v1166, %v1163
  %v1275 = vpack.c.b16 %v1167, %v1164
  %v1276 = vpack.c.b16 %v1168, %v1165
  %v1277 = vpack.c.b16 %v1172, %v1169
  %v1278 = vpack.c.b16 %v1173, %v1170
  %v1279 = vpack.c.b16 %v1174, %v1171
  %v1280 = vpack.c.b16 %v1178, %v1175
  %v1281 = vpack.c.b16 %v1179, %v1176
  %v1282 = vpack.c.b16 %v1180, %v1177
  %v1283 = vpack.c.b16 %v1184, %v1181
  %v1284 = vpack.c.b16 %v1185, %v1182
  %v1285 = vpack.c.b16 %v1186, %v1183
  %v1286 = vpack.c.b16 %v1190, %v1187
  %v1287 = vpack.c.b16 %v1191, %v1188
  %v1288 = vpack.c.b16 %v1192, %v1189
  %v1289 = vpack.c.b16 %v1196, %v1193
  %v1290 = vpack.c.b16 %v1197, %v1194
  %v1291 = vpack.c.b16 %v1198, %v1195
  %v1292 = vpack.c.b16 %v1202, %v1199
  %v1293 = vpack.c.b16 %v1203, %v1200
  %v1294 = vpack.c.b16 %v1204, %v1201
  %v1295 = vpack.c.b16 %v1208, %v1205
  %v1296 = vpack.c.b16 %v1209, %v1206
  %v1297 = vpack.c.b16 %v1210, %v1207
  %v1298 = vpack.c.b16 %v1214, %v1211
  %v1299 = vpack.c.b16 %v1215, %v1212
  %v1300 = vpack.c.b16 %v1216, %v1213
  %v1301 = vpack.c.b16 %v1220, %v1217
  %v1302 = vpack.c.b16 %v1221, %v1218
  %v1303 = vpack.c.b16 %v1222, %v1219
  %v1304 = vpack.c.b16 %v1226, %v1223
  %v1305 = vpack.c.b16 %v1227, %v1224
  %v1306 = vpack.c.b16 %v1228, %v1225
  %v1307 = vpack.c.b16 %v1232, %v1229
  %v1308 = vpack.c.b16 %v1233, %v1230
  %v1309 = vpack.c.b16 %v1234, %v1231
  %v1310 = vpack.c.b16 %v1238, %v1235
  %v1311 = vpack.c.b16 %v1239, %v1236
  %v1312 = vpack.c.b16 %v1240, %v1237
  %1385 = vmatprep.subr.bf16.mxu0 %v1242
  %1386 = vmatpush1.bf16.msra.mxu0 %v1241
  %1387 = vmatprep.subr.bf16.mxu0 %v1245
  %1388 = vmatpush1.bf16.msra.mxu0 %v1244
  %1389 = vmatprep.subr.bf16.mxu0 %v1248
  %1390 = vmatpush1.bf16.msra.mxu0 %v1247
  %1391 = vmatprep.subr.bf16.mxu0 %v1251
  %1392 = vmatpush1.bf16.msra.mxu0 %v1250
  %1393 = vmatprep.subr.bf16.mxu0 %v1254
  %1394 = vmatpush1.bf16.msra.mxu0 %v1253
  %1395 = vmatprep.subr.bf16.mxu0 %v1257
  %1396 = vmatpush1.bf16.msra.mxu0 %v1256
  %1397 = vmatprep.subr.bf16.mxu0 %v1260
  %1398 = vmatpush1.bf16.msra.mxu0 %v1259
  %1399 = vmatprep.subr.bf16.mxu0 %v1263
  %1400 = vmatpush1.bf16.msra.mxu0 %v1262
  %1401 = vmatprep.subr.bf16.mxu0 %v1266
  %1402 = vmatpush1.bf16.msra.mxu0 %v1265
  %1403 = vmatprep.subr.bf16.mxu0 %v1269
  %1404 = vmatpush1.bf16.msra.mxu0 %v1268
  %1405 = vmatprep.subr.bf16.mxu0 %v1272
  %1406 = vmatpush1.bf16.msra.mxu0 %v1271
  %1407 = vmatprep.subr.bf16.mxu0 %v1275
  %1408 = vmatpush1.bf16.msra.mxu0 %v1274
  %1409 = vmatprep.subr.bf16.mxu0 %v1278
  %1410 = vmatpush1.bf16.msra.mxu0 %v1277
  %1411 = vmatprep.subr.bf16.mxu0 %v1281
  %1412 = vmatpush1.bf16.msra.mxu0 %v1280
  %1413 = vmatprep.subr.bf16.mxu0 %v1284
  %1414 = vmatpush1.bf16.msra.mxu0 %v1283
  %1415 = vmatprep.subr.bf16.mxu0 %v1287
  %1416 = vmatpush1.bf16.msra.mxu0 %v1286
  %1417 = vmatprep.mubr.bf16.mxu0 %v886
  %1418 = vmatmul.mubr.bf16.gmra.mrb[0].mxu0 %v885
  %v1419 = vpop.f32.mrb[0].mxu0
  %v1420 = vadd.f32 %v989, %v1419
  %v1421 = vpop.f32.mrb[0].mxu0
  %v1422 = vadd.f32 %v993, %v1421
  %v1423 = vpop.f32.mrb[0].mxu0
  %v1424 = vadd.f32 %v989, %v1423
  %v1425 = vpop.f32.mrb[0].mxu0
  %v1426 = vadd.f32 %v993, %v1425
  %1427 = vdwg.mxu0
  %1428 = vmatprep.subr.bf16.mxu0 %v1290
  %1429 = vmatpush1.bf16.msra.mxu0 %v1289
  %1430 = vmatprep.subr.bf16.mxu0 %v1293
  %1431 = vmatpush1.bf16.msra.mxu0 %v1292
  %1432 = vmatprep.subr.bf16.mxu0 %v1296
  %1433 = vmatpush1.bf16.msra.mxu0 %v1295
  %1434 = vmatprep.subr.bf16.mxu0 %v1299
  %1435 = vmatpush1.bf16.msra.mxu0 %v1298
  %1436 = vmatprep.subr.bf16.mxu0 %v1302
  %1437 = vmatpush1.bf16.msra.mxu0 %v1301
  %1438 = vmatprep.subr.bf16.mxu0 %v1305
  %1439 = vmatpush1.bf16.msra.mxu0 %v1304
  %1440 = vmatprep.subr.bf16.mxu0 %v1308
  %1441 = vmatpush1.bf16.msra.mxu0 %v1307
  %1442 = vmatprep.subr.bf16.mxu0 %v1311
  %1443 = vmatpush1.bf16.msra.mxu0 %v1310
  %1444 = vmatprep.subr.bf16.mxu0 0
  %1445 = vmatpush1.bf16.msra.mxu0 0
  %1446 = vmatprep.subr.bf16.mxu0 0
  %1447 = vmatpush1.bf16.msra.mxu0 0
  %1448 = vmatprep.subr.bf16.mxu0 0
  %1449 = vmatpush1.bf16.msra.mxu0 0
  %1450 = vmatprep.subr.bf16.mxu0 0
  %1451 = vmatpush1.bf16.msra.mxu0 0
  %1452 = vmatprep.subr.bf16.mxu0 0
  %1453 = vmatpush1.bf16.msra.mxu0 0
  %1454 = vmatprep.subr.bf16.mxu0 0
  %1455 = vmatpush1.bf16.msra.mxu0 0
  %1456 = vmatprep.subr.bf16.mxu0 0
  %1457 = vmatpush1.bf16.msra.mxu0 0
  %1458 = vmatprep.subr.bf16.mxu0 0
  %1459 = vmatpush1.bf16.msra.mxu0 0
  %1460 = vmatprep.mubr.bf16.mxu0 0
  %1461 = vmatmul.mubr.bf16.gmra.mrb[0].mxu0 %v887
  %v1462 = vpop.f32.mrb[0].mxu0
  %v1463 = vadd.f32 %v1420, %v1462
  %v1464 = vpop.f32.mrb[0].mxu0
  %v1465 = vadd.f32 %v1422, %v1464
  %v1466 = vpop.f32.mrb[0].mxu0
  %v1467 = vadd.f32 %v1424, %v1466
  %v1468 = vpop.f32.mrb[0].mxu0
  %v1469 = vadd.f32 %v1426, %v1468
  %1470 = vdwg.mxu0
  %1471 = vmatprep.subr.bf16.mxu0 0
  %1472 = vmatpush1.bf16.msra.mxu0 %v1243
  %1473 = vmatprep.subr.bf16.mxu0 0
  %1474 = vmatpush1.bf16.msra.mxu0 %v1246
  %1475 = vmatprep.subr.bf16.mxu0 0
  %1476 = vmatpush1.bf16.msra.mxu0 %v1249
  %1477 = vmatprep.subr.bf16.mxu0 0
  %1478 = vmatpush1.bf16.msra.mxu0 %v1252
  %1479 = vmatprep.subr.bf16.mxu0 0
  %1480 = vmatpush1.bf16.msra.mxu0 %v1255
  %1481 = vmatprep.subr.bf16.mxu0 0
  %1482 = vmatpush1.bf16.msra.mxu0 %v1258
  %1483 = vmatprep.subr.bf16.mxu0 0
  %1484 = vmatpush1.bf16.msra.mxu0 %v1261
  %1485 = vmatprep.subr.bf16.mxu0 0
  %1486 = vmatpush1.bf16.msra.mxu0 %v1264
  %1487 = vmatprep.subr.bf16.mxu0 0
  %1488 = vmatpush1.bf16.msra.mxu0 %v1267
  %1489 = vmatprep.subr.bf16.mxu0 0
  %1490 = vmatpush1.bf16.msra.mxu0 %v1270
  %1491 = vmatprep.subr.bf16.mxu0 0
  %1492 = vmatpush1.bf16.msra.mxu0 %v1273
  %1493 = vmatprep.subr.bf16.mxu0 0
  %1494 = vmatpush1.bf16.msra.mxu0 %v1276
  %1495 = vmatprep.subr.bf16.mxu0 0
  %1496 = vmatpush1.bf16.msra.mxu0 %v1279
  %1497 = vmatprep.subr.bf16.mxu0 0
  %1498 = vmatpush1.bf16.msra.mxu0 %v1282
  %1499 = vmatprep.subr.bf16.mxu0 0
  %1500 = vmatpush1.bf16.msra.mxu0 %v1285
  %1501 = vmatprep.subr.bf16.mxu0 0
  %1502 = vmatpush1.bf16.msra.mxu0 %v1288
  %1503 = vmatprep.mubr.bf16.mxu0 %v886
  %1504 = vmatmul.mubr.bf16.gmra.mrb[0].mxu0 %v885
  %v1505 = vpop.f32.mrb[0].mxu0
  %v1506 = vadd.f32 %v997, %v1505
  %v1507 = vpop.f32.mrb[0].mxu0
  %v1508 = vpop.f32.mrb[0].mxu0
  %v1509 = vadd.f32 %v997, %v1508
  %v1510 = vpop.f32.mrb[0].mxu0
  %1511 = vdwg.mxu0
  %1512 = vmatprep.subr.bf16.mxu0 0
  %1513 = vmatpush1.bf16.msra.mxu0 %v1291
  %1514 = vmatprep.subr.bf16.mxu0 0
  %1515 = vmatpush1.bf16.msra.mxu0 %v1294
  %1516 = vmatprep.subr.bf16.mxu0 0
  %1517 = vmatpush1.bf16.msra.mxu0 %v1297
  %1518 = vmatprep.subr.bf16.mxu0 0
  %1519 = vmatpush1.bf16.msra.mxu0 %v1300
  %1520 = vmatprep.subr.bf16.mxu0 0
  %1521 = vmatpush1.bf16.msra.mxu0 %v1303
  %1522 = vmatprep.subr.bf16.mxu0 0
  %1523 = vmatpush1.bf16.msra.mxu0 %v1306
  %1524 = vmatprep.subr.bf16.mxu0 0
  %1525 = vmatpush1.bf16.msra.mxu0 %v1309
  %1526 = vmatprep.subr.bf16.mxu0 0
  %1527 = vmatpush1.bf16.msra.mxu0 %v1312
  %1528 = vmatprep.subr.bf16.mxu0 0
  %1529 = vmatpush1.bf16.msra.mxu0 0
  %1530 = vmatprep.subr.bf16.mxu0 0
  %1531 = vmatpush1.bf16.msra.mxu0 0
  %1532 = vmatprep.subr.bf16.mxu0 0
  %1533 = vmatpush1.bf16.msra.mxu0 0
  %1534 = vmatprep.subr.bf16.mxu0 0
  %1535 = vmatpush1.bf16.msra.mxu0 0
  %1536 = vmatprep.subr.bf16.mxu0 0
  %1537 = vmatpush1.bf16.msra.mxu0 0
  %1538 = vmatprep.subr.bf16.mxu0 0
  %1539 = vmatpush1.bf16.msra.mxu0 0
  %1540 = vmatprep.subr.bf16.mxu0 0
  %1541 = vmatpush1.bf16.msra.mxu0 0
  %1542 = vmatprep.subr.bf16.mxu0 0
  %1543 = vmatpush1.bf16.msra.mxu0 0
  %1544 = vmatprep.mubr.bf16.mxu0 0
  %1545 = vmatmul.mubr.bf16.gmra.mrb[0].mxu0 %v887
  %v1546 = vpop.f32.mrb[0].mxu0
  %v1547 = vadd.f32 %v1506, %v1546
  %v1548 = vpop.f32.mrb[0].mxu0
  %v1549 = vpop.f32.mrb[0].mxu0
  %v1550 = vadd.f32 %v1509, %v1549
  %v1551 = vpop.f32.mrb[0].mxu0
  %1552 = vdwg.mxu0
  %v1553 = vxor.u32 %v1463, 2147483648
  %v1554 = vxor.u32 %v1465, 2147483648
  %v1555 = vxor.u32 %v1547, 2147483648
  %v1556 = vxor.u32 %v1467, 2147483648
  %v1557 = vxor.u32 %v1469, 2147483648
  %v1558 = vxor.u32 %v1550, 2147483648
  %v1559 = vmul.f32 %v1553, 1.442695
  %v1560 = vpow.pop %v1559
  %v1561 = vmul.f32 %v1554, 1.442695
  %v1562 = vpow.pop %v1561
  %v1563 = vmul.f32 %v1555, 1.442695
  %v1564 = vpow.pop %v1563
  %v1565 = vmul.f32 %v1556, 1.442695
  %v1566 = vpow.pop %v1565
  %v1567 = vmul.f32 %v1557, 1.442695
  %v1568 = vpow.pop %v1567
  %v1569 = vmul.f32 %v1558, 1.442695
  %v1570 = vpow.pop %v1569
  %v1571 = vadd.f32 %v1560, 1.0
  %v1572 = vadd.f32 %v1562, 1.0
  %v1573 = vadd.f32 %v1564, 1.0
  %v1574 = vadd.f32 %v1566, 1.0
  %v1575 = vadd.f32 %v1568, 1.0
  %v1576 = vadd.f32 %v1570, 1.0
  %v1577 = vrcp.pop %v1571
  %v1578 = vmul.f32 1.0, %v1577
  %v1579 = vrcp.pop %v1572
  %v1580 = vmul.f32 1.0, %v1579
  %v1581 = vrcp.pop %v1573
  %v1582 = vmul.f32 1.0, %v1581
  %v1583 = vrcp.pop %v1574
  %v1584 = vmul.f32 1.0, %v1583
  %v1585 = vrcp.pop %v1575
  %v1586 = vmul.f32 1.0, %v1585
  %v1587 = vrcp.pop %v1576
  %v1588 = vmul.f32 1.0, %v1587
  %v1589 = vld [vmem:[%s1] sm:$0xff]
  %v1590 = vld [vmem:[%s1 + $0x8] sm:$0xff]
  %v1591 = vld [vmem:[%s1 + $0x10] sm:$0xff]
  %v1592 = vld [vmem:[%s1 + $0x18] sm:$0xff]
  %v1593 = vld [vmem:[%s1 + $0x20] sm:$0xff]
  %v1594 = vld [vmem:[%s1 + $0x28] sm:$0xff]
  %v1595 = vld [vmem:[%s1 + $0x30] sm:$0xff]
  %v1596 = vld [vmem:[%s1 + $0x38] sm:$0xff]
  %v1597 = vld [vmem:[%s1 + $0x40] sm:$0xff]
  %v1598 = vld [vmem:[%s1 + $0x48] sm:$0xff]
  %v1599 = vld [vmem:[%s1 + $0x50] sm:$0xff]
  %v1600 = vld [vmem:[%s1 + $0x58] sm:$0xff]
  %v1601 = vmul.f32 %v1589, %v1578
  %v1602 = vmul.f32 %v1590, %v1580
  %v1603 = vmul.f32 %v1591, %v1582
  %v1604 = vmul.f32 %v1595, %v1584
  %v1605 = vmul.f32 %v1596, %v1586
  %v1606 = vmul.f32 %v1597, %v1588
  %v1607 = vpack.c.bf16 %v1604, %v1601
  %v1608 = vpack.c.bf16 %v1605, %v1602
  %v1609 = vpack.c.bf16 %v1606, %v1603
  %v1610 = vmul.f32 %v1592, %v1578
  %v1611 = vmul.f32 %v1593, %v1580
  %v1612 = vmul.f32 %v1594, %v1582
  %v1613 = vmul.f32 %v1598, %v1584
  %v1614 = vmul.f32 %v1599, %v1586
  %v1615 = vmul.f32 %v1600, %v1588
  %v1616 = vpack.c.bf16 %v1613, %v1610
  %v1617 = vpack.c.bf16 %v1614, %v1611
  %v1618 = vpack.c.bf16 %v1615, %v1612
  %v1619 = vld [vmem:[%s6] sm:$0xff]
  %v1620 = vld [vmem:[%s6 + $0x8] sm:$0xff]
  %v1621 = vld [vmem:[%s6 + $0x10] sm:$0xff]
  %v1622 = vld [vmem:[%s6 + $0x18] sm:$0xff]
  %v1623 = vld [vmem:[%s6 + $0x20] sm:$0xff]
  %v1624 = vld [vmem:[%s6 + $0x28] sm:$0xff]
  %v1625 = vld [vmem:[%s6 + $0x30] sm:$0xff]
  %v1626 = vld [vmem:[%s6 + $0x38] sm:$0xff]
  %v1627 = vld [vmem:[%s6 + $0x40] sm:$0xff]
  %v1628 = vld [vmem:[%s6 + $0x48] sm:$0xff]
  %v1629 = vld [vmem:[%s6 + $0x50] sm:$0xff]
  %v1630 = vld [vmem:[%s6 + $0x58] sm:$0xff]
  %v1631 = vld [vmem:[%s6 + $0x60] sm:$0xff]
  %v1632 = vld [vmem:[%s6 + $0x68] sm:$0xff]
  %v1633 = vld [vmem:[%s6 + $0x70] sm:$0xff]
  %v1634 = vld [vmem:[%s6 + $0x78] sm:$0xff]
  %v1635 = vld [vmem:[%s6 + $0x80] sm:$0xff]
  %v1636 = vld [vmem:[%s6 + $0x88] sm:$0xff]
  %v1637 = vld [vmem:[%s6 + $0x90] sm:$0xff]
  %v1638 = vld [vmem:[%s6 + $0x98] sm:$0xff]
  %v1639 = vld [vmem:[%s6 + $0xa0] sm:$0xff]
  %v1640 = vld [vmem:[%s6 + $0xa8] sm:$0xff]
  %v1641 = vld [vmem:[%s6 + $0xb0] sm:$0xff]
  %v1642 = vld [vmem:[%s6 + $0xb8] sm:$0xff]
  %v1643 = vld [vmem:[%s6 + $0xc0] sm:$0xff]
  %v1644 = vld [vmem:[%s6 + $0xc8] sm:$0xff]
  %v1645 = vld [vmem:[%s6 + $0xd0] sm:$0xff]
  %v1646 = vld [vmem:[%s6 + $0xd8] sm:$0xff]
  %v1647 = vld [vmem:[%s6 + $0xe0] sm:$0xff]
  %v1648 = vld [vmem:[%s6 + $0xe8] sm:$0xff]
  %v1649 = vld [vmem:[%s6 + $0xf0] sm:$0xff]
  %v1650 = vld [vmem:[%s6 + $0xf8] sm:$0xff]
  %v1651 = vld [vmem:[%s6 + $0x100] sm:$0xff]
  %v1652 = vld [vmem:[%s6 + $0x108] sm:$0xff]
  %v1653 = vld [vmem:[%s6 + $0x110] sm:$0xff]
  %v1654 = vld [vmem:[%s6 + $0x118] sm:$0xff]
  %v1655 = vld [vmem:[%s6 + $0x120] sm:$0xff]
  %v1656 = vld [vmem:[%s6 + $0x128] sm:$0xff]
  %v1657 = vld [vmem:[%s6 + $0x130] sm:$0xff]
  %v1658 = vld [vmem:[%s6 + $0x138] sm:$0xff]
  %v1659 = vld [vmem:[%s6 + $0x140] sm:$0xff]
  %v1660 = vld [vmem:[%s6 + $0x148] sm:$0xff]
  %v1661 = vld [vmem:[%s6 + $0x150] sm:$0xff]
  %v1662 = vld [vmem:[%s6 + $0x158] sm:$0xff]
  %v1663 = vld [vmem:[%s6 + $0x160] sm:$0xff]
  %v1664 = vld [vmem:[%s6 + $0x168] sm:$0xff]
  %v1665 = vld [vmem:[%s6 + $0x170] sm:$0xff]
  %v1666 = vld [vmem:[%s6 + $0x178] sm:$0xff]
  %v1667 = vld [vmem:[%s6 + $0x180] sm:$0xff]
  %v1668 = vld [vmem:[%s6 + $0x188] sm:$0xff]
  %v1669 = vld [vmem:[%s6 + $0x190] sm:$0xff]
  %v1670 = vld [vmem:[%s6 + $0x198] sm:$0xff]
  %v1671 = vld [vmem:[%s6 + $0x1a0] sm:$0xff]
  %v1672 = vld [vmem:[%s6 + $0x1a8] sm:$0xff]
  %v1673 = vld [vmem:[%s6 + $0x1b0] sm:$0xff]
  %v1674 = vld [vmem:[%s6 + $0x1b8] sm:$0xff]
  %v1675 = vld [vmem:[%s6 + $0x1c0] sm:$0xff]
  %v1676 = vld [vmem:[%s6 + $0x1c8] sm:$0xff]
  %v1677 = vld [vmem:[%s6 + $0x1d0] sm:$0xff]
  %v1678 = vld [vmem:[%s6 + $0x1d8] sm:$0xff]
  %v1679 = vld [vmem:[%s6 + $0x1e0] sm:$0xff]
  %v1680 = vld [vmem:[%s6 + $0x1e8] sm:$0xff]
  %v1681 = vld [vmem:[%s6 + $0x1f0] sm:$0xff]
  %v1682 = vld [vmem:[%s6 + $0x1f8] sm:$0xff]
  %v1683 = vld [vmem:[%s6 + $0x200] sm:$0xff]
  %v1684 = vld [vmem:[%s6 + $0x208] sm:$0xff]
  %v1685 = vld [vmem:[%s6 + $0x210] sm:$0xff]
  %v1686 = vld [vmem:[%s6 + $0x218] sm:$0xff]
  %v1687 = vld [vmem:[%s6 + $0x220] sm:$0xff]
  %v1688 = vld [vmem:[%s6 + $0x228] sm:$0xff]
  %v1689 = vld [vmem:[%s6 + $0x230] sm:$0xff]
  %v1690 = vld [vmem:[%s6 + $0x238] sm:$0xff]
  %v1691 = vld [vmem:[%s6 + $0x240] sm:$0xff]
  %v1692 = vld [vmem:[%s6 + $0x248] sm:$0xff]
  %v1693 = vld [vmem:[%s6 + $0x250] sm:$0xff]
  %v1694 = vld [vmem:[%s6 + $0x258] sm:$0xff]
  %v1695 = vld [vmem:[%s6 + $0x260] sm:$0xff]
  %v1696 = vld [vmem:[%s6 + $0x268] sm:$0xff]
  %v1697 = vld [vmem:[%s6 + $0x270] sm:$0xff]
  %v1698 = vld [vmem:[%s6 + $0x278] sm:$0xff]
  %v1699 = vld [vmem:[%s6 + $0x280] sm:$0xff]
  %v1700 = vld [vmem:[%s6 + $0x288] sm:$0xff]
  %v1701 = vld [vmem:[%s6 + $0x290] sm:$0xff]
  %v1702 = vld [vmem:[%s6 + $0x298] sm:$0xff]
  %v1703 = vld [vmem:[%s6 + $0x2a0] sm:$0xff]
  %v1704 = vld [vmem:[%s6 + $0x2a8] sm:$0xff]
  %v1705 = vld [vmem:[%s6 + $0x2b0] sm:$0xff]
  %v1706 = vld [vmem:[%s6 + $0x2b8] sm:$0xff]
  %v1707 = vld [vmem:[%s6 + $0x2c0] sm:$0xff]
  %v1708 = vld [vmem:[%s6 + $0x2c8] sm:$0xff]
  %v1709 = vld [vmem:[%s6 + $0x2d0] sm:$0xff]
  %v1710 = vld [vmem:[%s6 + $0x2d8] sm:$0xff]
  %v1711 = vld [vmem:[%s6 + $0x2e0] sm:$0xff]
  %v1712 = vld [vmem:[%s6 + $0x2e8] sm:$0xff]
  %v1713 = vld [vmem:[%s6 + $0x2f0] sm:$0xff]
  %v1714 = vld [vmem:[%s6 + $0x2f8] sm:$0xff]
  %v1715 = vld [vmem:[%s7] sm:$0xff]
  %v1716 = vld [vmem:[%s7 + $0x8] sm:$0xff]
  %v1717 = vld [vmem:[%s7 + $0x10] sm:$0xff]
  %v1718 = vld [vmem:[%s7 + $0x18] sm:$0xff]
  %v1719 = vld [vmem:[%s7 + $0x20] sm:$0xff]
  %v1720 = vld [vmem:[%s7 + $0x28] sm:$0xff]
  %v1721 = vld [vmem:[%s7 + $0x30] sm:$0xff]
  %v1722 = vld [vmem:[%s7 + $0x38] sm:$0xff]
  %v1723 = vld [vmem:[%s7 + $0x40] sm:$0xff]
  %v1724 = vld [vmem:[%s7 + $0x48] sm:$0xff]
  %v1725 = vld [vmem:[%s7 + $0x50] sm:$0xff]
  %v1726 = vld [vmem:[%s7 + $0x58] sm:$0xff]
  %v1727 = vld [vmem:[%s7 + $0x60] sm:$0xff]
  %v1728 = vld [vmem:[%s7 + $0x68] sm:$0xff]
  %v1729 = vld [vmem:[%s7 + $0x70] sm:$0xff]
  %v1730 = vld [vmem:[%s7 + $0x78] sm:$0xff]
  %v1731 = vld [vmem:[%s7 + $0x80] sm:$0xff]
  %v1732 = vld [vmem:[%s7 + $0x88] sm:$0xff]
  %v1733 = vld [vmem:[%s7 + $0x90] sm:$0xff]
  %v1734 = vld [vmem:[%s7 + $0x98] sm:$0xff]
  %v1735 = vld [vmem:[%s7 + $0xa0] sm:$0xff]
  %v1736 = vld [vmem:[%s7 + $0xa8] sm:$0xff]
  %v1737 = vld [vmem:[%s7 + $0xb0] sm:$0xff]
  %v1738 = vld [vmem:[%s7 + $0xb8] sm:$0xff]
  %v1739 = vld [vmem:[%s7 + $0xc0] sm:$0xff]
  %v1740 = vld [vmem:[%s7 + $0xc8] sm:$0xff]
  %v1741 = vld [vmem:[%s7 + $0xd0] sm:$0xff]
  %v1742 = vld [vmem:[%s7 + $0xd8] sm:$0xff]
  %v1743 = vld [vmem:[%s7 + $0xe0] sm:$0xff]
  %v1744 = vld [vmem:[%s7 + $0xe8] sm:$0xff]
  %v1745 = vld [vmem:[%s7 + $0xf0] sm:$0xff]
  %v1746 = vld [vmem:[%s7 + $0xf8] sm:$0xff]
  %v1747 = vld [vmem:[%s7 + $0x100] sm:$0xff]
  %v1748 = vld [vmem:[%s7 + $0x108] sm:$0xff]
  %v1749 = vld [vmem:[%s7 + $0x110] sm:$0xff]
  %v1750 = vld [vmem:[%s7 + $0x118] sm:$0xff]
  %v1751 = vld [vmem:[%s7 + $0x120] sm:$0xff]
  %v1752 = vld [vmem:[%s7 + $0x128] sm:$0xff]
  %v1753 = vld [vmem:[%s7 + $0x130] sm:$0xff]
  %v1754 = vld [vmem:[%s7 + $0x138] sm:$0xff]
  %v1755 = vld [vmem:[%s7 + $0x140] sm:$0xff]
  %v1756 = vld [vmem:[%s7 + $0x148] sm:$0xff]
  %v1757 = vld [vmem:[%s7 + $0x150] sm:$0xff]
  %v1758 = vld [vmem:[%s7 + $0x158] sm:$0xff]
  %v1759 = vld [vmem:[%s7 + $0x160] sm:$0xff]
  %v1760 = vld [vmem:[%s7 + $0x168] sm:$0xff]
  %v1761 = vld [vmem:[%s7 + $0x170] sm:$0xff]
  %v1762 = vld [vmem:[%s7 + $0x178] sm:$0xff]
  %v1763 = vld [vmem:[%s7 + $0x180] sm:$0xff]
  %v1764 = vld [vmem:[%s7 + $0x188] sm:$0xff]
  %v1765 = vld [vmem:[%s7 + $0x190] sm:$0xff]
  %v1766 = vld [vmem:[%s7 + $0x198] sm:$0xff]
  %v1767 = vld [vmem:[%s7 + $0x1a0] sm:$0xff]
  %v1768 = vld [vmem:[%s7 + $0x1a8] sm:$0xff]
  %v1769 = vld [vmem:[%s7 + $0x1b0] sm:$0xff]
  %v1770 = vld [vmem:[%s7 + $0x1b8] sm:$0xff]
  %v1771 = vld [vmem:[%s7 + $0x1c0] sm:$0xff]
  %v1772 = vld [vmem:[%s7 + $0x1c8] sm:$0xff]
  %v1773 = vld [vmem:[%s7 + $0x1d0] sm:$0xff]
  %v1774 = vld [vmem:[%s7 + $0x1d8] sm:$0xff]
  %v1775 = vld [vmem:[%s7 + $0x1e0] sm:$0xff]
  %v1776 = vld [vmem:[%s7 + $0x1e8] sm:$0xff]
  %v1777 = vld [vmem:[%s7 + $0x1f0] sm:$0xff]
  %v1778 = vld [vmem:[%s7 + $0x1f8] sm:$0xff]
  %v1779 = vld [vmem:[%s7 + $0x200] sm:$0xff]
  %v1780 = vld [vmem:[%s7 + $0x208] sm:$0xff]
  %v1781 = vld [vmem:[%s7 + $0x210] sm:$0xff]
  %v1782 = vld [vmem:[%s7 + $0x218] sm:$0xff]
  %v1783 = vld [vmem:[%s7 + $0x220] sm:$0xff]
  %v1784 = vld [vmem:[%s7 + $0x228] sm:$0xff]
  %v1785 = vld [vmem:[%s7 + $0x230] sm:$0xff]
  %v1786 = vld [vmem:[%s7 + $0x238] sm:$0xff]
  %v1787 = vld [vmem:[%s7 + $0x240] sm:$0xff]
  %v1788 = vld [vmem:[%s7 + $0x248] sm:$0xff]
  %v1789 = vld [vmem:[%s7 + $0x250] sm:$0xff]
  %v1790 = vld [vmem:[%s7 + $0x258] sm:$0xff]
  %v1791 = vld [vmem:[%s7 + $0x260] sm:$0xff]
  %v1792 = vld [vmem:[%s7 + $0x268] sm:$0xff]
  %v1793 = vld [vmem:[%s7 + $0x270] sm:$0xff]
  %v1794 = vld [vmem:[%s7 + $0x278] sm:$0xff]
  %v1795 = vld [vmem:[%s7 + $0x280] sm:$0xff]
  %v1796 = vld [vmem:[%s7 + $0x288] sm:$0xff]
  %v1797 = vld [vmem:[%s7 + $0x290] sm:$0xff]
  %v1798 = vld [vmem:[%s7 + $0x298] sm:$0xff]
  %v1799 = vld [vmem:[%s7 + $0x2a0] sm:$0xff]
  %v1800 = vld [vmem:[%s7 + $0x2a8] sm:$0xff]
  %v1801 = vld [vmem:[%s7 + $0x2b0] sm:$0xff]
  %v1802 = vld [vmem:[%s7 + $0x2b8] sm:$0xff]
  %v1803 = vld [vmem:[%s7 + $0x2c0] sm:$0xff]
  %v1804 = vld [vmem:[%s7 + $0x2c8] sm:$0xff]
  %v1805 = vld [vmem:[%s7 + $0x2d0] sm:$0xff]
  %v1806 = vld [vmem:[%s7 + $0x2d8] sm:$0xff]
  %v1807 = vld [vmem:[%s7 + $0x2e0] sm:$0xff]
  %v1808 = vld [vmem:[%s7 + $0x2e8] sm:$0xff]
  %v1809 = vld [vmem:[%s7 + $0x2f0] sm:$0xff]
  %v1810 = vld [vmem:[%s7 + $0x2f8] sm:$0xff]
  %v1907 = vunpack.c.l.b16 %v1715
  %v1908 = vunpack.c.h.b16 %v1715
  %v1909 = vunpack.c.l.b16 %v1716
  %v1910 = vunpack.c.h.b16 %v1716
  %v1911 = vunpack.c.l.b16 %v1717
  %v1912 = vunpack.c.h.b16 %v1717
  %v1913 = vunpack.c.l.b16 %v1718
  %v1914 = vunpack.c.h.b16 %v1718
  %v1915 = vunpack.c.l.b16 %v1719
  %v1916 = vunpack.c.h.b16 %v1719
  %v1917 = vunpack.c.l.b16 %v1720
  %v1918 = vunpack.c.h.b16 %v1720
  %v1919 = vunpack.c.l.b16 %v1721
  %v1920 = vunpack.c.h.b16 %v1721
  %v1921 = vunpack.c.l.b16 %v1722
  %v1922 = vunpack.c.h.b16 %v1722
  %v1923 = vunpack.c.l.b16 %v1723
  %v1924 = vunpack.c.h.b16 %v1723
  %v1925 = vunpack.c.l.b16 %v1724
  %v1926 = vunpack.c.h.b16 %v1724
  %v1927 = vunpack.c.l.b16 %v1725
  %v1928 = vunpack.c.h.b16 %v1725
  %v1929 = vunpack.c.l.b16 %v1726
  %v1930 = vunpack.c.h.b16 %v1726
  %v1931 = vunpack.c.l.b16 %v1727
  %v1932 = vunpack.c.h.b16 %v1727
  %v1933 = vunpack.c.l.b16 %v1728
  %v1934 = vunpack.c.h.b16 %v1728
  %v1935 = vunpack.c.l.b16 %v1729
  %v1936 = vunpack.c.h.b16 %v1729
  %v1937 = vunpack.c.l.b16 %v1730
  %v1938 = vunpack.c.h.b16 %v1730
  %v1939 = vunpack.c.l.b16 %v1731
  %v1940 = vunpack.c.h.b16 %v1731
  %v1941 = vunpack.c.l.b16 %v1732
  %v1942 = vunpack.c.h.b16 %v1732
  %v1943 = vunpack.c.l.b16 %v1733
  %v1944 = vunpack.c.h.b16 %v1733
  %v1945 = vunpack.c.l.b16 %v1734
  %v1946 = vunpack.c.h.b16 %v1734
  %v1947 = vunpack.c.l.b16 %v1735
  %v1948 = vunpack.c.h.b16 %v1735
  %v1949 = vunpack.c.l.b16 %v1736
  %v1950 = vunpack.c.h.b16 %v1736
  %v1951 = vunpack.c.l.b16 %v1737
  %v1952 = vunpack.c.h.b16 %v1737
  %v1953 = vunpack.c.l.b16 %v1738
  %v1954 = vunpack.c.h.b16 %v1738
  %v1955 = vunpack.c.l.b16 %v1739
  %v1956 = vunpack.c.h.b16 %v1739
  %v1957 = vunpack.c.l.b16 %v1740
  %v1958 = vunpack.c.h.b16 %v1740
  %v1959 = vunpack.c.l.b16 %v1741
  %v1960 = vunpack.c.h.b16 %v1741
  %v1961 = vunpack.c.l.b16 %v1742
  %v1962 = vunpack.c.h.b16 %v1742
  %v1963 = vunpack.c.l.b16 %v1743
  %v1964 = vunpack.c.h.b16 %v1743
  %v1965 = vunpack.c.l.b16 %v1744
  %v1966 = vunpack.c.h.b16 %v1744
  %v1967 = vunpack.c.l.b16 %v1745
  %v1968 = vunpack.c.h.b16 %v1745
  %v1969 = vunpack.c.l.b16 %v1746
  %v1970 = vunpack.c.h.b16 %v1746
  %v1971 = vunpack.c.l.b16 %v1747
  %v1972 = vunpack.c.h.b16 %v1747
  %v1973 = vunpack.c.l.b16 %v1748
  %v1974 = vunpack.c.h.b16 %v1748
  %v1975 = vunpack.c.l.b16 %v1749
  %v1976 = vunpack.c.h.b16 %v1749
  %v1977 = vunpack.c.l.b16 %v1750
  %v1978 = vunpack.c.h.b16 %v1750
  %v1979 = vunpack.c.l.b16 %v1751
  %v1980 = vunpack.c.h.b16 %v1751
  %v1981 = vunpack.c.l.b16 %v1752
  %v1982 = vunpack.c.h.b16 %v1752
  %v1983 = vunpack.c.l.b16 %v1753
  %v1984 = vunpack.c.h.b16 %v1753
  %v1985 = vunpack.c.l.b16 %v1754
  %v1986 = vunpack.c.h.b16 %v1754
  %v1987 = vunpack.c.l.b16 %v1755
  %v1988 = vunpack.c.h.b16 %v1755
  %v1989 = vunpack.c.l.b16 %v1756
  %v1990 = vunpack.c.h.b16 %v1756
  %v1991 = vunpack.c.l.b16 %v1757
  %v1992 = vunpack.c.h.b16 %v1757
  %v1993 = vunpack.c.l.b16 %v1758
  %v1994 = vunpack.c.h.b16 %v1758
  %v1995 = vunpack.c.l.b16 %v1759
  %v1996 = vunpack.c.h.b16 %v1759
  %v1997 = vunpack.c.l.b16 %v1760
  %v1998 = vunpack.c.h.b16 %v1760
  %v1999 = vunpack.c.l.b16 %v1761
  %v2000 = vunpack.c.h.b16 %v1761
  %v2001 = vunpack.c.l.b16 %v1762
  %v2002 = vunpack.c.h.b16 %v1762
  %v2003 = vunpack.c.l.b16 %v1763
  %v2004 = vunpack.c.h.b16 %v1763
  %v2005 = vunpack.c.l.b16 %v1764
  %v2006 = vunpack.c.h.b16 %v1764
  %v2007 = vunpack.c.l.b16 %v1765
  %v2008 = vunpack.c.h.b16 %v1765
  %v2009 = vunpack.c.l.b16 %v1766
  %v2010 = vunpack.c.h.b16 %v1766
  %v2011 = vunpack.c.l.b16 %v1767
  %v2012 = vunpack.c.h.b16 %v1767
  %v2013 = vunpack.c.l.b16 %v1768
  %v2014 = vunpack.c.h.b16 %v1768
  %v2015 = vunpack.c.l.b16 %v1769
  %v2016 = vunpack.c.h.b16 %v1769
  %v2017 = vunpack.c.l.b16 %v1770
  %v2018 = vunpack.c.h.b16 %v1770
  %v2019 = vunpack.c.l.b16 %v1771
  %v2020 = vunpack.c.h.b16 %v1771
  %v2021 = vunpack.c.l.b16 %v1772
  %v2022 = vunpack.c.h.b16 %v1772
  %v2023 = vunpack.c.l.b16 %v1773
  %v2024 = vunpack.c.h.b16 %v1773
  %v2025 = vunpack.c.l.b16 %v1774
  %v2026 = vunpack.c.h.b16 %v1774
  %v2027 = vunpack.c.l.b16 %v1775
  %v2028 = vunpack.c.h.b16 %v1775
  %v2029 = vunpack.c.l.b16 %v1776
  %v2030 = vunpack.c.h.b16 %v1776
  %v2031 = vunpack.c.l.b16 %v1777
  %v2032 = vunpack.c.h.b16 %v1777
  %v2033 = vunpack.c.l.b16 %v1778
  %v2034 = vunpack.c.h.b16 %v1778
  %v2035 = vunpack.c.l.b16 %v1779
  %v2036 = vunpack.c.h.b16 %v1779
  %v2037 = vunpack.c.l.b16 %v1780
  %v2038 = vunpack.c.h.b16 %v1780
  %v2039 = vunpack.c.l.b16 %v1781
  %v2040 = vunpack.c.h.b16 %v1781
  %v2041 = vunpack.c.l.b16 %v1782
  %v2042 = vunpack.c.h.b16 %v1782
  %v2043 = vunpack.c.l.b16 %v1783
  %v2044 = vunpack.c.h.b16 %v1783
  %v2045 = vunpack.c.l.b16 %v1784
  %v2046 = vunpack.c.h.b16 %v1784
  %v2047 = vunpack.c.l.b16 %v1785
  %v2048 = vunpack.c.h.b16 %v1785
  %v2049 = vunpack.c.l.b16 %v1786
  %v2050 = vunpack.c.h.b16 %v1786
  %v2051 = vunpack.c.l.b16 %v1787
  %v2052 = vunpack.c.h.b16 %v1787
  %v2053 = vunpack.c.l.b16 %v1788
  %v2054 = vunpack.c.h.b16 %v1788
  %v2055 = vunpack.c.l.b16 %v1789
  %v2056 = vunpack.c.h.b16 %v1789
  %v2057 = vunpack.c.l.b16 %v1790
  %v2058 = vunpack.c.h.b16 %v1790
  %v2059 = vunpack.c.l.b16 %v1791
  %v2060 = vunpack.c.h.b16 %v1791
  %v2061 = vunpack.c.l.b16 %v1792
  %v2062 = vunpack.c.h.b16 %v1792
  %v2063 = vunpack.c.l.b16 %v1793
  %v2064 = vunpack.c.h.b16 %v1793
  %v2065 = vunpack.c.l.b16 %v1794
  %v2066 = vunpack.c.h.b16 %v1794
  %v2067 = vunpack.c.l.b16 %v1795
  %v2068 = vunpack.c.h.b16 %v1795
  %v2069 = vunpack.c.l.b16 %v1796
  %v2070 = vunpack.c.h.b16 %v1796
  %v2071 = vunpack.c.l.b16 %v1797
  %v2072 = vunpack.c.h.b16 %v1797
  %v2073 = vunpack.c.l.b16 %v1798
  %v2074 = vunpack.c.h.b16 %v1798
  %v2075 = vunpack.c.l.b16 %v1799
  %v2076 = vunpack.c.h.b16 %v1799
  %v2077 = vunpack.c.l.b16 %v1800
  %v2078 = vunpack.c.h.b16 %v1800
  %v2079 = vunpack.c.l.b16 %v1801
  %v2080 = vunpack.c.h.b16 %v1801
  %v2081 = vunpack.c.l.b16 %v1802
  %v2082 = vunpack.c.h.b16 %v1802
  %v2083 = vunpack.c.l.b16 %v1803
  %v2084 = vunpack.c.h.b16 %v1803
  %v2085 = vunpack.c.l.b16 %v1804
  %v2086 = vunpack.c.h.b16 %v1804
  %v2087 = vunpack.c.l.b16 %v1805
  %v2088 = vunpack.c.h.b16 %v1805
  %v2089 = vunpack.c.l.b16 %v1806
  %v2090 = vunpack.c.h.b16 %v1806
  %v2091 = vunpack.c.l.b16 %v1807
  %v2092 = vunpack.c.h.b16 %v1807
  %v2093 = vunpack.c.l.b16 %v1808
  %v2094 = vunpack.c.h.b16 %v1808
  %v2095 = vunpack.c.l.b16 %v1809
  %v2096 = vunpack.c.h.b16 %v1809
  %v2097 = vunpack.c.l.b16 %v1810
  %v2098 = vunpack.c.h.b16 %v1810
  %v2099 = vpack.c.b16 %v1911, %v1907
  %v2100 = vpack.c.b16 %v1912, %v1908
  %v2101 = vpack.c.b16 %v1913, %v1909
  %v2102 = vpack.c.b16 %v1914, %v1910
  %v2103 = vpack.c.b16 %v1919, %v1915
  %v2104 = vpack.c.b16 %v1920, %v1916
  %v2105 = vpack.c.b16 %v1921, %v1917
  %v2106 = vpack.c.b16 %v1922, %v1918
  %v2107 = vpack.c.b16 %v1927, %v1923
  %v2108 = vpack.c.b16 %v1928, %v1924
  %v2109 = vpack.c.b16 %v1929, %v1925
  %v2110 = vpack.c.b16 %v1930, %v1926
  %v2111 = vpack.c.b16 %v1935, %v1931
  %v2112 = vpack.c.b16 %v1936, %v1932
  %v2113 = vpack.c.b16 %v1937, %v1933
  %v2114 = vpack.c.b16 %v1938, %v1934
  %v2115 = vpack.c.b16 %v1943, %v1939
  %v2116 = vpack.c.b16 %v1944, %v1940
  %v2117 = vpack.c.b16 %v1945, %v1941
  %v2118 = vpack.c.b16 %v1946, %v1942
  %v2119 = vpack.c.b16 %v1951, %v1947
  %v2120 = vpack.c.b16 %v1952, %v1948
  %v2121 = vpack.c.b16 %v1953, %v1949
  %v2122 = vpack.c.b16 %v1954, %v1950
  %v2123 = vpack.c.b16 %v1959, %v1955
  %v2124 = vpack.c.b16 %v1960, %v1956
  %v2125 = vpack.c.b16 %v1961, %v1957
  %v2126 = vpack.c.b16 %v1962, %v1958
  %v2127 = vpack.c.b16 %v1967, %v1963
  %v2128 = vpack.c.b16 %v1968, %v1964
  %v2129 = vpack.c.b16 %v1969, %v1965
  %v2130 = vpack.c.b16 %v1970, %v1966
  %v2131 = vpack.c.b16 %v1975, %v1971
  %v2132 = vpack.c.b16 %v1976, %v1972
  %v2133 = vpack.c.b16 %v1977, %v1973
  %v2134 = vpack.c.b16 %v1978, %v1974
  %v2135 = vpack.c.b16 %v1983, %v1979
  %v2136 = vpack.c.b16 %v1984, %v1980
  %v2137 = vpack.c.b16 %v1985, %v1981
  %v2138 = vpack.c.b16 %v1986, %v1982
  %v2139 = vpack.c.b16 %v1991, %v1987
  %v2140 = vpack.c.b16 %v1992, %v1988
  %v2141 = vpack.c.b16 %v1993, %v1989
  %v2142 = vpack.c.b16 %v1994, %v1990
  %v2143 = vpack.c.b16 %v1999, %v1995
  %v2144 = vpack.c.b16 %v2000, %v1996
  %v2145 = vpack.c.b16 %v2001, %v1997
  %v2146 = vpack.c.b16 %v2002, %v1998
  %v2147 = vpack.c.b16 %v2007, %v2003
  %v2148 = vpack.c.b16 %v2008, %v2004
  %v2149 = vpack.c.b16 %v2009, %v2005
  %v2150 = vpack.c.b16 %v2010, %v2006
  %v2151 = vpack.c.b16 %v2015, %v2011
  %v2152 = vpack.c.b16 %v2016, %v2012
  %v2153 = vpack.c.b16 %v2017, %v2013
  %v2154 = vpack.c.b16 %v2018, %v2014
  %v2155 = vpack.c.b16 %v2023, %v2019
  %v2156 = vpack.c.b16 %v2024, %v2020
  %v2157 = vpack.c.b16 %v2025, %v2021
  %v2158 = vpack.c.b16 %v2026, %v2022
  %v2159 = vpack.c.b16 %v2031, %v2027
  %v2160 = vpack.c.b16 %v2032, %v2028
  %v2161 = vpack.c.b16 %v2033, %v2029
  %v2162 = vpack.c.b16 %v2034, %v2030
  %v2163 = vpack.c.b16 %v2039, %v2035
  %v2164 = vpack.c.b16 %v2040, %v2036
  %v2165 = vpack.c.b16 %v2041, %v2037
  %v2166 = vpack.c.b16 %v2042, %v2038
  %v2167 = vpack.c.b16 %v2047, %v2043
  %v2168 = vpack.c.b16 %v2048, %v2044
  %v2169 = vpack.c.b16 %v2049, %v2045
  %v2170 = vpack.c.b16 %v2050, %v2046
  %v2171 = vpack.c.b16 %v2055, %v2051
  %v2172 = vpack.c.b16 %v2056, %v2052
  %v2173 = vpack.c.b16 %v2057, %v2053
  %v2174 = vpack.c.b16 %v2058, %v2054
  %v2175 = vpack.c.b16 %v2063, %v2059
  %v2176 = vpack.c.b16 %v2064, %v2060
  %v2177 = vpack.c.b16 %v2065, %v2061
  %v2178 = vpack.c.b16 %v2066, %v2062
  %v2179 = vpack.c.b16 %v2071, %v2067
  %v2180 = vpack.c.b16 %v2072, %v2068
  %v2181 = vpack.c.b16 %v2073, %v2069
  %v2182 = vpack.c.b16 %v2074, %v2070
  %v2183 = vpack.c.b16 %v2079, %v2075
  %v2184 = vpack.c.b16 %v2080, %v2076
  %v2185 = vpack.c.b16 %v2081, %v2077
  %v2186 = vpack.c.b16 %v2082, %v2078
  %v2187 = vpack.c.b16 %v2087, %v2083
  %v2188 = vpack.c.b16 %v2088, %v2084
  %v2189 = vpack.c.b16 %v2089, %v2085
  %v2190 = vpack.c.b16 %v2090, %v2086
  %v2191 = vpack.c.b16 %v2095, %v2091
  %v2192 = vpack.c.b16 %v2096, %v2092
  %v2193 = vpack.c.b16 %v2097, %v2093
  %v2194 = vpack.c.b16 %v2098, %v2094
  %2291 = vmatprep.subr.bf16.mxu0 %v2100
  %2292 = vmatpush1.bf16.msra.mxu0 %v2099
  %2293 = vmatprep.subr.bf16.mxu0 %v2104
  %2294 = vmatpush1.bf16.msra.mxu0 %v2103
  %2295 = vmatprep.subr.bf16.mxu0 %v2108
  %2296 = vmatpush1.bf16.msra.mxu0 %v2107
  %2297 = vmatprep.subr.bf16.mxu0 %v2112
  %2298 = vmatpush1.bf16.msra.mxu0 %v2111
  %2299 = vmatprep.subr.bf16.mxu0 %v2116
  %2300 = vmatpush1.bf16.msra.mxu0 %v2115
  %2301 = vmatprep.subr.bf16.mxu0 %v2120
  %2302 = vmatpush1.bf16.msra.mxu0 %v2119
  %2303 = vmatprep.subr.bf16.mxu0 %v2124
  %2304 = vmatpush1.bf16.msra.mxu0 %v2123
  %2305 = vmatprep.subr.bf16.mxu0 %v2128
  %2306 = vmatpush1.bf16.msra.mxu0 %v2127
  %2307 = vmatprep.subr.bf16.mxu0 %v2132
  %2308 = vmatpush1.bf16.msra.mxu0 %v2131
  %2309 = vmatprep.subr.bf16.mxu0 %v2136
  %2310 = vmatpush1.bf16.msra.mxu0 %v2135
  %2311 = vmatprep.subr.bf16.mxu0 %v2140
  %2312 = vmatpush1.bf16.msra.mxu0 %v2139
  %2313 = vmatprep.subr.bf16.mxu0 %v2144
  %2314 = vmatpush1.bf16.msra.mxu0 %v2143
  %2315 = vmatprep.subr.bf16.mxu0 %v2148
  %2316 = vmatpush1.bf16.msra.mxu0 %v2147
  %2317 = vmatprep.subr.bf16.mxu0 %v2152
  %2318 = vmatpush1.bf16.msra.mxu0 %v2151
  %2319 = vmatprep.subr.bf16.mxu0 %v2156
  %2320 = vmatpush1.bf16.msra.mxu0 %v2155
  %2321 = vmatprep.subr.bf16.mxu0 %v2160
  %2322 = vmatpush1.bf16.msra.mxu0 %v2159
  %2323 = vmatprep.mubr.bf16.mxu0 %v1617
  %2324 = vmatmul.mubr.bf16.gmra.mrb[0].mxu0 %v1616
  %v2325 = vpop.f32.mrb[0].mxu0
  %v2326 = vadd.f32 0.0, %v2325
  %v2327 = vpop.f32.mrb[0].mxu0
  %v2328 = vadd.f32 0.0, %v2327
  %v2329 = vpop.f32.mrb[0].mxu0
  %v2330 = vadd.f32 0.0, %v2329
  %v2331 = vpop.f32.mrb[0].mxu0
  %v2332 = vadd.f32 0.0, %v2331
  %2333 = vdwg.mxu0
  %2334 = vmatprep.subr.bf16.mxu0 %v2164
  %2335 = vmatpush1.bf16.msra.mxu0 %v2163
  %2336 = vmatprep.subr.bf16.mxu0 %v2168
  %2337 = vmatpush1.bf16.msra.mxu0 %v2167
  %2338 = vmatprep.subr.bf16.mxu0 %v2172
  %2339 = vmatpush1.bf16.msra.mxu0 %v2171
  %2340 = vmatprep.subr.bf16.mxu0 %v2176
  %2341 = vmatpush1.bf16.msra.mxu0 %v2175
  %2342 = vmatprep.subr.bf16.mxu0 %v2180
  %2343 = vmatpush1.bf16.msra.mxu0 %v2179
  %2344 = vmatprep.subr.bf16.mxu0 %v2184
  %2345 = vmatpush1.bf16.msra.mxu0 %v2183
  %2346 = vmatprep.subr.bf16.mxu0 %v2188
  %2347 = vmatpush1.bf16.msra.mxu0 %v2187
  %2348 = vmatprep.subr.bf16.mxu0 %v2192
  %2349 = vmatpush1.bf16.msra.mxu0 %v2191
  %2350 = vmatprep.subr.bf16.mxu0 0
  %2351 = vmatpush1.bf16.msra.mxu0 0
  %2352 = vmatprep.subr.bf16.mxu0 0
  %2353 = vmatpush1.bf16.msra.mxu0 0
  %2354 = vmatprep.subr.bf16.mxu0 0
  %2355 = vmatpush1.bf16.msra.mxu0 0
  %2356 = vmatprep.subr.bf16.mxu0 0
  %2357 = vmatpush1.bf16.msra.mxu0 0
  %2358 = vmatprep.subr.bf16.mxu0 0
  %2359 = vmatpush1.bf16.msra.mxu0 0
  %2360 = vmatprep.subr.bf16.mxu0 0
  %2361 = vmatpush1.bf16.msra.mxu0 0
  %2362 = vmatprep.subr.bf16.mxu0 0
  %2363 = vmatpush1.bf16.msra.mxu0 0
  %2364 = vmatprep.subr.bf16.mxu0 0
  %2365 = vmatpush1.bf16.msra.mxu0 0
  %2366 = vmatprep.mubr.bf16.mxu0 0
  %2367 = vmatmul.mubr.bf16.gmra.mrb[0].mxu0 %v1618
  %v2368 = vpop.f32.mrb[0].mxu0
  %v2369 = vadd.f32 %v2326, %v2368
  %v2370 = vpop.f32.mrb[0].mxu0
  %v2371 = vadd.f32 %v2328, %v2370
  %v2372 = vpop.f32.mrb[0].mxu0
  %v2373 = vadd.f32 %v2330, %v2372
  %v2374 = vpop.f32.mrb[0].mxu0
  %v2375 = vadd.f32 %v2332, %v2374
  %2376 = vdwg.mxu0
  %2377 = vmatprep.subr.bf16.mxu0 %v2102
  %2378 = vmatpush1.bf16.msra.mxu0 %v2101
  %2379 = vmatprep.subr.bf16.mxu0 %v2106
  %2380 = vmatpush1.bf16.msra.mxu0 %v2105
  %2381 = vmatprep.subr.bf16.mxu0 %v2110
  %2382 = vmatpush1.bf16.msra.mxu0 %v2109
  %2383 = vmatprep.subr.bf16.mxu0 %v2114
  %2384 = vmatpush1.bf16.msra.mxu0 %v2113
  %2385 = vmatprep.subr.bf16.mxu0 %v2118
  %2386 = vmatpush1.bf16.msra.mxu0 %v2117
  %2387 = vmatprep.subr.bf16.mxu0 %v2122
  %2388 = vmatpush1.bf16.msra.mxu0 %v2121
  %2389 = vmatprep.subr.bf16.mxu0 %v2126
  %2390 = vmatpush1.bf16.msra.mxu0 %v2125
  %2391 = vmatprep.subr.bf16.mxu0 %v2130
  %2392 = vmatpush1.bf16.msra.mxu0 %v2129
  %2393 = vmatprep.subr.bf16.mxu0 %v2134
  %2394 = vmatpush1.bf16.msra.mxu0 %v2133
  %2395 = vmatprep.subr.bf16.mxu0 %v2138
  %2396 = vmatpush1.bf16.msra.mxu0 %v2137
  %2397 = vmatprep.subr.bf16.mxu0 %v2142
  %2398 = vmatpush1.bf16.msra.mxu0 %v2141
  %2399 = vmatprep.subr.bf16.mxu0 %v2146
  %2400 = vmatpush1.bf16.msra.mxu0 %v2145
  %2401 = vmatprep.subr.bf16.mxu0 %v2150
  %2402 = vmatpush1.bf16.msra.mxu0 %v2149
  %2403 = vmatprep.subr.bf16.mxu0 %v2154
  %2404 = vmatpush1.bf16.msra.mxu0 %v2153
  %2405 = vmatprep.subr.bf16.mxu0 %v2158
  %2406 = vmatpush1.bf16.msra.mxu0 %v2157
  %2407 = vmatprep.subr.bf16.mxu0 %v2162
  %2408 = vmatpush1.bf16.msra.mxu0 %v2161
  %2409 = vmatprep.mubr.bf16.mxu0 %v1617
  %2410 = vmatmul.mubr.bf16.gmra.mrb[0].mxu0 %v1616
  %v2411 = vpop.f32.mrb[0].mxu0
  %v2412 = vadd.f32 0.0, %v2411
  %v2413 = vpop.f32.mrb[0].mxu0
  %v2414 = vadd.f32 0.0, %v2413
  %v2415 = vpop.f32.mrb[0].mxu0
  %v2416 = vadd.f32 0.0, %v2415
  %v2417 = vpop.f32.mrb[0].mxu0
  %v2418 = vadd.f32 0.0, %v2417
  %2419 = vdwg.mxu0
  %2420 = vmatprep.subr.bf16.mxu0 %v2166
  %2421 = vmatpush1.bf16.msra.mxu0 %v2165
  %2422 = vmatprep.subr.bf16.mxu0 %v2170
  %2423 = vmatpush1.bf16.msra.mxu0 %v2169
  %2424 = vmatprep.subr.bf16.mxu0 %v2174
  %2425 = vmatpush1.bf16.msra.mxu0 %v2173
  %2426 = vmatprep.subr.bf16.mxu0 %v2178
  %2427 = vmatpush1.bf16.msra.mxu0 %v2177
  %2428 = vmatprep.subr.bf16.mxu0 %v2182
  %2429 = vmatpush1.bf16.msra.mxu0 %v2181
  %2430 = vmatprep.subr.bf16.mxu0 %v2186
  %2431 = vmatpush1.bf16.msra.mxu0 %v2185
  %2432 = vmatprep.subr.bf16.mxu0 %v2190
  %2433 = vmatpush1.bf16.msra.mxu0 %v2189
  %2434 = vmatprep.subr.bf16.mxu0 %v2194
  %2435 = vmatpush1.bf16.msra.mxu0 %v2193
  %2436 = vmatprep.subr.bf16.mxu0 0
  %2437 = vmatpush1.bf16.msra.mxu0 0
  %2438 = vmatprep.subr.bf16.mxu0 0
  %2439 = vmatpush1.bf16.msra.mxu0 0
  %2440 = vmatprep.subr.bf16.mxu0 0
  %2441 = vmatpush1.bf16.msra.mxu0 0
  %2442 = vmatprep.subr.bf16.mxu0 0
  %2443 = vmatpush1.bf16.msra.mxu0 0
  %2444 = vmatprep.subr.bf16.mxu0 0
  %2445 = vmatpush1.bf16.msra.mxu0 0
  %2446 = vmatprep.subr.bf16.mxu0 0
  %2447 = vmatpush1.bf16.msra.mxu0 0
  %2448 = vmatprep.subr.bf16.mxu0 0
  %2449 = vmatpush1.bf16.msra.mxu0 0
  %2450 = vmatprep.subr.bf16.mxu0 0
  %2451 = vmatpush1.bf16.msra.mxu0 0
  %2452 = vmatprep.mubr.bf16.mxu0 0
  %2453 = vmatmul.mubr.bf16.gmra.mrb[0].mxu0 %v1618
  %v2454 = vpop.f32.mrb[0].mxu0
  %v2455 = vadd.f32 %v2412, %v2454
  %v2456 = vpop.f32.mrb[0].mxu0
  %v2457 = vadd.f32 %v2414, %v2456
  %v2458 = vpop.f32.mrb[0].mxu0
  %v2459 = vadd.f32 %v2416, %v2458
  %v2460 = vpop.f32.mrb[0].mxu0
  %v2461 = vadd.f32 %v2418, %v2460
  %2462 = vdwg.mxu0
  %v2559 = vunpack.c.l.b16 %v1619
  %v2560 = vunpack.c.h.b16 %v1619
  %v2561 = vunpack.c.l.b16 %v1620
  %v2562 = vunpack.c.h.b16 %v1620
  %v2563 = vunpack.c.l.b16 %v1621
  %v2564 = vunpack.c.h.b16 %v1621
  %v2565 = vunpack.c.l.b16 %v1622
  %v2566 = vunpack.c.h.b16 %v1622
  %v2567 = vunpack.c.l.b16 %v1623
  %v2568 = vunpack.c.h.b16 %v1623
  %v2569 = vunpack.c.l.b16 %v1624
  %v2570 = vunpack.c.h.b16 %v1624
  %v2571 = vunpack.c.l.b16 %v1625
  %v2572 = vunpack.c.h.b16 %v1625
  %v2573 = vunpack.c.l.b16 %v1626
  %v2574 = vunpack.c.h.b16 %v1626
  %v2575 = vunpack.c.l.b16 %v1627
  %v2576 = vunpack.c.h.b16 %v1627
  %v2577 = vunpack.c.l.b16 %v1628
  %v2578 = vunpack.c.h.b16 %v1628
  %v2579 = vunpack.c.l.b16 %v1629
  %v2580 = vunpack.c.h.b16 %v1629
  %v2581 = vunpack.c.l.b16 %v1630
  %v2582 = vunpack.c.h.b16 %v1630
  %v2583 = vunpack.c.l.b16 %v1631
  %v2584 = vunpack.c.h.b16 %v1631
  %v2585 = vunpack.c.l.b16 %v1632
  %v2586 = vunpack.c.h.b16 %v1632
  %v2587 = vunpack.c.l.b16 %v1633
  %v2588 = vunpack.c.h.b16 %v1633
  %v2589 = vunpack.c.l.b16 %v1634
  %v2590 = vunpack.c.h.b16 %v1634
  %v2591 = vunpack.c.l.b16 %v1635
  %v2592 = vunpack.c.h.b16 %v1635
  %v2593 = vunpack.c.l.b16 %v1636
  %v2594 = vunpack.c.h.b16 %v1636
  %v2595 = vunpack.c.l.b16 %v1637
  %v2596 = vunpack.c.h.b16 %v1637
  %v2597 = vunpack.c.l.b16 %v1638
  %v2598 = vunpack.c.h.b16 %v1638
  %v2599 = vunpack.c.l.b16 %v1639
  %v2600 = vunpack.c.h.b16 %v1639
  %v2601 = vunpack.c.l.b16 %v1640
  %v2602 = vunpack.c.h.b16 %v1640
  %v2603 = vunpack.c.l.b16 %v1641
  %v2604 = vunpack.c.h.b16 %v1641
  %v2605 = vunpack.c.l.b16 %v1642
  %v2606 = vunpack.c.h.b16 %v1642
  %v2607 = vunpack.c.l.b16 %v1643
  %v2608 = vunpack.c.h.b16 %v1643
  %v2609 = vunpack.c.l.b16 %v1644
  %v2610 = vunpack.c.h.b16 %v1644
  %v2611 = vunpack.c.l.b16 %v1645
  %v2612 = vunpack.c.h.b16 %v1645
  %v2613 = vunpack.c.l.b16 %v1646
  %v2614 = vunpack.c.h.b16 %v1646
  %v2615 = vunpack.c.l.b16 %v1647
  %v2616 = vunpack.c.h.b16 %v1647
  %v2617 = vunpack.c.l.b16 %v1648
  %v2618 = vunpack.c.h.b16 %v1648
  %v2619 = vunpack.c.l.b16 %v1649
  %v2620 = vunpack.c.h.b16 %v1649
  %v2621 = vunpack.c.l.b16 %v1650
  %v2622 = vunpack.c.h.b16 %v1650
  %v2623 = vunpack.c.l.b16 %v1651
  %v2624 = vunpack.c.h.b16 %v1651
  %v2625 = vunpack.c.l.b16 %v1652
  %v2626 = vunpack.c.h.b16 %v1652
  %v2627 = vunpack.c.l.b16 %v1653
  %v2628 = vunpack.c.h.b16 %v1653
  %v2629 = vunpack.c.l.b16 %v1654
  %v2630 = vunpack.c.h.b16 %v1654
  %v2631 = vunpack.c.l.b16 %v1655
  %v2632 = vunpack.c.h.b16 %v1655
  %v2633 = vunpack.c.l.b16 %v1656
  %v2634 = vunpack.c.h.b16 %v1656
  %v2635 = vunpack.c.l.b16 %v1657
  %v2636 = vunpack.c.h.b16 %v1657
  %v2637 = vunpack.c.l.b16 %v1658
  %v2638 = vunpack.c.h.b16 %v1658
  %v2639 = vunpack.c.l.b16 %v1659
  %v2640 = vunpack.c.h.b16 %v1659
  %v2641 = vunpack.c.l.b16 %v1660
  %v2642 = vunpack.c.h.b16 %v1660
  %v2643 = vunpack.c.l.b16 %v1661
  %v2644 = vunpack.c.h.b16 %v1661
  %v2645 = vunpack.c.l.b16 %v1662
  %v2646 = vunpack.c.h.b16 %v1662
  %v2647 = vunpack.c.l.b16 %v1663
  %v2648 = vunpack.c.h.b16 %v1663
  %v2649 = vunpack.c.l.b16 %v1664
  %v2650 = vunpack.c.h.b16 %v1664
  %v2651 = vunpack.c.l.b16 %v1665
  %v2652 = vunpack.c.h.b16 %v1665
  %v2653 = vunpack.c.l.b16 %v1666
  %v2654 = vunpack.c.h.b16 %v1666
  %v2655 = vunpack.c.l.b16 %v1667
  %v2656 = vunpack.c.h.b16 %v1667
  %v2657 = vunpack.c.l.b16 %v1668
  %v2658 = vunpack.c.h.b16 %v1668
  %v2659 = vunpack.c.l.b16 %v1669
  %v2660 = vunpack.c.h.b16 %v1669
  %v2661 = vunpack.c.l.b16 %v1670
  %v2662 = vunpack.c.h.b16 %v1670
  %v2663 = vunpack.c.l.b16 %v1671
  %v2664 = vunpack.c.h.b16 %v1671
  %v2665 = vunpack.c.l.b16 %v1672
  %v2666 = vunpack.c.h.b16 %v1672
  %v2667 = vunpack.c.l.b16 %v1673
  %v2668 = vunpack.c.h.b16 %v1673
  %v2669 = vunpack.c.l.b16 %v1674
  %v2670 = vunpack.c.h.b16 %v1674
  %v2671 = vunpack.c.l.b16 %v1675
  %v2672 = vunpack.c.h.b16 %v1675
  %v2673 = vunpack.c.l.b16 %v1676
  %v2674 = vunpack.c.h.b16 %v1676
  %v2675 = vunpack.c.l.b16 %v1677
  %v2676 = vunpack.c.h.b16 %v1677
  %v2677 = vunpack.c.l.b16 %v1678
  %v2678 = vunpack.c.h.b16 %v1678
  %v2679 = vunpack.c.l.b16 %v1679
  %v2680 = vunpack.c.h.b16 %v1679
  %v2681 = vunpack.c.l.b16 %v1680
  %v2682 = vunpack.c.h.b16 %v1680
  %v2683 = vunpack.c.l.b16 %v1681
  %v2684 = vunpack.c.h.b16 %v1681
  %v2685 = vunpack.c.l.b16 %v1682
  %v2686 = vunpack.c.h.b16 %v1682
  %v2687 = vunpack.c.l.b16 %v1683
  %v2688 = vunpack.c.h.b16 %v1683
  %v2689 = vunpack.c.l.b16 %v1684
  %v2690 = vunpack.c.h.b16 %v1684
  %v2691 = vunpack.c.l.b16 %v1685
  %v2692 = vunpack.c.h.b16 %v1685
  %v2693 = vunpack.c.l.b16 %v1686
  %v2694 = vunpack.c.h.b16 %v1686
  %v2695 = vunpack.c.l.b16 %v1687
  %v2696 = vunpack.c.h.b16 %v1687
  %v2697 = vunpack.c.l.b16 %v1688
  %v2698 = vunpack.c.h.b16 %v1688
  %v2699 = vunpack.c.l.b16 %v1689
  %v2700 = vunpack.c.h.b16 %v1689
  %v2701 = vunpack.c.l.b16 %v1690
  %v2702 = vunpack.c.h.b16 %v1690
  %v2703 = vunpack.c.l.b16 %v1691
  %v2704 = vunpack.c.h.b16 %v1691
  %v2705 = vunpack.c.l.b16 %v1692
  %v2706 = vunpack.c.h.b16 %v1692
  %v2707 = vunpack.c.l.b16 %v1693
  %v2708 = vunpack.c.h.b16 %v1693
  %v2709 = vunpack.c.l.b16 %v1694
  %v2710 = vunpack.c.h.b16 %v1694
  %v2711 = vunpack.c.l.b16 %v1695
  %v2712 = vunpack.c.h.b16 %v1695
  %v2713 = vunpack.c.l.b16 %v1696
  %v2714 = vunpack.c.h.b16 %v1696
  %v2715 = vunpack.c.l.b16 %v1697
  %v2716 = vunpack.c.h.b16 %v1697
  %v2717 = vunpack.c.l.b16 %v1698
  %v2718 = vunpack.c.h.b16 %v1698
  %v2719 = vunpack.c.l.b16 %v1699
  %v2720 = vunpack.c.h.b16 %v1699
  %v2721 = vunpack.c.l.b16 %v1700
  %v2722 = vunpack.c.h.b16 %v1700
  %v2723 = vunpack.c.l.b16 %v1701
  %v2724 = vunpack.c.h.b16 %v1701
  %v2725 = vunpack.c.l.b16 %v1702
  %v2726 = vunpack.c.h.b16 %v1702
  %v2727 = vunpack.c.l.b16 %v1703
  %v2728 = vunpack.c.h.b16 %v1703
  %v2729 = vunpack.c.l.b16 %v1704
  %v2730 = vunpack.c.h.b16 %v1704
  %v2731 = vunpack.c.l.b16 %v1705
  %v2732 = vunpack.c.h.b16 %v1705
  %v2733 = vunpack.c.l.b16 %v1706
  %v2734 = vunpack.c.h.b16 %v1706
  %v2735 = vunpack.c.l.b16 %v1707
  %v2736 = vunpack.c.h.b16 %v1707
  %v2737 = vunpack.c.l.b16 %v1708
  %v2738 = vunpack.c.h.b16 %v1708
  %v2739 = vunpack.c.l.b16 %v1709
  %v2740 = vunpack.c.h.b16 %v1709
  %v2741 = vunpack.c.l.b16 %v1710
  %v2742 = vunpack.c.h.b16 %v1710
  %v2743 = vunpack.c.l.b16 %v1711
  %v2744 = vunpack.c.h.b16 %v1711
  %v2745 = vunpack.c.l.b16 %v1712
  %v2746 = vunpack.c.h.b16 %v1712
  %v2747 = vunpack.c.l.b16 %v1713
  %v2748 = vunpack.c.h.b16 %v1713
  %v2749 = vunpack.c.l.b16 %v1714
  %v2750 = vunpack.c.h.b16 %v1714
  %v2751 = vpack.c.b16 %v2563, %v2559
  %v2752 = vpack.c.b16 %v2564, %v2560
  %v2753 = vpack.c.b16 %v2565, %v2561
  %v2754 = vpack.c.b16 %v2566, %v2562
  %v2755 = vpack.c.b16 %v2571, %v2567
  %v2756 = vpack.c.b16 %v2572, %v2568
  %v2757 = vpack.c.b16 %v2573, %v2569
  %v2758 = vpack.c.b16 %v2574, %v2570
  %v2759 = vpack.c.b16 %v2579, %v2575
  %v2760 = vpack.c.b16 %v2580, %v2576
  %v2761 = vpack.c.b16 %v2581, %v2577
  %v2762 = vpack.c.b16 %v2582, %v2578
  %v2763 = vpack.c.b16 %v2587, %v2583
  %v2764 = vpack.c.b16 %v2588, %v2584
  %v2765 = vpack.c.b16 %v2589, %v2585
  %v2766 = vpack.c.b16 %v2590, %v2586
  %v2767 = vpack.c.b16 %v2595, %v2591
  %v2768 = vpack.c.b16 %v2596, %v2592
  %v2769 = vpack.c.b16 %v2597, %v2593
  %v2770 = vpack.c.b16 %v2598, %v2594
  %v2771 = vpack.c.b16 %v2603, %v2599
  %v2772 = vpack.c.b16 %v2604, %v2600
  %v2773 = vpack.c.b16 %v2605, %v2601
  %v2774 = vpack.c.b16 %v2606, %v2602
  %v2775 = vpack.c.b16 %v2611, %v2607
  %v2776 = vpack.c.b16 %v2612, %v2608
  %v2777 = vpack.c.b16 %v2613, %v2609
  %v2778 = vpack.c.b16 %v2614, %v2610
  %v2779 = vpack.c.b16 %v2619, %v2615
  %v2780 = vpack.c.b16 %v2620, %v2616
  %v2781 = vpack.c.b16 %v2621, %v2617
  %v2782 = vpack.c.b16 %v2622, %v2618
  %v2783 = vpack.c.b16 %v2627, %v2623
  %v2784 = vpack.c.b16 %v2628, %v2624
  %v2785 = vpack.c.b16 %v2629, %v2625
  %v2786 = vpack.c.b16 %v2630, %v2626
  %v2787 = vpack.c.b16 %v2635, %v2631
  %v2788 = vpack.c.b16 %v2636, %v2632
  %v2789 = vpack.c.b16 %v2637, %v2633
  %v2790 = vpack.c.b16 %v2638, %v2634
  %v2791 = vpack.c.b16 %v2643, %v2639
  %v2792 = vpack.c.b16 %v2644, %v2640
  %v2793 = vpack.c.b16 %v2645, %v2641
  %v2794 = vpack.c.b16 %v2646, %v2642
  %v2795 = vpack.c.b16 %v2651, %v2647
  %v2796 = vpack.c.b16 %v2652, %v2648
  %v2797 = vpack.c.b16 %v2653, %v2649
  %v2798 = vpack.c.b16 %v2654, %v2650
  %v2799 = vpack.c.b16 %v2659, %v2655
  %v2800 = vpack.c.b16 %v2660, %v2656
  %v2801 = vpack.c.b16 %v2661, %v2657
  %v2802 = vpack.c.b16 %v2662, %v2658
  %v2803 = vpack.c.b16 %v2667, %v2663
  %v2804 = vpack.c.b16 %v2668, %v2664
  %v2805 = vpack.c.b16 %v2669, %v2665
  %v2806 = vpack.c.b16 %v2670, %v2666
  %v2807 = vpack.c.b16 %v2675, %v2671
  %v2808 = vpack.c.b16 %v2676, %v2672
  %v2809 = vpack.c.b16 %v2677, %v2673
  %v2810 = vpack.c.b16 %v2678, %v2674
  %v2811 = vpack.c.b16 %v2683, %v2679
  %v2812 = vpack.c.b16 %v2684, %v2680
  %v2813 = vpack.c.b16 %v2685, %v2681
  %v2814 = vpack.c.b16 %v2686, %v2682
  %v2815 = vpack.c.b16 %v2691, %v2687
  %v2816 = vpack.c.b16 %v2692, %v2688
  %v2817 = vpack.c.b16 %v2693, %v2689
  %v2818 = vpack.c.b16 %v2694, %v2690
  %v2819 = vpack.c.b16 %v2699, %v2695
  %v2820 = vpack.c.b16 %v2700, %v2696
  %v2821 = vpack.c.b16 %v2701, %v2697
  %v2822 = vpack.c.b16 %v2702, %v2698
  %v2823 = vpack.c.b16 %v2707, %v2703
  %v2824 = vpack.c.b16 %v2708, %v2704
  %v2825 = vpack.c.b16 %v2709, %v2705
  %v2826 = vpack.c.b16 %v2710, %v2706
  %v2827 = vpack.c.b16 %v2715, %v2711
  %v2828 = vpack.c.b16 %v2716, %v2712
  %v2829 = vpack.c.b16 %v2717, %v2713
  %v2830 = vpack.c.b16 %v2718, %v2714
  %v2831 = vpack.c.b16 %v2723, %v2719
  %v2832 = vpack.c.b16 %v2724, %v2720
  %v2833 = vpack.c.b16 %v2725, %v2721
  %v2834 = vpack.c.b16 %v2726, %v2722
  %v2835 = vpack.c.b16 %v2731, %v2727
  %v2836 = vpack.c.b16 %v2732, %v2728
  %v2837 = vpack.c.b16 %v2733, %v2729
  %v2838 = vpack.c.b16 %v2734, %v2730
  %v2839 = vpack.c.b16 %v2739, %v2735
  %v2840 = vpack.c.b16 %v2740, %v2736
  %v2841 = vpack.c.b16 %v2741, %v2737
  %v2842 = vpack.c.b16 %v2742, %v2738
  %v2843 = vpack.c.b16 %v2747, %v2743
  %v2844 = vpack.c.b16 %v2748, %v2744
  %v2845 = vpack.c.b16 %v2749, %v2745
  %v2846 = vpack.c.b16 %v2750, %v2746
  %2943 = vmatprep.subr.bf16.mxu0 %v2752
  %2944 = vmatpush1.bf16.msra.mxu0 %v2751
  %2945 = vmatprep.subr.bf16.mxu0 %v2756
  %2946 = vmatpush1.bf16.msra.mxu0 %v2755
  %2947 = vmatprep.subr.bf16.mxu0 %v2760
  %2948 = vmatpush1.bf16.msra.mxu0 %v2759
  %2949 = vmatprep.subr.bf16.mxu0 %v2764
  %2950 = vmatpush1.bf16.msra.mxu0 %v2763
  %2951 = vmatprep.subr.bf16.mxu0 %v2768
  %2952 = vmatpush1.bf16.msra.mxu0 %v2767
  %2953 = vmatprep.subr.bf16.mxu0 %v2772
  %2954 = vmatpush1.bf16.msra.mxu0 %v2771
  %2955 = vmatprep.subr.bf16.mxu0 %v2776
  %2956 = vmatpush1.bf16.msra.mxu0 %v2775
  %2957 = vmatprep.subr.bf16.mxu0 %v2780
  %2958 = vmatpush1.bf16.msra.mxu0 %v2779
  %2959 = vmatprep.subr.bf16.mxu0 %v2784
  %2960 = vmatpush1.bf16.msra.mxu0 %v2783
  %2961 = vmatprep.subr.bf16.mxu0 %v2788
  %2962 = vmatpush1.bf16.msra.mxu0 %v2787
  %2963 = vmatprep.subr.bf16.mxu0 %v2792
  %2964 = vmatpush1.bf16.msra.mxu0 %v2791
  %2965 = vmatprep.subr.bf16.mxu0 %v2796
  %2966 = vmatpush1.bf16.msra.mxu0 %v2795
  %2967 = vmatprep.subr.bf16.mxu0 %v2800
  %2968 = vmatpush1.bf16.msra.mxu0 %v2799
  %2969 = vmatprep.subr.bf16.mxu0 %v2804
  %2970 = vmatpush1.bf16.msra.mxu0 %v2803
  %2971 = vmatprep.subr.bf16.mxu0 %v2808
  %2972 = vmatpush1.bf16.msra.mxu0 %v2807
  %2973 = vmatprep.subr.bf16.mxu0 %v2812
  %2974 = vmatpush1.bf16.msra.mxu0 %v2811
  %2975 = vmatprep.mubr.bf16.mxu0 %v1608
  %2976 = vmatmul.mubr.bf16.gmra.mrb[0].mxu0 %v1607
  %v2977 = vpop.f32.mrb[0].mxu0
  %v2978 = vadd.f32 %v2369, %v2977
  %v2979 = vpop.f32.mrb[0].mxu0
  %v2980 = vadd.f32 %v2371, %v2979
  %v2981 = vpop.f32.mrb[0].mxu0
  %v2982 = vadd.f32 %v2373, %v2981
  %v2983 = vpop.f32.mrb[0].mxu0
  %v2984 = vadd.f32 %v2375, %v2983
  %2985 = vdwg.mxu0
  %2986 = vmatprep.subr.bf16.mxu0 %v2816
  %2987 = vmatpush1.bf16.msra.mxu0 %v2815
  %2988 = vmatprep.subr.bf16.mxu0 %v2820
  %2989 = vmatpush1.bf16.msra.mxu0 %v2819
  %2990 = vmatprep.subr.bf16.mxu0 %v2824
  %2991 = vmatpush1.bf16.msra.mxu0 %v2823
  %2992 = vmatprep.subr.bf16.mxu0 %v2828
  %2993 = vmatpush1.bf16.msra.mxu0 %v2827
  %2994 = vmatprep.subr.bf16.mxu0 %v2832
  %2995 = vmatpush1.bf16.msra.mxu0 %v2831
  %2996 = vmatprep.subr.bf16.mxu0 %v2836
  %2997 = vmatpush1.bf16.msra.mxu0 %v2835
  %2998 = vmatprep.subr.bf16.mxu0 %v2840
  %2999 = vmatpush1.bf16.msra.mxu0 %v2839
  %3000 = vmatprep.subr.bf16.mxu0 %v2844
  %3001 = vmatpush1.bf16.msra.mxu0 %v2843
  %3002 = vmatprep.subr.bf16.mxu0 0
  %3003 = vmatpush1.bf16.msra.mxu0 0
  %3004 = vmatprep.subr.bf16.mxu0 0
  %3005 = vmatpush1.bf16.msra.mxu0 0
  %3006 = vmatprep.subr.bf16.mxu0 0
  %3007 = vmatpush1.bf16.msra.mxu0 0
  %3008 = vmatprep.subr.bf16.mxu0 0
  %3009 = vmatpush1.bf16.msra.mxu0 0
  %3010 = vmatprep.subr.bf16.mxu0 0
  %3011 = vmatpush1.bf16.msra.mxu0 0
  %3012 = vmatprep.subr.bf16.mxu0 0
  %3013 = vmatpush1.bf16.msra.mxu0 0
  %3014 = vmatprep.subr.bf16.mxu0 0
  %3015 = vmatpush1.bf16.msra.mxu0 0
  %3016 = vmatprep.subr.bf16.mxu0 0
  %3017 = vmatpush1.bf16.msra.mxu0 0
  %3018 = vmatprep.mubr.bf16.mxu0 0
  %3019 = vmatmul.mubr.bf16.gmra.mrb[0].mxu0 %v1609
  %v3020 = vpop.f32.mrb[0].mxu0
  %v3021 = vadd.f32 %v2978, %v3020
  %v3022 = vpop.f32.mrb[0].mxu0
  %v3023 = vadd.f32 %v2980, %v3022
  %v3024 = vpop.f32.mrb[0].mxu0
  %v3025 = vadd.f32 %v2982, %v3024
  %v3026 = vpop.f32.mrb[0].mxu0
  %v3027 = vadd.f32 %v2984, %v3026
  %3028 = vdwg.mxu0
  %3029 = vmatprep.subr.bf16.mxu0 %v2754
  %3030 = vmatpush1.bf16.msra.mxu0 %v2753
  %3031 = vmatprep.subr.bf16.mxu0 %v2758
  %3032 = vmatpush1.bf16.msra.mxu0 %v2757
  %3033 = vmatprep.subr.bf16.mxu0 %v2762
  %3034 = vmatpush1.bf16.msra.mxu0 %v2761
  %3035 = vmatprep.subr.bf16.mxu0 %v2766
  %3036 = vmatpush1.bf16.msra.mxu0 %v2765
  %3037 = vmatprep.subr.bf16.mxu0 %v2770
  %3038 = vmatpush1.bf16.msra.mxu0 %v2769
  %3039 = vmatprep.subr.bf16.mxu0 %v2774
  %3040 = vmatpush1.bf16.msra.mxu0 %v2773
  %3041 = vmatprep.subr.bf16.mxu0 %v2778
  %3042 = vmatpush1.bf16.msra.mxu0 %v2777
  %3043 = vmatprep.subr.bf16.mxu0 %v2782
  %3044 = vmatpush1.bf16.msra.mxu0 %v2781
  %3045 = vmatprep.subr.bf16.mxu0 %v2786
  %3046 = vmatpush1.bf16.msra.mxu0 %v2785
  %3047 = vmatprep.subr.bf16.mxu0 %v2790
  %3048 = vmatpush1.bf16.msra.mxu0 %v2789
  %3049 = vmatprep.subr.bf16.mxu0 %v2794
  %3050 = vmatpush1.bf16.msra.mxu0 %v2793
  %3051 = vmatprep.subr.bf16.mxu0 %v2798
  %3052 = vmatpush1.bf16.msra.mxu0 %v2797
  %3053 = vmatprep.subr.bf16.mxu0 %v2802
  %3054 = vmatpush1.bf16.msra.mxu0 %v2801
  %3055 = vmatprep.subr.bf16.mxu0 %v2806
  %3056 = vmatpush1.bf16.msra.mxu0 %v2805
  %3057 = vmatprep.subr.bf16.mxu0 %v2810
  %3058 = vmatpush1.bf16.msra.mxu0 %v2809
  %3059 = vmatprep.subr.bf16.mxu0 %v2814
  %3060 = vmatpush1.bf16.msra.mxu0 %v2813
  %3061 = vmatprep.mubr.bf16.mxu0 %v1608
  %3062 = vmatmul.mubr.bf16.gmra.mrb[0].mxu0 %v1607
  %v3063 = vpop.f32.mrb[0].mxu0
  %v3064 = vadd.f32 %v2455, %v3063
  %v3065 = vpop.f32.mrb[0].mxu0
  %v3066 = vadd.f32 %v2457, %v3065
  %v3067 = vpop.f32.mrb[0].mxu0
  %v3068 = vadd.f32 %v2459, %v3067
  %v3069 = vpop.f32.mrb[0].mxu0
  %v3070 = vadd.f32 %v2461, %v3069
  %3071 = vdwg.mxu0
  %3072 = vmatprep.subr.bf16.mxu0 %v2818
  %3073 = vmatpush1.bf16.msra.mxu0 %v2817
  %3074 = vmatprep.subr.bf16.mxu0 %v2822
  %3075 = vmatpush1.bf16.msra.mxu0 %v2821
  %3076 = vmatprep.subr.bf16.mxu0 %v2826
  %3077 = vmatpush1.bf16.msra.mxu0 %v2825
  %3078 = vmatprep.subr.bf16.mxu0 %v2830
  %3079 = vmatpush1.bf16.msra.mxu0 %v2829
  %3080 = vmatprep.subr.bf16.mxu0 %v2834
  %3081 = vmatpush1.bf16.msra.mxu0 %v2833
  %3082 = vmatprep.subr.bf16.mxu0 %v2838
  %3083 = vmatpush1.bf16.msra.mxu0 %v2837
  %3084 = vmatprep.subr.bf16.mxu0 %v2842
  %3085 = vmatpush1.bf16.msra.mxu0 %v2841
  %3086 = vmatprep.subr.bf16.mxu0 %v2846
  %3087 = vmatpush1.bf16.msra.mxu0 %v2845
  %3088 = vmatprep.subr.bf16.mxu0 0
  %3089 = vmatpush1.bf16.msra.mxu0 0
  %3090 = vmatprep.subr.bf16.mxu0 0
  %3091 = vmatpush1.bf16.msra.mxu0 0
  %3092 = vmatprep.subr.bf16.mxu0 0
  %3093 = vmatpush1.bf16.msra.mxu0 0
  %3094 = vmatprep.subr.bf16.mxu0 0
  %3095 = vmatpush1.bf16.msra.mxu0 0
  %3096 = vmatprep.subr.bf16.mxu0 0
  %3097 = vmatpush1.bf16.msra.mxu0 0
  %3098 = vmatprep.subr.bf16.mxu0 0
  %3099 = vmatpush1.bf16.msra.mxu0 0
  %3100 = vmatprep.subr.bf16.mxu0 0
  %3101 = vmatpush1.bf16.msra.mxu0 0
  %3102 = vmatprep.subr.bf16.mxu0 0
  %3103 = vmatpush1.bf16.msra.mxu0 0
  %3104 = vmatprep.mubr.bf16.mxu0 0
  %3105 = vmatmul.mubr.bf16.gmra.mrb[0].mxu0 %v1609
  %v3106 = vpop.f32.mrb[0].mxu0
  %v3107 = vadd.f32 %v3064, %v3106
  %v3108 = vpop.f32.mrb[0].mxu0
  %v3109 = vadd.f32 %v3066, %v3108
  %v3110 = vpop.f32.mrb[0].mxu0
  %v3111 = vadd.f32 %v3068, %v3110
  %v3112 = vpop.f32.mrb[0].mxu0
  %v3113 = vadd.f32 %v3070, %v3112
  %3114 = vdwg.mxu0
  %3115 = vst [vmem:[%s8] sm:$0xff] %v3021
  %3116 = vst [vmem:[%s8 + $0x8] sm:$0xff] %v3023
  %3117 = vst [vmem:[%s8 + $0x10] sm:$0xff] %v3107
  %3118 = vst [vmem:[%s8 + $0x18] sm:$0xff] %v3109
  %3119 = vst [vmem:[%s8 + $0x20] sm:$0xff] %v3025
  %3120 = vst [vmem:[%s8 + $0x28] sm:$0xff] %v3027
  %3121 = vst [vmem:[%s8 + $0x30] sm:$0xff] %v3111
  %3122 = vst [vmem:[%s8 + $0x38] sm:$0xff] %v3113
  // Predicated region
  $region34: #{generator_forward.7} parent=0 // pred_check
    _
  $region35: #{generator_forward.7} parent=0 // pred_check_branch
    %3124 = sbr.rel (0) target = $region37
  $region36: #{generator_forward.7} parent=0 // pred_region
    _
  $region37: #{generator_forward.7} parent=0 // pred_fallthru
    _
  // Predicated region
  $region38: #{generator_forward.7} parent=0 // pred_check
    _
  $region39: #{generator_forward.7} parent=0 // pred_check_branch
    %3126 = sbr.rel (0) target = $region41
  $region40: #{generator_forward.7} parent=0 // pred_region
    _
  $region41: #{generator_forward.7} parent=0 // pred_fallthru
    _

</llo_original>
